<compile_context>
chip_gen: v7x
topology: tpu7x:2x2x1
jax: 0.10.0
libtpu: 0.0.40
codegen_flags: <defaults>
</compile_context>

<pallas_src>
import functools

import jax
import jax.numpy as jnp
from jax.experimental import pallas as pl
from jax.experimental.pallas import tpu as pltpu

_LANE = 128   # lane width: channel padding target


def _round_up(x, m):
    return (x + m - 1) // m * m


def _res_unit_kernel(x_ref, w1_ref, b1_ref, w3_ref, b3_ref, o_ref, slab_ref,
                     *, n, shortcut, H, W, C1p, C2p, cdt):
    """Per-image ResUnit_n body (all planes flattened to (H*W, Cpad)).

    x_ref    : (1, HW, C1p)     lane-dense, channel-padded input (f32)
    w1_ref   : (C1p, C1p)       folded 1x1 conv weight (cin, cout), dtype cdt
    b1_ref   : (1, C1p)         folded BN bias for CBL1 (f32)
    w3_ref   : (3, 3*C1p, C2p)  folded 3x3 conv weight, one fat (K, N) slab per
                                kernel row, K ordered (kw, cin), dtype cdt
    b3_ref   : (1, C2p)         folded BN bias for CBL2 (f32)
    o_ref    : (1, HW, C2p)     output (f32)
    slab_ref : VMEM (W + HW + W, 3*C1p), dtype cdt -- halo-padded im2col slab.
               Lane blocks: [0:C1p]   = left  tap (kw=0),
                            [C1p:2C1p]= centre tap (kw=1),
                            [2C1p:3C1p]= right tap (kw=2).
               Row W + p holds the taps of flattened pixel p; the W-row
               top/bottom halos stay zero (out-of-image rows).
    """
    HW = H * W

    # ---- hoisted once per image: weights, biases, column-border masks ----
    w1 = w1_ref[...]
    b1 = b1_ref[...]
    b3 = b3_ref[...]
    w3_top = w3_ref[0]        # kernel row kh = 0
    w3_mid = w3_ref[1]        # kernel row kh = 1
    w3_bot = w3_ref[2]        # kernel row kh = 2

    # (HW, 1) masks, broadcast along lanes: zero where the pixel sits on the
    # left / right image border (kills the wrap-around of the +/-1 row shift).
    w_idx = jax.lax.broadcasted_iota(jnp.int32, (HW, 1), 0) % W
    m_left = (w_idx != 0).astype(cdt)
    m_right = (w_idx != W - 1).astype(cdt)

    # Zero the slab once per image.  Every interior row is rewritten on every
    # repeat; the W-row halos are never written again and stay zero.
    slab_ref[...] = jnp.zeros((W + HW + W, 3 * C1p), cdt)

    def res_unit(t):
        # ----- CBL1: 1x1 conv (BN folded) + SiLU -----
        y1 = jnp.dot(t.astype(cdt), w1, preferred_element_type=jnp.float32) + b1
        y1 = (y1 * jax.nn.sigmoid(y1)).astype(cdt)

        # ----- CBL2: 3x3 conv pad=1 (BN folded) + SiLU -----
        # Centre taps: one aligned store into the slab.
        slab_ref[W:W + HW, C1p:2 * C1p] = y1
        # +/-1 column taps: read the centre block at a +/-1 row offset (the
        # halo supplies zeros at the image top/bottom), mask the border
        # columns, store back into the aligned left/right lane blocks.
        lft = slab_ref[W - 1:W - 1 + HW, C1p:2 * C1p] * m_left    # value at (h, w-1)
        rgt = slab_ref[W + 1:W + 1 + HW, C1p:2 * C1p] * m_right   # value at (h, w+1)
        slab_ref[W:W + HW, 0:C1p] = lft
        slab_ref[W:W + HW, 2 * C1p:3 * C1p] = rgt

        # Three fat matmuls (K = 3*C1p), one per kernel row, fed straight from
        # row-shifted (multiple-of-8) slices of the slab.  Value accumulation:
        # no VMEM accumulator scratch, no extra load/store passes.
        acc = jnp.dot(slab_ref[0:HW, :], w3_top,
                      preferred_element_type=jnp.float32)           # kh = 0 (row above)
        acc = acc + jnp.dot(slab_ref[W:W + HW, :], w3_mid,
                            preferred_element_type=jnp.float32)     # kh = 1 (same row)
        acc = acc + jnp.dot(slab_ref[2 * W:2 * W + HW, :], w3_bot,
                            preferred_element_type=jnp.float32)     # kh = 2 (row below)
        y2 = acc + b3
        return y2 * jax.nn.sigmoid(y2)

    # Shared weights applied n times.  Small static n -> Python unroll; larger
    # n -> fori_loop so code size / live ranges stay bounded.
    t = x_ref[0]
    if n <= 4:
        for _ in range(n):
            t = res_unit(t)
    else:
        t = jax.lax.fori_loop(0, n, lambda _, tt: res_unit(tt), t)

    if shortcut:
        # Re-read the (VMEM-resident) input block here instead of keeping it
        # live across the whole repeat loop.
        t = t + x_ref[0]
    o_ref[0] = t.astype(o_ref.dtype)


def res_unit_n_pallas(x_nchw, w1f, b1f, w3f, b3f, *, n, use_bf16=False):
    """x_nchw: (N, C1, H, W) float32.  Returns (N, C2, H, W) float32.

    w1f: (C1, C1)      folded 1x1 weight, layout (cin, cout)
    b1f: (C1,)         folded bias
    w3f: (3, 3, C1, C2) folded 3x3 weight, layout (kh, kw, cin, cout)
    b3f: (C2,)         folded bias
    """
    N, C1, H, W = x_nchw.shape
    C2 = w3f.shape[-1]
    shortcut = (C1 == C2)
    assert shortcut or n == 1, "repeating the shared res_unit requires c1 == c2"
    HW = H * W
    assert W % 8 == 0, "W must be a multiple of 8 (keeps row shifts aligned)"

    C1p = _round_up(C1, _LANE)
    C2p = _round_up(C2, _LANE)
    cdt = jnp.bfloat16 if use_bf16 else jnp.float32

    # NCHW -> lane-dense, channel-padded (N, H*W, C1p).  Padded channels stay
    # exactly zero through every CBL (zero weights/bias + SiLU(0) = 0), so
    # slicing the output back is exact.
    x = jnp.transpose(x_nchw, (0, 2, 3, 1)).astype(jnp.float32)
    x = x.reshape(N, HW, C1)
    x = jnp.pad(x, ((0, 0), (0, 0), (0, C1p - C1)))

    w1p = jnp.zeros((C1p, C1p), jnp.float32).at[:C1, :C1].set(
        w1f.astype(jnp.float32)).astype(cdt)
    b1p = jnp.zeros((1, C1p), jnp.float32).at[0, :C1].set(b1f.astype(jnp.float32))
    # (kh, kw, cin, cout) padded then reshaped to (kh, kw*cin, cout): each
    # kernel row becomes one fat (K = 3*C1p, C2p) matmul operand.
    w3p = jnp.zeros((3, 3, C1p, C2p), jnp.float32).at[:, :, :C1, :C2].set(
        w3f.astype(jnp.float32))
    w3r = w3p.reshape(3, 3 * C1p, C2p).astype(cdt)
    b3p = jnp.zeros((1, C2p), jnp.float32).at[0, :C2].set(b3f.astype(jnp.float32))

    # --- generation-aware VMEM budget -------------------------------------
    cbytes = 2 if use_bf16 else 4
    slab_bytes = (W + HW + W) * 3 * C1p * cbytes
    io_bytes = 2 * HW * C1p * 4 + 2 * HW * C2p * 4          # double-buffered x / out
    wt_bytes = 2 * (C1p * C1p + 3 * 3 * C1p * C2p) * cbytes + 2 * (C1p + C2p) * 4
    need = slab_bytes + io_bytes + wt_bytes + (4 << 20)     # margin for temporaries
    try:
        phys = pltpu.get_tpu_info().vmem_capacity_bytes
    except Exception:
        phys = 64 << 20                                     # conservative (v7x) fallback
    vmem_cap = int(phys) * 3 // 4
    if need > vmem_cap:
        # TODO(synk): tile CBL2 over the HW (M) dimension inside the kernel for
        # feature maps too large to keep whole-image slabs in VMEM (v7x 64 MiB).
        raise ValueError(
            f"ResUnit_n Pallas kernel needs ~{need >> 20} MiB VMEM but only "
            f"{vmem_cap >> 20} MiB is budgeted; tile the HW dimension.")
    vmem_limit = min(max(need, 32 << 20), vmem_cap)

    kernel = functools.partial(_res_unit_kernel, n=n, shortcut=shortcut,
                               H=H, W=W, C1p=C1p, C2p=C2p, cdt=cdt)

    out = pl.pallas_call(
        kernel,
        out_shape=jax.ShapeDtypeStruct((N, HW, C2p), jnp.float32),
        grid_spec=pltpu.PrefetchScalarGridSpec(
            num_scalar_prefetch=0,
            grid=(N,),
            in_specs=[
                pl.BlockSpec((1, HW, C1p), lambda b: (b, 0, 0)),
                # Constant-index weight/bias blocks are DMA'd only once.
                # TODO(synk): sweep pipeline_mode=pl.Buffered(1) here to drop
                # the dead second weight buffer at large channel counts.
                pl.BlockSpec((C1p, C1p), lambda b: (0, 0)),
                pl.BlockSpec((1, C1p), lambda b: (0, 0)),
                pl.BlockSpec((3, 3 * C1p, C2p), lambda b: (0, 0, 0)),
                pl.BlockSpec((1, C2p), lambda b: (0, 0)),
            ],
            out_specs=pl.BlockSpec((1, HW, C2p), lambda b: (b, 0, 0)),
            scratch_shapes=[
                pltpu.VMEM((W + HW + W, 3 * C1p), cdt),   # halo-padded im2col slab
            ],
        ),
        compiler_params=pltpu.CompilerParams(
            # Batch elements are independent -> shard across TensorCores.
            # TODO(synk): for batch-1 inference on v7x, add a second parallel
            # grid axis splitting H (with an n-row halo) so both cores work.
            dimension_semantics=("parallel",),
            vmem_limit_bytes=int(vmem_limit),
        ),
    )(x, w1p, b1p, w3r, b3p)

    out = out[:, :, :C2].reshape(N, H, W, C2)
    return jnp.transpose(out, (0, 3, 1, 2))


def _ref_forward(x_nchw, w1f, b1f, w3f, b3f, *, n):
    """Pure-JAX reference (lax.conv) for correctness checking."""
    N, C1, H, W = x_nchw.shape
    shortcut = (C1 == w3f.shape[-1])
    t = jnp.transpose(x_nchw, (0, 2, 3, 1))
    x0 = t
    dn = ('NHWC', 'HWIO', 'NHWC')
    for _ in range(n):
        y1 = jax.lax.conv_general_dilated(
            t, w1f.reshape(1, 1, C1, C1), (1, 1), 'VALID', dimension_numbers=dn)
        y1 = y1 + b1f
        y1 = y1 * jax.nn.sigmoid(y1)
        y2 = jax.lax.conv_general_dilated(
            y1, w3f, (1, 1), ((1, 1), (1, 1)), dimension_numbers=dn)
        y2 = y2 + b3f
        y2 = y2 * jax.nn.sigmoid(y2)
        t = y2
    out = x0 + t if shortcut else t
    return jnp.transpose(out, (0, 3, 1, 2))


def _make_params(key, c1, c2, eps=1e-5):
    """Deterministic synthetic weights; BN (inference) folded into conv."""
    ks = jax.random.split(key, 10)
    # CBL1: 1x1 conv (c1 -> c1), weight layout (cout, cin) like PyTorch
    w1 = jax.random.normal(ks[0], (c1, c1), jnp.float32) * 0.3
    g1 = 1.0 + 0.1 * jax.random.normal(ks[1], (c1,), jnp.float32)
    beta1 = 0.1 * jax.random.normal(ks[2], (c1,), jnp.float32)
    mean1 = 0.1 * jax.random.normal(ks[3], (c1,), jnp.float32)
    var1 = jnp.abs(jax.random.normal(ks[4], (c1,), jnp.float32)) + 0.5
    # CBL2: 3x3 conv (c1 -> c2), weight layout (cout, cin, kh, kw)
    w3 = jax.random.normal(ks[5], (c2, c1, 3, 3), jnp.float32) * 0.1
    g2 = 1.0 + 0.1 * jax.random.normal(ks[6], (c2,), jnp.float32)
    beta2 = 0.1 * jax.random.normal(ks[7], (c2,), jnp.float32)
    mean2 = 0.1 * jax.random.normal(ks[8], (c2,), jnp.float32)
    var2 = jnp.abs(jax.random.normal(ks[9], (c2,), jnp.float32)) + 0.5

    s1 = g1 / jnp.sqrt(var1 + eps)
    w1f = (w1 * s1[:, None]).T                      # (cin, cout)
    b1f = beta1 - mean1 * s1

    s2 = g2 / jnp.sqrt(var2 + eps)
    w3f = jnp.transpose(w3, (2, 3, 1, 0)) * s2      # (kh, kw, cin, cout)
    b3f = beta2 - mean2 * s2
    return w1f, b1f, w3f, b3f


if __name__ == "__main__":
    key = jax.random.PRNGKey(0)
    k_x, k_w, k_x2, k_w2 = jax.random.split(key, 4)

    # Case 1: c1 == c2 -> residual shortcut active, n = 2 shared repeats.
    N, C1, C2, H, W = 2, 4, 4, 16, 16
    n_rep = 2
    x = jax.random.normal(k_x, (N, C1, H, W), jnp.float32)
    w1f, b1f, w3f, b3f = _make_params(k_w, C1, C2)

    out = jax.block_until_ready(res_unit_n_pallas(x, w1f, b1f, w3f, b3f, n=n_rep))
    ref = jax.block_until_ready(_ref_forward(x, w1f, b1f, w3f, b3f, n=n_rep))
    assert out.shape == (N, C2, H, W)
    assert jnp.allclose(out, ref, rtol=1e-4, atol=1e-4), (
        float(jnp.max(jnp.abs(out - ref))))

    # Case 2: c1 != c2 -> no shortcut (single application).
    C2b = 8
    x2 = jax.random.normal(k_x2, (N, C1, H, W), jnp.float32)
    w1b, b1b, w3b, b3b = _make_params(k_w2, C1, C2b)

    out2 = jax.block_until_ready(res_unit_n_pallas(x2, w1b, b1b, w3b, b3b, n=1))
    ref2 = jax.block_until_ready(_ref_forward(x2, w1b, b1b, w3b, b3b, n=1))
    assert out2.shape == (N, C2b, H, W)
    assert jnp.allclose(out2, ref2, rtol=1e-4, atol=1e-4), (
        float(jnp.max(jnp.abs(out2 - ref2))))

    print("KERNEL_OK")
</pallas_src>

<mosaic_0001>
module attributes {stable_mosaic.version = 11 : i64} {
  func.func @_res_unit_kernel(%arg0: i32, %arg1: memref<1x256x128xf32, #tpu.memory_space<vmem>>, %arg2: memref<128x128xf32, #tpu.memory_space<vmem>>, %arg3: memref<1x128xf32, #tpu.memory_space<vmem>>, %arg4: memref<3x384x128xf32, #tpu.memory_space<vmem>>, %arg5: memref<1x128xf32, #tpu.memory_space<vmem>>, %arg6: memref<1x256x128xf32, #tpu.memory_space<vmem>>, %arg7: memref<288x384xf32, #tpu.memory_space<vmem>>) attributes {dimension_semantics = [#tpu.dimension_semantics<parallel>], iteration_bounds = array<i64: 2>, scalar_prefetch = 0 : i64, scratch_operands = 1 : i64, tpu.core_type = #tpu.core_type<tc>, window_params = [{transform_indices = @transform_0, window_bounds = array<i64: 1, 256, 128>}, {pipeline_mode = #tpu.pipeline_mode<synchronous>, transform_indices = @transform_1, window_bounds = array<i64: 128, 128>}, {pipeline_mode = #tpu.pipeline_mode<synchronous>, transform_indices = @transform_2, window_bounds = array<i64: 1, 128>}, {pipeline_mode = #tpu.pipeline_mode<synchronous>, transform_indices = @transform_3, window_bounds = array<i64: 3, 384, 128>}, {pipeline_mode = #tpu.pipeline_mode<synchronous>, transform_indices = @transform_4, window_bounds = array<i64: 1, 128>}, {transform_indices = @transform_5, window_bounds = array<i64: 1, 256, 128>}]} {
    %c0 = arith.constant 0 : index
    %c0_0 = arith.constant 0 : index
    %0 = vector.load %arg2[%c0, %c0_0] : memref<128x128xf32, #tpu.memory_space<vmem>>, vector<128x128xf32>
    %c0_1 = arith.constant 0 : index
    %c0_2 = arith.constant 0 : index
    %1 = vector.load %arg3[%c0_1, %c0_2] : memref<1x128xf32, #tpu.memory_space<vmem>>, vector<1x128xf32>
    %c0_3 = arith.constant 0 : index
    %c0_4 = arith.constant 0 : index
    %2 = vector.load %arg5[%c0_3, %c0_4] : memref<1x128xf32, #tpu.memory_space<vmem>>, vector<1x128xf32>
    %c0_5 = arith.constant 0 : index
    %c0_6 = arith.constant 0 : index
    %c0_7 = arith.constant 0 : index
    %3 = vector.load %arg4[%c0_5, %c0_6, %c0_7] : memref<3x384x128xf32, #tpu.memory_space<vmem>>, vector<1x384x128xf32>
    %4 = vector.shape_cast %3 : vector<1x384x128xf32> to vector<384x128xf32>
    %c1 = arith.constant 1 : index
    %c0_8 = arith.constant 0 : index
    %c0_9 = arith.constant 0 : index
    %5 = vector.load %arg4[%c1, %c0_8, %c0_9] : memref<3x384x128xf32, #tpu.memory_space<vmem>>, vector<1x384x128xf32>
    %6 = vector.shape_cast %5 : vector<1x384x128xf32> to vector<384x128xf32>
    %c2 = arith.constant 2 : index
    %c0_10 = arith.constant 0 : index
    %c0_11 = arith.constant 0 : index
    %7 = vector.load %arg4[%c2, %c0_10, %c0_11] : memref<3x384x128xf32, #tpu.memory_space<vmem>>, vector<1x384x128xf32>
    %8 = vector.shape_cast %7 : vector<1x384x128xf32> to vector<384x128xf32>
    %9 = tpu.iota {dimensions = array<i32: 0>} : vector<256x1xi32>
    %c16_i32 = arith.constant 16 : i32
    %c0_i32 = arith.constant 0 : i32
    %10 = arith.cmpi eq, %c16_i32, %c0_i32 : i32
    %c1_i32 = arith.constant 1 : i32
    %11 = arith.select %10, %c1_i32, %c16_i32 : i32
    %12 = vector.broadcast %11 : i32 to vector<256x1xi32>
    %13 = arith.remsi %9, %12 : vector<256x1xi32>
    %c0_i32_12 = arith.constant 0 : i32
    %14 = vector.broadcast %c0_i32_12 : i32 to vector<256x1xi32>
    %15 = arith.cmpi ne, %13, %14 : vector<256x1xi32>
    %c0_i32_13 = arith.constant 0 : i32
    %16 = vector.broadcast %c0_i32_13 : i32 to vector<256x1xi32>
    %17 = arith.cmpi slt, %13, %16 : vector<256x1xi32>
    %c0_i32_14 = arith.constant 0 : i32
    %18 = arith.cmpi slt, %11, %c0_i32_14 : i32
    %19 = vector.broadcast %18 : i1 to vector<256x1xi1>
    %20 = vector.broadcast %19 : vector<256x1xi1> to vector<256x1xi1>
    %21 = arith.xori %17, %20 : vector<256x1xi1>
    %22 = arith.andi %21, %15 : vector<256x1xi1>
    %23 = vector.broadcast %11 : i32 to vector<256x1xi32>
    %24 = arith.addi %13, %23 : vector<256x1xi32>
    %25 = arith.select %22, %24, %13 : vector<256x1xi1>, vector<256x1xi32>
    %c0_i32_15 = arith.constant 0 : i32
    %26 = vector.broadcast %c0_i32_15 : i32 to vector<256x1xi32>
    %27 = arith.cmpi ne, %25, %26 : vector<256x1xi32>
    %28 = arith.extui %27 : vector<256x1xi1> to vector<256x1xi32>
    %29 = arith.sitofp %28 : vector<256x1xi32> to vector<256x1xf32>
    %c15_i32 = arith.constant 15 : i32
    %30 = vector.broadcast %c15_i32 : i32 to vector<256x1xi32>
    %31 = arith.cmpi ne, %25, %30 : vector<256x1xi32>
    %32 = arith.extui %31 : vector<256x1xi1> to vector<256x1xi32>
    %33 = arith.sitofp %32 : vector<256x1xi32> to vector<256x1xf32>
    %cst = arith.constant 0.000000e+00 : f32
    %34 = vector.broadcast %cst : f32 to vector<288x384xf32>
    %c0_16 = arith.constant 0 : index
    %c0_17 = arith.constant 0 : index
    %35 = vector.load %arg7[%c0_16, %c0_17] : memref<288x384xf32, #tpu.memory_space<vmem>>, vector<288x384xf32>
    tpu.vector_store %arg7[%c0_16, %c0_17], %34 {strides = array<i32>} : memref<288x384xf32, #tpu.memory_space<vmem>>, vector<288x384xf32>,
    %c0_18 = arith.constant 0 : index
    %c0_19 = arith.constant 0 : index
    %c0_20 = arith.constant 0 : index
    %36 = vector.load %arg1[%c0_18, %c0_19, %c0_20] : memref<1x256x128xf32, #tpu.memory_space<vmem>>, vector<1x256x128xf32>
    %37 = vector.shape_cast %36 : vector<1x256x128xf32> to vector<256x128xf32>
    %cst_21 = arith.constant dense<0.000000e+00> : vector<256x128xf32>
    %38 = tpu.matmul %37, %0, %cst_21 {dimension_numbers = #tpu.dot_dimension_numbers<[1], [0], [0], [1], [0, 0, 1, 1], [], []>} : vector<256x128xf32>, vector<128x128xf32>, vector<256x128xf32> -> vector<256x128xf32>
    %39 = vector.broadcast %1 : vector<1x128xf32> to vector<256x128xf32>
    %40 = arith.addf %38, %39 : vector<256x128xf32>
    %41 = arith.negf %40 : vector<256x128xf32>
    %42 = math.exp %41 : vector<256x128xf32>
    %cst_22 = arith.constant 1.000000e+00 : f32
    %43 = vector.broadcast %cst_22 : f32 to vector<256x128xf32>
    %44 = arith.addf %43, %42 : vector<256x128xf32>
    %45 = arith.divf %43, %44 : vector<256x128xf32>
    %46 = arith.mulf %40, %45 : vector<256x128xf32>
    %c16 = arith.constant 16 : index
    %c128 = arith.constant 128 : index
    %47 = vector.load %arg7[%c16, %c128] : memref<288x384xf32, #tpu.memory_space<vmem>>, vector<256x128xf32>
    tpu.vector_store %arg7[%c16, %c128], %46 {strides = array<i32>} : memref<288x384xf32, #tpu.memory_space<vmem>>, vector<256x128xf32>,
    %c15 = arith.constant 15 : index
    %c128_23 = arith.constant 128 : index
    %48 = vector.load %arg7[%c15, %c128_23] : memref<288x384xf32, #tpu.memory_space<vmem>>, vector<256x128xf32>
    %49 = vector.broadcast %29 : vector<256x1xf32> to vector<256x128xf32>
    %50 = arith.mulf %48, %49 : vector<256x128xf32>
    %c17 = arith.constant 17 : index
    %c128_24 = arith.constant 128 : index
    %51 = vector.load %arg7[%c17, %c128_24] : memref<288x384xf32, #tpu.memory_space<vmem>>, vector<256x128xf32>
    %52 = vector.broadcast %33 : vector<256x1xf32> to vector<256x128xf32>
    %53 = arith.mulf %51, %52 : vector<256x128xf32>
    %c16_25 = arith.constant 16 : index
    %c0_26 = arith.constant 0 : index
    %54 = vector.load %arg7[%c16_25, %c0_26] : memref<288x384xf32, #tpu.memory_space<vmem>>, vector<256x128xf32>
    tpu.vector_store %arg7[%c16_25, %c0_26], %50 {strides = array<i32>} : memref<288x384xf32, #tpu.memory_space<vmem>>, vector<256x128xf32>,
    %c16_27 = arith.constant 16 : index
    %c256 = arith.constant 256 : index
    %55 = vector.load %arg7[%c16_27, %c256] : memref<288x384xf32, #tpu.memory_space<vmem>>, vector<256x128xf32>
    tpu.vector_store %arg7[%c16_27, %c256], %53 {strides = array<i32>} : memref<288x384xf32, #tpu.memory_space<vmem>>, vector<256x128xf32>,
    %c0_28 = arith.constant 0 : index
    %c0_29 = arith.constant 0 : index
    %56 = vector.load %arg7[%c0_28, %c0_29] : memref<288x384xf32, #tpu.memory_space<vmem>>, vector<256x384xf32>
    %cst_30 = arith.constant dense<0.000000e+00> : vector<256x128xf32>
    %57 = tpu.matmul %56, %4, %cst_30 {dimension_numbers = #tpu.dot_dimension_numbers<[1], [0], [0], [1], [0, 0, 1, 1], [], []>} : vector<256x384xf32>, vector<384x128xf32>, vector<256x128xf32> -> vector<256x128xf32>
    %c16_31 = arith.constant 16 : index
    %c0_32 = arith.constant 0 : index
    %58 = vector.load %arg7[%c16_31, %c0_32] : memref<288x384xf32, #tpu.memory_space<vmem>>, vector<256x384xf32>
    %cst_33 = arith.constant dense<0.000000e+00> : vector<256x128xf32>
    %59 = tpu.matmul %58, %6, %cst_33 {dimension_numbers = #tpu.dot_dimension_numbers<[1], [0], [0], [1], [0, 0, 1, 1], [], []>} : vector<256x384xf32>, vector<384x128xf32>, vector<256x128xf32> -> vector<256x128xf32>
    %60 = arith.addf %57, %59 : vector<256x128xf32>
    %c32 = arith.constant 32 : index
    %c0_34 = arith.constant 0 : index
    %61 = vector.load %arg7[%c32, %c0_34] : memref<288x384xf32, #tpu.memory_space<vmem>>, vector<256x384xf32>
    %cst_35 = arith.constant dense<0.000000e+00> : vector<256x128xf32>
    %62 = tpu.matmul %61, %8, %cst_35 {dimension_numbers = #tpu.dot_dimension_numbers<[1], [0], [0], [1], [0, 0, 1, 1], [], []>} : vector<256x384xf32>, vector<384x128xf32>, vector<256x128xf32> -> vector<256x128xf32>
    %63 = arith.addf %60, %62 : vector<256x128xf32>
    %64 = vector.broadcast %2 : vector<1x128xf32> to vector<256x128xf32>
    %65 = arith.addf %63, %64 : vector<256x128xf32>
    %66 = arith.negf %65 : vector<256x128xf32>
    %67 = math.exp %66 : vector<256x128xf32>
    %cst_36 = arith.constant 1.000000e+00 : f32
    %68 = vector.broadcast %cst_36 : f32 to vector<256x128xf32>
    %69 = arith.addf %68, %67 : vector<256x128xf32>
    %70 = arith.divf %68, %69 : vector<256x128xf32>
    %71 = arith.mulf %65, %70 : vector<256x128xf32>
    %cst_37 = arith.constant dense<0.000000e+00> : vector<256x128xf32>
    %72 = tpu.matmul %71, %0, %cst_37 {dimension_numbers = #tpu.dot_dimension_numbers<[1], [0], [0], [1], [0, 0, 1, 1], [], []>} : vector<256x128xf32>, vector<128x128xf32>, vector<256x128xf32> -> vector<256x128xf32>
    %73 = vector.broadcast %1 : vector<1x128xf32> to vector<256x128xf32>
    %74 = arith.addf %72, %73 : vector<256x128xf32>
    %75 = arith.negf %74 : vector<256x128xf32>
    %76 = math.exp %75 : vector<256x128xf32>
    %cst_38 = arith.constant 1.000000e+00 : f32
    %77 = vector.broadcast %cst_38 : f32 to vector<256x128xf32>
    %78 = arith.addf %77, %76 : vector<256x128xf32>
    %79 = arith.divf %77, %78 : vector<256x128xf32>
    %80 = arith.mulf %74, %79 : vector<256x128xf32>
    %c16_39 = arith.constant 16 : index
    %c128_40 = arith.constant 128 : index
    %81 = vector.load %arg7[%c16_39, %c128_40] : memref<288x384xf32, #tpu.memory_space<vmem>>, vector<256x128xf32>
    tpu.vector_store %arg7[%c16_39, %c128_40], %80 {strides = array<i32>} : memref<288x384xf32, #tpu.memory_space<vmem>>, vector<256x128xf32>,
    %c15_41 = arith.constant 15 : index
    %c128_42 = arith.constant 128 : index
    %82 = vector.load %arg7[%c15_41, %c128_42] : memref<288x384xf32, #tpu.memory_space<vmem>>, vector<256x128xf32>
    %83 = vector.broadcast %29 : vector<256x1xf32> to vector<256x128xf32>
    %84 = arith.mulf %82, %83 : vector<256x128xf32>
    %c17_43 = arith.constant 17 : index
    %c128_44 = arith.constant 128 : index
    %85 = vector.load %arg7[%c17_43, %c128_44] : memref<288x384xf32, #tpu.memory_space<vmem>>, vector<256x128xf32>
    %86 = vector.broadcast %33 : vector<256x1xf32> to vector<256x128xf32>
    %87 = arith.mulf %85, %86 : vector<256x128xf32>
    %c16_45 = arith.constant 16 : index
    %c0_46 = arith.constant 0 : index
    %88 = vector.load %arg7[%c16_45, %c0_46] : memref<288x384xf32, #tpu.memory_space<vmem>>, vector<256x128xf32>
    tpu.vector_store %arg7[%c16_45, %c0_46], %84 {strides = array<i32>} : memref<288x384xf32, #tpu.memory_space<vmem>>, vector<256x128xf32>,
    %c16_47 = arith.constant 16 : index
    %c256_48 = arith.constant 256 : index
    %89 = vector.load %arg7[%c16_47, %c256_48] : memref<288x384xf32, #tpu.memory_space<vmem>>, vector<256x128xf32>
    tpu.vector_store %arg7[%c16_47, %c256_48], %87 {strides = array<i32>} : memref<288x384xf32, #tpu.memory_space<vmem>>, vector<256x128xf32>,
    %c0_49 = arith.constant 0 : index
    %c0_50 = arith.constant 0 : index
    %90 = vector.load %arg7[%c0_49, %c0_50] : memref<288x384xf32, #tpu.memory_space<vmem>>, vector<256x384xf32>
    %cst_51 = arith.constant dense<0.000000e+00> : vector<256x128xf32>
    %91 = tpu.matmul %90, %4, %cst_51 {dimension_numbers = #tpu.dot_dimension_numbers<[1], [0], [0], [1], [0, 0, 1, 1], [], []>} : vector<256x384xf32>, vector<384x128xf32>, vector<256x128xf32> -> vector<256x128xf32>
    %c16_52 = arith.constant 16 : index
    %c0_53 = arith.constant 0 : index
    %92 = vector.load %arg7[%c16_52, %c0_53] : memref<288x384xf32, #tpu.memory_space<vmem>>, vector<256x384xf32>
    %cst_54 = arith.constant dense<0.000000e+00> : vector<256x128xf32>
    %93 = tpu.matmul %92, %6, %cst_54 {dimension_numbers = #tpu.dot_dimension_numbers<[1], [0], [0], [1], [0, 0, 1, 1], [], []>} : vector<256x384xf32>, vector<384x128xf32>, vector<256x128xf32> -> vector<256x128xf32>
    %94 = arith.addf %91, %93 : vector<256x128xf32>
    %c32_55 = arith.constant 32 : index
    %c0_56 = arith.constant 0 : index
    %95 = vector.load %arg7[%c32_55, %c0_56] : memref<288x384xf32, #tpu.memory_space<vmem>>, vector<256x384xf32>
    %cst_57 = arith.constant dense<0.000000e+00> : vector<256x128xf32>
    %96 = tpu.matmul %95, %8, %cst_57 {dimension_numbers = #tpu.dot_dimension_numbers<[1], [0], [0], [1], [0, 0, 1, 1], [], []>} : vector<256x384xf32>, vector<384x128xf32>, vector<256x128xf32> -> vector<256x128xf32>
    %97 = arith.addf %94, %96 : vector<256x128xf32>
    %98 = vector.broadcast %2 : vector<1x128xf32> to vector<256x128xf32>
    %99 = arith.addf %97, %98 : vector<256x128xf32>
    %100 = arith.negf %99 : vector<256x128xf32>
    %101 = math.exp %100 : vector<256x128xf32>
    %cst_58 = arith.constant 1.000000e+00 : f32
    %102 = vector.broadcast %cst_58 : f32 to vector<256x128xf32>
    %103 = arith.addf %102, %101 : vector<256x128xf32>
    %104 = arith.divf %102, %103 : vector<256x128xf32>
    %105 = arith.mulf %99, %104 : vector<256x128xf32>
    %c0_59 = arith.constant 0 : index
    %c0_60 = arith.constant 0 : index
    %c0_61 = arith.constant 0 : index
    %106 = vector.load %arg1[%c0_59, %c0_60, %c0_61] : memref<1x256x128xf32, #tpu.memory_space<vmem>>, vector<1x256x128xf32>
    %107 = vector.shape_cast %106 : vector<1x256x128xf32> to vector<256x128xf32>
    %108 = arith.addf %105, %107 : vector<256x128xf32>
    %c0_62 = arith.constant 0 : index
    %c0_63 = arith.constant 0 : index
    %c0_64 = arith.constant 0 : index
    %109 = vector.load %arg6[%c0_62, %c0_63, %c0_64] : memref<1x256x128xf32, #tpu.memory_space<vmem>>, vector<1x256x128xf32>
    %110 = vector.shape_cast %109 : vector<1x256x128xf32> to vector<256x128xf32>
    %111 = vector.shape_cast %108 : vector<256x128xf32> to vector<1x256x128xf32>
    tpu.vector_store %arg6[%c0_62, %c0_63, %c0_64], %111 {strides = array<i32>} : memref<1x256x128xf32, #tpu.memory_space<vmem>>, vector<1x256x128xf32>,
    return
  }
  func.func @transform_0(%arg0: i32) -> (i32, i32, i32) {
    %c0_i32 = arith.constant 0 : i32
    %c0_i32_0 = arith.constant 0 : i32
    %c0_i32_1 = arith.constant 0 : i32
    return %arg0, %c0_i32, %c0_i32_0 : i32, i32, i32
  }
  func.func @transform_1(%arg0: i32) -> (i32, i32) {
    %c0_i32 = arith.constant 0 : i32
    %c0_i32_0 = arith.constant 0 : i32
    %c0_i32_1 = arith.constant 0 : i32
    return %c0_i32, %c0_i32_0 : i32, i32
  }
  func.func @transform_2(%arg0: i32) -> (i32, i32) {
    %c0_i32 = arith.constant 0 : i32
    %c0_i32_0 = arith.constant 0 : i32
    %c0_i32_1 = arith.constant 0 : i32
    return %c0_i32, %c0_i32_0 : i32, i32
  }
  func.func @transform_3(%arg0: i32) -> (i32, i32, i32) {
    %c0_i32 = arith.constant 0 : i32
    %c0_i32_0 = arith.constant 0 : i32
    %c0_i32_1 = arith.constant 0 : i32
    %c0_i32_2 = arith.constant 0 : i32
    return %c0_i32, %c0_i32_0, %c0_i32_1 : i32, i32, i32
  }
  func.func @transform_4(%arg0: i32) -> (i32, i32) {
    %c0_i32 = arith.constant 0 : i32
    %c0_i32_0 = arith.constant 0 : i32
    %c0_i32_1 = arith.constant 0 : i32
    return %c0_i32, %c0_i32_0 : i32, i32
  }
  func.func @transform_5(%arg0: i32) -> (i32, i32, i32) {
    %c0_i32 = arith.constant 0 : i32
    %c0_i32_0 = arith.constant 0 : i32
    %c0_i32_1 = arith.constant 0 : i32
    return %arg0, %c0_i32, %c0_i32_0 : i32, i32, i32
  }
}

</mosaic_0001>

<llo_original>
// kernel: tpu_custom_call.1
$region0: #{tpu_custom_call.1}
  #allocation0 [shape = 'u32[]', space=smem, size = 0x4, offset = 0x4, fixed_abs, tag = 'smem constant byte address 0x4 - core index']
  #allocation1 [shape = 'u32[144,128]{1,0:T(1,128)}', space=vmem, size = 0x12000, scoped, tag = 'internal scratch']
  #allocation2 [shape = 'f32[288,384]{1,0:T(8,128)}', space=vmem, size = 0x6c000, scoped, tag = 'scratch operand']
  %s0 = inlined_call_operand.hbm [shape: f32[2,256,128], index: 0, kind: input, shape index: {}]
  %s1 = inlined_call_operand.hbm [shape: f32[128,128], index: 1, kind: input, shape index: {}]
  %s2 = inlined_call_operand.vmem [shape: f32[1,128], index: 2, kind: input, shape index: {}]
  %s3 = inlined_call_operand.hbm [shape: f32[3,384,128], index: 3, kind: input, shape index: {}]
  %s4 = inlined_call_operand.vmem [shape: f32[1,128], index: 4, kind: input, shape index: {}]
  %s5 = inlined_call_operand.hbm [shape: f32[2,256,128], index: 5, kind: output, shape index: {}]
  %s6 = sld [smem:[#allocation0]]
  $region65: #{tpu_custom_call.1} parent=0
    _
  %s8 = ssub.s32 1, %s6
  %s9 = scalar_select 0, %s8, %s6
  $region1: #{tpu_custom_call.1} parent=0
    #allocation3 [shape = 'u8[262144]{0}', space=vmem, size = 0x40000, scoped, tag = 'input window, operand 0']
    #allocation4 [shape = 's32[2]{0}', space=sflag, size = 0x8, scoped, tag = 'scoped memory for tpu_custom_call.1']
    #allocation5 [shape = 's32[2]{0}', space=sflag, size = 0x8, scoped, tag = 'scoped memory for tpu_custom_call.1']
    #allocation6 [shape = 'u8[65536]{0}', space=vmem, size = 0x10000, scoped, tag = 'input window, operand 1, single buffered']
    #allocation7 [shape = 's32[1]{0}', space=sflag, size = 0x4, scoped, tag = 'scoped memory for tpu_custom_call.1']
    #allocation8 [shape = 'u8[589824]{0}', space=vmem, size = 0x90000, scoped, tag = 'input window, operand 3, single buffered']
    #allocation9 [shape = 'u8[262144]{0}', space=vmem, size = 0x40000, scoped, tag = 'output window, operand 0']
    %10 = vsyncpa [#allocation4], 0
    %s11 = scalar_lea.sflag [#allocation4], 1
    %12 = vsyncpa %s11, 0
    %13 = vsyncpa [#allocation7], 0
    %14 = vsyncpa [#allocation5], 0
    %s15 = scalar_lea.sflag [#allocation5], 1
    %16 = vsyncpa %s15, 0
    loop: start=0, step=1, limit=4
    $region2: #{tpu_custom_call.1} parent=1 // loop_pre_header
      _
    $region3: #{tpu_custom_call.1} parent=1 // loop_header
      %s18 = sphi 0, %s22
      %p19 = scmp.ge.s32.totalorder %s18, 4
      %s28 = sphi 0, %s30
      %s31 = sphi 0, %s28
      %s32 = sphi 0, %s31
      %s48 = sphi 0, %s32
      %s52 = sphi 0, %s52
      %s54 = sphi 0, %s52
      %s55 = sphi 0, %s54
      %s69 = sphi 0, %s55
      %s73 = sphi 0, %s73
      %s75 = sphi 0, %s73
      %s76 = sphi 0, %s75
      %s90 = sphi 0, %s76
      %s94 = sphi 0, %s94
      %s96 = sphi 0, %s94
      %s97 = sphi 0, %s96
      %s111 = sphi 0, %s97
      %s115 = sphi 0, %s115
      %s117 = sphi 0, %s115
      %s118 = sphi 0, %s117
      %s132 = sphi 0, %s118
      %s138 = sphi 0, %s140
      %s141 = sphi 0, %s138
      %s142 = sphi 0, %s141
      %s158 = sphi 0, %s142
    $region4: #{tpu_custom_call.1} parent=1 // loop_header_branch
      %21 = sbr.rel (%p19) target = $region8
    $region5: #{tpu_custom_call.1} parent=1 // loop_body
      %s23 = ssub.s32 %s18, 1
      %s24 = ssub.s32 %s18, 2
      %s25 = sadd.s32 %s18, 1
      %s26 = ssub.s32 %s18, %s25
      %p27 = scmp.eq.s32.totalorder %s26, 0
      %s29 = sadd.s32 %s28, 1
      %s30 = scalar_select %p27, %s28, %s29
      %p33 = pneg %p27
      %p34 = scmp.eq.s32.totalorder %s18, 1
      %p35 = por %p33, %p34
      %p36 = scmp.ne.s32.totalorder %s28, %s31
      %p37 = scmp.eq.s32.totalorder %s18, 0
      %p38 = por %p36, %p37
      %p39 = scmp.ne.s32.totalorder %s28, %s31
      %p40 = scmp.eq.s32.totalorder %s23, 1
      %p41 = por %p39, %p40
      %p42 = scmp.ne.s32.totalorder %s31, %s32
      %p43 = scmp.eq.s32.totalorder %s23, 0
      %p44 = por %p42, %p43
      %p45 = scmp.ne.s32.totalorder %s31, %s32
      %p46 = scmp.eq.s32.totalorder %s24, 1
      %p47 = por %p45, %p46
      %p49 = scmp.ne.s32.totalorder %s32, %s48
      %p50 = scmp.eq.s32.totalorder %s24, 0
      %p51 = por %p49, %p50
      %s53 = sadd.s32 %s52, 1
      %p56 = scmp.eq.s32.totalorder %s18, 1
      %p57 = scmp.ne.s32.totalorder %s52, %s54
      %p58 = scmp.eq.s32.totalorder %s18, 0
      %p59 = por %p57, %p58
      %p60 = scmp.ne.s32.totalorder %s52, %s54
      %p61 = scmp.eq.s32.totalorder %s23, 1
      %p62 = por %p60, %p61
      %p63 = scmp.ne.s32.totalorder %s54, %s55
      %p64 = scmp.eq.s32.totalorder %s23, 0
      %p65 = por %p63, %p64
      %p66 = scmp.ne.s32.totalorder %s54, %s55
      %p67 = scmp.eq.s32.totalorder %s24, 1
      %p68 = por %p66, %p67
      %p70 = scmp.ne.s32.totalorder %s55, %s69
      %p71 = scmp.eq.s32.totalorder %s24, 0
      %p72 = por %p70, %p71
      %s74 = sadd.s32 %s73, 1
      %p77 = scmp.eq.s32.totalorder %s18, 1
      %p78 = scmp.ne.s32.totalorder %s73, %s75
      %p79 = scmp.eq.s32.totalorder %s18, 0
      %p80 = por %p78, %p79
      %p81 = scmp.ne.s32.totalorder %s73, %s75
      %p82 = scmp.eq.s32.totalorder %s23, 1
      %p83 = por %p81, %p82
      %p84 = scmp.ne.s32.totalorder %s75, %s76
      %p85 = scmp.eq.s32.totalorder %s23, 0
      %p86 = por %p84, %p85
      %p87 = scmp.ne.s32.totalorder %s75, %s76
      %p88 = scmp.eq.s32.totalorder %s24, 1
      %p89 = por %p87, %p88
      %p91 = scmp.ne.s32.totalorder %s76, %s90
      %p92 = scmp.eq.s32.totalorder %s24, 0
      %p93 = por %p91, %p92
      %s95 = sadd.s32 %s94, 1
      %p98 = scmp.eq.s32.totalorder %s18, 1
      %p99 = scmp.ne.s32.totalorder %s94, %s96
      %p100 = scmp.eq.s32.totalorder %s18, 0
      %p101 = por %p99, %p100
      %p102 = scmp.ne.s32.totalorder %s94, %s96
      %p103 = scmp.eq.s32.totalorder %s23, 1
      %p104 = por %p102, %p103
      %p105 = scmp.ne.s32.totalorder %s96, %s97
      %p106 = scmp.eq.s32.totalorder %s23, 0
      %p107 = por %p105, %p106
      %p108 = scmp.ne.s32.totalorder %s96, %s97
      %p109 = scmp.eq.s32.totalorder %s24, 1
      %p110 = por %p108, %p109
      %p112 = scmp.ne.s32.totalorder %s97, %s111
      %p113 = scmp.eq.s32.totalorder %s24, 0
      %p114 = por %p112, %p113
      %s116 = sadd.s32 %s115, 1
      %p119 = scmp.eq.s32.totalorder %s18, 1
      %p120 = scmp.ne.s32.totalorder %s115, %s117
      %p121 = scmp.eq.s32.totalorder %s18, 0
      %p122 = por %p120, %p121
      %p123 = scmp.ne.s32.totalorder %s115, %s117
      %p124 = scmp.eq.s32.totalorder %s23, 1
      %p125 = por %p123, %p124
      %p126 = scmp.ne.s32.totalorder %s117, %s118
      %p127 = scmp.eq.s32.totalorder %s23, 0
      %p128 = por %p126, %p127
      %p129 = scmp.ne.s32.totalorder %s117, %s118
      %p130 = scmp.eq.s32.totalorder %s24, 1
      %p131 = por %p129, %p130
      %p133 = scmp.ne.s32.totalorder %s118, %s132
      %p134 = scmp.eq.s32.totalorder %s24, 0
      %p135 = por %p133, %p134
      %s136 = ssub.s32 %s18, %s25
      %p137 = scmp.eq.s32.totalorder %s136, 0
      %s139 = sadd.s32 %s138, 1
      %s140 = scalar_select %p137, %s138, %s139
      %p143 = pneg %p137
      %p144 = scmp.eq.s32.totalorder %s18, 1
      %p145 = por %p143, %p144
      %p146 = scmp.ne.s32.totalorder %s138, %s141
      %p147 = scmp.eq.s32.totalorder %s18, 0
      %p148 = por %p146, %p147
      %p149 = scmp.ne.s32.totalorder %s138, %s141
      %p150 = scmp.eq.s32.totalorder %s23, 1
      %p151 = por %p149, %p150
      %p152 = scmp.ne.s32.totalorder %s141, %s142
      %p153 = scmp.eq.s32.totalorder %s23, 0
      %p154 = por %p152, %p153
      %p155 = scmp.ne.s32.totalorder %s141, %s142
      %p156 = scmp.eq.s32.totalorder %s24, 1
      %p157 = por %p155, %p156
      %p159 = scmp.ne.s32.totalorder %s142, %s158
      %p160 = scmp.eq.s32.totalorder %s24, 0
      %p161 = por %p159, %p160
      %p162 = scmp.le.s32.totalorder 1, %s18
      %p163 = scmp.lt.s32.totalorder %s18, 3
      %p164 = pnand %p162, %p163
      %p165 = pneg %p164
      // Predicated region
      $region9: #{tpu_custom_call.1} parent=5 // pred_check
        _
      $region10: #{tpu_custom_call.1} parent=5 // pred_check_branch
        %167 = sbr.rel (%p164) target = $region12
      $region11: #{tpu_custom_call.1} parent=5 // pred_region
        %s168 = ssub.s32 %s18, 1
        // Predicated region
        $region13: #{tpu_custom_call.1} parent=11 // pred_check
          %p169 = pneg %p65
        $region14: #{tpu_custom_call.1} parent=11 // pred_check_branch
          %171 = sbr.rel (%p169) target = $region16
        $region15: #{tpu_custom_call.1} parent=11 // pred_region
          %s173 = ssub.s32 2048, 2048
          %174 = vsyncadd [#allocation7], %s173
          %s175 = sshll.u32 [#allocation6], 4
          %s176 = int_to_ptr.vmem [resolvable:$true] %s175
          %181 = dma.hbm_to_vmem [thread:$0]  %s1, 2048, %s176, [#allocation7], 128, 128, 8
        $region16: #{tpu_custom_call.1} parent=11 // pred_fallthru
          _
        // Predicated region
        $region17: #{tpu_custom_call.1} parent=11 // pred_check
          %p182 = pneg %p86
        $region18: #{tpu_custom_call.1} parent=11 // pred_check_branch
          %184 = sbr.rel (%p182) target = $region20
        $region19: #{tpu_custom_call.1} parent=11 // pred_region
          _
        $region20: #{tpu_custom_call.1} parent=11 // pred_fallthru
          _
        // Predicated region
        $region21: #{tpu_custom_call.1} parent=11 // pred_check
          %p185 = pneg %p107
        $region22: #{tpu_custom_call.1} parent=11 // pred_check_branch
          %187 = sbr.rel (%p185) target = $region24
        $region23: #{tpu_custom_call.1} parent=11 // pred_region
          %s189 = ssub.s32 18432, 18432
          %190 = vsyncadd [#allocation7], %s189
          %s191 = sshll.u32 [#allocation8], 4
          %s192 = int_to_ptr.vmem [resolvable:$true] %s191
          %197 = dma.hbm_to_vmem [thread:$0]  %s3, 18432, %s192, [#allocation7], 128, 128, 8
        $region24: #{tpu_custom_call.1} parent=11 // pred_fallthru
          _
        // Predicated region
        $region25: #{tpu_custom_call.1} parent=11 // pred_check
          %p198 = pneg %p128
        $region26: #{tpu_custom_call.1} parent=11 // pred_check_branch
          %200 = sbr.rel (%p198) target = $region28
        $region27: #{tpu_custom_call.1} parent=11 // pred_region
          _
        $region28: #{tpu_custom_call.1} parent=11 // pred_fallthru
          _
      $region12: #{tpu_custom_call.1} parent=5 // pred_fallthru
        _
      %p201 = scmp.lt.s32.totalorder %s18, 2
      // Predicated region
      $region29: #{tpu_custom_call.1} parent=5 // pred_check
        %p202 = pneg %p201
      $region30: #{tpu_custom_call.1} parent=5 // pred_check_branch
        %204 = sbr.rel (%p202) target = $region32
      $region31: #{tpu_custom_call.1} parent=5 // pred_region
        // Predicated region
        $region33: #{tpu_custom_call.1} parent=31 // pred_check
          %p205 = pneg %p38
        $region34: #{tpu_custom_call.1} parent=31 // pred_check_branch
          %207 = sbr.rel (%p205) target = $region36
        $region35: #{tpu_custom_call.1} parent=31 // pred_region
          %s208 = sand.u32 %s28, 1
          %s209 = scalar_lea.sflag [#allocation4], %s208
          %s210 = sand.u32 %s28, 1
          %s211 = smul.addr %s210, 256
          %s212 = scalar_lea.vmem [#allocation3], %s211
          %s214 = ssub.s32 4096, 4096
          %215 = vsyncadd %s209, %s214
          %s216 = smul.addr %s18, 32
          %s217 = smul.addr %s216, 128
          %s218 = scalar_lea.hbm %s0, %s217
          %s219 = sshll.u32 %s212, 4
          %s220 = int_to_ptr.vmem [resolvable:$true] %s219
          %225 = dma.hbm_to_vmem [thread:$0]  %s218, 4096, %s220, %s209, 128, 128, 8
        $region36: #{tpu_custom_call.1} parent=31 // pred_fallthru
          _
      $region32: #{tpu_custom_call.1} parent=5 // pred_fallthru
        _
      %p226 = scmp.le.s32.totalorder 1, %s18
      %p227 = scmp.lt.s32.totalorder %s18, 3
      %p228 = pnand %p226, %p227
      %p229 = pneg %p228
      // Predicated region
      $region37: #{tpu_custom_call.1} parent=5 // pred_check
        _
      $region38: #{tpu_custom_call.1} parent=5 // pred_check_branch
        %231 = sbr.rel (%p228) target = $region40
      $region39: #{tpu_custom_call.1} parent=5 // pred_region
        %s232 = ssub.s32 %s18, 1
        %s233 = sand.u32 %s31, 1
        %s234 = scalar_lea.sflag [#allocation4], %s233
        %s235 = sand.u32 %s31, 1
        %s236 = smul.addr %s235, 256
        %s237 = scalar_lea.vmem [#allocation3], %s236
        // Predicated region
        $region41: #{tpu_custom_call.1} parent=39 // pred_check
          %p238 = pneg %p44
        $region42: #{tpu_custom_call.1} parent=39 // pred_check_branch
          %240 = sbr.rel (%p238) target = $region44
        $region43: #{tpu_custom_call.1} parent=39 // pred_region
          %241 = dma.done %s234, 4096
        $region44: #{tpu_custom_call.1} parent=39 // pred_fallthru
          _
        // Predicated region
        $region45: #{tpu_custom_call.1} parent=39 // pred_check
          %p242 = pneg %p65
        $region46: #{tpu_custom_call.1} parent=39 // pred_check_branch
          %244 = sbr.rel (%p242) target = $region48
        $region47: #{tpu_custom_call.1} parent=39 // pred_region
          %245 = dma.done [#allocation7], 2048
        $region48: #{tpu_custom_call.1} parent=39 // pred_fallthru
          _
        // Predicated region
        $region49: #{tpu_custom_call.1} parent=39 // pred_check
          %p246 = pneg %p107
        $region50: #{tpu_custom_call.1} parent=39 // pred_check_branch
          %248 = sbr.rel (%p246) target = $region52
        $region51: #{tpu_custom_call.1} parent=39 // pred_region
          %249 = dma.done [#allocation7], 18432
        $region52: #{tpu_custom_call.1} parent=39 // pred_fallthru
          _
        %s250 = sand.u32 %s31, 1
        %s251 = scalar_lea.sflag [#allocation4], %s250
        %s252 = sand.u32 %s31, 1
        %s253 = smul.addr %s252, 256
        %s254 = scalar_lea.vmem [#allocation3], %s253
        %p255 = pneg %p44
        %p256 = pneg %p41
        %p257 = pneg %p65
        %p258 = pneg %p62
        %p259 = pneg %p86
        %p260 = pneg %p83
        %p261 = pneg %p107
        %p262 = pneg %p104
        %p263 = pneg %p128
        %p264 = pneg %p125
        %p265 = pneg %p154
        %p266 = pneg %p151
        %s267 = sand.u32 %s141, 1
        %s268 = scalar_lea.sflag [#allocation5], %s267
        %s269 = sand.u32 %s141, 1
        %s270 = smul.addr %s269, 256
        %s271 = scalar_lea.vmem [#allocation9], %s270
        %v272 = vld [vmem:[#allocation6] sm:$0xff]
        %v273 = vld [vmem:[#allocation6 + $0x8] sm:$0xff]
        %v274 = vld [vmem:[#allocation6 + $0x10] sm:$0xff]
        %v275 = vld [vmem:[#allocation6 + $0x18] sm:$0xff]
        %v276 = vld [vmem:[#allocation6 + $0x20] sm:$0xff]
        %v277 = vld [vmem:[#allocation6 + $0x28] sm:$0xff]
        %v278 = vld [vmem:[#allocation6 + $0x30] sm:$0xff]
        %v279 = vld [vmem:[#allocation6 + $0x38] sm:$0xff]
        %v280 = vld [vmem:[#allocation6 + $0x40] sm:$0xff]
        %v281 = vld [vmem:[#allocation6 + $0x48] sm:$0xff]
        %v282 = vld [vmem:[#allocation6 + $0x50] sm:$0xff]
        %v283 = vld [vmem:[#allocation6 + $0x58] sm:$0xff]
        %v284 = vld [vmem:[#allocation6 + $0x60] sm:$0xff]
        %v285 = vld [vmem:[#allocation6 + $0x68] sm:$0xff]
        %v286 = vld [vmem:[#allocation6 + $0x70] sm:$0xff]
        %v287 = vld [vmem:[#allocation6 + $0x78] sm:$0xff]
        %v288 = vld [vmem:[%s2] sm:$0x1]
        %v289 = vld [vmem:[%s4] sm:$0x1]
        %v290 = vld [vmem:[#allocation8] sm:$0xff]
        %v291 = vld [vmem:[#allocation8 + $0x8] sm:$0xff]
        %v292 = vld [vmem:[#allocation8 + $0x10] sm:$0xff]
        %v293 = vld [vmem:[#allocation8 + $0x18] sm:$0xff]
        %v294 = vld [vmem:[#allocation8 + $0x20] sm:$0xff]
        %v295 = vld [vmem:[#allocation8 + $0x28] sm:$0xff]
        %v296 = vld [vmem:[#allocation8 + $0x30] sm:$0xff]
        %v297 = vld [vmem:[#allocation8 + $0x38] sm:$0xff]
        %v298 = vld [vmem:[#allocation8 + $0x40] sm:$0xff]
        %v299 = vld [vmem:[#allocation8 + $0x48] sm:$0xff]
        %v300 = vld [vmem:[#allocation8 + $0x50] sm:$0xff]
        %v301 = vld [vmem:[#allocation8 + $0x58] sm:$0xff]
        %v302 = vld [vmem:[#allocation8 + $0x60] sm:$0xff]
        %v303 = vld [vmem:[#allocation8 + $0x68] sm:$0xff]
        %v304 = vld [vmem:[#allocation8 + $0x70] sm:$0xff]
        %v305 = vld [vmem:[#allocation8 + $0x78] sm:$0xff]
        %v306 = vld [vmem:[#allocation8 + $0x80] sm:$0xff]
        %v307 = vld [vmem:[#allocation8 + $0x88] sm:$0xff]
        %v308 = vld [vmem:[#allocation8 + $0x90] sm:$0xff]
        %v309 = vld [vmem:[#allocation8 + $0x98] sm:$0xff]
        %v310 = vld [vmem:[#allocation8 + $0xa0] sm:$0xff]
        %v311 = vld [vmem:[#allocation8 + $0xa8] sm:$0xff]
        %v312 = vld [vmem:[#allocation8 + $0xb0] sm:$0xff]
        %v313 = vld [vmem:[#allocation8 + $0xb8] sm:$0xff]
        %v314 = vld [vmem:[#allocation8 + $0xc0] sm:$0xff]
        %v315 = vld [vmem:[#allocation8 + $0xc8] sm:$0xff]
        %v316 = vld [vmem:[#allocation8 + $0xd0] sm:$0xff]
        %v317 = vld [vmem:[#allocation8 + $0xd8] sm:$0xff]
        %v318 = vld [vmem:[#allocation8 + $0xe0] sm:$0xff]
        %v319 = vld [vmem:[#allocation8 + $0xe8] sm:$0xff]
        %v320 = vld [vmem:[#allocation8 + $0xf0] sm:$0xff]
        %v321 = vld [vmem:[#allocation8 + $0xf8] sm:$0xff]
        %v322 = vld [vmem:[#allocation8 + $0x100] sm:$0xff]
        %v323 = vld [vmem:[#allocation8 + $0x108] sm:$0xff]
        %v324 = vld [vmem:[#allocation8 + $0x110] sm:$0xff]
        %v325 = vld [vmem:[#allocation8 + $0x118] sm:$0xff]
        %v326 = vld [vmem:[#allocation8 + $0x120] sm:$0xff]
        %v327 = vld [vmem:[#allocation8 + $0x128] sm:$0xff]
        %v328 = vld [vmem:[#allocation8 + $0x130] sm:$0xff]
        %v329 = vld [vmem:[#allocation8 + $0x138] sm:$0xff]
        %v330 = vld [vmem:[#allocation8 + $0x140] sm:$0xff]
        %v331 = vld [vmem:[#allocation8 + $0x148] sm:$0xff]
        %v332 = vld [vmem:[#allocation8 + $0x150] sm:$0xff]
        %v333 = vld [vmem:[#allocation8 + $0x158] sm:$0xff]
        %v334 = vld [vmem:[#allocation8 + $0x160] sm:$0xff]
        %v335 = vld [vmem:[#allocation8 + $0x168] sm:$0xff]
        %v336 = vld [vmem:[#allocation8 + $0x170] sm:$0xff]
        %v337 = vld [vmem:[#allocation8 + $0x178] sm:$0xff]
        %s338 = scalar_lea.vmem [#allocation8], 384
        %v339 = vld [vmem:[%s338] sm:$0xff]
        %v340 = vld [vmem:[%s338 + $0x8] sm:$0xff]
        %v341 = vld [vmem:[%s338 + $0x10] sm:$0xff]
        %v342 = vld [vmem:[%s338 + $0x18] sm:$0xff]
        %v343 = vld [vmem:[%s338 + $0x20] sm:$0xff]
        %v344 = vld [vmem:[%s338 + $0x28] sm:$0xff]
        %v345 = vld [vmem:[%s338 + $0x30] sm:$0xff]
        %v346 = vld [vmem:[%s338 + $0x38] sm:$0xff]
        %v347 = vld [vmem:[%s338 + $0x40] sm:$0xff]
        %v348 = vld [vmem:[%s338 + $0x48] sm:$0xff]
        %v349 = vld [vmem:[%s338 + $0x50] sm:$0xff]
        %v350 = vld [vmem:[%s338 + $0x58] sm:$0xff]
        %v351 = vld [vmem:[%s338 + $0x60] sm:$0xff]
        %v352 = vld [vmem:[%s338 + $0x68] sm:$0xff]
        %v353 = vld [vmem:[%s338 + $0x70] sm:$0xff]
        %v354 = vld [vmem:[%s338 + $0x78] sm:$0xff]
        %v355 = vld [vmem:[%s338 + $0x80] sm:$0xff]
        %v356 = vld [vmem:[%s338 + $0x88] sm:$0xff]
        %v357 = vld [vmem:[%s338 + $0x90] sm:$0xff]
        %v358 = vld [vmem:[%s338 + $0x98] sm:$0xff]
        %v359 = vld [vmem:[%s338 + $0xa0] sm:$0xff]
        %v360 = vld [vmem:[%s338 + $0xa8] sm:$0xff]
        %v361 = vld [vmem:[%s338 + $0xb0] sm:$0xff]
        %v362 = vld [vmem:[%s338 + $0xb8] sm:$0xff]
        %v363 = vld [vmem:[%s338 + $0xc0] sm:$0xff]
        %v364 = vld [vmem:[%s338 + $0xc8] sm:$0xff]
        %v365 = vld [vmem:[%s338 + $0xd0] sm:$0xff]
        %v366 = vld [vmem:[%s338 + $0xd8] sm:$0xff]
        %v367 = vld [vmem:[%s338 + $0xe0] sm:$0xff]
        %v368 = vld [vmem:[%s338 + $0xe8] sm:$0xff]
        %v369 = vld [vmem:[%s338 + $0xf0] sm:$0xff]
        %v370 = vld [vmem:[%s338 + $0xf8] sm:$0xff]
        %v371 = vld [vmem:[%s338 + $0x100] sm:$0xff]
        %v372 = vld [vmem:[%s338 + $0x108] sm:$0xff]
        %v373 = vld [vmem:[%s338 + $0x110] sm:$0xff]
        %v374 = vld [vmem:[%s338 + $0x118] sm:$0xff]
        %v375 = vld [vmem:[%s338 + $0x120] sm:$0xff]
        %v376 = vld [vmem:[%s338 + $0x128] sm:$0xff]
        %v377 = vld [vmem:[%s338 + $0x130] sm:$0xff]
        %v378 = vld [vmem:[%s338 + $0x138] sm:$0xff]
        %v379 = vld [vmem:[%s338 + $0x140] sm:$0xff]
        %v380 = vld [vmem:[%s338 + $0x148] sm:$0xff]
        %v381 = vld [vmem:[%s338 + $0x150] sm:$0xff]
        %v382 = vld [vmem:[%s338 + $0x158] sm:$0xff]
        %v383 = vld [vmem:[%s338 + $0x160] sm:$0xff]
        %v384 = vld [vmem:[%s338 + $0x168] sm:$0xff]
        %v385 = vld [vmem:[%s338 + $0x170] sm:$0xff]
        %v386 = vld [vmem:[%s338 + $0x178] sm:$0xff]
        %s387 = scalar_lea.vmem [#allocation8], 768
        %v388 = vld [vmem:[%s387] sm:$0xff]
        %v389 = vld [vmem:[%s387 + $0x8] sm:$0xff]
        %v390 = vld [vmem:[%s387 + $0x10] sm:$0xff]
        %v391 = vld [vmem:[%s387 + $0x18] sm:$0xff]
        %v392 = vld [vmem:[%s387 + $0x20] sm:$0xff]
        %v393 = vld [vmem:[%s387 + $0x28] sm:$0xff]
        %v394 = vld [vmem:[%s387 + $0x30] sm:$0xff]
        %v395 = vld [vmem:[%s387 + $0x38] sm:$0xff]
        %v396 = vld [vmem:[%s387 + $0x40] sm:$0xff]
        %v397 = vld [vmem:[%s387 + $0x48] sm:$0xff]
        %v398 = vld [vmem:[%s387 + $0x50] sm:$0xff]
        %v399 = vld [vmem:[%s387 + $0x58] sm:$0xff]
        %v400 = vld [vmem:[%s387 + $0x60] sm:$0xff]
        %v401 = vld [vmem:[%s387 + $0x68] sm:$0xff]
        %v402 = vld [vmem:[%s387 + $0x70] sm:$0xff]
        %v403 = vld [vmem:[%s387 + $0x78] sm:$0xff]
        %v404 = vld [vmem:[%s387 + $0x80] sm:$0xff]
        %v405 = vld [vmem:[%s387 + $0x88] sm:$0xff]
        %v406 = vld [vmem:[%s387 + $0x90] sm:$0xff]
        %v407 = vld [vmem:[%s387 + $0x98] sm:$0xff]
        %v408 = vld [vmem:[%s387 + $0xa0] sm:$0xff]
        %v409 = vld [vmem:[%s387 + $0xa8] sm:$0xff]
        %v410 = vld [vmem:[%s387 + $0xb0] sm:$0xff]
        %v411 = vld [vmem:[%s387 + $0xb8] sm:$0xff]
        %v412 = vld [vmem:[%s387 + $0xc0] sm:$0xff]
        %v413 = vld [vmem:[%s387 + $0xc8] sm:$0xff]
        %v414 = vld [vmem:[%s387 + $0xd0] sm:$0xff]
        %v415 = vld [vmem:[%s387 + $0xd8] sm:$0xff]
        %v416 = vld [vmem:[%s387 + $0xe0] sm:$0xff]
        %v417 = vld [vmem:[%s387 + $0xe8] sm:$0xff]
        %v418 = vld [vmem:[%s387 + $0xf0] sm:$0xff]
        %v419 = vld [vmem:[%s387 + $0xf8] sm:$0xff]
        %v420 = vld [vmem:[%s387 + $0x100] sm:$0xff]
        %v421 = vld [vmem:[%s387 + $0x108] sm:$0xff]
        %v422 = vld [vmem:[%s387 + $0x110] sm:$0xff]
        %v423 = vld [vmem:[%s387 + $0x118] sm:$0xff]
        %v424 = vld [vmem:[%s387 + $0x120] sm:$0xff]
        %v425 = vld [vmem:[%s387 + $0x128] sm:$0xff]
        %v426 = vld [vmem:[%s387 + $0x130] sm:$0xff]
        %v427 = vld [vmem:[%s387 + $0x138] sm:$0xff]
        %v428 = vld [vmem:[%s387 + $0x140] sm:$0xff]
        %v429 = vld [vmem:[%s387 + $0x148] sm:$0xff]
        %v430 = vld [vmem:[%s387 + $0x150] sm:$0xff]
        %v431 = vld [vmem:[%s387 + $0x158] sm:$0xff]
        %v432 = vld [vmem:[%s387 + $0x160] sm:$0xff]
        %v433 = vld [vmem:[%s387 + $0x168] sm:$0xff]
        %v434 = vld [vmem:[%s387 + $0x170] sm:$0xff]
        %v435 = vld [vmem:[%s387 + $0x178] sm:$0xff]
        %v436 = vlaneseq
        %v437 = vshrl.u32 %v436, 7
        %v438 = vadd.s32 %v437, 8
        %v439 = vadd.s32 %v437, 16
        %v440 = vadd.s32 %v437, 24
        %v441 = vadd.s32 %v437, 32
        %v442 = vadd.s32 %v437, 40
        %v443 = vadd.s32 %v437, 48
        %v444 = vadd.s32 %v437, 56
        %v445 = vadd.s32 %v437, 64
        %v446 = vadd.s32 %v437, 72
        %v447 = vadd.s32 %v437, 80
        %v448 = vadd.s32 %v437, 88
        %v449 = vadd.s32 %v437, 96
        %v450 = vadd.s32 %v437, 104
        %v451 = vadd.s32 %v437, 112
        %v452 = vadd.s32 %v437, 120
        %v453 = vadd.s32 %v437, 128
        %v454 = vadd.s32 %v437, 136
        %v455 = vadd.s32 %v437, 144
        %v456 = vadd.s32 %v437, 152
        %v457 = vadd.s32 %v437, 160
        %v458 = vadd.s32 %v437, 168
        %v459 = vadd.s32 %v437, 176
        %v460 = vadd.s32 %v437, 184
        %v461 = vadd.s32 %v437, 192
        %v462 = vadd.s32 %v437, 200
        %v463 = vadd.s32 %v437, 208
        %v464 = vadd.s32 %v437, 216
        %v465 = vadd.s32 %v437, 224
        %v466 = vadd.s32 %v437, 232
        %v467 = vadd.s32 %v437, 240
        %v468 = vadd.s32 %v437, 248
        %vm469 = vcmp.lt.s32.totalorder %v437, 0
        %v470 = vsub.s32 0, %v437
        %v471 = vsel %vm469, %v470, %v437
        %v472 = vshrl.u32 %v471, 4
        %v473 = vand.u32 %v471, 15
        %v474 = vsub.s32 0, %v473
        %v475 = vsel %vm469, %v474, %v473
        %vm476 = vcmp.lt.s32.totalorder %v438, 0
        %v477 = vsub.s32 0, %v438
        %v478 = vsel %vm476, %v477, %v438
        %v479 = vshrl.u32 %v478, 4
        %v480 = vand.u32 %v478, 15
        %v481 = vsub.s32 0, %v480
        %v482 = vsel %vm476, %v481, %v480
        %vm483 = vcmp.lt.s32.totalorder %v439, 0
        %v484 = vsub.s32 0, %v439
        %v485 = vsel %vm483, %v484, %v439
        %v486 = vshrl.u32 %v485, 4
        %v487 = vand.u32 %v485, 15
        %v488 = vsub.s32 0, %v487
        %v489 = vsel %vm483, %v488, %v487
        %vm490 = vcmp.lt.s32.totalorder %v440, 0
        %v491 = vsub.s32 0, %v440
        %v492 = vsel %vm490, %v491, %v440
        %v493 = vshrl.u32 %v492, 4
        %v494 = vand.u32 %v492, 15
        %v495 = vsub.s32 0, %v494
        %v496 = vsel %vm490, %v495, %v494
        %vm497 = vcmp.lt.s32.totalorder %v441, 0
        %v498 = vsub.s32 0, %v441
        %v499 = vsel %vm497, %v498, %v441
        %v500 = vshrl.u32 %v499, 4
        %v501 = vand.u32 %v499, 15
        %v502 = vsub.s32 0, %v501
        %v503 = vsel %vm497, %v502, %v501
        %vm504 = vcmp.lt.s32.totalorder %v442, 0
        %v505 = vsub.s32 0, %v442
        %v506 = vsel %vm504, %v505, %v442
        %v507 = vshrl.u32 %v506, 4
        %v508 = vand.u32 %v506, 15
        %v509 = vsub.s32 0, %v508
        %v510 = vsel %vm504, %v509, %v508
        %vm511 = vcmp.lt.s32.totalorder %v443, 0
        %v512 = vsub.s32 0, %v443
        %v513 = vsel %vm511, %v512, %v443
        %v514 = vshrl.u32 %v513, 4
        %v515 = vand.u32 %v513, 15
        %v516 = vsub.s32 0, %v515
        %v517 = vsel %vm511, %v516, %v515
        %vm518 = vcmp.lt.s32.totalorder %v444, 0
        %v519 = vsub.s32 0, %v444
        %v520 = vsel %vm518, %v519, %v444
        %v521 = vshrl.u32 %v520, 4
        %v522 = vand.u32 %v520, 15
        %v523 = vsub.s32 0, %v522
        %v524 = vsel %vm518, %v523, %v522
        %vm525 = vcmp.lt.s32.totalorder %v445, 0
        %v526 = vsub.s32 0, %v445
        %v527 = vsel %vm525, %v526, %v445
        %v528 = vshrl.u32 %v527, 4
        %v529 = vand.u32 %v527, 15
        %v530 = vsub.s32 0, %v529
        %v531 = vsel %vm525, %v530, %v529
        %vm532 = vcmp.lt.s32.totalorder %v446, 0
        %v533 = vsub.s32 0, %v446
        %v534 = vsel %vm532, %v533, %v446
        %v535 = vshrl.u32 %v534, 4
        %v536 = vand.u32 %v534, 15
        %v537 = vsub.s32 0, %v536
        %v538 = vsel %vm532, %v537, %v536
        %vm539 = vcmp.lt.s32.totalorder %v447, 0
        %v540 = vsub.s32 0, %v447
        %v541 = vsel %vm539, %v540, %v447
        %v542 = vshrl.u32 %v541, 4
        %v543 = vand.u32 %v541, 15
        %v544 = vsub.s32 0, %v543
        %v545 = vsel %vm539, %v544, %v543
        %vm546 = vcmp.lt.s32.totalorder %v448, 0
        %v547 = vsub.s32 0, %v448
        %v548 = vsel %vm546, %v547, %v448
        %v549 = vshrl.u32 %v548, 4
        %v550 = vand.u32 %v548, 15
        %v551 = vsub.s32 0, %v550
        %v552 = vsel %vm546, %v551, %v550
        %vm553 = vcmp.lt.s32.totalorder %v449, 0
        %v554 = vsub.s32 0, %v449
        %v555 = vsel %vm553, %v554, %v449
        %v556 = vshrl.u32 %v555, 4
        %v557 = vand.u32 %v555, 15
        %v558 = vsub.s32 0, %v557
        %v559 = vsel %vm553, %v558, %v557
        %vm560 = vcmp.lt.s32.totalorder %v450, 0
        %v561 = vsub.s32 0, %v450
        %v562 = vsel %vm560, %v561, %v450
        %v563 = vshrl.u32 %v562, 4
        %v564 = vand.u32 %v562, 15
        %v565 = vsub.s32 0, %v564
        %v566 = vsel %vm560, %v565, %v564
        %vm567 = vcmp.lt.s32.totalorder %v451, 0
        %v568 = vsub.s32 0, %v451
        %v569 = vsel %vm567, %v568, %v451
        %v570 = vshrl.u32 %v569, 4
        %v571 = vand.u32 %v569, 15
        %v572 = vsub.s32 0, %v571
        %v573 = vsel %vm567, %v572, %v571
        %vm574 = vcmp.lt.s32.totalorder %v452, 0
        %v575 = vsub.s32 0, %v452
        %v576 = vsel %vm574, %v575, %v452
        %v577 = vshrl.u32 %v576, 4
        %v578 = vand.u32 %v576, 15
        %v579 = vsub.s32 0, %v578
        %v580 = vsel %vm574, %v579, %v578
        %vm581 = vcmp.lt.s32.totalorder %v453, 0
        %v582 = vsub.s32 0, %v453
        %v583 = vsel %vm581, %v582, %v453
        %v584 = vshrl.u32 %v583, 4
        %v585 = vand.u32 %v583, 15
        %v586 = vsub.s32 0, %v585
        %v587 = vsel %vm581, %v586, %v585
        %vm588 = vcmp.lt.s32.totalorder %v454, 0
        %v589 = vsub.s32 0, %v454
        %v590 = vsel %vm588, %v589, %v454
        %v591 = vshrl.u32 %v590, 4
        %v592 = vand.u32 %v590, 15
        %v593 = vsub.s32 0, %v592
        %v594 = vsel %vm588, %v593, %v592
        %vm595 = vcmp.lt.s32.totalorder %v455, 0
        %v596 = vsub.s32 0, %v455
        %v597 = vsel %vm595, %v596, %v455
        %v598 = vshrl.u32 %v597, 4
        %v599 = vand.u32 %v597, 15
        %v600 = vsub.s32 0, %v599
        %v601 = vsel %vm595, %v600, %v599
        %vm602 = vcmp.lt.s32.totalorder %v456, 0
        %v603 = vsub.s32 0, %v456
        %v604 = vsel %vm602, %v603, %v456
        %v605 = vshrl.u32 %v604, 4
        %v606 = vand.u32 %v604, 15
        %v607 = vsub.s32 0, %v606
        %v608 = vsel %vm602, %v607, %v606
        %vm609 = vcmp.lt.s32.totalorder %v457, 0
        %v610 = vsub.s32 0, %v457
        %v611 = vsel %vm609, %v610, %v457
        %v612 = vshrl.u32 %v611, 4
        %v613 = vand.u32 %v611, 15
        %v614 = vsub.s32 0, %v613
        %v615 = vsel %vm609, %v614, %v613
        %vm616 = vcmp.lt.s32.totalorder %v458, 0
        %v617 = vsub.s32 0, %v458
        %v618 = vsel %vm616, %v617, %v458
        %v619 = vshrl.u32 %v618, 4
        %v620 = vand.u32 %v618, 15
        %v621 = vsub.s32 0, %v620
        %v622 = vsel %vm616, %v621, %v620
        %vm623 = vcmp.lt.s32.totalorder %v459, 0
        %v624 = vsub.s32 0, %v459
        %v625 = vsel %vm623, %v624, %v459
        %v626 = vshrl.u32 %v625, 4
        %v627 = vand.u32 %v625, 15
        %v628 = vsub.s32 0, %v627
        %v629 = vsel %vm623, %v628, %v627
        %vm630 = vcmp.lt.s32.totalorder %v460, 0
        %v631 = vsub.s32 0, %v460
        %v632 = vsel %vm630, %v631, %v460
        %v633 = vshrl.u32 %v632, 4
        %v634 = vand.u32 %v632, 15
        %v635 = vsub.s32 0, %v634
        %v636 = vsel %vm630, %v635, %v634
        %vm637 = vcmp.lt.s32.totalorder %v461, 0
        %v638 = vsub.s32 0, %v461
        %v639 = vsel %vm637, %v638, %v461
        %v640 = vshrl.u32 %v639, 4
        %v641 = vand.u32 %v639, 15
        %v642 = vsub.s32 0, %v641
        %v643 = vsel %vm637, %v642, %v641
        %vm644 = vcmp.lt.s32.totalorder %v462, 0
        %v645 = vsub.s32 0, %v462
        %v646 = vsel %vm644, %v645, %v462
        %v647 = vshrl.u32 %v646, 4
        %v648 = vand.u32 %v646, 15
        %v649 = vsub.s32 0, %v648
        %v650 = vsel %vm644, %v649, %v648
        %vm651 = vcmp.lt.s32.totalorder %v463, 0
        %v652 = vsub.s32 0, %v463
        %v653 = vsel %vm651, %v652, %v463
        %v654 = vshrl.u32 %v653, 4
        %v655 = vand.u32 %v653, 15
        %v656 = vsub.s32 0, %v655
        %v657 = vsel %vm651, %v656, %v655
        %vm658 = vcmp.lt.s32.totalorder %v464, 0
        %v659 = vsub.s32 0, %v464
        %v660 = vsel %vm658, %v659, %v464
        %v661 = vshrl.u32 %v660, 4
        %v662 = vand.u32 %v660, 15
        %v663 = vsub.s32 0, %v662
        %v664 = vsel %vm658, %v663, %v662
        %vm665 = vcmp.lt.s32.totalorder %v465, 0
        %v666 = vsub.s32 0, %v465
        %v667 = vsel %vm665, %v666, %v465
        %v668 = vshrl.u32 %v667, 4
        %v669 = vand.u32 %v667, 15
        %v670 = vsub.s32 0, %v669
        %v671 = vsel %vm665, %v670, %v669
        %vm672 = vcmp.lt.s32.totalorder %v466, 0
        %v673 = vsub.s32 0, %v466
        %v674 = vsel %vm672, %v673, %v466
        %v675 = vshrl.u32 %v674, 4
        %v676 = vand.u32 %v674, 15
        %v677 = vsub.s32 0, %v676
        %v678 = vsel %vm672, %v677, %v676
        %vm679 = vcmp.lt.s32.totalorder %v467, 0
        %v680 = vsub.s32 0, %v467
        %v681 = vsel %vm679, %v680, %v467
        %v682 = vshrl.u32 %v681, 4
        %v683 = vand.u32 %v681, 15
        %v684 = vsub.s32 0, %v683
        %v685 = vsel %vm679, %v684, %v683
        %vm686 = vcmp.lt.s32.totalorder %v468, 0
        %v687 = vsub.s32 0, %v468
        %v688 = vsel %vm686, %v687, %v468
        %v689 = vshrl.u32 %v688, 4
        %v690 = vand.u32 %v688, 15
        %v691 = vsub.s32 0, %v690
        %v692 = vsel %vm686, %v691, %v690
        %vm693 = vcmp.ne.s32.totalorder %v475, 0
        %vm694 = vcmp.ne.s32.totalorder %v482, 0
        %vm695 = vcmp.ne.s32.totalorder %v489, 0
        %vm696 = vcmp.ne.s32.totalorder %v496, 0
        %vm697 = vcmp.ne.s32.totalorder %v503, 0
        %vm698 = vcmp.ne.s32.totalorder %v510, 0
        %vm699 = vcmp.ne.s32.totalorder %v517, 0
        %vm700 = vcmp.ne.s32.totalorder %v524, 0
        %vm701 = vcmp.ne.s32.totalorder %v531, 0
        %vm702 = vcmp.ne.s32.totalorder %v538, 0
        %vm703 = vcmp.ne.s32.totalorder %v545, 0
        %vm704 = vcmp.ne.s32.totalorder %v552, 0
        %vm705 = vcmp.ne.s32.totalorder %v559, 0
        %vm706 = vcmp.ne.s32.totalorder %v566, 0
        %vm707 = vcmp.ne.s32.totalorder %v573, 0
        %vm708 = vcmp.ne.s32.totalorder %v580, 0
        %vm709 = vcmp.ne.s32.totalorder %v587, 0
        %vm710 = vcmp.ne.s32.totalorder %v594, 0
        %vm711 = vcmp.ne.s32.totalorder %v601, 0
        %vm712 = vcmp.ne.s32.totalorder %v608, 0
        %vm713 = vcmp.ne.s32.totalorder %v615, 0
        %vm714 = vcmp.ne.s32.totalorder %v622, 0
        %vm715 = vcmp.ne.s32.totalorder %v629, 0
        %vm716 = vcmp.ne.s32.totalorder %v636, 0
        %vm717 = vcmp.ne.s32.totalorder %v643, 0
        %vm718 = vcmp.ne.s32.totalorder %v650, 0
        %vm719 = vcmp.ne.s32.totalorder %v657, 0
        %vm720 = vcmp.ne.s32.totalorder %v664, 0
        %vm721 = vcmp.ne.s32.totalorder %v671, 0
        %vm722 = vcmp.ne.s32.totalorder %v678, 0
        %vm723 = vcmp.ne.s32.totalorder %v685, 0
        %vm724 = vcmp.ne.s32.totalorder %v692, 0
        %vm725 = vcmp.lt.s32.totalorder %v475, 0
        %vm726 = vcmp.lt.s32.totalorder %v482, 0
        %vm727 = vcmp.lt.s32.totalorder %v489, 0
        %vm728 = vcmp.lt.s32.totalorder %v496, 0
        %vm729 = vcmp.lt.s32.totalorder %v503, 0
        %vm730 = vcmp.lt.s32.totalorder %v510, 0
        %vm731 = vcmp.lt.s32.totalorder %v517, 0
        %vm732 = vcmp.lt.s32.totalorder %v524, 0
        %vm733 = vcmp.lt.s32.totalorder %v531, 0
        %vm734 = vcmp.lt.s32.totalorder %v538, 0
        %vm735 = vcmp.lt.s32.totalorder %v545, 0
        %vm736 = vcmp.lt.s32.totalorder %v552, 0
        %vm737 = vcmp.lt.s32.totalorder %v559, 0
        %vm738 = vcmp.lt.s32.totalorder %v566, 0
        %vm739 = vcmp.lt.s32.totalorder %v573, 0
        %vm740 = vcmp.lt.s32.totalorder %v580, 0
        %vm741 = vcmp.lt.s32.totalorder %v587, 0
        %vm742 = vcmp.lt.s32.totalorder %v594, 0
        %vm743 = vcmp.lt.s32.totalorder %v601, 0
        %vm744 = vcmp.lt.s32.totalorder %v608, 0
        %vm745 = vcmp.lt.s32.totalorder %v615, 0
        %vm746 = vcmp.lt.s32.totalorder %v622, 0
        %vm747 = vcmp.lt.s32.totalorder %v629, 0
        %vm748 = vcmp.lt.s32.totalorder %v636, 0
        %vm749 = vcmp.lt.s32.totalorder %v643, 0
        %vm750 = vcmp.lt.s32.totalorder %v650, 0
        %vm751 = vcmp.lt.s32.totalorder %v657, 0
        %vm752 = vcmp.lt.s32.totalorder %v664, 0
        %vm753 = vcmp.lt.s32.totalorder %v671, 0
        %vm754 = vcmp.lt.s32.totalorder %v678, 0
        %vm755 = vcmp.lt.s32.totalorder %v685, 0
        %vm756 = vcmp.lt.s32.totalorder %v692, 0
        %vm757 = vmand %vm725, %vm693
        %vm758 = vmand %vm726, %vm694
        %vm759 = vmand %vm727, %vm695
        %vm760 = vmand %vm728, %vm696
        %vm761 = vmand %vm729, %vm697
        %vm762 = vmand %vm730, %vm698
        %vm763 = vmand %vm731, %vm699
        %vm764 = vmand %vm732, %vm700
        %vm765 = vmand %vm733, %vm701
        %vm766 = vmand %vm734, %vm702
        %vm767 = vmand %vm735, %vm703
        %vm768 = vmand %vm736, %vm704
        %vm769 = vmand %vm737, %vm705
        %vm770 = vmand %vm738, %vm706
        %vm771 = vmand %vm739, %vm707
        %vm772 = vmand %vm740, %vm708
        %vm773 = vmand %vm741, %vm709
        %vm774 = vmand %vm742, %vm710
        %vm775 = vmand %vm743, %vm711
        %vm776 = vmand %vm744, %vm712
        %vm777 = vmand %vm745, %vm713
        %vm778 = vmand %vm746, %vm714
        %vm779 = vmand %vm747, %vm715
        %vm780 = vmand %vm748, %vm716
        %vm781 = vmand %vm749, %vm717
        %vm782 = vmand %vm750, %vm718
        %vm783 = vmand %vm751, %vm719
        %vm784 = vmand %vm752, %vm720
        %vm785 = vmand %vm753, %vm721
        %vm786 = vmand %vm754, %vm722
        %vm787 = vmand %vm755, %vm723
        %vm788 = vmand %vm756, %vm724
        %v789 = vadd.s32 %v475, 16
        %v790 = vadd.s32 %v482, 16
        %v791 = vadd.s32 %v489, 16
        %v792 = vadd.s32 %v496, 16
        %v793 = vadd.s32 %v503, 16
        %v794 = vadd.s32 %v510, 16
        %v795 = vadd.s32 %v517, 16
        %v796 = vadd.s32 %v524, 16
        %v797 = vadd.s32 %v531, 16
        %v798 = vadd.s32 %v538, 16
        %v799 = vadd.s32 %v545, 16
        %v800 = vadd.s32 %v552, 16
        %v801 = vadd.s32 %v559, 16
        %v802 = vadd.s32 %v566, 16
        %v803 = vadd.s32 %v573, 16
        %v804 = vadd.s32 %v580, 16
        %v805 = vadd.s32 %v587, 16
        %v806 = vadd.s32 %v594, 16
        %v807 = vadd.s32 %v601, 16
        %v808 = vadd.s32 %v608, 16
        %v809 = vadd.s32 %v615, 16
        %v810 = vadd.s32 %v622, 16
        %v811 = vadd.s32 %v629, 16
        %v812 = vadd.s32 %v636, 16
        %v813 = vadd.s32 %v643, 16
        %v814 = vadd.s32 %v650, 16
        %v815 = vadd.s32 %v657, 16
        %v816 = vadd.s32 %v664, 16
        %v817 = vadd.s32 %v671, 16
        %v818 = vadd.s32 %v678, 16
        %v819 = vadd.s32 %v685, 16
        %v820 = vadd.s32 %v692, 16
        %v821 = vsel %vm757, %v789, %v475
        %v822 = vsel %vm758, %v790, %v482
        %v823 = vsel %vm759, %v791, %v489
        %v824 = vsel %vm760, %v792, %v496
        %v825 = vsel %vm761, %v793, %v503
        %v826 = vsel %vm762, %v794, %v510
        %v827 = vsel %vm763, %v795, %v517
        %v828 = vsel %vm764, %v796, %v524
        %v829 = vsel %vm765, %v797, %v531
        %v830 = vsel %vm766, %v798, %v538
        %v831 = vsel %vm767, %v799, %v545
        %v832 = vsel %vm768, %v800, %v552
        %v833 = vsel %vm769, %v801, %v559
        %v834 = vsel %vm770, %v802, %v566
        %v835 = vsel %vm771, %v803, %v573
        %v836 = vsel %vm772, %v804, %v580
        %v837 = vsel %vm773, %v805, %v587
        %v838 = vsel %vm774, %v806, %v594
        %v839 = vsel %vm775, %v807, %v601
        %v840 = vsel %vm776, %v808, %v608
        %v841 = vsel %vm777, %v809, %v615
        %v842 = vsel %vm778, %v810, %v622
        %v843 = vsel %vm779, %v811, %v629
        %v844 = vsel %vm780, %v812, %v636
        %v845 = vsel %vm781, %v813, %v643
        %v846 = vsel %vm782, %v814, %v650
        %v847 = vsel %vm783, %v815, %v657
        %v848 = vsel %vm784, %v816, %v664
        %v849 = vsel %vm785, %v817, %v671
        %v850 = vsel %vm786, %v818, %v678
        %v851 = vsel %vm787, %v819, %v685
        %v852 = vsel %vm788, %v820, %v692
        %vm853 = vcmp.ne.s32.totalorder %v821, 0
        %vm854 = vcmp.ne.s32.totalorder %v822, 0
        %vm855 = vcmp.ne.s32.totalorder %v823, 0
        %vm856 = vcmp.ne.s32.totalorder %v824, 0
        %vm857 = vcmp.ne.s32.totalorder %v825, 0
        %vm858 = vcmp.ne.s32.totalorder %v826, 0
        %vm859 = vcmp.ne.s32.totalorder %v827, 0
        %vm860 = vcmp.ne.s32.totalorder %v828, 0
        %vm861 = vcmp.ne.s32.totalorder %v829, 0
        %vm862 = vcmp.ne.s32.totalorder %v830, 0
        %vm863 = vcmp.ne.s32.totalorder %v831, 0
        %vm864 = vcmp.ne.s32.totalorder %v832, 0
        %vm865 = vcmp.ne.s32.totalorder %v833, 0
        %vm866 = vcmp.ne.s32.totalorder %v834, 0
        %vm867 = vcmp.ne.s32.totalorder %v835, 0
        %vm868 = vcmp.ne.s32.totalorder %v836, 0
        %vm869 = vcmp.ne.s32.totalorder %v837, 0
        %vm870 = vcmp.ne.s32.totalorder %v838, 0
        %vm871 = vcmp.ne.s32.totalorder %v839, 0
        %vm872 = vcmp.ne.s32.totalorder %v840, 0
        %vm873 = vcmp.ne.s32.totalorder %v841, 0
        %vm874 = vcmp.ne.s32.totalorder %v842, 0
        %vm875 = vcmp.ne.s32.totalorder %v843, 0
        %vm876 = vcmp.ne.s32.totalorder %v844, 0
        %vm877 = vcmp.ne.s32.totalorder %v845, 0
        %vm878 = vcmp.ne.s32.totalorder %v846, 0
        %vm879 = vcmp.ne.s32.totalorder %v847, 0
        %vm880 = vcmp.ne.s32.totalorder %v848, 0
        %vm881 = vcmp.ne.s32.totalorder %v849, 0
        %vm882 = vcmp.ne.s32.totalorder %v850, 0
        %vm883 = vcmp.ne.s32.totalorder %v851, 0
        %vm884 = vcmp.ne.s32.totalorder %v852, 0
        %v885 = vsel %vm853, 1, 0
        %v886 = vsel %vm854, 1, 0
        %v887 = vsel %vm855, 1, 0
        %v888 = vsel %vm856, 1, 0
        %v889 = vsel %vm857, 1, 0
        %v890 = vsel %vm858, 1, 0
        %v891 = vsel %vm859, 1, 0
        %v892 = vsel %vm860, 1, 0
        %v893 = vsel %vm861, 1, 0
        %v894 = vsel %vm862, 1, 0
        %v895 = vsel %vm863, 1, 0
        %v896 = vsel %vm864, 1, 0
        %v897 = vsel %vm865, 1, 0
        %v898 = vsel %vm866, 1, 0
        %v899 = vsel %vm867, 1, 0
        %v900 = vsel %vm868, 1, 0
        %v901 = vsel %vm869, 1, 0
        %v902 = vsel %vm870, 1, 0
        %v903 = vsel %vm871, 1, 0
        %v904 = vsel %vm872, 1, 0
        %v905 = vsel %vm873, 1, 0
        %v906 = vsel %vm874, 1, 0
        %v907 = vsel %vm875, 1, 0
        %v908 = vsel %vm876, 1, 0
        %v909 = vsel %vm877, 1, 0
        %v910 = vsel %vm878, 1, 0
        %v911 = vsel %vm879, 1, 0
        %v912 = vsel %vm880, 1, 0
        %v913 = vsel %vm881, 1, 0
        %v914 = vsel %vm882, 1, 0
        %v915 = vsel %vm883, 1, 0
        %v916 = vsel %vm884, 1, 0
        %v917 = vcvt.s32.f32 %v885
        %v918 = vcvt.s32.f32 %v886
        %v919 = vcvt.s32.f32 %v887
        %v920 = vcvt.s32.f32 %v888
        %v921 = vcvt.s32.f32 %v889
        %v922 = vcvt.s32.f32 %v890
        %v923 = vcvt.s32.f32 %v891
        %v924 = vcvt.s32.f32 %v892
        %v925 = vcvt.s32.f32 %v893
        %v926 = vcvt.s32.f32 %v894
        %v927 = vcvt.s32.f32 %v895
        %v928 = vcvt.s32.f32 %v896
        %v929 = vcvt.s32.f32 %v897
        %v930 = vcvt.s32.f32 %v898
        %v931 = vcvt.s32.f32 %v899
        %v932 = vcvt.s32.f32 %v900
        %v933 = vcvt.s32.f32 %v901
        %v934 = vcvt.s32.f32 %v902
        %v935 = vcvt.s32.f32 %v903
        %v936 = vcvt.s32.f32 %v904
        %v937 = vcvt.s32.f32 %v905
        %v938 = vcvt.s32.f32 %v906
        %v939 = vcvt.s32.f32 %v907
        %v940 = vcvt.s32.f32 %v908
        %v941 = vcvt.s32.f32 %v909
        %v942 = vcvt.s32.f32 %v910
        %v943 = vcvt.s32.f32 %v911
        %v944 = vcvt.s32.f32 %v912
        %v945 = vcvt.s32.f32 %v913
        %v946 = vcvt.s32.f32 %v914
        %v947 = vcvt.s32.f32 %v915
        %v948 = vcvt.s32.f32 %v916
        %vm949 = vcmp.ne.s32.totalorder %v821, 15
        %vm950 = vcmp.ne.s32.totalorder %v822, 15
        %vm951 = vcmp.ne.s32.totalorder %v823, 15
        %vm952 = vcmp.ne.s32.totalorder %v824, 15
        %vm953 = vcmp.ne.s32.totalorder %v825, 15
        %vm954 = vcmp.ne.s32.totalorder %v826, 15
        %vm955 = vcmp.ne.s32.totalorder %v827, 15
        %vm956 = vcmp.ne.s32.totalorder %v828, 15
        %vm957 = vcmp.ne.s32.totalorder %v829, 15
        %vm958 = vcmp.ne.s32.totalorder %v830, 15
        %vm959 = vcmp.ne.s32.totalorder %v831, 15
        %vm960 = vcmp.ne.s32.totalorder %v832, 15
        %vm961 = vcmp.ne.s32.totalorder %v833, 15
        %vm962 = vcmp.ne.s32.totalorder %v834, 15
        %vm963 = vcmp.ne.s32.totalorder %v835, 15
        %vm964 = vcmp.ne.s32.totalorder %v836, 15
        %vm965 = vcmp.ne.s32.totalorder %v837, 15
        %vm966 = vcmp.ne.s32.totalorder %v838, 15
        %vm967 = vcmp.ne.s32.totalorder %v839, 15
        %vm968 = vcmp.ne.s32.totalorder %v840, 15
        %vm969 = vcmp.ne.s32.totalorder %v841, 15
        %vm970 = vcmp.ne.s32.totalorder %v842, 15
        %vm971 = vcmp.ne.s32.totalorder %v843, 15
        %vm972 = vcmp.ne.s32.totalorder %v844, 15
        %vm973 = vcmp.ne.s32.totalorder %v845, 15
        %vm974 = vcmp.ne.s32.totalorder %v846, 15
        %vm975 = vcmp.ne.s32.totalorder %v847, 15
        %vm976 = vcmp.ne.s32.totalorder %v848, 15
        %vm977 = vcmp.ne.s32.totalorder %v849, 15
        %vm978 = vcmp.ne.s32.totalorder %v850, 15
        %vm979 = vcmp.ne.s32.totalorder %v851, 15
        %vm980 = vcmp.ne.s32.totalorder %v852, 15
        %v981 = vsel %vm949, 1, 0
        %v982 = vsel %vm950, 1, 0
        %v983 = vsel %vm951, 1, 0
        %v984 = vsel %vm952, 1, 0
        %v985 = vsel %vm953, 1, 0
        %v986 = vsel %vm954, 1, 0
        %v987 = vsel %vm955, 1, 0
        %v988 = vsel %vm956, 1, 0
        %v989 = vsel %vm957, 1, 0
        %v990 = vsel %vm958, 1, 0
        %v991 = vsel %vm959, 1, 0
        %v992 = vsel %vm960, 1, 0
        %v993 = vsel %vm961, 1, 0
        %v994 = vsel %vm962, 1, 0
        %v995 = vsel %vm963, 1, 0
        %v996 = vsel %vm964, 1, 0
        %v997 = vsel %vm965, 1, 0
        %v998 = vsel %vm966, 1, 0
        %v999 = vsel %vm967, 1, 0
        %v1000 = vsel %vm968, 1, 0
        %v1001 = vsel %vm969, 1, 0
        %v1002 = vsel %vm970, 1, 0
        %v1003 = vsel %vm971, 1, 0
        %v1004 = vsel %vm972, 1, 0
        %v1005 = vsel %vm973, 1, 0
        %v1006 = vsel %vm974, 1, 0
        %v1007 = vsel %vm975, 1, 0
        %v1008 = vsel %vm976, 1, 0
        %v1009 = vsel %vm977, 1, 0
        %v1010 = vsel %vm978, 1, 0
        %v1011 = vsel %vm979, 1, 0
        %v1012 = vsel %vm980, 1, 0
        %v1013 = vcvt.s32.f32 %v981
        %v1014 = vcvt.s32.f32 %v982
        %v1015 = vcvt.s32.f32 %v983
        %v1016 = vcvt.s32.f32 %v984
        %v1017 = vcvt.s32.f32 %v985
        %v1018 = vcvt.s32.f32 %v986
        %v1019 = vcvt.s32.f32 %v987
        %v1020 = vcvt.s32.f32 %v988
        %v1021 = vcvt.s32.f32 %v989
        %v1022 = vcvt.s32.f32 %v990
        %v1023 = vcvt.s32.f32 %v991
        %v1024 = vcvt.s32.f32 %v992
        %v1025 = vcvt.s32.f32 %v993
        %v1026 = vcvt.s32.f32 %v994
        %v1027 = vcvt.s32.f32 %v995
        %v1028 = vcvt.s32.f32 %v996
        %v1029 = vcvt.s32.f32 %v997
        %v1030 = vcvt.s32.f32 %v998
        %v1031 = vcvt.s32.f32 %v999
        %v1032 = vcvt.s32.f32 %v1000
        %v1033 = vcvt.s32.f32 %v1001
        %v1034 = vcvt.s32.f32 %v1002
        %v1035 = vcvt.s32.f32 %v1003
        %v1036 = vcvt.s32.f32 %v1004
        %v1037 = vcvt.s32.f32 %v1005
        %v1038 = vcvt.s32.f32 %v1006
        %v1039 = vcvt.s32.f32 %v1007
        %v1040 = vcvt.s32.f32 %v1008
        %v1041 = vcvt.s32.f32 %v1009
        %v1042 = vcvt.s32.f32 %v1010
        %v1043 = vcvt.s32.f32 %v1011
        %v1044 = vcvt.s32.f32 %v1012
        %1045 = vst [vmem:[#allocation2] sm:$0xff] 0.0
        %1046 = vst [vmem:[#allocation2 + $0x8] sm:$0xff] 0.0
        %1047 = vst [vmem:[#allocation2 + $0x10] sm:$0xff] 0.0
        %1048 = vst [vmem:[#allocation2 + $0x18] sm:$0xff] 0.0
        %1049 = vst [vmem:[#allocation2 + $0x20] sm:$0xff] 0.0
        %1050 = vst [vmem:[#allocation2 + $0x28] sm:$0xff] 0.0
        %1051 = vst [vmem:[#allocation2 + $0x30] sm:$0xff] 0.0
        %1052 = vst [vmem:[#allocation2 + $0x38] sm:$0xff] 0.0
        %1053 = vst [vmem:[#allocation2 + $0x40] sm:$0xff] 0.0
        %1054 = vst [vmem:[#allocation2 + $0x48] sm:$0xff] 0.0
        %1055 = vst [vmem:[#allocation2 + $0x50] sm:$0xff] 0.0
        %1056 = vst [vmem:[#allocation2 + $0x58] sm:$0xff] 0.0
        %1057 = vst [vmem:[#allocation2 + $0x60] sm:$0xff] 0.0
        %1058 = vst [vmem:[#allocation2 + $0x68] sm:$0xff] 0.0
        %1059 = vst [vmem:[#allocation2 + $0x70] sm:$0xff] 0.0
        %1060 = vst [vmem:[#allocation2 + $0x78] sm:$0xff] 0.0
        %1061 = vst [vmem:[#allocation2 + $0x80] sm:$0xff] 0.0
        %1062 = vst [vmem:[#allocation2 + $0x88] sm:$0xff] 0.0
        %1063 = vst [vmem:[#allocation2 + $0x90] sm:$0xff] 0.0
        %1064 = vst [vmem:[#allocation2 + $0x98] sm:$0xff] 0.0
        %1065 = vst [vmem:[#allocation2 + $0xa0] sm:$0xff] 0.0
        %1066 = vst [vmem:[#allocation2 + $0xa8] sm:$0xff] 0.0
        %1067 = vst [vmem:[#allocation2 + $0xb0] sm:$0xff] 0.0
        %1068 = vst [vmem:[#allocation2 + $0xb8] sm:$0xff] 0.0
        %1069 = vst [vmem:[#allocation2 + $0xc0] sm:$0xff] 0.0
        %1070 = vst [vmem:[#allocation2 + $0xc8] sm:$0xff] 0.0
        %1071 = vst [vmem:[#allocation2 + $0xd0] sm:$0xff] 0.0
        %1072 = vst [vmem:[#allocation2 + $0xd8] sm:$0xff] 0.0
        %1073 = vst [vmem:[#allocation2 + $0xe0] sm:$0xff] 0.0
        %1074 = vst [vmem:[#allocation2 + $0xe8] sm:$0xff] 0.0
        %1075 = vst [vmem:[#allocation2 + $0xf0] sm:$0xff] 0.0
        %1076 = vst [vmem:[#allocation2 + $0xf8] sm:$0xff] 0.0
        %1077 = vst [vmem:[#allocation2 + $0x100] sm:$0xff] 0.0
        %1078 = vst [vmem:[#allocation2 + $0x108] sm:$0xff] 0.0
        %1079 = vst [vmem:[#allocation2 + $0x110] sm:$0xff] 0.0
        %1080 = vst [vmem:[#allocation2 + $0x118] sm:$0xff] 0.0
        %1081 = vst [vmem:[#allocation2 + $0x120] sm:$0xff] 0.0
        %1082 = vst [vmem:[#allocation2 + $0x128] sm:$0xff] 0.0
        %1083 = vst [vmem:[#allocation2 + $0x130] sm:$0xff] 0.0
        %1084 = vst [vmem:[#allocation2 + $0x138] sm:$0xff] 0.0
        %1085 = vst [vmem:[#allocation2 + $0x140] sm:$0xff] 0.0
        %1086 = vst [vmem:[#allocation2 + $0x148] sm:$0xff] 0.0
        %1087 = vst [vmem:[#allocation2 + $0x150] sm:$0xff] 0.0
        %1088 = vst [vmem:[#allocation2 + $0x158] sm:$0xff] 0.0
        %1089 = vst [vmem:[#allocation2 + $0x160] sm:$0xff] 0.0
        %1090 = vst [vmem:[#allocation2 + $0x168] sm:$0xff] 0.0
        %1091 = vst [vmem:[#allocation2 + $0x170] sm:$0xff] 0.0
        %1092 = vst [vmem:[#allocation2 + $0x178] sm:$0xff] 0.0
        %1093 = vst [vmem:[#allocation2 + $0x180] sm:$0xff] 0.0
        %1094 = vst [vmem:[#allocation2 + $0x188] sm:$0xff] 0.0
        %1095 = vst [vmem:[#allocation2 + $0x190] sm:$0xff] 0.0
        %1096 = vst [vmem:[#allocation2 + $0x198] sm:$0xff] 0.0
        %1097 = vst [vmem:[#allocation2 + $0x1a0] sm:$0xff] 0.0
        %1098 = vst [vmem:[#allocation2 + $0x1a8] sm:$0xff] 0.0
        %1099 = vst [vmem:[#allocation2 + $0x1b0] sm:$0xff] 0.0
        %1100 = vst [vmem:[#allocation2 + $0x1b8] sm:$0xff] 0.0
        %1101 = vst [vmem:[#allocation2 + $0x1c0] sm:$0xff] 0.0
        %1102 = vst [vmem:[#allocation2 + $0x1c8] sm:$0xff] 0.0
        %1103 = vst [vmem:[#allocation2 + $0x1d0] sm:$0xff] 0.0
        %1104 = vst [vmem:[#allocation2 + $0x1d8] sm:$0xff] 0.0
        %1105 = vst [vmem:[#allocation2 + $0x1e0] sm:$0xff] 0.0
        %1106 = vst [vmem:[#allocation2 + $0x1e8] sm:$0xff] 0.0
        %1107 = vst [vmem:[#allocation2 + $0x1f0] sm:$0xff] 0.0
        %1108 = vst [vmem:[#allocation2 + $0x1f8] sm:$0xff] 0.0
        %1109 = vst [vmem:[#allocation2 + $0x200] sm:$0xff] 0.0
        %1110 = vst [vmem:[#allocation2 + $0x208] sm:$0xff] 0.0
        %1111 = vst [vmem:[#allocation2 + $0x210] sm:$0xff] 0.0
        %1112 = vst [vmem:[#allocation2 + $0x218] sm:$0xff] 0.0
        %1113 = vst [vmem:[#allocation2 + $0x220] sm:$0xff] 0.0
        %1114 = vst [vmem:[#allocation2 + $0x228] sm:$0xff] 0.0
        %1115 = vst [vmem:[#allocation2 + $0x230] sm:$0xff] 0.0
        %1116 = vst [vmem:[#allocation2 + $0x238] sm:$0xff] 0.0
        %1117 = vst [vmem:[#allocation2 + $0x240] sm:$0xff] 0.0
        %1118 = vst [vmem:[#allocation2 + $0x248] sm:$0xff] 0.0
        %1119 = vst [vmem:[#allocation2 + $0x250] sm:$0xff] 0.0
        %1120 = vst [vmem:[#allocation2 + $0x258] sm:$0xff] 0.0
        %1121 = vst [vmem:[#allocation2 + $0x260] sm:$0xff] 0.0
        %1122 = vst [vmem:[#allocation2 + $0x268] sm:$0xff] 0.0
        %1123 = vst [vmem:[#allocation2 + $0x270] sm:$0xff] 0.0
        %1124 = vst [vmem:[#allocation2 + $0x278] sm:$0xff] 0.0
        %1125 = vst [vmem:[#allocation2 + $0x280] sm:$0xff] 0.0
        %1126 = vst [vmem:[#allocation2 + $0x288] sm:$0xff] 0.0
        %1127 = vst [vmem:[#allocation2 + $0x290] sm:$0xff] 0.0
        %1128 = vst [vmem:[#allocation2 + $0x298] sm:$0xff] 0.0
        %1129 = vst [vmem:[#allocation2 + $0x2a0] sm:$0xff] 0.0
        %1130 = vst [vmem:[#allocation2 + $0x2a8] sm:$0xff] 0.0
        %1131 = vst [vmem:[#allocation2 + $0x2b0] sm:$0xff] 0.0
        %1132 = vst [vmem:[#allocation2 + $0x2b8] sm:$0xff] 0.0
        %1133 = vst [vmem:[#allocation2 + $0x2c0] sm:$0xff] 0.0
        %1134 = vst [vmem:[#allocation2 + $0x2c8] sm:$0xff] 0.0
        %1135 = vst [vmem:[#allocation2 + $0x2d0] sm:$0xff] 0.0
        %1136 = vst [vmem:[#allocation2 + $0x2d8] sm:$0xff] 0.0
        %1137 = vst [vmem:[#allocation2 + $0x2e0] sm:$0xff] 0.0
        %1138 = vst [vmem:[#allocation2 + $0x2e8] sm:$0xff] 0.0
        %1139 = vst [vmem:[#allocation2 + $0x2f0] sm:$0xff] 0.0
        %1140 = vst [vmem:[#allocation2 + $0x2f8] sm:$0xff] 0.0
        %1141 = vst [vmem:[#allocation2 + $0x300] sm:$0xff] 0.0
        %1142 = vst [vmem:[#allocation2 + $0x308] sm:$0xff] 0.0
        %1143 = vst [vmem:[#allocation2 + $0x310] sm:$0xff] 0.0
        %1144 = vst [vmem:[#allocation2 + $0x318] sm:$0xff] 0.0
        %1145 = vst [vmem:[#allocation2 + $0x320] sm:$0xff] 0.0
        %1146 = vst [vmem:[#allocation2 + $0x328] sm:$0xff] 0.0
        %1147 = vst [vmem:[#allocation2 + $0x330] sm:$0xff] 0.0
        %1148 = vst [vmem:[#allocation2 + $0x338] sm:$0xff] 0.0
        %1149 = vst [vmem:[#allocation2 + $0x340] sm:$0xff] 0.0
        %1150 = vst [vmem:[#allocation2 + $0x348] sm:$0xff] 0.0
        %1151 = vst [vmem:[#allocation2 + $0x350] sm:$0xff] 0.0
        %1152 = vst [vmem:[#allocation2 + $0x358] sm:$0xff] 0.0
        %v1153 = vld [vmem:[%s237] sm:$0xff]
        %v1154 = vld [vmem:[%s237 + $0x8] sm:$0xff]
        %v1155 = vld [vmem:[%s237 + $0x10] sm:$0xff]
        %v1156 = vld [vmem:[%s237 + $0x18] sm:$0xff]
        %v1157 = vld [vmem:[%s237 + $0x20] sm:$0xff]
        %v1158 = vld [vmem:[%s237 + $0x28] sm:$0xff]
        %v1159 = vld [vmem:[%s237 + $0x30] sm:$0xff]
        %v1160 = vld [vmem:[%s237 + $0x38] sm:$0xff]
        %v1161 = vld [vmem:[%s237 + $0x40] sm:$0xff]
        %v1162 = vld [vmem:[%s237 + $0x48] sm:$0xff]
        %v1163 = vld [vmem:[%s237 + $0x50] sm:$0xff]
        %v1164 = vld [vmem:[%s237 + $0x58] sm:$0xff]
        %v1165 = vld [vmem:[%s237 + $0x60] sm:$0xff]
        %v1166 = vld [vmem:[%s237 + $0x68] sm:$0xff]
        %v1167 = vld [vmem:[%s237 + $0x70] sm:$0xff]
        %v1168 = vld [vmem:[%s237 + $0x78] sm:$0xff]
        %v1169 = vld [vmem:[%s237 + $0x80] sm:$0xff]
        %v1170 = vld [vmem:[%s237 + $0x88] sm:$0xff]
        %v1171 = vld [vmem:[%s237 + $0x90] sm:$0xff]
        %v1172 = vld [vmem:[%s237 + $0x98] sm:$0xff]
        %v1173 = vld [vmem:[%s237 + $0xa0] sm:$0xff]
        %v1174 = vld [vmem:[%s237 + $0xa8] sm:$0xff]
        %v1175 = vld [vmem:[%s237 + $0xb0] sm:$0xff]
        %v1176 = vld [vmem:[%s237 + $0xb8] sm:$0xff]
        %v1177 = vld [vmem:[%s237 + $0xc0] sm:$0xff]
        %v1178 = vld [vmem:[%s237 + $0xc8] sm:$0xff]
        %v1179 = vld [vmem:[%s237 + $0xd0] sm:$0xff]
        %v1180 = vld [vmem:[%s237 + $0xd8] sm:$0xff]
        %v1181 = vld [vmem:[%s237 + $0xe0] sm:$0xff]
        %v1182 = vld [vmem:[%s237 + $0xe8] sm:$0xff]
        %v1183 = vld [vmem:[%s237 + $0xf0] sm:$0xff]
        %v1184 = vld [vmem:[%s237 + $0xf8] sm:$0xff]
        %v1186 = vlaneseq
        %v1187 = vshrl.u32 %v1186, 7
        %v1188 = vsub.s32 0, %v1187
        %v1189 = vrot.slane %v288, %v1188
        %1191 = vmatprep.subr.mxu0 0.0
        %1192 = vmatpush1.msra.mxu0 %v272
        %1193 = vmatprep.subr.mxu0 0.0
        %1194 = vmatpush1.msra.mxu0 %v273
        %1195 = vmatprep.subr.mxu0 0.0
        %1196 = vmatpush1.msra.mxu0 %v274
        %1197 = vmatprep.subr.mxu0 0.0
        %1198 = vmatpush1.msra.mxu0 %v275
        %1199 = vmatprep.subr.mxu0 0.0
        %1200 = vmatpush1.msra.mxu0 %v276
        %1201 = vmatprep.subr.mxu0 0.0
        %1202 = vmatpush1.msra.mxu0 %v277
        %1203 = vmatprep.subr.mxu0 0.0
        %1204 = vmatpush1.msra.mxu0 %v278
        %1205 = vmatprep.subr.mxu0 0.0
        %1206 = vmatpush1.msra.mxu0 %v279
        %1207 = vmatprep.subr.mxu0 0.0
        %1208 = vmatpush1.msra.mxu0 %v280
        %1209 = vmatprep.subr.mxu0 0.0
        %1210 = vmatpush1.msra.mxu0 %v281
        %1211 = vmatprep.subr.mxu0 0.0
        %1212 = vmatpush1.msra.mxu0 %v282
        %1213 = vmatprep.subr.mxu0 0.0
        %1214 = vmatpush1.msra.mxu0 %v283
        %1215 = vmatprep.subr.mxu0 0.0
        %1216 = vmatpush1.msra.mxu0 %v284
        %1217 = vmatprep.subr.mxu0 0.0
        %1218 = vmatpush1.msra.mxu0 %v285
        %1219 = vmatprep.subr.mxu0 0.0
        %1220 = vmatpush1.msra.mxu0 %v286
        %1221 = vmatprep.subr.mxu0 0.0
        %1222 = vmatpush1.msra.mxu0 %v287
        %1223 = vmatprep.subr.mxu0 0.0
        %1224 = vmatpush1.msra.mxu0 0.0
        %1225 = vmatprep.subr.mxu0 0.0
        %1226 = vmatpush1.msra.mxu0 0.0
        %1227 = vmatprep.subr.mxu0 0.0
        %1228 = vmatpush1.msra.mxu0 0.0
        %1229 = vmatprep.subr.mxu0 0.0
        %1230 = vmatpush1.msra.mxu0 0.0
        %1231 = vmatprep.subr.mxu0 0.0
        %1232 = vmatpush1.msra.mxu0 0.0
        %1233 = vmatprep.subr.mxu0 0.0
        %1234 = vmatpush1.msra.mxu0 0.0
        %1235 = vmatprep.subr.mxu0 0.0
        %1236 = vmatpush1.msra.mxu0 0.0
        %1237 = vmatprep.subr.mxu0 0.0
        %1238 = vmatpush1.msra.mxu0 0.0
        %1239 = vmatprep.subr.mxu0 0.0
        %1240 = vmatpush1.msra.mxu0 0.0
        %1241 = vmatprep.subr.mxu0 0.0
        %1242 = vmatpush1.msra.mxu0 0.0
        %1243 = vmatprep.subr.mxu0 0.0
        %1244 = vmatpush1.msra.mxu0 0.0
        %1245 = vmatprep.subr.mxu0 0.0
        %1246 = vmatpush1.msra.mxu0 0.0
        %1247 = vmatprep.subr.mxu0 0.0
        %1248 = vmatpush1.msra.mxu0 0.0
        %1249 = vmatprep.subr.mxu0 0.0
        %1250 = vmatpush1.msra.mxu0 0.0
        %1251 = vmatprep.subr.mxu0 0.0
        %1252 = vmatpush1.msra.mxu0 0.0
        %1253 = vmatprep.subr.mxu0 0.0
        %1254 = vmatpush1.msra.mxu0 0.0
        %1255 = vmatprep.mubr.f32.mxu0 0.0
        %1256 = vmatmul.mubr.f32.gmra.mrb[0].mxu0 %v1153
        %v1257 = vpop.f32.mrb[0].mxu0
        %v1258 = vadd.f32 %v1189, %v1257
        %v1259 = vpop.f32.mrb[0].mxu0
        %1260 = vmatprep.mubr.f32.mxu0 0.0
        %1261 = vmatmul.mubr.f32.gmra.mrb[0].mxu0 %v1154
        %v1262 = vpop.f32.mrb[0].mxu0
        %v1263 = vadd.f32 %v1189, %v1262
        %v1264 = vpop.f32.mrb[0].mxu0
        %1265 = vmatprep.mubr.f32.mxu0 0.0
        %1266 = vmatmul.mubr.f32.gmra.mrb[0].mxu0 %v1155
        %v1267 = vpop.f32.mrb[0].mxu0
        %v1268 = vadd.f32 %v1189, %v1267
        %v1269 = vpop.f32.mrb[0].mxu0
        %1270 = vmatprep.mubr.f32.mxu0 0.0
        %1271 = vmatmul.mubr.f32.gmra.mrb[0].mxu0 %v1156
        %v1272 = vpop.f32.mrb[0].mxu0
        %v1273 = vadd.f32 %v1189, %v1272
        %v1274 = vpop.f32.mrb[0].mxu0
        %1275 = vmatprep.mubr.f32.mxu0 0.0
        %1276 = vmatmul.mubr.f32.gmra.mrb[0].mxu0 %v1157
        %v1277 = vpop.f32.mrb[0].mxu0
        %v1278 = vadd.f32 %v1189, %v1277
        %v1279 = vpop.f32.mrb[0].mxu0
        %1280 = vmatprep.mubr.f32.mxu0 0.0
        %1281 = vmatmul.mubr.f32.gmra.mrb[0].mxu0 %v1158
        %v1282 = vpop.f32.mrb[0].mxu0
        %v1283 = vadd.f32 %v1189, %v1282
        %v1284 = vpop.f32.mrb[0].mxu0
        %1285 = vmatprep.mubr.f32.mxu0 0.0
        %1286 = vmatmul.mubr.f32.gmra.mrb[0].mxu0 %v1159
        %v1287 = vpop.f32.mrb[0].mxu0
        %v1288 = vadd.f32 %v1189, %v1287
        %v1289 = vpop.f32.mrb[0].mxu0
        %1290 = vmatprep.mubr.f32.mxu0 0.0
        %1291 = vmatmul.mubr.f32.gmra.mrb[0].mxu0 %v1160
        %v1292 = vpop.f32.mrb[0].mxu0
        %v1293 = vadd.f32 %v1189, %v1292
        %v1294 = vpop.f32.mrb[0].mxu0
        %1295 = vmatprep.mubr.f32.mxu0 0.0
        %1296 = vmatmul.mubr.f32.gmra.mrb[0].mxu0 %v1161
        %v1297 = vpop.f32.mrb[0].mxu0
        %v1298 = vadd.f32 %v1189, %v1297
        %v1299 = vpop.f32.mrb[0].mxu0
        %1300 = vmatprep.mubr.f32.mxu0 0.0
        %1301 = vmatmul.mubr.f32.gmra.mrb[0].mxu0 %v1162
        %v1302 = vpop.f32.mrb[0].mxu0
        %v1303 = vadd.f32 %v1189, %v1302
        %v1304 = vpop.f32.mrb[0].mxu0
        %1305 = vmatprep.mubr.f32.mxu0 0.0
        %1306 = vmatmul.mubr.f32.gmra.mrb[0].mxu0 %v1163
        %v1307 = vpop.f32.mrb[0].mxu0
        %v1308 = vadd.f32 %v1189, %v1307
        %v1309 = vpop.f32.mrb[0].mxu0
        %1310 = vmatprep.mubr.f32.mxu0 0.0
        %1311 = vmatmul.mubr.f32.gmra.mrb[0].mxu0 %v1164
        %v1312 = vpop.f32.mrb[0].mxu0
        %v1313 = vadd.f32 %v1189, %v1312
        %v1314 = vpop.f32.mrb[0].mxu0
        %1315 = vmatprep.mubr.f32.mxu0 0.0
        %1316 = vmatmul.mubr.f32.gmra.mrb[0].mxu0 %v1165
        %v1317 = vpop.f32.mrb[0].mxu0
        %v1318 = vadd.f32 %v1189, %v1317
        %v1319 = vpop.f32.mrb[0].mxu0
        %1320 = vmatprep.mubr.f32.mxu0 0.0
        %1321 = vmatmul.mubr.f32.gmra.mrb[0].mxu0 %v1166
        %v1322 = vpop.f32.mrb[0].mxu0
        %v1323 = vadd.f32 %v1189, %v1322
        %v1324 = vpop.f32.mrb[0].mxu0
        %1325 = vmatprep.mubr.f32.mxu0 0.0
        %1326 = vmatmul.mubr.f32.gmra.mrb[0].mxu0 %v1167
        %v1327 = vpop.f32.mrb[0].mxu0
        %v1328 = vadd.f32 %v1189, %v1327
        %v1329 = vpop.f32.mrb[0].mxu0
        %1330 = vmatprep.mubr.f32.mxu0 0.0
        %1331 = vmatmul.mubr.f32.gmra.mrb[0].mxu0 %v1168
        %v1332 = vpop.f32.mrb[0].mxu0
        %v1333 = vadd.f32 %v1189, %v1332
        %v1334 = vpop.f32.mrb[0].mxu0
        %1335 = vmatprep.mubr.f32.mxu0 0.0
        %1336 = vmatmul.mubr.f32.gmra.mrb[0].mxu0 %v1169
        %v1337 = vpop.f32.mrb[0].mxu0
        %v1338 = vadd.f32 %v1189, %v1337
        %v1339 = vpop.f32.mrb[0].mxu0
        %1340 = vmatprep.mubr.f32.mxu0 0.0
        %1341 = vmatmul.mubr.f32.gmra.mrb[0].mxu0 %v1170
        %v1342 = vpop.f32.mrb[0].mxu0
        %v1343 = vadd.f32 %v1189, %v1342
        %v1344 = vpop.f32.mrb[0].mxu0
        %1345 = vmatprep.mubr.f32.mxu0 0.0
        %1346 = vmatmul.mubr.f32.gmra.mrb[0].mxu0 %v1171
        %v1347 = vpop.f32.mrb[0].mxu0
        %v1348 = vadd.f32 %v1189, %v1347
        %v1349 = vpop.f32.mrb[0].mxu0
        %1350 = vmatprep.mubr.f32.mxu0 0.0
        %1351 = vmatmul.mubr.f32.gmra.mrb[0].mxu0 %v1172
        %v1352 = vpop.f32.mrb[0].mxu0
        %v1353 = vadd.f32 %v1189, %v1352
        %v1354 = vpop.f32.mrb[0].mxu0
        %1355 = vmatprep.mubr.f32.mxu0 0.0
        %1356 = vmatmul.mubr.f32.gmra.mrb[0].mxu0 %v1173
        %v1357 = vpop.f32.mrb[0].mxu0
        %v1358 = vadd.f32 %v1189, %v1357
        %v1359 = vpop.f32.mrb[0].mxu0
        %1360 = vmatprep.mubr.f32.mxu0 0.0
        %1361 = vmatmul.mubr.f32.gmra.mrb[0].mxu0 %v1174
        %v1362 = vpop.f32.mrb[0].mxu0
        %v1363 = vadd.f32 %v1189, %v1362
        %v1364 = vpop.f32.mrb[0].mxu0
        %1365 = vmatprep.mubr.f32.mxu0 0.0
        %1366 = vmatmul.mubr.f32.gmra.mrb[0].mxu0 %v1175
        %v1367 = vpop.f32.mrb[0].mxu0
        %v1368 = vadd.f32 %v1189, %v1367
        %v1369 = vpop.f32.mrb[0].mxu0
        %1370 = vmatprep.mubr.f32.mxu0 0.0
        %1371 = vmatmul.mubr.f32.gmra.mrb[0].mxu0 %v1176
        %v1372 = vpop.f32.mrb[0].mxu0
        %v1373 = vadd.f32 %v1189, %v1372
        %v1374 = vpop.f32.mrb[0].mxu0
        %1375 = vmatprep.mubr.f32.mxu0 0.0
        %1376 = vmatmul.mubr.f32.gmra.mrb[0].mxu0 %v1177
        %v1377 = vpop.f32.mrb[0].mxu0
        %v1378 = vadd.f32 %v1189, %v1377
        %v1379 = vpop.f32.mrb[0].mxu0
        %1380 = vmatprep.mubr.f32.mxu0 0.0
        %1381 = vmatmul.mubr.f32.gmra.mrb[0].mxu0 %v1178
        %v1382 = vpop.f32.mrb[0].mxu0
        %v1383 = vadd.f32 %v1189, %v1382
        %v1384 = vpop.f32.mrb[0].mxu0
        %1385 = vmatprep.mubr.f32.mxu0 0.0
        %1386 = vmatmul.mubr.f32.gmra.mrb[0].mxu0 %v1179
        %v1387 = vpop.f32.mrb[0].mxu0
        %v1388 = vadd.f32 %v1189, %v1387
        %v1389 = vpop.f32.mrb[0].mxu0
        %1390 = vmatprep.mubr.f32.mxu0 0.0
        %1391 = vmatmul.mubr.f32.gmra.mrb[0].mxu0 %v1180
        %v1392 = vpop.f32.mrb[0].mxu0
        %v1393 = vadd.f32 %v1189, %v1392
        %v1394 = vpop.f32.mrb[0].mxu0
        %1395 = vmatprep.mubr.f32.mxu0 0.0
        %1396 = vmatmul.mubr.f32.gmra.mrb[0].mxu0 %v1181
        %v1397 = vpop.f32.mrb[0].mxu0
        %v1398 = vadd.f32 %v1189, %v1397
        %v1399 = vpop.f32.mrb[0].mxu0
        %1400 = vmatprep.mubr.f32.mxu0 0.0
        %1401 = vmatmul.mubr.f32.gmra.mrb[0].mxu0 %v1182
        %v1402 = vpop.f32.mrb[0].mxu0
        %v1403 = vadd.f32 %v1189, %v1402
        %v1404 = vpop.f32.mrb[0].mxu0
        %1405 = vmatprep.mubr.f32.mxu0 0.0
        %1406 = vmatmul.mubr.f32.gmra.mrb[0].mxu0 %v1183
        %v1407 = vpop.f32.mrb[0].mxu0
        %v1408 = vadd.f32 %v1189, %v1407
        %v1409 = vpop.f32.mrb[0].mxu0
        %1410 = vmatprep.mubr.f32.mxu0 0.0
        %1411 = vmatmul.mubr.f32.gmra.mrb[0].mxu0 %v1184
        %v1412 = vpop.f32.mrb[0].mxu0
        %v1413 = vadd.f32 %v1189, %v1412
        %v1414 = vpop.f32.mrb[0].mxu0
        %1415 = vdwg.mxu0
        %v1416 = vxor.u32 %v1258, 2147483648
        %v1417 = vxor.u32 %v1263, 2147483648
        %v1418 = vxor.u32 %v1268, 2147483648
        %v1419 = vxor.u32 %v1273, 2147483648
        %v1420 = vxor.u32 %v1278, 2147483648
        %v1421 = vxor.u32 %v1283, 2147483648
        %v1422 = vxor.u32 %v1288, 2147483648
        %v1423 = vxor.u32 %v1293, 2147483648
        %v1424 = vxor.u32 %v1298, 2147483648
        %v1425 = vxor.u32 %v1303, 2147483648
        %v1426 = vxor.u32 %v1308, 2147483648
        %v1427 = vxor.u32 %v1313, 2147483648
        %v1428 = vxor.u32 %v1318, 2147483648
        %v1429 = vxor.u32 %v1323, 2147483648
        %v1430 = vxor.u32 %v1328, 2147483648
        %v1431 = vxor.u32 %v1333, 2147483648
        %v1432 = vxor.u32 %v1338, 2147483648
        %v1433 = vxor.u32 %v1343, 2147483648
        %v1434 = vxor.u32 %v1348, 2147483648
        %v1435 = vxor.u32 %v1353, 2147483648
        %v1436 = vxor.u32 %v1358, 2147483648
        %v1437 = vxor.u32 %v1363, 2147483648
        %v1438 = vxor.u32 %v1368, 2147483648
        %v1439 = vxor.u32 %v1373, 2147483648
        %v1440 = vxor.u32 %v1378, 2147483648
        %v1441 = vxor.u32 %v1383, 2147483648
        %v1442 = vxor.u32 %v1388, 2147483648
        %v1443 = vxor.u32 %v1393, 2147483648
        %v1444 = vxor.u32 %v1398, 2147483648
        %v1445 = vxor.u32 %v1403, 2147483648
        %v1446 = vxor.u32 %v1408, 2147483648
        %v1447 = vxor.u32 %v1413, 2147483648
        %v1448 = vmul.f32 %v1416, 1.442695
        %v1449 = vpow.pop %v1448
        %v1450 = vmul.f32 %v1417, 1.442695
        %v1451 = vpow.pop %v1450
        %v1452 = vmul.f32 %v1418, 1.442695
        %v1453 = vpow.pop %v1452
        %v1454 = vmul.f32 %v1419, 1.442695
        %v1455 = vpow.pop %v1454
        %v1456 = vmul.f32 %v1420, 1.442695
        %v1457 = vpow.pop %v1456
        %v1458 = vmul.f32 %v1421, 1.442695
        %v1459 = vpow.pop %v1458
        %v1460 = vmul.f32 %v1422, 1.442695
        %v1461 = vpow.pop %v1460
        %v1462 = vmul.f32 %v1423, 1.442695
        %v1463 = vpow.pop %v1462
        %v1464 = vmul.f32 %v1424, 1.442695
        %v1465 = vpow.pop %v1464
        %v1466 = vmul.f32 %v1425, 1.442695
        %v1467 = vpow.pop %v1466
        %v1468 = vmul.f32 %v1426, 1.442695
        %v1469 = vpow.pop %v1468
        %v1470 = vmul.f32 %v1427, 1.442695
        %v1471 = vpow.pop %v1470
        %v1472 = vmul.f32 %v1428, 1.442695
        %v1473 = vpow.pop %v1472
        %v1474 = vmul.f32 %v1429, 1.442695
        %v1475 = vpow.pop %v1474
        %v1476 = vmul.f32 %v1430, 1.442695
        %v1477 = vpow.pop %v1476
        %v1478 = vmul.f32 %v1431, 1.442695
        %v1479 = vpow.pop %v1478
        %v1480 = vmul.f32 %v1432, 1.442695
        %v1481 = vpow.pop %v1480
        %v1482 = vmul.f32 %v1433, 1.442695
        %v1483 = vpow.pop %v1482
        %v1484 = vmul.f32 %v1434, 1.442695
        %v1485 = vpow.pop %v1484
        %v1486 = vmul.f32 %v1435, 1.442695
        %v1487 = vpow.pop %v1486
        %v1488 = vmul.f32 %v1436, 1.442695
        %v1489 = vpow.pop %v1488
        %v1490 = vmul.f32 %v1437, 1.442695
        %v1491 = vpow.pop %v1490
        %v1492 = vmul.f32 %v1438, 1.442695
        %v1493 = vpow.pop %v1492
        %v1494 = vmul.f32 %v1439, 1.442695
        %v1495 = vpow.pop %v1494
        %v1496 = vmul.f32 %v1440, 1.442695
        %v1497 = vpow.pop %v1496
        %v1498 = vmul.f32 %v1441, 1.442695
        %v1499 = vpow.pop %v1498
        %v1500 = vmul.f32 %v1442, 1.442695
        %v1501 = vpow.pop %v1500
        %v1502 = vmul.f32 %v1443, 1.442695
        %v1503 = vpow.pop %v1502
        %v1504 = vmul.f32 %v1444, 1.442695
        %v1505 = vpow.pop %v1504
        %v1506 = vmul.f32 %v1445, 1.442695
        %v1507 = vpow.pop %v1506
        %v1508 = vmul.f32 %v1446, 1.442695
        %v1509 = vpow.pop %v1508
        %v1510 = vmul.f32 %v1447, 1.442695
        %v1511 = vpow.pop %v1510
        %v1512 = vadd.f32 %v1449, 1.0
        %v1513 = vadd.f32 %v1451, 1.0
        %v1514 = vadd.f32 %v1453, 1.0
        %v1515 = vadd.f32 %v1455, 1.0
        %v1516 = vadd.f32 %v1457, 1.0
        %v1517 = vadd.f32 %v1459, 1.0
        %v1518 = vadd.f32 %v1461, 1.0
        %v1519 = vadd.f32 %v1463, 1.0
        %v1520 = vadd.f32 %v1465, 1.0
        %v1521 = vadd.f32 %v1467, 1.0
        %v1522 = vadd.f32 %v1469, 1.0
        %v1523 = vadd.f32 %v1471, 1.0
        %v1524 = vadd.f32 %v1473, 1.0
        %v1525 = vadd.f32 %v1475, 1.0
        %v1526 = vadd.f32 %v1477, 1.0
        %v1527 = vadd.f32 %v1479, 1.0
        %v1528 = vadd.f32 %v1481, 1.0
        %v1529 = vadd.f32 %v1483, 1.0
        %v1530 = vadd.f32 %v1485, 1.0
        %v1531 = vadd.f32 %v1487, 1.0
        %v1532 = vadd.f32 %v1489, 1.0
        %v1533 = vadd.f32 %v1491, 1.0
        %v1534 = vadd.f32 %v1493, 1.0
        %v1535 = vadd.f32 %v1495, 1.0
        %v1536 = vadd.f32 %v1497, 1.0
        %v1537 = vadd.f32 %v1499, 1.0
        %v1538 = vadd.f32 %v1501, 1.0
        %v1539 = vadd.f32 %v1503, 1.0
        %v1540 = vadd.f32 %v1505, 1.0
        %v1541 = vadd.f32 %v1507, 1.0
        %v1542 = vadd.f32 %v1509, 1.0
        %v1543 = vadd.f32 %v1511, 1.0
        %v1544 = vrcp.pop %v1512
        %v1545 = vmul.f32 1.0, %v1544
        %v1546 = vrcp.pop %v1513
        %v1547 = vmul.f32 1.0, %v1546
        %v1548 = vrcp.pop %v1514
        %v1549 = vmul.f32 1.0, %v1548
        %v1550 = vrcp.pop %v1515
        %v1551 = vmul.f32 1.0, %v1550
        %v1552 = vrcp.pop %v1516
        %v1553 = vmul.f32 1.0, %v1552
        %v1554 = vrcp.pop %v1517
        %v1555 = vmul.f32 1.0, %v1554
        %v1556 = vrcp.pop %v1518
        %v1557 = vmul.f32 1.0, %v1556
        %v1558 = vrcp.pop %v1519
        %v1559 = vmul.f32 1.0, %v1558
        %v1560 = vrcp.pop %v1520
        %v1561 = vmul.f32 1.0, %v1560
        %v1562 = vrcp.pop %v1521
        %v1563 = vmul.f32 1.0, %v1562
        %v1564 = vrcp.pop %v1522
        %v1565 = vmul.f32 1.0, %v1564
        %v1566 = vrcp.pop %v1523
        %v1567 = vmul.f32 1.0, %v1566
        %v1568 = vrcp.pop %v1524
        %v1569 = vmul.f32 1.0, %v1568
        %v1570 = vrcp.pop %v1525
        %v1571 = vmul.f32 1.0, %v1570
        %v1572 = vrcp.pop %v1526
        %v1573 = vmul.f32 1.0, %v1572
        %v1574 = vrcp.pop %v1527
        %v1575 = vmul.f32 1.0, %v1574
        %v1576 = vrcp.pop %v1528
        %v1577 = vmul.f32 1.0, %v1576
        %v1578 = vrcp.pop %v1529
        %v1579 = vmul.f32 1.0, %v1578
        %v1580 = vrcp.pop %v1530
        %v1581 = vmul.f32 1.0, %v1580
        %v1582 = vrcp.pop %v1531
        %v1583 = vmul.f32 1.0, %v1582
        %v1584 = vrcp.pop %v1532
        %v1585 = vmul.f32 1.0, %v1584
        %v1586 = vrcp.pop %v1533
        %v1587 = vmul.f32 1.0, %v1586
        %v1588 = vrcp.pop %v1534
        %v1589 = vmul.f32 1.0, %v1588
        %v1590 = vrcp.pop %v1535
        %v1591 = vmul.f32 1.0, %v1590
        %v1592 = vrcp.pop %v1536
        %v1593 = vmul.f32 1.0, %v1592
        %v1594 = vrcp.pop %v1537
        %v1595 = vmul.f32 1.0, %v1594
        %v1596 = vrcp.pop %v1538
        %v1597 = vmul.f32 1.0, %v1596
        %v1598 = vrcp.pop %v1539
        %v1599 = vmul.f32 1.0, %v1598
        %v1600 = vrcp.pop %v1540
        %v1601 = vmul.f32 1.0, %v1600
        %v1602 = vrcp.pop %v1541
        %v1603 = vmul.f32 1.0, %v1602
        %v1604 = vrcp.pop %v1542
        %v1605 = vmul.f32 1.0, %v1604
        %v1606 = vrcp.pop %v1543
        %v1607 = vmul.f32 1.0, %v1606
        %v1608 = vmul.f32 %v1258, %v1545
        %v1609 = vmul.f32 %v1263, %v1547
        %v1610 = vmul.f32 %v1268, %v1549
        %v1611 = vmul.f32 %v1273, %v1551
        %v1612 = vmul.f32 %v1278, %v1553
        %v1613 = vmul.f32 %v1283, %v1555
        %v1614 = vmul.f32 %v1288, %v1557
        %v1615 = vmul.f32 %v1293, %v1559
        %v1616 = vmul.f32 %v1298, %v1561
        %v1617 = vmul.f32 %v1303, %v1563
        %v1618 = vmul.f32 %v1308, %v1565
        %v1619 = vmul.f32 %v1313, %v1567
        %v1620 = vmul.f32 %v1318, %v1569
        %v1621 = vmul.f32 %v1323, %v1571
        %v1622 = vmul.f32 %v1328, %v1573
        %v1623 = vmul.f32 %v1333, %v1575
        %v1624 = vmul.f32 %v1338, %v1577
        %v1625 = vmul.f32 %v1343, %v1579
        %v1626 = vmul.f32 %v1348, %v1581
        %v1627 = vmul.f32 %v1353, %v1583
        %v1628 = vmul.f32 %v1358, %v1585
        %v1629 = vmul.f32 %v1363, %v1587
        %v1630 = vmul.f32 %v1368, %v1589
        %v1631 = vmul.f32 %v1373, %v1591
        %v1632 = vmul.f32 %v1378, %v1593
        %v1633 = vmul.f32 %v1383, %v1595
        %v1634 = vmul.f32 %v1388, %v1597
        %v1635 = vmul.f32 %v1393, %v1599
        %v1636 = vmul.f32 %v1398, %v1601
        %v1637 = vmul.f32 %v1403, %v1603
        %v1638 = vmul.f32 %v1408, %v1605
        %v1639 = vmul.f32 %v1413, %v1607
        %1640 = vst [vmem:[#allocation2 + $0x38] sm:$0xff] %v1608
        %1641 = vst [vmem:[#allocation2 + $0x50] sm:$0xff] %v1609
        %1642 = vst [vmem:[#allocation2 + $0x68] sm:$0xff] %v1610
        %1643 = vst [vmem:[#allocation2 + $0x80] sm:$0xff] %v1611
        %1644 = vst [vmem:[#allocation2 + $0x98] sm:$0xff] %v1612
        %1645 = vst [vmem:[#allocation2 + $0xb0] sm:$0xff] %v1613
        %1646 = vst [vmem:[#allocation2 + $0xc8] sm:$0xff] %v1614
        %1647 = vst [vmem:[#allocation2 + $0xe0] sm:$0xff] %v1615
        %1648 = vst [vmem:[#allocation2 + $0xf8] sm:$0xff] %v1616
        %1649 = vst [vmem:[#allocation2 + $0x110] sm:$0xff] %v1617
        %1650 = vst [vmem:[#allocation2 + $0x128] sm:$0xff] %v1618
        %1651 = vst [vmem:[#allocation2 + $0x140] sm:$0xff] %v1619
        %1652 = vst [vmem:[#allocation2 + $0x158] sm:$0xff] %v1620
        %1653 = vst [vmem:[#allocation2 + $0x170] sm:$0xff] %v1621
        %1654 = vst [vmem:[#allocation2 + $0x188] sm:$0xff] %v1622
        %1655 = vst [vmem:[#allocation2 + $0x1a0] sm:$0xff] %v1623
        %1656 = vst [vmem:[#allocation2 + $0x1b8] sm:$0xff] %v1624
        %1657 = vst [vmem:[#allocation2 + $0x1d0] sm:$0xff] %v1625
        %1658 = vst [vmem:[#allocation2 + $0x1e8] sm:$0xff] %v1626
        %1659 = vst [vmem:[#allocation2 + $0x200] sm:$0xff] %v1627
        %1660 = vst [vmem:[#allocation2 + $0x218] sm:$0xff] %v1628
        %1661 = vst [vmem:[#allocation2 + $0x230] sm:$0xff] %v1629
        %1662 = vst [vmem:[#allocation2 + $0x248] sm:$0xff] %v1630
        %1663 = vst [vmem:[#allocation2 + $0x260] sm:$0xff] %v1631
        %1664 = vst [vmem:[#allocation2 + $0x278] sm:$0xff] %v1632
        %1665 = vst [vmem:[#allocation2 + $0x290] sm:$0xff] %v1633
        %1666 = vst [vmem:[#allocation2 + $0x2a8] sm:$0xff] %v1634
        %1667 = vst [vmem:[#allocation2 + $0x2c0] sm:$0xff] %v1635
        %1668 = vst [vmem:[#allocation2 + $0x2d8] sm:$0xff] %v1636
        %1669 = vst [vmem:[#allocation2 + $0x2f0] sm:$0xff] %v1637
        %1670 = vst [vmem:[#allocation2 + $0x308] sm:$0xff] %v1638
        %1671 = vst [vmem:[#allocation2 + $0x320] sm:$0xff] %v1639
        %v1672 = vld [vmem:[#allocation2 + $0x20] sm:$0x80]
        %v1673 = vld [vmem:[#allocation2 + $0x38] sm:$0xff]
        %v1674 = vld [vmem:[#allocation2 + $0x50] sm:$0xff]
        %v1675 = vld [vmem:[#allocation2 + $0x68] sm:$0xff]
        %v1676 = vld [vmem:[#allocation2 + $0x80] sm:$0xff]
        %v1677 = vld [vmem:[#allocation2 + $0x98] sm:$0xff]
        %v1678 = vld [vmem:[#allocation2 + $0xb0] sm:$0xff]
        %v1679 = vld [vmem:[#allocation2 + $0xc8] sm:$0xff]
        %v1680 = vld [vmem:[#allocation2 + $0xe0] sm:$0xff]
        %v1681 = vld [vmem:[#allocation2 + $0xf8] sm:$0xff]
        %v1682 = vld [vmem:[#allocation2 + $0x110] sm:$0xff]
        %v1683 = vld [vmem:[#allocation2 + $0x128] sm:$0xff]
        %v1684 = vld [vmem:[#allocation2 + $0x140] sm:$0xff]
        %v1685 = vld [vmem:[#allocation2 + $0x158] sm:$0xff]
        %v1686 = vld [vmem:[#allocation2 + $0x170] sm:$0xff]
        %v1687 = vld [vmem:[#allocation2 + $0x188] sm:$0xff]
        %v1688 = vld [vmem:[#allocation2 + $0x1a0] sm:$0xff]
        %v1689 = vld [vmem:[#allocation2 + $0x1b8] sm:$0xff]
        %v1690 = vld [vmem:[#allocation2 + $0x1d0] sm:$0xff]
        %v1691 = vld [vmem:[#allocation2 + $0x1e8] sm:$0xff]
        %v1692 = vld [vmem:[#allocation2 + $0x200] sm:$0xff]
        %v1693 = vld [vmem:[#allocation2 + $0x218] sm:$0xff]
        %v1694 = vld [vmem:[#allocation2 + $0x230] sm:$0xff]
        %v1695 = vld [vmem:[#allocation2 + $0x248] sm:$0xff]
        %v1696 = vld [vmem:[#allocation2 + $0x260] sm:$0xff]
        %v1697 = vld [vmem:[#allocation2 + $0x278] sm:$0xff]
        %v1698 = vld [vmem:[#allocation2 + $0x290] sm:$0xff]
        %v1699 = vld [vmem:[#allocation2 + $0x2a8] sm:$0xff]
        %v1700 = vld [vmem:[#allocation2 + $0x2c0] sm:$0xff]
        %v1701 = vld [vmem:[#allocation2 + $0x2d8] sm:$0xff]
        %v1702 = vld [vmem:[#allocation2 + $0x2f0] sm:$0xff]
        %v1703 = vld [vmem:[#allocation2 + $0x308] sm:$0xff]
        %v1704 = vld [vmem:[#allocation2 + $0x320] sm:$0x7f]
        %vm1737 = vcmask 1046528
        %v1738 = vrot.slane %v917, 1
        %v1739 = vrot.slane %v918, 1
        %v1740 = vsel %vm1737, %v1738, %v1739
        %v1741 = vrot.slane %v919, 1
        %v1742 = vsel %vm1737, %v1739, %v1741
        %v1743 = vrot.slane %v920, 1
        %v1744 = vsel %vm1737, %v1741, %v1743
        %v1745 = vrot.slane %v921, 1
        %v1746 = vsel %vm1737, %v1743, %v1745
        %v1747 = vrot.slane %v922, 1
        %v1748 = vsel %vm1737, %v1745, %v1747
        %v1749 = vrot.slane %v923, 1
        %v1750 = vsel %vm1737, %v1747, %v1749
        %v1751 = vrot.slane %v924, 1
        %v1752 = vsel %vm1737, %v1749, %v1751
        %v1753 = vrot.slane %v925, 1
        %v1754 = vsel %vm1737, %v1751, %v1753
        %v1755 = vrot.slane %v926, 1
        %v1756 = vsel %vm1737, %v1753, %v1755
        %v1757 = vrot.slane %v927, 1
        %v1758 = vsel %vm1737, %v1755, %v1757
        %v1759 = vrot.slane %v928, 1
        %v1760 = vsel %vm1737, %v1757, %v1759
        %v1761 = vrot.slane %v929, 1
        %v1762 = vsel %vm1737, %v1759, %v1761
        %v1763 = vrot.slane %v930, 1
        %v1764 = vsel %vm1737, %v1761, %v1763
        %v1765 = vrot.slane %v931, 1
        %v1766 = vsel %vm1737, %v1763, %v1765
        %v1767 = vrot.slane %v932, 1
        %v1768 = vsel %vm1737, %v1765, %v1767
        %v1769 = vrot.slane %v933, 1
        %v1770 = vsel %vm1737, %v1767, %v1769
        %v1771 = vrot.slane %v934, 1
        %v1772 = vsel %vm1737, %v1769, %v1771
        %v1773 = vrot.slane %v935, 1
        %v1774 = vsel %vm1737, %v1771, %v1773
        %v1775 = vrot.slane %v936, 1
        %v1776 = vsel %vm1737, %v1773, %v1775
        %v1777 = vrot.slane %v937, 1
        %v1778 = vsel %vm1737, %v1775, %v1777
        %v1779 = vrot.slane %v938, 1
        %v1780 = vsel %vm1737, %v1777, %v1779
        %v1781 = vrot.slane %v939, 1
        %v1782 = vsel %vm1737, %v1779, %v1781
        %v1783 = vrot.slane %v940, 1
        %v1784 = vsel %vm1737, %v1781, %v1783
        %v1785 = vrot.slane %v941, 1
        %v1786 = vsel %vm1737, %v1783, %v1785
        %v1787 = vrot.slane %v942, 1
        %v1788 = vsel %vm1737, %v1785, %v1787
        %v1789 = vrot.slane %v943, 1
        %v1790 = vsel %vm1737, %v1787, %v1789
        %v1791 = vrot.slane %v944, 1
        %v1792 = vsel %vm1737, %v1789, %v1791
        %v1793 = vrot.slane %v945, 1
        %v1794 = vsel %vm1737, %v1791, %v1793
        %v1795 = vrot.slane %v946, 1
        %v1796 = vsel %vm1737, %v1793, %v1795
        %v1797 = vrot.slane %v947, 1
        %v1798 = vsel %vm1737, %v1795, %v1797
        %v1799 = vrot.slane %v948, 1
        %v1800 = vsel %vm1737, %v1797, %v1799
        %v1834 = vmul.f32 %v1672, %v1738
        %v1835 = vmul.f32 %v1673, %v1740
        %v1836 = vmul.f32 %v1674, %v1742
        %v1837 = vmul.f32 %v1675, %v1744
        %v1838 = vmul.f32 %v1676, %v1746
        %v1839 = vmul.f32 %v1677, %v1748
        %v1840 = vmul.f32 %v1678, %v1750
        %v1841 = vmul.f32 %v1679, %v1752
        %v1842 = vmul.f32 %v1680, %v1754
        %v1843 = vmul.f32 %v1681, %v1756
        %v1844 = vmul.f32 %v1682, %v1758
        %v1845 = vmul.f32 %v1683, %v1760
        %v1846 = vmul.f32 %v1684, %v1762
        %v1847 = vmul.f32 %v1685, %v1764
        %v1848 = vmul.f32 %v1686, %v1766
        %v1849 = vmul.f32 %v1687, %v1768
        %v1850 = vmul.f32 %v1688, %v1770
        %v1851 = vmul.f32 %v1689, %v1772
        %v1852 = vmul.f32 %v1690, %v1774
        %v1853 = vmul.f32 %v1691, %v1776
        %v1854 = vmul.f32 %v1692, %v1778
        %v1855 = vmul.f32 %v1693, %v1780
        %v1856 = vmul.f32 %v1694, %v1782
        %v1857 = vmul.f32 %v1695, %v1784
        %v1858 = vmul.f32 %v1696, %v1786
        %v1859 = vmul.f32 %v1697, %v1788
        %v1860 = vmul.f32 %v1698, %v1790
        %v1861 = vmul.f32 %v1699, %v1792
        %v1862 = vmul.f32 %v1700, %v1794
        %v1863 = vmul.f32 %v1701, %v1796
        %v1864 = vmul.f32 %v1702, %v1798
        %v1865 = vmul.f32 %v1703, %v1800
        %v1866 = vmul.f32 %v1704, %v1799
        %v1867 = vld [vmem:[#allocation2 + $0x38] sm:$0xfe]
        %v1868 = vld [vmem:[#allocation2 + $0x320] sm:$0xff]
        %v1869 = vld [vmem:[#allocation2 + $0x338] sm:$0x1]
        %vm1902 = vcmask 1040384
        %v1903 = vrot.slane %v1013, 7
        %v1904 = vrot.slane %v1014, 7
        %v1905 = vsel %vm1902, %v1903, %v1904
        %v1906 = vrot.slane %v1015, 7
        %v1907 = vsel %vm1902, %v1904, %v1906
        %v1908 = vrot.slane %v1016, 7
        %v1909 = vsel %vm1902, %v1906, %v1908
        %v1910 = vrot.slane %v1017, 7
        %v1911 = vsel %vm1902, %v1908, %v1910
        %v1912 = vrot.slane %v1018, 7
        %v1913 = vsel %vm1902, %v1910, %v1912
        %v1914 = vrot.slane %v1019, 7
        %v1915 = vsel %vm1902, %v1912, %v1914
        %v1916 = vrot.slane %v1020, 7
        %v1917 = vsel %vm1902, %v1914, %v1916
        %v1918 = vrot.slane %v1021, 7
        %v1919 = vsel %vm1902, %v1916, %v1918
        %v1920 = vrot.slane %v1022, 7
        %v1921 = vsel %vm1902, %v1918, %v1920
        %v1922 = vrot.slane %v1023, 7
        %v1923 = vsel %vm1902, %v1920, %v1922
        %v1924 = vrot.slane %v1024, 7
        %v1925 = vsel %vm1902, %v1922, %v1924
        %v1926 = vrot.slane %v1025, 7
        %v1927 = vsel %vm1902, %v1924, %v1926
        %v1928 = vrot.slane %v1026, 7
        %v1929 = vsel %vm1902, %v1926, %v1928
        %v1930 = vrot.slane %v1027, 7
        %v1931 = vsel %vm1902, %v1928, %v1930
        %v1932 = vrot.slane %v1028, 7
        %v1933 = vsel %vm1902, %v1930, %v1932
        %v1934 = vrot.slane %v1029, 7
        %v1935 = vsel %vm1902, %v1932, %v1934
        %v1936 = vrot.slane %v1030, 7
        %v1937 = vsel %vm1902, %v1934, %v1936
        %v1938 = vrot.slane %v1031, 7
        %v1939 = vsel %vm1902, %v1936, %v1938
        %v1940 = vrot.slane %v1032, 7
        %v1941 = vsel %vm1902, %v1938, %v1940
        %v1942 = vrot.slane %v1033, 7
        %v1943 = vsel %vm1902, %v1940, %v1942
        %v1944 = vrot.slane %v1034, 7
        %v1945 = vsel %vm1902, %v1942, %v1944
        %v1946 = vrot.slane %v1035, 7
        %v1947 = vsel %vm1902, %v1944, %v1946
        %v1948 = vrot.slane %v1036, 7
        %v1949 = vsel %vm1902, %v1946, %v1948
        %v1950 = vrot.slane %v1037, 7
        %v1951 = vsel %vm1902, %v1948, %v1950
        %v1952 = vrot.slane %v1038, 7
        %v1953 = vsel %vm1902, %v1950, %v1952
        %v1954 = vrot.slane %v1039, 7
        %v1955 = vsel %vm1902, %v1952, %v1954
        %v1956 = vrot.slane %v1040, 7
        %v1957 = vsel %vm1902, %v1954, %v1956
        %v1958 = vrot.slane %v1041, 7
        %v1959 = vsel %vm1902, %v1956, %v1958
        %v1960 = vrot.slane %v1042, 7
        %v1961 = vsel %vm1902, %v1958, %v1960
        %v1962 = vrot.slane %v1043, 7
        %v1963 = vsel %vm1902, %v1960, %v1962
        %v1964 = vrot.slane %v1044, 7
        %v1965 = vsel %vm1902, %v1962, %v1964
        %v1999 = vmul.f32 %v1867, %v1903
        %v2000 = vmul.f32 %v1674, %v1905
        %v2001 = vmul.f32 %v1675, %v1907
        %v2002 = vmul.f32 %v1676, %v1909
        %v2003 = vmul.f32 %v1677, %v1911
        %v2004 = vmul.f32 %v1678, %v1913
        %v2005 = vmul.f32 %v1679, %v1915
        %v2006 = vmul.f32 %v1680, %v1917
        %v2007 = vmul.f32 %v1681, %v1919
        %v2008 = vmul.f32 %v1682, %v1921
        %v2009 = vmul.f32 %v1683, %v1923
        %v2010 = vmul.f32 %v1684, %v1925
        %v2011 = vmul.f32 %v1685, %v1927
        %v2012 = vmul.f32 %v1686, %v1929
        %v2013 = vmul.f32 %v1687, %v1931
        %v2014 = vmul.f32 %v1688, %v1933
        %v2015 = vmul.f32 %v1689, %v1935
        %v2016 = vmul.f32 %v1690, %v1937
        %v2017 = vmul.f32 %v1691, %v1939
        %v2018 = vmul.f32 %v1692, %v1941
        %v2019 = vmul.f32 %v1693, %v1943
        %v2020 = vmul.f32 %v1694, %v1945
        %v2021 = vmul.f32 %v1695, %v1947
        %v2022 = vmul.f32 %v1696, %v1949
        %v2023 = vmul.f32 %v1697, %v1951
        %v2024 = vmul.f32 %v1698, %v1953
        %v2025 = vmul.f32 %v1699, %v1955
        %v2026 = vmul.f32 %v1700, %v1957
        %v2027 = vmul.f32 %v1701, %v1959
        %v2028 = vmul.f32 %v1702, %v1961
        %v2029 = vmul.f32 %v1703, %v1963
        %v2030 = vmul.f32 %v1868, %v1965
        %v2031 = vmul.f32 %v1869, %v1964
        %v2065 = vrot.slane %v1834, 7
        %v2066 = vrot.slane %v1835, 7
        %v2067 = vsel %vm1902, %v2065, %v2066
        %v2068 = vrot.slane %v1836, 7
        %v2069 = vsel %vm1902, %v2066, %v2068
        %v2070 = vrot.slane %v1837, 7
        %v2071 = vsel %vm1902, %v2068, %v2070
        %v2072 = vrot.slane %v1838, 7
        %v2073 = vsel %vm1902, %v2070, %v2072
        %v2074 = vrot.slane %v1839, 7
        %v2075 = vsel %vm1902, %v2072, %v2074
        %v2076 = vrot.slane %v1840, 7
        %v2077 = vsel %vm1902, %v2074, %v2076
        %v2078 = vrot.slane %v1841, 7
        %v2079 = vsel %vm1902, %v2076, %v2078
        %v2080 = vrot.slane %v1842, 7
        %v2081 = vsel %vm1902, %v2078, %v2080
        %v2082 = vrot.slane %v1843, 7
        %v2083 = vsel %vm1902, %v2080, %v2082
        %v2084 = vrot.slane %v1844, 7
        %v2085 = vsel %vm1902, %v2082, %v2084
        %v2086 = vrot.slane %v1845, 7
        %v2087 = vsel %vm1902, %v2084, %v2086
        %v2088 = vrot.slane %v1846, 7
        %v2089 = vsel %vm1902, %v2086, %v2088
        %v2090 = vrot.slane %v1847, 7
        %v2091 = vsel %vm1902, %v2088, %v2090
        %v2092 = vrot.slane %v1848, 7
        %v2093 = vsel %vm1902, %v2090, %v2092
        %v2094 = vrot.slane %v1849, 7
        %v2095 = vsel %vm1902, %v2092, %v2094
        %v2096 = vrot.slane %v1850, 7
        %v2097 = vsel %vm1902, %v2094, %v2096
        %v2098 = vrot.slane %v1851, 7
        %v2099 = vsel %vm1902, %v2096, %v2098
        %v2100 = vrot.slane %v1852, 7
        %v2101 = vsel %vm1902, %v2098, %v2100
        %v2102 = vrot.slane %v1853, 7
        %v2103 = vsel %vm1902, %v2100, %v2102
        %v2104 = vrot.slane %v1854, 7
        %v2105 = vsel %vm1902, %v2102, %v2104
        %v2106 = vrot.slane %v1855, 7
        %v2107 = vsel %vm1902, %v2104, %v2106
        %v2108 = vrot.slane %v1856, 7
        %v2109 = vsel %vm1902, %v2106, %v2108
        %v2110 = vrot.slane %v1857, 7
        %v2111 = vsel %vm1902, %v2108, %v2110
        %v2112 = vrot.slane %v1858, 7
        %v2113 = vsel %vm1902, %v2110, %v2112
        %v2114 = vrot.slane %v1859, 7
        %v2115 = vsel %vm1902, %v2112, %v2114
        %v2116 = vrot.slane %v1860, 7
        %v2117 = vsel %vm1902, %v2114, %v2116
        %v2118 = vrot.slane %v1861, 7
        %v2119 = vsel %vm1902, %v2116, %v2118
        %v2120 = vrot.slane %v1862, 7
        %v2121 = vsel %vm1902, %v2118, %v2120
        %v2122 = vrot.slane %v1863, 7
        %v2123 = vsel %vm1902, %v2120, %v2122
        %v2124 = vrot.slane %v1864, 7
        %v2125 = vsel %vm1902, %v2122, %v2124
        %v2126 = vrot.slane %v1865, 7
        %v2127 = vsel %vm1902, %v2124, %v2126
        %v2128 = vrot.slane %v1866, 7
        %v2129 = vsel %vm1902, %v2126, %v2128
        %2162 = vst [vmem:[#allocation2 + $0x30] sm:$0xff] %v2067
        %2163 = vst [vmem:[#allocation2 + $0x48] sm:$0xff] %v2069
        %2164 = vst [vmem:[#allocation2 + $0x60] sm:$0xff] %v2071
        %2165 = vst [vmem:[#allocation2 + $0x78] sm:$0xff] %v2073
        %2166 = vst [vmem:[#allocation2 + $0x90] sm:$0xff] %v2075
        %2167 = vst [vmem:[#allocation2 + $0xa8] sm:$0xff] %v2077
        %2168 = vst [vmem:[#allocation2 + $0xc0] sm:$0xff] %v2079
        %2169 = vst [vmem:[#allocation2 + $0xd8] sm:$0xff] %v2081
        %2170 = vst [vmem:[#allocation2 + $0xf0] sm:$0xff] %v2083
        %2171 = vst [vmem:[#allocation2 + $0x108] sm:$0xff] %v2085
        %2172 = vst [vmem:[#allocation2 + $0x120] sm:$0xff] %v2087
        %2173 = vst [vmem:[#allocation2 + $0x138] sm:$0xff] %v2089
        %2174 = vst [vmem:[#allocation2 + $0x150] sm:$0xff] %v2091
        %2175 = vst [vmem:[#allocation2 + $0x168] sm:$0xff] %v2093
        %2176 = vst [vmem:[#allocation2 + $0x180] sm:$0xff] %v2095
        %2177 = vst [vmem:[#allocation2 + $0x198] sm:$0xff] %v2097
        %2178 = vst [vmem:[#allocation2 + $0x1b0] sm:$0xff] %v2099
        %2179 = vst [vmem:[#allocation2 + $0x1c8] sm:$0xff] %v2101
        %2180 = vst [vmem:[#allocation2 + $0x1e0] sm:$0xff] %v2103
        %2181 = vst [vmem:[#allocation2 + $0x1f8] sm:$0xff] %v2105
        %2182 = vst [vmem:[#allocation2 + $0x210] sm:$0xff] %v2107
        %2183 = vst [vmem:[#allocation2 + $0x228] sm:$0xff] %v2109
        %2184 = vst [vmem:[#allocation2 + $0x240] sm:$0xff] %v2111
        %2185 = vst [vmem:[#allocation2 + $0x258] sm:$0xff] %v2113
        %2186 = vst [vmem:[#allocation2 + $0x270] sm:$0xff] %v2115
        %2187 = vst [vmem:[#allocation2 + $0x288] sm:$0xff] %v2117
        %2188 = vst [vmem:[#allocation2 + $0x2a0] sm:$0xff] %v2119
        %2189 = vst [vmem:[#allocation2 + $0x2b8] sm:$0xff] %v2121
        %2190 = vst [vmem:[#allocation2 + $0x2d0] sm:$0xff] %v2123
        %2191 = vst [vmem:[#allocation2 + $0x2e8] sm:$0xff] %v2125
        %2192 = vst [vmem:[#allocation2 + $0x300] sm:$0xff] %v2127
        %2193 = vst [vmem:[#allocation2 + $0x318] sm:$0xff] %v2129
        %v2227 = vrot.slane %v1999, 1
        %v2228 = vrot.slane %v2000, 1
        %v2229 = vsel %vm1737, %v2227, %v2228
        %v2230 = vrot.slane %v2001, 1
        %v2231 = vsel %vm1737, %v2228, %v2230
        %v2232 = vrot.slane %v2002, 1
        %v2233 = vsel %vm1737, %v2230, %v2232
        %v2234 = vrot.slane %v2003, 1
        %v2235 = vsel %vm1737, %v2232, %v2234
        %v2236 = vrot.slane %v2004, 1
        %v2237 = vsel %vm1737, %v2234, %v2236
        %v2238 = vrot.slane %v2005, 1
        %v2239 = vsel %vm1737, %v2236, %v2238
        %v2240 = vrot.slane %v2006, 1
        %v2241 = vsel %vm1737, %v2238, %v2240
        %v2242 = vrot.slane %v2007, 1
        %v2243 = vsel %vm1737, %v2240, %v2242
        %v2244 = vrot.slane %v2008, 1
        %v2245 = vsel %vm1737, %v2242, %v2244
        %v2246 = vrot.slane %v2009, 1
        %v2247 = vsel %vm1737, %v2244, %v2246
        %v2248 = vrot.slane %v2010, 1
        %v2249 = vsel %vm1737, %v2246, %v2248
        %v2250 = vrot.slane %v2011, 1
        %v2251 = vsel %vm1737, %v2248, %v2250
        %v2252 = vrot.slane %v2012, 1
        %v2253 = vsel %vm1737, %v2250, %v2252
        %v2254 = vrot.slane %v2013, 1
        %v2255 = vsel %vm1737, %v2252, %v2254
        %v2256 = vrot.slane %v2014, 1
        %v2257 = vsel %vm1737, %v2254, %v2256
        %v2258 = vrot.slane %v2015, 1
        %v2259 = vsel %vm1737, %v2256, %v2258
        %v2260 = vrot.slane %v2016, 1
        %v2261 = vsel %vm1737, %v2258, %v2260
        %v2262 = vrot.slane %v2017, 1
        %v2263 = vsel %vm1737, %v2260, %v2262
        %v2264 = vrot.slane %v2018, 1
        %v2265 = vsel %vm1737, %v2262, %v2264
        %v2266 = vrot.slane %v2019, 1
        %v2267 = vsel %vm1737, %v2264, %v2266
        %v2268 = vrot.slane %v2020, 1
        %v2269 = vsel %vm1737, %v2266, %v2268
        %v2270 = vrot.slane %v2021, 1
        %v2271 = vsel %vm1737, %v2268, %v2270
        %v2272 = vrot.slane %v2022, 1
        %v2273 = vsel %vm1737, %v2270, %v2272
        %v2274 = vrot.slane %v2023, 1
        %v2275 = vsel %vm1737, %v2272, %v2274
        %v2276 = vrot.slane %v2024, 1
        %v2277 = vsel %vm1737, %v2274, %v2276
        %v2278 = vrot.slane %v2025, 1
        %v2279 = vsel %vm1737, %v2276, %v2278
        %v2280 = vrot.slane %v2026, 1
        %v2281 = vsel %vm1737, %v2278, %v2280
        %v2282 = vrot.slane %v2027, 1
        %v2283 = vsel %vm1737, %v2280, %v2282
        %v2284 = vrot.slane %v2028, 1
        %v2285 = vsel %vm1737, %v2282, %v2284
        %v2286 = vrot.slane %v2029, 1
        %v2287 = vsel %vm1737, %v2284, %v2286
        %v2288 = vrot.slane %v2030, 1
        %v2289 = vsel %vm1737, %v2286, %v2288
        %v2290 = vrot.slane %v2031, 1
        %v2291 = vsel %vm1737, %v2288, %v2290
        %2324 = vst [vmem:[#allocation2 + $0x40] sm:$0xff] %v2229
        %2325 = vst [vmem:[#allocation2 + $0x58] sm:$0xff] %v2231
        %2326 = vst [vmem:[#allocation2 + $0x70] sm:$0xff] %v2233
        %2327 = vst [vmem:[#allocation2 + $0x88] sm:$0xff] %v2235
        %2328 = vst [vmem:[#allocation2 + $0xa0] sm:$0xff] %v2237
        %2329 = vst [vmem:[#allocation2 + $0xb8] sm:$0xff] %v2239
        %2330 = vst [vmem:[#allocation2 + $0xd0] sm:$0xff] %v2241
        %2331 = vst [vmem:[#allocation2 + $0xe8] sm:$0xff] %v2243
        %2332 = vst [vmem:[#allocation2 + $0x100] sm:$0xff] %v2245
        %2333 = vst [vmem:[#allocation2 + $0x118] sm:$0xff] %v2247
        %2334 = vst [vmem:[#allocation2 + $0x130] sm:$0xff] %v2249
        %2335 = vst [vmem:[#allocation2 + $0x148] sm:$0xff] %v2251
        %2336 = vst [vmem:[#allocation2 + $0x160] sm:$0xff] %v2253
        %2337 = vst [vmem:[#allocation2 + $0x178] sm:$0xff] %v2255
        %2338 = vst [vmem:[#allocation2 + $0x190] sm:$0xff] %v2257
        %2339 = vst [vmem:[#allocation2 + $0x1a8] sm:$0xff] %v2259
        %2340 = vst [vmem:[#allocation2 + $0x1c0] sm:$0xff] %v2261
        %2341 = vst [vmem:[#allocation2 + $0x1d8] sm:$0xff] %v2263
        %2342 = vst [vmem:[#allocation2 + $0x1f0] sm:$0xff] %v2265
        %2343 = vst [vmem:[#allocation2 + $0x208] sm:$0xff] %v2267
        %2344 = vst [vmem:[#allocation2 + $0x220] sm:$0xff] %v2269
        %2345 = vst [vmem:[#allocation2 + $0x238] sm:$0xff] %v2271
        %2346 = vst [vmem:[#allocation2 + $0x250] sm:$0xff] %v2273
        %2347 = vst [vmem:[#allocation2 + $0x268] sm:$0xff] %v2275
        %2348 = vst [vmem:[#allocation2 + $0x280] sm:$0xff] %v2277
        %2349 = vst [vmem:[#allocation2 + $0x298] sm:$0xff] %v2279
        %2350 = vst [vmem:[#allocation2 + $0x2b0] sm:$0xff] %v2281
        %2351 = vst [vmem:[#allocation2 + $0x2c8] sm:$0xff] %v2283
        %2352 = vst [vmem:[#allocation2 + $0x2e0] sm:$0xff] %v2285
        %2353 = vst [vmem:[#allocation2 + $0x2f8] sm:$0xff] %v2287
        %2354 = vst [vmem:[#allocation2 + $0x310] sm:$0xff] %v2289
        %2355 = vst [vmem:[#allocation2 + $0x328] sm:$0xff] %v2291
        %v2356 = vld [vmem:[#allocation2] sm:$0xff]
        %v2357 = vld [vmem:[#allocation2 + $0x8] sm:$0xff]
        %v2358 = vld [vmem:[#allocation2 + $0x10] sm:$0xff]
        %v2359 = vld [vmem:[#allocation2 + $0x18] sm:$0xff]
        %v2360 = vld [vmem:[#allocation2 + $0x20] sm:$0xff]
        %v2361 = vld [vmem:[#allocation2 + $0x28] sm:$0xff]
        %v2362 = vld [vmem:[#allocation2 + $0x30] sm:$0xff]
        %v2363 = vld [vmem:[#allocation2 + $0x38] sm:$0xff]
        %v2364 = vld [vmem:[#allocation2 + $0x40] sm:$0xff]
        %v2365 = vld [vmem:[#allocation2 + $0x48] sm:$0xff]
        %v2366 = vld [vmem:[#allocation2 + $0x50] sm:$0xff]
        %v2367 = vld [vmem:[#allocation2 + $0x58] sm:$0xff]
        %v2368 = vld [vmem:[#allocation2 + $0x60] sm:$0xff]
        %v2369 = vld [vmem:[#allocation2 + $0x68] sm:$0xff]
        %v2370 = vld [vmem:[#allocation2 + $0x70] sm:$0xff]
        %v2371 = vld [vmem:[#allocation2 + $0x78] sm:$0xff]
        %v2372 = vld [vmem:[#allocation2 + $0x80] sm:$0xff]
        %v2373 = vld [vmem:[#allocation2 + $0x88] sm:$0xff]
        %v2374 = vld [vmem:[#allocation2 + $0x90] sm:$0xff]
        %v2375 = vld [vmem:[#allocation2 + $0x98] sm:$0xff]
        %v2376 = vld [vmem:[#allocation2 + $0xa0] sm:$0xff]
        %v2377 = vld [vmem:[#allocation2 + $0xa8] sm:$0xff]
        %v2378 = vld [vmem:[#allocation2 + $0xb0] sm:$0xff]
        %v2379 = vld [vmem:[#allocation2 + $0xb8] sm:$0xff]
        %v2380 = vld [vmem:[#allocation2 + $0xc0] sm:$0xff]
        %v2381 = vld [vmem:[#allocation2 + $0xc8] sm:$0xff]
        %v2382 = vld [vmem:[#allocation2 + $0xd0] sm:$0xff]
        %v2383 = vld [vmem:[#allocation2 + $0xd8] sm:$0xff]
        %v2384 = vld [vmem:[#allocation2 + $0xe0] sm:$0xff]
        %v2385 = vld [vmem:[#allocation2 + $0xe8] sm:$0xff]
        %v2386 = vld [vmem:[#allocation2 + $0xf0] sm:$0xff]
        %v2387 = vld [vmem:[#allocation2 + $0xf8] sm:$0xff]
        %v2388 = vld [vmem:[#allocation2 + $0x100] sm:$0xff]
        %v2389 = vld [vmem:[#allocation2 + $0x108] sm:$0xff]
        %v2390 = vld [vmem:[#allocation2 + $0x110] sm:$0xff]
        %v2391 = vld [vmem:[#allocation2 + $0x118] sm:$0xff]
        %v2392 = vld [vmem:[#allocation2 + $0x120] sm:$0xff]
        %v2393 = vld [vmem:[#allocation2 + $0x128] sm:$0xff]
        %v2394 = vld [vmem:[#allocation2 + $0x130] sm:$0xff]
        %v2395 = vld [vmem:[#allocation2 + $0x138] sm:$0xff]
        %v2396 = vld [vmem:[#allocation2 + $0x140] sm:$0xff]
        %v2397 = vld [vmem:[#allocation2 + $0x148] sm:$0xff]
        %v2398 = vld [vmem:[#allocation2 + $0x150] sm:$0xff]
        %v2399 = vld [vmem:[#allocation2 + $0x158] sm:$0xff]
        %v2400 = vld [vmem:[#allocation2 + $0x160] sm:$0xff]
        %v2401 = vld [vmem:[#allocation2 + $0x168] sm:$0xff]
        %v2402 = vld [vmem:[#allocation2 + $0x170] sm:$0xff]
        %v2403 = vld [vmem:[#allocation2 + $0x178] sm:$0xff]
        %v2404 = vld [vmem:[#allocation2 + $0x180] sm:$0xff]
        %v2405 = vld [vmem:[#allocation2 + $0x188] sm:$0xff]
        %v2406 = vld [vmem:[#allocation2 + $0x190] sm:$0xff]
        %v2407 = vld [vmem:[#allocation2 + $0x198] sm:$0xff]
        %v2408 = vld [vmem:[#allocation2 + $0x1a0] sm:$0xff]
        %v2409 = vld [vmem:[#allocation2 + $0x1a8] sm:$0xff]
        %v2410 = vld [vmem:[#allocation2 + $0x1b0] sm:$0xff]
        %v2411 = vld [vmem:[#allocation2 + $0x1b8] sm:$0xff]
        %v2412 = vld [vmem:[#allocation2 + $0x1c0] sm:$0xff]
        %v2413 = vld [vmem:[#allocation2 + $0x1c8] sm:$0xff]
        %v2414 = vld [vmem:[#allocation2 + $0x1d0] sm:$0xff]
        %v2415 = vld [vmem:[#allocation2 + $0x1d8] sm:$0xff]
        %v2416 = vld [vmem:[#allocation2 + $0x1e0] sm:$0xff]
        %v2417 = vld [vmem:[#allocation2 + $0x1e8] sm:$0xff]
        %v2418 = vld [vmem:[#allocation2 + $0x1f0] sm:$0xff]
        %v2419 = vld [vmem:[#allocation2 + $0x1f8] sm:$0xff]
        %v2420 = vld [vmem:[#allocation2 + $0x200] sm:$0xff]
        %v2421 = vld [vmem:[#allocation2 + $0x208] sm:$0xff]
        %v2422 = vld [vmem:[#allocation2 + $0x210] sm:$0xff]
        %v2423 = vld [vmem:[#allocation2 + $0x218] sm:$0xff]
        %v2424 = vld [vmem:[#allocation2 + $0x220] sm:$0xff]
        %v2425 = vld [vmem:[#allocation2 + $0x228] sm:$0xff]
        %v2426 = vld [vmem:[#allocation2 + $0x230] sm:$0xff]
        %v2427 = vld [vmem:[#allocation2 + $0x238] sm:$0xff]
        %v2428 = vld [vmem:[#allocation2 + $0x240] sm:$0xff]
        %v2429 = vld [vmem:[#allocation2 + $0x248] sm:$0xff]
        %v2430 = vld [vmem:[#allocation2 + $0x250] sm:$0xff]
        %v2431 = vld [vmem:[#allocation2 + $0x258] sm:$0xff]
        %v2432 = vld [vmem:[#allocation2 + $0x260] sm:$0xff]
        %v2433 = vld [vmem:[#allocation2 + $0x268] sm:$0xff]
        %v2434 = vld [vmem:[#allocation2 + $0x270] sm:$0xff]
        %v2435 = vld [vmem:[#allocation2 + $0x278] sm:$0xff]
        %v2436 = vld [vmem:[#allocation2 + $0x280] sm:$0xff]
        %v2437 = vld [vmem:[#allocation2 + $0x288] sm:$0xff]
        %v2438 = vld [vmem:[#allocation2 + $0x290] sm:$0xff]
        %v2439 = vld [vmem:[#allocation2 + $0x298] sm:$0xff]
        %v2440 = vld [vmem:[#allocation2 + $0x2a0] sm:$0xff]
        %v2441 = vld [vmem:[#allocation2 + $0x2a8] sm:$0xff]
        %v2442 = vld [vmem:[#allocation2 + $0x2b0] sm:$0xff]
        %v2443 = vld [vmem:[#allocation2 + $0x2b8] sm:$0xff]
        %v2444 = vld [vmem:[#allocation2 + $0x2c0] sm:$0xff]
        %v2445 = vld [vmem:[#allocation2 + $0x2c8] sm:$0xff]
        %v2446 = vld [vmem:[#allocation2 + $0x2d0] sm:$0xff]
        %v2447 = vld [vmem:[#allocation2 + $0x2d8] sm:$0xff]
        %v2448 = vld [vmem:[#allocation2 + $0x2e0] sm:$0xff]
        %v2449 = vld [vmem:[#allocation2 + $0x2e8] sm:$0xff]
        %v2450 = vld [vmem:[#allocation2 + $0x2f0] sm:$0xff]
        %v2451 = vld [vmem:[#allocation2 + $0x2f8] sm:$0xff]
        %v2452 = vld [vmem:[#allocation2 + $0x300] sm:$0xff]
        %v2453 = vld [vmem:[#allocation2 + $0x308] sm:$0xff]
        %v2454 = vld [vmem:[#allocation2 + $0x310] sm:$0xff]
        %v2455 = vld [vmem:[#allocation2 + $0x318] sm:$0xff]
        %v2456 = vld [vmem:[#allocation2 + $0x320] sm:$0xff]
        %v2457 = vld [vmem:[#allocation2 + $0x328] sm:$0xff]
        %2458 = vmatprep.subr.mxu0 0.0
        %2459 = vmatpush1.msra.mxu0 %v339
        %2460 = vmatprep.subr.mxu0 0.0
        %2461 = vmatpush1.msra.mxu0 %v340
        %2462 = vmatprep.subr.mxu0 0.0
        %2463 = vmatpush1.msra.mxu0 %v341
        %2464 = vmatprep.subr.mxu0 0.0
        %2465 = vmatpush1.msra.mxu0 %v342
        %2466 = vmatprep.subr.mxu0 0.0
        %2467 = vmatpush1.msra.mxu0 %v343
        %2468 = vmatprep.subr.mxu0 0.0
        %2469 = vmatpush1.msra.mxu0 %v344
        %2470 = vmatprep.subr.mxu0 0.0
        %2471 = vmatpush1.msra.mxu0 %v345
        %2472 = vmatprep.subr.mxu0 0.0
        %2473 = vmatpush1.msra.mxu0 %v346
        %2474 = vmatprep.subr.mxu0 0.0
        %2475 = vmatpush1.msra.mxu0 %v347
        %2476 = vmatprep.subr.mxu0 0.0
        %2477 = vmatpush1.msra.mxu0 %v348
        %2478 = vmatprep.subr.mxu0 0.0
        %2479 = vmatpush1.msra.mxu0 %v349
        %2480 = vmatprep.subr.mxu0 0.0
        %2481 = vmatpush1.msra.mxu0 %v350
        %2482 = vmatprep.subr.mxu0 0.0
        %2483 = vmatpush1.msra.mxu0 %v351
        %2484 = vmatprep.subr.mxu0 0.0
        %2485 = vmatpush1.msra.mxu0 %v352
        %2486 = vmatprep.subr.mxu0 0.0
        %2487 = vmatpush1.msra.mxu0 %v353
        %2488 = vmatprep.subr.mxu0 0.0
        %2489 = vmatpush1.msra.mxu0 %v354
        %2490 = vmatprep.subr.mxu0 0.0
        %2491 = vmatpush1.msra.mxu0 %v355
        %2492 = vmatprep.subr.mxu0 0.0
        %2493 = vmatpush1.msra.mxu0 %v356
        %2494 = vmatprep.subr.mxu0 0.0
        %2495 = vmatpush1.msra.mxu0 %v357
        %2496 = vmatprep.subr.mxu0 0.0
        %2497 = vmatpush1.msra.mxu0 %v358
        %2498 = vmatprep.subr.mxu0 0.0
        %2499 = vmatpush1.msra.mxu0 %v359
        %2500 = vmatprep.subr.mxu0 0.0
        %2501 = vmatpush1.msra.mxu0 %v360
        %2502 = vmatprep.subr.mxu0 0.0
        %2503 = vmatpush1.msra.mxu0 %v361
        %2504 = vmatprep.subr.mxu0 0.0
        %2505 = vmatpush1.msra.mxu0 %v362
        %2506 = vmatprep.subr.mxu0 0.0
        %2507 = vmatpush1.msra.mxu0 %v363
        %2508 = vmatprep.subr.mxu0 0.0
        %2509 = vmatpush1.msra.mxu0 %v364
        %2510 = vmatprep.subr.mxu0 0.0
        %2511 = vmatpush1.msra.mxu0 %v365
        %2512 = vmatprep.subr.mxu0 0.0
        %2513 = vmatpush1.msra.mxu0 %v366
        %2514 = vmatprep.subr.mxu0 0.0
        %2515 = vmatpush1.msra.mxu0 %v367
        %2516 = vmatprep.subr.mxu0 0.0
        %2517 = vmatpush1.msra.mxu0 %v368
        %2518 = vmatprep.subr.mxu0 0.0
        %2519 = vmatpush1.msra.mxu0 %v369
        %2520 = vmatprep.subr.mxu0 0.0
        %2521 = vmatpush1.msra.mxu0 %v370
        %2522 = vmatprep.mubr.f32.mxu0 %v2363
        %2523 = vmatmul.mubr.f32.gmra.mrb[0].mxu0 %v2362
        %v2524 = vpop.f32.mrb[0].mxu0
        %v2525 = vadd.f32 0.0, %v2524
        %v2526 = vpop.f32.mrb[0].mxu0
        %2527 = vmatprep.mubr.f32.mxu0 %v2366
        %2528 = vmatmul.mubr.f32.gmra.mrb[0].mxu0 %v2365
        %v2529 = vpop.f32.mrb[0].mxu0
        %v2530 = vadd.f32 0.0, %v2529
        %v2531 = vpop.f32.mrb[0].mxu0
        %2532 = vmatprep.mubr.f32.mxu0 %v2369
        %2533 = vmatmul.mubr.f32.gmra.mrb[0].mxu0 %v2368
        %v2534 = vpop.f32.mrb[0].mxu0
        %v2535 = vadd.f32 0.0, %v2534
        %v2536 = vpop.f32.mrb[0].mxu0
        %2537 = vmatprep.mubr.f32.mxu0 %v2372
        %2538 = vmatmul.mubr.f32.gmra.mrb[0].mxu0 %v2371
        %v2539 = vpop.f32.mrb[0].mxu0
        %v2540 = vadd.f32 0.0, %v2539
        %v2541 = vpop.f32.mrb[0].mxu0
        %2542 = vmatprep.mubr.f32.mxu0 %v2375
        %2543 = vmatmul.mubr.f32.gmra.mrb[0].mxu0 %v2374
        %v2544 = vpop.f32.mrb[0].mxu0
        %v2545 = vadd.f32 0.0, %v2544
        %v2546 = vpop.f32.mrb[0].mxu0
        %2547 = vmatprep.mubr.f32.mxu0 %v2378
        %2548 = vmatmul.mubr.f32.gmra.mrb[0].mxu0 %v2377
        %v2549 = vpop.f32.mrb[0].mxu0
        %v2550 = vadd.f32 0.0, %v2549
        %v2551 = vpop.f32.mrb[0].mxu0
        %2552 = vmatprep.mubr.f32.mxu0 %v2381
        %2553 = vmatmul.mubr.f32.gmra.mrb[0].mxu0 %v2380
        %v2554 = vpop.f32.mrb[0].mxu0
        %v2555 = vadd.f32 0.0, %v2554
        %v2556 = vpop.f32.mrb[0].mxu0
        %2557 = vmatprep.mubr.f32.mxu0 %v2384
        %2558 = vmatmul.mubr.f32.gmra.mrb[0].mxu0 %v2383
        %v2559 = vpop.f32.mrb[0].mxu0
        %v2560 = vadd.f32 0.0, %v2559
        %v2561 = vpop.f32.mrb[0].mxu0
        %2562 = vmatprep.mubr.f32.mxu0 %v2387
        %2563 = vmatmul.mubr.f32.gmra.mrb[0].mxu0 %v2386
        %v2564 = vpop.f32.mrb[0].mxu0
        %v2565 = vadd.f32 0.0, %v2564
        %v2566 = vpop.f32.mrb[0].mxu0
        %2567 = vmatprep.mubr.f32.mxu0 %v2390
        %2568 = vmatmul.mubr.f32.gmra.mrb[0].mxu0 %v2389
        %v2569 = vpop.f32.mrb[0].mxu0
        %v2570 = vadd.f32 0.0, %v2569
        %v2571 = vpop.f32.mrb[0].mxu0
        %2572 = vmatprep.mubr.f32.mxu0 %v2393
        %2573 = vmatmul.mubr.f32.gmra.mrb[0].mxu0 %v2392
        %v2574 = vpop.f32.mrb[0].mxu0
        %v2575 = vadd.f32 0.0, %v2574
        %v2576 = vpop.f32.mrb[0].mxu0
        %2577 = vmatprep.mubr.f32.mxu0 %v2396
        %2578 = vmatmul.mubr.f32.gmra.mrb[0].mxu0 %v2395
        %v2579 = vpop.f32.mrb[0].mxu0
        %v2580 = vadd.f32 0.0, %v2579
        %v2581 = vpop.f32.mrb[0].mxu0
        %2582 = vmatprep.mubr.f32.mxu0 %v2399
        %2583 = vmatmul.mubr.f32.gmra.mrb[0].mxu0 %v2398
        %v2584 = vpop.f32.mrb[0].mxu0
        %v2585 = vadd.f32 0.0, %v2584
        %v2586 = vpop.f32.mrb[0].mxu0
        %2587 = vmatprep.mubr.f32.mxu0 %v2402
        %2588 = vmatmul.mubr.f32.gmra.mrb[0].mxu0 %v2401
        %v2589 = vpop.f32.mrb[0].mxu0
        %v2590 = vadd.f32 0.0, %v2589
        %v2591 = vpop.f32.mrb[0].mxu0
        %2592 = vmatprep.mubr.f32.mxu0 %v2405
        %2593 = vmatmul.mubr.f32.gmra.mrb[0].mxu0 %v2404
        %v2594 = vpop.f32.mrb[0].mxu0
        %v2595 = vadd.f32 0.0, %v2594
        %v2596 = vpop.f32.mrb[0].mxu0
        %2597 = vmatprep.mubr.f32.mxu0 %v2408
        %2598 = vmatmul.mubr.f32.gmra.mrb[0].mxu0 %v2407
        %v2599 = vpop.f32.mrb[0].mxu0
        %v2600 = vadd.f32 0.0, %v2599
        %v2601 = vpop.f32.mrb[0].mxu0
        %2602 = vmatprep.mubr.f32.mxu0 %v2411
        %2603 = vmatmul.mubr.f32.gmra.mrb[0].mxu0 %v2410
        %v2604 = vpop.f32.mrb[0].mxu0
        %v2605 = vadd.f32 0.0, %v2604
        %v2606 = vpop.f32.mrb[0].mxu0
        %2607 = vmatprep.mubr.f32.mxu0 %v2414
        %2608 = vmatmul.mubr.f32.gmra.mrb[0].mxu0 %v2413
        %v2609 = vpop.f32.mrb[0].mxu0
        %v2610 = vadd.f32 0.0, %v2609
        %v2611 = vpop.f32.mrb[0].mxu0
        %2612 = vmatprep.mubr.f32.mxu0 %v2417
        %2613 = vmatmul.mubr.f32.gmra.mrb[0].mxu0 %v2416
        %v2614 = vpop.f32.mrb[0].mxu0
        %v2615 = vadd.f32 0.0, %v2614
        %v2616 = vpop.f32.mrb[0].mxu0
        %2617 = vmatprep.mubr.f32.mxu0 %v2420
        %2618 = vmatmul.mubr.f32.gmra.mrb[0].mxu0 %v2419
        %v2619 = vpop.f32.mrb[0].mxu0
        %v2620 = vadd.f32 0.0, %v2619
        %v2621 = vpop.f32.mrb[0].mxu0
        %2622 = vmatprep.mubr.f32.mxu0 %v2423
        %2623 = vmatmul.mubr.f32.gmra.mrb[0].mxu0 %v2422
        %v2624 = vpop.f32.mrb[0].mxu0
        %v2625 = vadd.f32 0.0, %v2624
        %v2626 = vpop.f32.mrb[0].mxu0
        %2627 = vmatprep.mubr.f32.mxu0 %v2426
        %2628 = vmatmul.mubr.f32.gmra.mrb[0].mxu0 %v2425
        %v2629 = vpop.f32.mrb[0].mxu0
        %v2630 = vadd.f32 0.0, %v2629
        %v2631 = vpop.f32.mrb[0].mxu0
        %2632 = vmatprep.mubr.f32.mxu0 %v2429
        %2633 = vmatmul.mubr.f32.gmra.mrb[0].mxu0 %v2428
        %v2634 = vpop.f32.mrb[0].mxu0
        %v2635 = vadd.f32 0.0, %v2634
        %v2636 = vpop.f32.mrb[0].mxu0
        %2637 = vmatprep.mubr.f32.mxu0 %v2432
        %2638 = vmatmul.mubr.f32.gmra.mrb[0].mxu0 %v2431
        %v2639 = vpop.f32.mrb[0].mxu0
        %v2640 = vadd.f32 0.0, %v2639
        %v2641 = vpop.f32.mrb[0].mxu0
        %2642 = vmatprep.mubr.f32.mxu0 %v2435
        %2643 = vmatmul.mubr.f32.gmra.mrb[0].mxu0 %v2434
        %v2644 = vpop.f32.mrb[0].mxu0
        %v2645 = vadd.f32 0.0, %v2644
        %v2646 = vpop.f32.mrb[0].mxu0
        %2647 = vmatprep.mubr.f32.mxu0 %v2438
        %2648 = vmatmul.mubr.f32.gmra.mrb[0].mxu0 %v2437
        %v2649 = vpop.f32.mrb[0].mxu0
        %v2650 = vadd.f32 0.0, %v2649
        %v2651 = vpop.f32.mrb[0].mxu0
        %2652 = vmatprep.mubr.f32.mxu0 %v2441
        %2653 = vmatmul.mubr.f32.gmra.mrb[0].mxu0 %v2440
        %v2654 = vpop.f32.mrb[0].mxu0
        %v2655 = vadd.f32 0.0, %v2654
        %v2656 = vpop.f32.mrb[0].mxu0
        %2657 = vmatprep.mubr.f32.mxu0 %v2444
        %2658 = vmatmul.mubr.f32.gmra.mrb[0].mxu0 %v2443
        %v2659 = vpop.f32.mrb[0].mxu0
        %v2660 = vadd.f32 0.0, %v2659
        %v2661 = vpop.f32.mrb[0].mxu0
        %2662 = vmatprep.mubr.f32.mxu0 %v2447
        %2663 = vmatmul.mubr.f32.gmra.mrb[0].mxu0 %v2446
        %v2664 = vpop.f32.mrb[0].mxu0
        %v2665 = vadd.f32 0.0, %v2664
        %v2666 = vpop.f32.mrb[0].mxu0
        %2667 = vmatprep.mubr.f32.mxu0 %v2450
        %2668 = vmatmul.mubr.f32.gmra.mrb[0].mxu0 %v2449
        %v2669 = vpop.f32.mrb[0].mxu0
        %v2670 = vadd.f32 0.0, %v2669
        %v2671 = vpop.f32.mrb[0].mxu0
        %2672 = vmatprep.mubr.f32.mxu0 %v2453
        %2673 = vmatmul.mubr.f32.gmra.mrb[0].mxu0 %v2452
        %v2674 = vpop.f32.mrb[0].mxu0
        %v2675 = vadd.f32 0.0, %v2674
        %v2676 = vpop.f32.mrb[0].mxu0
        %2677 = vmatprep.mubr.f32.mxu0 %v2456
        %2678 = vmatmul.mubr.f32.gmra.mrb[0].mxu0 %v2455
        %v2679 = vpop.f32.mrb[0].mxu0
        %v2680 = vadd.f32 0.0, %v2679
        %v2681 = vpop.f32.mrb[0].mxu0
        %2682 = vdwg.mxu0
        %2683 = vmatprep.subr.mxu0 0.0
        %2684 = vmatpush1.msra.mxu0 %v371
        %2685 = vmatprep.subr.mxu0 0.0
        %2686 = vmatpush1.msra.mxu0 %v372
        %2687 = vmatprep.subr.mxu0 0.0
        %2688 = vmatpush1.msra.mxu0 %v373
        %2689 = vmatprep.subr.mxu0 0.0
        %2690 = vmatpush1.msra.mxu0 %v374
        %2691 = vmatprep.subr.mxu0 0.0
        %2692 = vmatpush1.msra.mxu0 %v375
        %2693 = vmatprep.subr.mxu0 0.0
        %2694 = vmatpush1.msra.mxu0 %v376
        %2695 = vmatprep.subr.mxu0 0.0
        %2696 = vmatpush1.msra.mxu0 %v377
        %2697 = vmatprep.subr.mxu0 0.0
        %2698 = vmatpush1.msra.mxu0 %v378
        %2699 = vmatprep.subr.mxu0 0.0
        %2700 = vmatpush1.msra.mxu0 %v379
        %2701 = vmatprep.subr.mxu0 0.0
        %2702 = vmatpush1.msra.mxu0 %v380
        %2703 = vmatprep.subr.mxu0 0.0
        %2704 = vmatpush1.msra.mxu0 %v381
        %2705 = vmatprep.subr.mxu0 0.0
        %2706 = vmatpush1.msra.mxu0 %v382
        %2707 = vmatprep.subr.mxu0 0.0
        %2708 = vmatpush1.msra.mxu0 %v383
        %2709 = vmatprep.subr.mxu0 0.0
        %2710 = vmatpush1.msra.mxu0 %v384
        %2711 = vmatprep.subr.mxu0 0.0
        %2712 = vmatpush1.msra.mxu0 %v385
        %2713 = vmatprep.subr.mxu0 0.0
        %2714 = vmatpush1.msra.mxu0 %v386
        %2715 = vmatprep.subr.mxu0 0.0
        %2716 = vmatpush1.msra.mxu0 0.0
        %2717 = vmatprep.subr.mxu0 0.0
        %2718 = vmatpush1.msra.mxu0 0.0
        %2719 = vmatprep.subr.mxu0 0.0
        %2720 = vmatpush1.msra.mxu0 0.0
        %2721 = vmatprep.subr.mxu0 0.0
        %2722 = vmatpush1.msra.mxu0 0.0
        %2723 = vmatprep.subr.mxu0 0.0
        %2724 = vmatpush1.msra.mxu0 0.0
        %2725 = vmatprep.subr.mxu0 0.0
        %2726 = vmatpush1.msra.mxu0 0.0
        %2727 = vmatprep.subr.mxu0 0.0
        %2728 = vmatpush1.msra.mxu0 0.0
        %2729 = vmatprep.subr.mxu0 0.0
        %2730 = vmatpush1.msra.mxu0 0.0
        %2731 = vmatprep.subr.mxu0 0.0
        %2732 = vmatpush1.msra.mxu0 0.0
        %2733 = vmatprep.subr.mxu0 0.0
        %2734 = vmatpush1.msra.mxu0 0.0
        %2735 = vmatprep.subr.mxu0 0.0
        %2736 = vmatpush1.msra.mxu0 0.0
        %2737 = vmatprep.subr.mxu0 0.0
        %2738 = vmatpush1.msra.mxu0 0.0
        %2739 = vmatprep.subr.mxu0 0.0
        %2740 = vmatpush1.msra.mxu0 0.0
        %2741 = vmatprep.subr.mxu0 0.0
        %2742 = vmatpush1.msra.mxu0 0.0
        %2743 = vmatprep.subr.mxu0 0.0
        %2744 = vmatpush1.msra.mxu0 0.0
        %2745 = vmatprep.subr.mxu0 0.0
        %2746 = vmatpush1.msra.mxu0 0.0
        %2747 = vmatprep.mubr.f32.mxu0 0.0
        %2748 = vmatmul.mubr.f32.gmra.mrb[0].mxu0 %v2364
        %v2749 = vpop.f32.mrb[0].mxu0
        %v2750 = vadd.f32 %v2525, %v2749
        %v2751 = vpop.f32.mrb[0].mxu0
        %2752 = vmatprep.mubr.f32.mxu0 0.0
        %2753 = vmatmul.mubr.f32.gmra.mrb[0].mxu0 %v2367
        %v2754 = vpop.f32.mrb[0].mxu0
        %v2755 = vadd.f32 %v2530, %v2754
        %v2756 = vpop.f32.mrb[0].mxu0
        %2757 = vmatprep.mubr.f32.mxu0 0.0
        %2758 = vmatmul.mubr.f32.gmra.mrb[0].mxu0 %v2370
        %v2759 = vpop.f32.mrb[0].mxu0
        %v2760 = vadd.f32 %v2535, %v2759
        %v2761 = vpop.f32.mrb[0].mxu0
        %2762 = vmatprep.mubr.f32.mxu0 0.0
        %2763 = vmatmul.mubr.f32.gmra.mrb[0].mxu0 %v2373
        %v2764 = vpop.f32.mrb[0].mxu0
        %v2765 = vadd.f32 %v2540, %v2764
        %v2766 = vpop.f32.mrb[0].mxu0
        %2767 = vmatprep.mubr.f32.mxu0 0.0
        %2768 = vmatmul.mubr.f32.gmra.mrb[0].mxu0 %v2376
        %v2769 = vpop.f32.mrb[0].mxu0
        %v2770 = vadd.f32 %v2545, %v2769
        %v2771 = vpop.f32.mrb[0].mxu0
        %2772 = vmatprep.mubr.f32.mxu0 0.0
        %2773 = vmatmul.mubr.f32.gmra.mrb[0].mxu0 %v2379
        %v2774 = vpop.f32.mrb[0].mxu0
        %v2775 = vadd.f32 %v2550, %v2774
        %v2776 = vpop.f32.mrb[0].mxu0
        %2777 = vmatprep.mubr.f32.mxu0 0.0
        %2778 = vmatmul.mubr.f32.gmra.mrb[0].mxu0 %v2382
        %v2779 = vpop.f32.mrb[0].mxu0
        %v2780 = vadd.f32 %v2555, %v2779
        %v2781 = vpop.f32.mrb[0].mxu0
        %2782 = vmatprep.mubr.f32.mxu0 0.0
        %2783 = vmatmul.mubr.f32.gmra.mrb[0].mxu0 %v2385
        %v2784 = vpop.f32.mrb[0].mxu0
        %v2785 = vadd.f32 %v2560, %v2784
        %v2786 = vpop.f32.mrb[0].mxu0
        %2787 = vmatprep.mubr.f32.mxu0 0.0
        %2788 = vmatmul.mubr.f32.gmra.mrb[0].mxu0 %v2388
        %v2789 = vpop.f32.mrb[0].mxu0
        %v2790 = vadd.f32 %v2565, %v2789
        %v2791 = vpop.f32.mrb[0].mxu0
        %2792 = vmatprep.mubr.f32.mxu0 0.0
        %2793 = vmatmul.mubr.f32.gmra.mrb[0].mxu0 %v2391
        %v2794 = vpop.f32.mrb[0].mxu0
        %v2795 = vadd.f32 %v2570, %v2794
        %v2796 = vpop.f32.mrb[0].mxu0
        %2797 = vmatprep.mubr.f32.mxu0 0.0
        %2798 = vmatmul.mubr.f32.gmra.mrb[0].mxu0 %v2394
        %v2799 = vpop.f32.mrb[0].mxu0
        %v2800 = vadd.f32 %v2575, %v2799
        %v2801 = vpop.f32.mrb[0].mxu0
        %2802 = vmatprep.mubr.f32.mxu0 0.0
        %2803 = vmatmul.mubr.f32.gmra.mrb[0].mxu0 %v2397
        %v2804 = vpop.f32.mrb[0].mxu0
        %v2805 = vadd.f32 %v2580, %v2804
        %v2806 = vpop.f32.mrb[0].mxu0
        %2807 = vmatprep.mubr.f32.mxu0 0.0
        %2808 = vmatmul.mubr.f32.gmra.mrb[0].mxu0 %v2400
        %v2809 = vpop.f32.mrb[0].mxu0
        %v2810 = vadd.f32 %v2585, %v2809
        %v2811 = vpop.f32.mrb[0].mxu0
        %2812 = vmatprep.mubr.f32.mxu0 0.0
        %2813 = vmatmul.mubr.f32.gmra.mrb[0].mxu0 %v2403
        %v2814 = vpop.f32.mrb[0].mxu0
        %v2815 = vadd.f32 %v2590, %v2814
        %v2816 = vpop.f32.mrb[0].mxu0
        %2817 = vmatprep.mubr.f32.mxu0 0.0
        %2818 = vmatmul.mubr.f32.gmra.mrb[0].mxu0 %v2406
        %v2819 = vpop.f32.mrb[0].mxu0
        %v2820 = vadd.f32 %v2595, %v2819
        %v2821 = vpop.f32.mrb[0].mxu0
        %2822 = vmatprep.mubr.f32.mxu0 0.0
        %2823 = vmatmul.mubr.f32.gmra.mrb[0].mxu0 %v2409
        %v2824 = vpop.f32.mrb[0].mxu0
        %v2825 = vadd.f32 %v2600, %v2824
        %v2826 = vpop.f32.mrb[0].mxu0
        %2827 = vmatprep.mubr.f32.mxu0 0.0
        %2828 = vmatmul.mubr.f32.gmra.mrb[0].mxu0 %v2412
        %v2829 = vpop.f32.mrb[0].mxu0
        %v2830 = vadd.f32 %v2605, %v2829
        %v2831 = vpop.f32.mrb[0].mxu0
        %2832 = vmatprep.mubr.f32.mxu0 0.0
        %2833 = vmatmul.mubr.f32.gmra.mrb[0].mxu0 %v2415
        %v2834 = vpop.f32.mrb[0].mxu0
        %v2835 = vadd.f32 %v2610, %v2834
        %v2836 = vpop.f32.mrb[0].mxu0
        %2837 = vmatprep.mubr.f32.mxu0 0.0
        %2838 = vmatmul.mubr.f32.gmra.mrb[0].mxu0 %v2418
        %v2839 = vpop.f32.mrb[0].mxu0
        %v2840 = vadd.f32 %v2615, %v2839
        %v2841 = vpop.f32.mrb[0].mxu0
        %2842 = vmatprep.mubr.f32.mxu0 0.0
        %2843 = vmatmul.mubr.f32.gmra.mrb[0].mxu0 %v2421
        %v2844 = vpop.f32.mrb[0].mxu0
        %v2845 = vadd.f32 %v2620, %v2844
        %v2846 = vpop.f32.mrb[0].mxu0
        %2847 = vmatprep.mubr.f32.mxu0 0.0
        %2848 = vmatmul.mubr.f32.gmra.mrb[0].mxu0 %v2424
        %v2849 = vpop.f32.mrb[0].mxu0
        %v2850 = vadd.f32 %v2625, %v2849
        %v2851 = vpop.f32.mrb[0].mxu0
        %2852 = vmatprep.mubr.f32.mxu0 0.0
        %2853 = vmatmul.mubr.f32.gmra.mrb[0].mxu0 %v2427
        %v2854 = vpop.f32.mrb[0].mxu0
        %v2855 = vadd.f32 %v2630, %v2854
        %v2856 = vpop.f32.mrb[0].mxu0
        %2857 = vmatprep.mubr.f32.mxu0 0.0
        %2858 = vmatmul.mubr.f32.gmra.mrb[0].mxu0 %v2430
        %v2859 = vpop.f32.mrb[0].mxu0
        %v2860 = vadd.f32 %v2635, %v2859
        %v2861 = vpop.f32.mrb[0].mxu0
        %2862 = vmatprep.mubr.f32.mxu0 0.0
        %2863 = vmatmul.mubr.f32.gmra.mrb[0].mxu0 %v2433
        %v2864 = vpop.f32.mrb[0].mxu0
        %v2865 = vadd.f32 %v2640, %v2864
        %v2866 = vpop.f32.mrb[0].mxu0
        %2867 = vmatprep.mubr.f32.mxu0 0.0
        %2868 = vmatmul.mubr.f32.gmra.mrb[0].mxu0 %v2436
        %v2869 = vpop.f32.mrb[0].mxu0
        %v2870 = vadd.f32 %v2645, %v2869
        %v2871 = vpop.f32.mrb[0].mxu0
        %2872 = vmatprep.mubr.f32.mxu0 0.0
        %2873 = vmatmul.mubr.f32.gmra.mrb[0].mxu0 %v2439
        %v2874 = vpop.f32.mrb[0].mxu0
        %v2875 = vadd.f32 %v2650, %v2874
        %v2876 = vpop.f32.mrb[0].mxu0
        %2877 = vmatprep.mubr.f32.mxu0 0.0
        %2878 = vmatmul.mubr.f32.gmra.mrb[0].mxu0 %v2442
        %v2879 = vpop.f32.mrb[0].mxu0
        %v2880 = vadd.f32 %v2655, %v2879
        %v2881 = vpop.f32.mrb[0].mxu0
        %2882 = vmatprep.mubr.f32.mxu0 0.0
        %2883 = vmatmul.mubr.f32.gmra.mrb[0].mxu0 %v2445
        %v2884 = vpop.f32.mrb[0].mxu0
        %v2885 = vadd.f32 %v2660, %v2884
        %v2886 = vpop.f32.mrb[0].mxu0
        %2887 = vmatprep.mubr.f32.mxu0 0.0
        %2888 = vmatmul.mubr.f32.gmra.mrb[0].mxu0 %v2448
        %v2889 = vpop.f32.mrb[0].mxu0
        %v2890 = vadd.f32 %v2665, %v2889
        %v2891 = vpop.f32.mrb[0].mxu0
        %2892 = vmatprep.mubr.f32.mxu0 0.0
        %2893 = vmatmul.mubr.f32.gmra.mrb[0].mxu0 %v2451
        %v2894 = vpop.f32.mrb[0].mxu0
        %v2895 = vadd.f32 %v2670, %v2894
        %v2896 = vpop.f32.mrb[0].mxu0
        %2897 = vmatprep.mubr.f32.mxu0 0.0
        %2898 = vmatmul.mubr.f32.gmra.mrb[0].mxu0 %v2454
        %v2899 = vpop.f32.mrb[0].mxu0
        %v2900 = vadd.f32 %v2675, %v2899
        %v2901 = vpop.f32.mrb[0].mxu0
        %2902 = vmatprep.mubr.f32.mxu0 0.0
        %2903 = vmatmul.mubr.f32.gmra.mrb[0].mxu0 %v2457
        %v2904 = vpop.f32.mrb[0].mxu0
        %v2905 = vadd.f32 %v2680, %v2904
        %v2906 = vpop.f32.mrb[0].mxu0
        %2907 = vdwg.mxu0
        %2908 = vmatprep.subr.mxu0 0.0
        %2909 = vmatpush1.msra.mxu0 %v290
        %2910 = vmatprep.subr.mxu0 0.0
        %2911 = vmatpush1.msra.mxu0 %v291
        %2912 = vmatprep.subr.mxu0 0.0
        %2913 = vmatpush1.msra.mxu0 %v292
        %2914 = vmatprep.subr.mxu0 0.0
        %2915 = vmatpush1.msra.mxu0 %v293
        %2916 = vmatprep.subr.mxu0 0.0
        %2917 = vmatpush1.msra.mxu0 %v294
        %2918 = vmatprep.subr.mxu0 0.0
        %2919 = vmatpush1.msra.mxu0 %v295
        %2920 = vmatprep.subr.mxu0 0.0
        %2921 = vmatpush1.msra.mxu0 %v296
        %2922 = vmatprep.subr.mxu0 0.0
        %2923 = vmatpush1.msra.mxu0 %v297
        %2924 = vmatprep.subr.mxu0 0.0
        %2925 = vmatpush1.msra.mxu0 %v298
        %2926 = vmatprep.subr.mxu0 0.0
        %2927 = vmatpush1.msra.mxu0 %v299
        %2928 = vmatprep.subr.mxu0 0.0
        %2929 = vmatpush1.msra.mxu0 %v300
        %2930 = vmatprep.subr.mxu0 0.0
        %2931 = vmatpush1.msra.mxu0 %v301
        %2932 = vmatprep.subr.mxu0 0.0
        %2933 = vmatpush1.msra.mxu0 %v302
        %2934 = vmatprep.subr.mxu0 0.0
        %2935 = vmatpush1.msra.mxu0 %v303
        %2936 = vmatprep.subr.mxu0 0.0
        %2937 = vmatpush1.msra.mxu0 %v304
        %2938 = vmatprep.subr.mxu0 0.0
        %2939 = vmatpush1.msra.mxu0 %v305
        %2940 = vmatprep.subr.mxu0 0.0
        %2941 = vmatpush1.msra.mxu0 %v306
        %2942 = vmatprep.subr.mxu0 0.0
        %2943 = vmatpush1.msra.mxu0 %v307
        %2944 = vmatprep.subr.mxu0 0.0
        %2945 = vmatpush1.msra.mxu0 %v308
        %2946 = vmatprep.subr.mxu0 0.0
        %2947 = vmatpush1.msra.mxu0 %v309
        %2948 = vmatprep.subr.mxu0 0.0
        %2949 = vmatpush1.msra.mxu0 %v310
        %2950 = vmatprep.subr.mxu0 0.0
        %2951 = vmatpush1.msra.mxu0 %v311
        %2952 = vmatprep.subr.mxu0 0.0
        %2953 = vmatpush1.msra.mxu0 %v312
        %2954 = vmatprep.subr.mxu0 0.0
        %2955 = vmatpush1.msra.mxu0 %v313
        %2956 = vmatprep.subr.mxu0 0.0
        %2957 = vmatpush1.msra.mxu0 %v314
        %2958 = vmatprep.subr.mxu0 0.0
        %2959 = vmatpush1.msra.mxu0 %v315
        %2960 = vmatprep.subr.mxu0 0.0
        %2961 = vmatpush1.msra.mxu0 %v316
        %2962 = vmatprep.subr.mxu0 0.0
        %2963 = vmatpush1.msra.mxu0 %v317
        %2964 = vmatprep.subr.mxu0 0.0
        %2965 = vmatpush1.msra.mxu0 %v318
        %2966 = vmatprep.subr.mxu0 0.0
        %2967 = vmatpush1.msra.mxu0 %v319
        %2968 = vmatprep.subr.mxu0 0.0
        %2969 = vmatpush1.msra.mxu0 %v320
        %2970 = vmatprep.subr.mxu0 0.0
        %2971 = vmatpush1.msra.mxu0 %v321
        %2972 = vmatprep.mubr.f32.mxu0 %v2357
        %2973 = vmatmul.mubr.f32.gmra.mrb[0].mxu0 %v2356
        %v2974 = vpop.f32.mrb[0].mxu0
        %v2975 = vadd.f32 %v2750, %v2974
        %v2976 = vpop.f32.mrb[0].mxu0
        %2977 = vmatprep.mubr.f32.mxu0 %v2360
        %2978 = vmatmul.mubr.f32.gmra.mrb[0].mxu0 %v2359
        %v2979 = vpop.f32.mrb[0].mxu0
        %v2980 = vadd.f32 %v2755, %v2979
        %v2981 = vpop.f32.mrb[0].mxu0
        %2982 = vmatprep.mubr.f32.mxu0 %v2363
        %2983 = vmatmul.mubr.f32.gmra.mrb[0].mxu0 %v2362
        %v2984 = vpop.f32.mrb[0].mxu0
        %v2985 = vadd.f32 %v2760, %v2984
        %v2986 = vpop.f32.mrb[0].mxu0
        %2987 = vmatprep.mubr.f32.mxu0 %v2366
        %2988 = vmatmul.mubr.f32.gmra.mrb[0].mxu0 %v2365
        %v2989 = vpop.f32.mrb[0].mxu0
        %v2990 = vadd.f32 %v2765, %v2989
        %v2991 = vpop.f32.mrb[0].mxu0
        %2992 = vmatprep.mubr.f32.mxu0 %v2369
        %2993 = vmatmul.mubr.f32.gmra.mrb[0].mxu0 %v2368
        %v2994 = vpop.f32.mrb[0].mxu0
        %v2995 = vadd.f32 %v2770, %v2994
        %v2996 = vpop.f32.mrb[0].mxu0
        %2997 = vmatprep.mubr.f32.mxu0 %v2372
        %2998 = vmatmul.mubr.f32.gmra.mrb[0].mxu0 %v2371
        %v2999 = vpop.f32.mrb[0].mxu0
        %v3000 = vadd.f32 %v2775, %v2999
        %v3001 = vpop.f32.mrb[0].mxu0
        %3002 = vmatprep.mubr.f32.mxu0 %v2375
        %3003 = vmatmul.mubr.f32.gmra.mrb[0].mxu0 %v2374
        %v3004 = vpop.f32.mrb[0].mxu0
        %v3005 = vadd.f32 %v2780, %v3004
        %v3006 = vpop.f32.mrb[0].mxu0
        %3007 = vmatprep.mubr.f32.mxu0 %v2378
        %3008 = vmatmul.mubr.f32.gmra.mrb[0].mxu0 %v2377
        %v3009 = vpop.f32.mrb[0].mxu0
        %v3010 = vadd.f32 %v2785, %v3009
        %v3011 = vpop.f32.mrb[0].mxu0
        %3012 = vmatprep.mubr.f32.mxu0 %v2381
        %3013 = vmatmul.mubr.f32.gmra.mrb[0].mxu0 %v2380
        %v3014 = vpop.f32.mrb[0].mxu0
        %v3015 = vadd.f32 %v2790, %v3014
        %v3016 = vpop.f32.mrb[0].mxu0
        %3017 = vmatprep.mubr.f32.mxu0 %v2384
        %3018 = vmatmul.mubr.f32.gmra.mrb[0].mxu0 %v2383
        %v3019 = vpop.f32.mrb[0].mxu0
        %v3020 = vadd.f32 %v2795, %v3019
        %v3021 = vpop.f32.mrb[0].mxu0
        %3022 = vmatprep.mubr.f32.mxu0 %v2387
        %3023 = vmatmul.mubr.f32.gmra.mrb[0].mxu0 %v2386
        %v3024 = vpop.f32.mrb[0].mxu0
        %v3025 = vadd.f32 %v2800, %v3024
        %v3026 = vpop.f32.mrb[0].mxu0
        %3027 = vmatprep.mubr.f32.mxu0 %v2390
        %3028 = vmatmul.mubr.f32.gmra.mrb[0].mxu0 %v2389
        %v3029 = vpop.f32.mrb[0].mxu0
        %v3030 = vadd.f32 %v2805, %v3029
        %v3031 = vpop.f32.mrb[0].mxu0
        %3032 = vmatprep.mubr.f32.mxu0 %v2393
        %3033 = vmatmul.mubr.f32.gmra.mrb[0].mxu0 %v2392
        %v3034 = vpop.f32.mrb[0].mxu0
        %v3035 = vadd.f32 %v2810, %v3034
        %v3036 = vpop.f32.mrb[0].mxu0
        %3037 = vmatprep.mubr.f32.mxu0 %v2396
        %3038 = vmatmul.mubr.f32.gmra.mrb[0].mxu0 %v2395
        %v3039 = vpop.f32.mrb[0].mxu0
        %v3040 = vadd.f32 %v2815, %v3039
        %v3041 = vpop.f32.mrb[0].mxu0
        %3042 = vmatprep.mubr.f32.mxu0 %v2399
        %3043 = vmatmul.mubr.f32.gmra.mrb[0].mxu0 %v2398
        %v3044 = vpop.f32.mrb[0].mxu0
        %v3045 = vadd.f32 %v2820, %v3044
        %v3046 = vpop.f32.mrb[0].mxu0
        %3047 = vmatprep.mubr.f32.mxu0 %v2402
        %3048 = vmatmul.mubr.f32.gmra.mrb[0].mxu0 %v2401
        %v3049 = vpop.f32.mrb[0].mxu0
        %v3050 = vadd.f32 %v2825, %v3049
        %v3051 = vpop.f32.mrb[0].mxu0
        %3052 = vmatprep.mubr.f32.mxu0 %v2405
        %3053 = vmatmul.mubr.f32.gmra.mrb[0].mxu0 %v2404
        %v3054 = vpop.f32.mrb[0].mxu0
        %v3055 = vadd.f32 %v2830, %v3054
        %v3056 = vpop.f32.mrb[0].mxu0
        %3057 = vmatprep.mubr.f32.mxu0 %v2408
        %3058 = vmatmul.mubr.f32.gmra.mrb[0].mxu0 %v2407
        %v3059 = vpop.f32.mrb[0].mxu0
        %v3060 = vadd.f32 %v2835, %v3059
        %v3061 = vpop.f32.mrb[0].mxu0
        %3062 = vmatprep.mubr.f32.mxu0 %v2411
        %3063 = vmatmul.mubr.f32.gmra.mrb[0].mxu0 %v2410
        %v3064 = vpop.f32.mrb[0].mxu0
        %v3065 = vadd.f32 %v2840, %v3064
        %v3066 = vpop.f32.mrb[0].mxu0
        %3067 = vmatprep.mubr.f32.mxu0 %v2414
        %3068 = vmatmul.mubr.f32.gmra.mrb[0].mxu0 %v2413
        %v3069 = vpop.f32.mrb[0].mxu0
        %v3070 = vadd.f32 %v2845, %v3069
        %v3071 = vpop.f32.mrb[0].mxu0
        %3072 = vmatprep.mubr.f32.mxu0 %v2417
        %3073 = vmatmul.mubr.f32.gmra.mrb[0].mxu0 %v2416
        %v3074 = vpop.f32.mrb[0].mxu0
        %v3075 = vadd.f32 %v2850, %v3074
        %v3076 = vpop.f32.mrb[0].mxu0
        %3077 = vmatprep.mubr.f32.mxu0 %v2420
        %3078 = vmatmul.mubr.f32.gmra.mrb[0].mxu0 %v2419
        %v3079 = vpop.f32.mrb[0].mxu0
        %v3080 = vadd.f32 %v2855, %v3079
        %v3081 = vpop.f32.mrb[0].mxu0
        %3082 = vmatprep.mubr.f32.mxu0 %v2423
        %3083 = vmatmul.mubr.f32.gmra.mrb[0].mxu0 %v2422
        %v3084 = vpop.f32.mrb[0].mxu0
        %v3085 = vadd.f32 %v2860, %v3084
        %v3086 = vpop.f32.mrb[0].mxu0
        %3087 = vmatprep.mubr.f32.mxu0 %v2426
        %3088 = vmatmul.mubr.f32.gmra.mrb[0].mxu0 %v2425
        %v3089 = vpop.f32.mrb[0].mxu0
        %v3090 = vadd.f32 %v2865, %v3089
        %v3091 = vpop.f32.mrb[0].mxu0
        %3092 = vmatprep.mubr.f32.mxu0 %v2429
        %3093 = vmatmul.mubr.f32.gmra.mrb[0].mxu0 %v2428
        %v3094 = vpop.f32.mrb[0].mxu0
        %v3095 = vadd.f32 %v2870, %v3094
        %v3096 = vpop.f32.mrb[0].mxu0
        %3097 = vmatprep.mubr.f32.mxu0 %v2432
        %3098 = vmatmul.mubr.f32.gmra.mrb[0].mxu0 %v2431
        %v3099 = vpop.f32.mrb[0].mxu0
        %v3100 = vadd.f32 %v2875, %v3099
        %v3101 = vpop.f32.mrb[0].mxu0
        %3102 = vmatprep.mubr.f32.mxu0 %v2435
        %3103 = vmatmul.mubr.f32.gmra.mrb[0].mxu0 %v2434
        %v3104 = vpop.f32.mrb[0].mxu0
        %v3105 = vadd.f32 %v2880, %v3104
        %v3106 = vpop.f32.mrb[0].mxu0
        %3107 = vmatprep.mubr.f32.mxu0 %v2438
        %3108 = vmatmul.mubr.f32.gmra.mrb[0].mxu0 %v2437
        %v3109 = vpop.f32.mrb[0].mxu0
        %v3110 = vadd.f32 %v2885, %v3109
        %v3111 = vpop.f32.mrb[0].mxu0
        %3112 = vmatprep.mubr.f32.mxu0 %v2441
        %3113 = vmatmul.mubr.f32.gmra.mrb[0].mxu0 %v2440
        %v3114 = vpop.f32.mrb[0].mxu0
        %v3115 = vadd.f32 %v2890, %v3114
        %v3116 = vpop.f32.mrb[0].mxu0
        %3117 = vmatprep.mubr.f32.mxu0 %v2444
        %3118 = vmatmul.mubr.f32.gmra.mrb[0].mxu0 %v2443
        %v3119 = vpop.f32.mrb[0].mxu0
        %v3120 = vadd.f32 %v2895, %v3119
        %v3121 = vpop.f32.mrb[0].mxu0
        %3122 = vmatprep.mubr.f32.mxu0 %v2447
        %3123 = vmatmul.mubr.f32.gmra.mrb[0].mxu0 %v2446
        %v3124 = vpop.f32.mrb[0].mxu0
        %v3125 = vadd.f32 %v2900, %v3124
        %v3126 = vpop.f32.mrb[0].mxu0
        %3127 = vmatprep.mubr.f32.mxu0 %v2450
        %3128 = vmatmul.mubr.f32.gmra.mrb[0].mxu0 %v2449
        %v3129 = vpop.f32.mrb[0].mxu0
        %v3130 = vadd.f32 %v2905, %v3129
        %v3131 = vpop.f32.mrb[0].mxu0
        %3132 = vdwg.mxu0
        %3133 = vmatprep.subr.mxu0 0.0
        %3134 = vmatpush1.msra.mxu0 %v322
        %3135 = vmatprep.subr.mxu0 0.0
        %3136 = vmatpush1.msra.mxu0 %v323
        %3137 = vmatprep.subr.mxu0 0.0
        %3138 = vmatpush1.msra.mxu0 %v324
        %3139 = vmatprep.subr.mxu0 0.0
        %3140 = vmatpush1.msra.mxu0 %v325
        %3141 = vmatprep.subr.mxu0 0.0
        %3142 = vmatpush1.msra.mxu0 %v326
        %3143 = vmatprep.subr.mxu0 0.0
        %3144 = vmatpush1.msra.mxu0 %v327
        %3145 = vmatprep.subr.mxu0 0.0
        %3146 = vmatpush1.msra.mxu0 %v328
        %3147 = vmatprep.subr.mxu0 0.0
        %3148 = vmatpush1.msra.mxu0 %v329
        %3149 = vmatprep.subr.mxu0 0.0
        %3150 = vmatpush1.msra.mxu0 %v330
        %3151 = vmatprep.subr.mxu0 0.0
        %3152 = vmatpush1.msra.mxu0 %v331
        %3153 = vmatprep.subr.mxu0 0.0
        %3154 = vmatpush1.msra.mxu0 %v332
        %3155 = vmatprep.subr.mxu0 0.0
        %3156 = vmatpush1.msra.mxu0 %v333
        %3157 = vmatprep.subr.mxu0 0.0
        %3158 = vmatpush1.msra.mxu0 %v334
        %3159 = vmatprep.subr.mxu0 0.0
        %3160 = vmatpush1.msra.mxu0 %v335
        %3161 = vmatprep.subr.mxu0 0.0
        %3162 = vmatpush1.msra.mxu0 %v336
        %3163 = vmatprep.subr.mxu0 0.0
        %3164 = vmatpush1.msra.mxu0 %v337
        %3165 = vmatprep.subr.mxu0 0.0
        %3166 = vmatpush1.msra.mxu0 0.0
        %3167 = vmatprep.subr.mxu0 0.0
        %3168 = vmatpush1.msra.mxu0 0.0
        %3169 = vmatprep.subr.mxu0 0.0
        %3170 = vmatpush1.msra.mxu0 0.0
        %3171 = vmatprep.subr.mxu0 0.0
        %3172 = vmatpush1.msra.mxu0 0.0
        %3173 = vmatprep.subr.mxu0 0.0
        %3174 = vmatpush1.msra.mxu0 0.0
        %3175 = vmatprep.subr.mxu0 0.0
        %3176 = vmatpush1.msra.mxu0 0.0
        %3177 = vmatprep.subr.mxu0 0.0
        %3178 = vmatpush1.msra.mxu0 0.0
        %3179 = vmatprep.subr.mxu0 0.0
        %3180 = vmatpush1.msra.mxu0 0.0
        %3181 = vmatprep.subr.mxu0 0.0
        %3182 = vmatpush1.msra.mxu0 0.0
        %3183 = vmatprep.subr.mxu0 0.0
        %3184 = vmatpush1.msra.mxu0 0.0
        %3185 = vmatprep.subr.mxu0 0.0
        %3186 = vmatpush1.msra.mxu0 0.0
        %3187 = vmatprep.subr.mxu0 0.0
        %3188 = vmatpush1.msra.mxu0 0.0
        %3189 = vmatprep.subr.mxu0 0.0
        %3190 = vmatpush1.msra.mxu0 0.0
        %3191 = vmatprep.subr.mxu0 0.0
        %3192 = vmatpush1.msra.mxu0 0.0
        %3193 = vmatprep.subr.mxu0 0.0
        %3194 = vmatpush1.msra.mxu0 0.0
        %3195 = vmatprep.subr.mxu0 0.0
        %3196 = vmatpush1.msra.mxu0 0.0
        %3197 = vmatprep.mubr.f32.mxu0 0.0
        %3198 = vmatmul.mubr.f32.gmra.mrb[0].mxu0 %v2358
        %v3199 = vpop.f32.mrb[0].mxu0
        %v3200 = vadd.f32 %v2975, %v3199
        %v3201 = vpop.f32.mrb[0].mxu0
        %3202 = vmatprep.mubr.f32.mxu0 0.0
        %3203 = vmatmul.mubr.f32.gmra.mrb[0].mxu0 %v2361
        %v3204 = vpop.f32.mrb[0].mxu0
        %v3205 = vadd.f32 %v2980, %v3204
        %v3206 = vpop.f32.mrb[0].mxu0
        %3207 = vmatprep.mubr.f32.mxu0 0.0
        %3208 = vmatmul.mubr.f32.gmra.mrb[0].mxu0 %v2364
        %v3209 = vpop.f32.mrb[0].mxu0
        %v3210 = vadd.f32 %v2985, %v3209
        %v3211 = vpop.f32.mrb[0].mxu0
        %3212 = vmatprep.mubr.f32.mxu0 0.0
        %3213 = vmatmul.mubr.f32.gmra.mrb[0].mxu0 %v2367
        %v3214 = vpop.f32.mrb[0].mxu0
        %v3215 = vadd.f32 %v2990, %v3214
        %v3216 = vpop.f32.mrb[0].mxu0
        %3217 = vmatprep.mubr.f32.mxu0 0.0
        %3218 = vmatmul.mubr.f32.gmra.mrb[0].mxu0 %v2370
        %v3219 = vpop.f32.mrb[0].mxu0
        %v3220 = vadd.f32 %v2995, %v3219
        %v3221 = vpop.f32.mrb[0].mxu0
        %3222 = vmatprep.mubr.f32.mxu0 0.0
        %3223 = vmatmul.mubr.f32.gmra.mrb[0].mxu0 %v2373
        %v3224 = vpop.f32.mrb[0].mxu0
        %v3225 = vadd.f32 %v3000, %v3224
        %v3226 = vpop.f32.mrb[0].mxu0
        %3227 = vmatprep.mubr.f32.mxu0 0.0
        %3228 = vmatmul.mubr.f32.gmra.mrb[0].mxu0 %v2376
        %v3229 = vpop.f32.mrb[0].mxu0
        %v3230 = vadd.f32 %v3005, %v3229
        %v3231 = vpop.f32.mrb[0].mxu0
        %3232 = vmatprep.mubr.f32.mxu0 0.0
        %3233 = vmatmul.mubr.f32.gmra.mrb[0].mxu0 %v2379
        %v3234 = vpop.f32.mrb[0].mxu0
        %v3235 = vadd.f32 %v3010, %v3234
        %v3236 = vpop.f32.mrb[0].mxu0
        %3237 = vmatprep.mubr.f32.mxu0 0.0
        %3238 = vmatmul.mubr.f32.gmra.mrb[0].mxu0 %v2382
        %v3239 = vpop.f32.mrb[0].mxu0
        %v3240 = vadd.f32 %v3015, %v3239
        %v3241 = vpop.f32.mrb[0].mxu0
        %3242 = vmatprep.mubr.f32.mxu0 0.0
        %3243 = vmatmul.mubr.f32.gmra.mrb[0].mxu0 %v2385
        %v3244 = vpop.f32.mrb[0].mxu0
        %v3245 = vadd.f32 %v3020, %v3244
        %v3246 = vpop.f32.mrb[0].mxu0
        %3247 = vmatprep.mubr.f32.mxu0 0.0
        %3248 = vmatmul.mubr.f32.gmra.mrb[0].mxu0 %v2388
        %v3249 = vpop.f32.mrb[0].mxu0
        %v3250 = vadd.f32 %v3025, %v3249
        %v3251 = vpop.f32.mrb[0].mxu0
        %3252 = vmatprep.mubr.f32.mxu0 0.0
        %3253 = vmatmul.mubr.f32.gmra.mrb[0].mxu0 %v2391
        %v3254 = vpop.f32.mrb[0].mxu0
        %v3255 = vadd.f32 %v3030, %v3254
        %v3256 = vpop.f32.mrb[0].mxu0
        %3257 = vmatprep.mubr.f32.mxu0 0.0
        %3258 = vmatmul.mubr.f32.gmra.mrb[0].mxu0 %v2394
        %v3259 = vpop.f32.mrb[0].mxu0
        %v3260 = vadd.f32 %v3035, %v3259
        %v3261 = vpop.f32.mrb[0].mxu0
        %3262 = vmatprep.mubr.f32.mxu0 0.0
        %3263 = vmatmul.mubr.f32.gmra.mrb[0].mxu0 %v2397
        %v3264 = vpop.f32.mrb[0].mxu0
        %v3265 = vadd.f32 %v3040, %v3264
        %v3266 = vpop.f32.mrb[0].mxu0
        %3267 = vmatprep.mubr.f32.mxu0 0.0
        %3268 = vmatmul.mubr.f32.gmra.mrb[0].mxu0 %v2400
        %v3269 = vpop.f32.mrb[0].mxu0
        %v3270 = vadd.f32 %v3045, %v3269
        %v3271 = vpop.f32.mrb[0].mxu0
        %3272 = vmatprep.mubr.f32.mxu0 0.0
        %3273 = vmatmul.mubr.f32.gmra.mrb[0].mxu0 %v2403
        %v3274 = vpop.f32.mrb[0].mxu0
        %v3275 = vadd.f32 %v3050, %v3274
        %v3276 = vpop.f32.mrb[0].mxu0
        %3277 = vmatprep.mubr.f32.mxu0 0.0
        %3278 = vmatmul.mubr.f32.gmra.mrb[0].mxu0 %v2406
        %v3279 = vpop.f32.mrb[0].mxu0
        %v3280 = vadd.f32 %v3055, %v3279
        %v3281 = vpop.f32.mrb[0].mxu0
        %3282 = vmatprep.mubr.f32.mxu0 0.0
        %3283 = vmatmul.mubr.f32.gmra.mrb[0].mxu0 %v2409
        %v3284 = vpop.f32.mrb[0].mxu0
        %v3285 = vadd.f32 %v3060, %v3284
        %v3286 = vpop.f32.mrb[0].mxu0
        %3287 = vmatprep.mubr.f32.mxu0 0.0
        %3288 = vmatmul.mubr.f32.gmra.mrb[0].mxu0 %v2412
        %v3289 = vpop.f32.mrb[0].mxu0
        %v3290 = vadd.f32 %v3065, %v3289
        %v3291 = vpop.f32.mrb[0].mxu0
        %3292 = vmatprep.mubr.f32.mxu0 0.0
        %3293 = vmatmul.mubr.f32.gmra.mrb[0].mxu0 %v2415
        %v3294 = vpop.f32.mrb[0].mxu0
        %v3295 = vadd.f32 %v3070, %v3294
        %v3296 = vpop.f32.mrb[0].mxu0
        %3297 = vmatprep.mubr.f32.mxu0 0.0
        %3298 = vmatmul.mubr.f32.gmra.mrb[0].mxu0 %v2418
        %v3299 = vpop.f32.mrb[0].mxu0
        %v3300 = vadd.f32 %v3075, %v3299
        %v3301 = vpop.f32.mrb[0].mxu0
        %3302 = vmatprep.mubr.f32.mxu0 0.0
        %3303 = vmatmul.mubr.f32.gmra.mrb[0].mxu0 %v2421
        %v3304 = vpop.f32.mrb[0].mxu0
        %v3305 = vadd.f32 %v3080, %v3304
        %v3306 = vpop.f32.mrb[0].mxu0
        %3307 = vmatprep.mubr.f32.mxu0 0.0
        %3308 = vmatmul.mubr.f32.gmra.mrb[0].mxu0 %v2424
        %v3309 = vpop.f32.mrb[0].mxu0
        %v3310 = vadd.f32 %v3085, %v3309
        %v3311 = vpop.f32.mrb[0].mxu0
        %3312 = vmatprep.mubr.f32.mxu0 0.0
        %3313 = vmatmul.mubr.f32.gmra.mrb[0].mxu0 %v2427
        %v3314 = vpop.f32.mrb[0].mxu0
        %v3315 = vadd.f32 %v3090, %v3314
        %v3316 = vpop.f32.mrb[0].mxu0
        %3317 = vmatprep.mubr.f32.mxu0 0.0
        %3318 = vmatmul.mubr.f32.gmra.mrb[0].mxu0 %v2430
        %v3319 = vpop.f32.mrb[0].mxu0
        %v3320 = vadd.f32 %v3095, %v3319
        %v3321 = vpop.f32.mrb[0].mxu0
        %3322 = vmatprep.mubr.f32.mxu0 0.0
        %3323 = vmatmul.mubr.f32.gmra.mrb[0].mxu0 %v2433
        %v3324 = vpop.f32.mrb[0].mxu0
        %v3325 = vadd.f32 %v3100, %v3324
        %v3326 = vpop.f32.mrb[0].mxu0
        %3327 = vmatprep.mubr.f32.mxu0 0.0
        %3328 = vmatmul.mubr.f32.gmra.mrb[0].mxu0 %v2436
        %v3329 = vpop.f32.mrb[0].mxu0
        %v3330 = vadd.f32 %v3105, %v3329
        %v3331 = vpop.f32.mrb[0].mxu0
        %3332 = vmatprep.mubr.f32.mxu0 0.0
        %3333 = vmatmul.mubr.f32.gmra.mrb[0].mxu0 %v2439
        %v3334 = vpop.f32.mrb[0].mxu0
        %v3335 = vadd.f32 %v3110, %v3334
        %v3336 = vpop.f32.mrb[0].mxu0
        %3337 = vmatprep.mubr.f32.mxu0 0.0
        %3338 = vmatmul.mubr.f32.gmra.mrb[0].mxu0 %v2442
        %v3339 = vpop.f32.mrb[0].mxu0
        %v3340 = vadd.f32 %v3115, %v3339
        %v3341 = vpop.f32.mrb[0].mxu0
        %3342 = vmatprep.mubr.f32.mxu0 0.0
        %3343 = vmatmul.mubr.f32.gmra.mrb[0].mxu0 %v2445
        %v3344 = vpop.f32.mrb[0].mxu0
        %v3345 = vadd.f32 %v3120, %v3344
        %v3346 = vpop.f32.mrb[0].mxu0
        %3347 = vmatprep.mubr.f32.mxu0 0.0
        %3348 = vmatmul.mubr.f32.gmra.mrb[0].mxu0 %v2448
        %v3349 = vpop.f32.mrb[0].mxu0
        %v3350 = vadd.f32 %v3125, %v3349
        %v3351 = vpop.f32.mrb[0].mxu0
        %3352 = vmatprep.mubr.f32.mxu0 0.0
        %3353 = vmatmul.mubr.f32.gmra.mrb[0].mxu0 %v2451
        %v3354 = vpop.f32.mrb[0].mxu0
        %v3355 = vadd.f32 %v3130, %v3354
        %v3356 = vpop.f32.mrb[0].mxu0
        %3357 = vdwg.mxu0
        %v3358 = vld [vmem:[#allocation2 + $0x60] sm:$0xff]
        %v3359 = vld [vmem:[#allocation2 + $0x68] sm:$0xff]
        %v3360 = vld [vmem:[#allocation2 + $0x70] sm:$0xff]
        %v3361 = vld [vmem:[#allocation2 + $0x78] sm:$0xff]
        %v3362 = vld [vmem:[#allocation2 + $0x80] sm:$0xff]
        %v3363 = vld [vmem:[#allocation2 + $0x88] sm:$0xff]
        %v3364 = vld [vmem:[#allocation2 + $0x90] sm:$0xff]
        %v3365 = vld [vmem:[#allocation2 + $0x98] sm:$0xff]
        %v3366 = vld [vmem:[#allocation2 + $0xa0] sm:$0xff]
        %v3367 = vld [vmem:[#allocation2 + $0xa8] sm:$0xff]
        %v3368 = vld [vmem:[#allocation2 + $0xb0] sm:$0xff]
        %v3369 = vld [vmem:[#allocation2 + $0xb8] sm:$0xff]
        %v3370 = vld [vmem:[#allocation2 + $0xc0] sm:$0xff]
        %v3371 = vld [vmem:[#allocation2 + $0xc8] sm:$0xff]
        %v3372 = vld [vmem:[#allocation2 + $0xd0] sm:$0xff]
        %v3373 = vld [vmem:[#allocation2 + $0xd8] sm:$0xff]
        %v3374 = vld [vmem:[#allocation2 + $0xe0] sm:$0xff]
        %v3375 = vld [vmem:[#allocation2 + $0xe8] sm:$0xff]
        %v3376 = vld [vmem:[#allocation2 + $0xf0] sm:$0xff]
        %v3377 = vld [vmem:[#allocation2 + $0xf8] sm:$0xff]
        %v3378 = vld [vmem:[#allocation2 + $0x100] sm:$0xff]
        %v3379 = vld [vmem:[#allocation2 + $0x108] sm:$0xff]
        %v3380 = vld [vmem:[#allocation2 + $0x110] sm:$0xff]
        %v3381 = vld [vmem:[#allocation2 + $0x118] sm:$0xff]
        %v3382 = vld [vmem:[#allocation2 + $0x120] sm:$0xff]
        %v3383 = vld [vmem:[#allocation2 + $0x128] sm:$0xff]
        %v3384 = vld [vmem:[#allocation2 + $0x130] sm:$0xff]
        %v3385 = vld [vmem:[#allocation2 + $0x138] sm:$0xff]
        %v3386 = vld [vmem:[#allocation2 + $0x140] sm:$0xff]
        %v3387 = vld [vmem:[#allocation2 + $0x148] sm:$0xff]
        %v3388 = vld [vmem:[#allocation2 + $0x150] sm:$0xff]
        %v3389 = vld [vmem:[#allocation2 + $0x158] sm:$0xff]
        %v3390 = vld [vmem:[#allocation2 + $0x160] sm:$0xff]
        %v3391 = vld [vmem:[#allocation2 + $0x168] sm:$0xff]
        %v3392 = vld [vmem:[#allocation2 + $0x170] sm:$0xff]
        %v3393 = vld [vmem:[#allocation2 + $0x178] sm:$0xff]
        %v3394 = vld [vmem:[#allocation2 + $0x180] sm:$0xff]
        %v3395 = vld [vmem:[#allocation2 + $0x188] sm:$0xff]
        %v3396 = vld [vmem:[#allocation2 + $0x190] sm:$0xff]
        %v3397 = vld [vmem:[#allocation2 + $0x198] sm:$0xff]
        %v3398 = vld [vmem:[#allocation2 + $0x1a0] sm:$0xff]
        %v3399 = vld [vmem:[#allocation2 + $0x1a8] sm:$0xff]
        %v3400 = vld [vmem:[#allocation2 + $0x1b0] sm:$0xff]
        %v3401 = vld [vmem:[#allocation2 + $0x1b8] sm:$0xff]
        %v3402 = vld [vmem:[#allocation2 + $0x1c0] sm:$0xff]
        %v3403 = vld [vmem:[#allocation2 + $0x1c8] sm:$0xff]
        %v3404 = vld [vmem:[#allocation2 + $0x1d0] sm:$0xff]
        %v3405 = vld [vmem:[#allocation2 + $0x1d8] sm:$0xff]
        %v3406 = vld [vmem:[#allocation2 + $0x1e0] sm:$0xff]
        %v3407 = vld [vmem:[#allocation2 + $0x1e8] sm:$0xff]
        %v3408 = vld [vmem:[#allocation2 + $0x1f0] sm:$0xff]
        %v3409 = vld [vmem:[#allocation2 + $0x1f8] sm:$0xff]
        %v3410 = vld [vmem:[#allocation2 + $0x200] sm:$0xff]
        %v3411 = vld [vmem:[#allocation2 + $0x208] sm:$0xff]
        %v3412 = vld [vmem:[#allocation2 + $0x210] sm:$0xff]
        %v3413 = vld [vmem:[#allocation2 + $0x218] sm:$0xff]
        %v3414 = vld [vmem:[#allocation2 + $0x220] sm:$0xff]
        %v3415 = vld [vmem:[#allocation2 + $0x228] sm:$0xff]
        %v3416 = vld [vmem:[#allocation2 + $0x230] sm:$0xff]
        %v3417 = vld [vmem:[#allocation2 + $0x238] sm:$0xff]
        %v3418 = vld [vmem:[#allocation2 + $0x240] sm:$0xff]
        %v3419 = vld [vmem:[#allocation2 + $0x248] sm:$0xff]
        %v3420 = vld [vmem:[#allocation2 + $0x250] sm:$0xff]
        %v3421 = vld [vmem:[#allocation2 + $0x258] sm:$0xff]
        %v3422 = vld [vmem:[#allocation2 + $0x260] sm:$0xff]
        %v3423 = vld [vmem:[#allocation2 + $0x268] sm:$0xff]
        %v3424 = vld [vmem:[#allocation2 + $0x270] sm:$0xff]
        %v3425 = vld [vmem:[#allocation2 + $0x278] sm:$0xff]
        %v3426 = vld [vmem:[#allocation2 + $0x280] sm:$0xff]
        %v3427 = vld [vmem:[#allocation2 + $0x288] sm:$0xff]
        %v3428 = vld [vmem:[#allocation2 + $0x290] sm:$0xff]
        %v3429 = vld [vmem:[#allocation2 + $0x298] sm:$0xff]
        %v3430 = vld [vmem:[#allocation2 + $0x2a0] sm:$0xff]
        %v3431 = vld [vmem:[#allocation2 + $0x2a8] sm:$0xff]
        %v3432 = vld [vmem:[#allocation2 + $0x2b0] sm:$0xff]
        %v3433 = vld [vmem:[#allocation2 + $0x2b8] sm:$0xff]
        %v3434 = vld [vmem:[#allocation2 + $0x2c0] sm:$0xff]
        %v3435 = vld [vmem:[#allocation2 + $0x2c8] sm:$0xff]
        %v3436 = vld [vmem:[#allocation2 + $0x2d0] sm:$0xff]
        %v3437 = vld [vmem:[#allocation2 + $0x2d8] sm:$0xff]
        %v3438 = vld [vmem:[#allocation2 + $0x2e0] sm:$0xff]
        %v3439 = vld [vmem:[#allocation2 + $0x2e8] sm:$0xff]
        %v3440 = vld [vmem:[#allocation2 + $0x2f0] sm:$0xff]
        %v3441 = vld [vmem:[#allocation2 + $0x2f8] sm:$0xff]
        %v3442 = vld [vmem:[#allocation2 + $0x300] sm:$0xff]
        %v3443 = vld [vmem:[#allocation2 + $0x308] sm:$0xff]
        %v3444 = vld [vmem:[#allocation2 + $0x310] sm:$0xff]
        %v3445 = vld [vmem:[#allocation2 + $0x318] sm:$0xff]
        %v3446 = vld [vmem:[#allocation2 + $0x320] sm:$0xff]
        %v3447 = vld [vmem:[#allocation2 + $0x328] sm:$0xff]
        %v3448 = vld [vmem:[#allocation2 + $0x330] sm:$0xff]
        %v3449 = vld [vmem:[#allocation2 + $0x338] sm:$0xff]
        %v3450 = vld [vmem:[#allocation2 + $0x340] sm:$0xff]
        %v3451 = vld [vmem:[#allocation2 + $0x348] sm:$0xff]
        %v3452 = vld [vmem:[#allocation2 + $0x350] sm:$0xff]
        %v3453 = vld [vmem:[#allocation2 + $0x358] sm:$0xff]
        %3454 = vmatprep.subr.mxu0 0.0
        %3455 = vmatpush1.msra.mxu0 %v388
        %3456 = vmatprep.subr.mxu0 0.0
        %3457 = vmatpush1.msra.mxu0 %v389
        %3458 = vmatprep.subr.mxu0 0.0
        %3459 = vmatpush1.msra.mxu0 %v390
        %3460 = vmatprep.subr.mxu0 0.0
        %3461 = vmatpush1.msra.mxu0 %v391
        %3462 = vmatprep.subr.mxu0 0.0
        %3463 = vmatpush1.msra.mxu0 %v392
        %3464 = vmatprep.subr.mxu0 0.0
        %3465 = vmatpush1.msra.mxu0 %v393
        %3466 = vmatprep.subr.mxu0 0.0
        %3467 = vmatpush1.msra.mxu0 %v394
        %3468 = vmatprep.subr.mxu0 0.0
        %3469 = vmatpush1.msra.mxu0 %v395
        %3470 = vmatprep.subr.mxu0 0.0
        %3471 = vmatpush1.msra.mxu0 %v396
        %3472 = vmatprep.subr.mxu0 0.0
        %3473 = vmatpush1.msra.mxu0 %v397
        %3474 = vmatprep.subr.mxu0 0.0
        %3475 = vmatpush1.msra.mxu0 %v398
        %3476 = vmatprep.subr.mxu0 0.0
        %3477 = vmatpush1.msra.mxu0 %v399
        %3478 = vmatprep.subr.mxu0 0.0
        %3479 = vmatpush1.msra.mxu0 %v400
        %3480 = vmatprep.subr.mxu0 0.0
        %3481 = vmatpush1.msra.mxu0 %v401
        %3482 = vmatprep.subr.mxu0 0.0
        %3483 = vmatpush1.msra.mxu0 %v402
        %3484 = vmatprep.subr.mxu0 0.0
        %3485 = vmatpush1.msra.mxu0 %v403
        %3486 = vmatprep.subr.mxu0 0.0
        %3487 = vmatpush1.msra.mxu0 %v404
        %3488 = vmatprep.subr.mxu0 0.0
        %3489 = vmatpush1.msra.mxu0 %v405
        %3490 = vmatprep.subr.mxu0 0.0
        %3491 = vmatpush1.msra.mxu0 %v406
        %3492 = vmatprep.subr.mxu0 0.0
        %3493 = vmatpush1.msra.mxu0 %v407
        %3494 = vmatprep.subr.mxu0 0.0
        %3495 = vmatpush1.msra.mxu0 %v408
        %3496 = vmatprep.subr.mxu0 0.0
        %3497 = vmatpush1.msra.mxu0 %v409
        %3498 = vmatprep.subr.mxu0 0.0
        %3499 = vmatpush1.msra.mxu0 %v410
        %3500 = vmatprep.subr.mxu0 0.0
        %3501 = vmatpush1.msra.mxu0 %v411
        %3502 = vmatprep.subr.mxu0 0.0
        %3503 = vmatpush1.msra.mxu0 %v412
        %3504 = vmatprep.subr.mxu0 0.0
        %3505 = vmatpush1.msra.mxu0 %v413
        %3506 = vmatprep.subr.mxu0 0.0
        %3507 = vmatpush1.msra.mxu0 %v414
        %3508 = vmatprep.subr.mxu0 0.0
        %3509 = vmatpush1.msra.mxu0 %v415
        %3510 = vmatprep.subr.mxu0 0.0
        %3511 = vmatpush1.msra.mxu0 %v416
        %3512 = vmatprep.subr.mxu0 0.0
        %3513 = vmatpush1.msra.mxu0 %v417
        %3514 = vmatprep.subr.mxu0 0.0
        %3515 = vmatpush1.msra.mxu0 %v418
        %3516 = vmatprep.subr.mxu0 0.0
        %3517 = vmatpush1.msra.mxu0 %v419
        %3518 = vmatprep.mubr.f32.mxu0 %v3359
        %3519 = vmatmul.mubr.f32.gmra.mrb[0].mxu0 %v3358
        %v3520 = vpop.f32.mrb[0].mxu0
        %v3521 = vadd.f32 0.0, %v3520
        %v3522 = vpop.f32.mrb[0].mxu0
        %3523 = vmatprep.mubr.f32.mxu0 %v3362
        %3524 = vmatmul.mubr.f32.gmra.mrb[0].mxu0 %v3361
        %v3525 = vpop.f32.mrb[0].mxu0
        %v3526 = vadd.f32 0.0, %v3525
        %v3527 = vpop.f32.mrb[0].mxu0
        %3528 = vmatprep.mubr.f32.mxu0 %v3365
        %3529 = vmatmul.mubr.f32.gmra.mrb[0].mxu0 %v3364
        %v3530 = vpop.f32.mrb[0].mxu0
        %v3531 = vadd.f32 0.0, %v3530
        %v3532 = vpop.f32.mrb[0].mxu0
        %3533 = vmatprep.mubr.f32.mxu0 %v3368
        %3534 = vmatmul.mubr.f32.gmra.mrb[0].mxu0 %v3367
        %v3535 = vpop.f32.mrb[0].mxu0
        %v3536 = vadd.f32 0.0, %v3535
        %v3537 = vpop.f32.mrb[0].mxu0
        %3538 = vmatprep.mubr.f32.mxu0 %v3371
        %3539 = vmatmul.mubr.f32.gmra.mrb[0].mxu0 %v3370
        %v3540 = vpop.f32.mrb[0].mxu0
        %v3541 = vadd.f32 0.0, %v3540
        %v3542 = vpop.f32.mrb[0].mxu0
        %3543 = vmatprep.mubr.f32.mxu0 %v3374
        %3544 = vmatmul.mubr.f32.gmra.mrb[0].mxu0 %v3373
        %v3545 = vpop.f32.mrb[0].mxu0
        %v3546 = vadd.f32 0.0, %v3545
        %v3547 = vpop.f32.mrb[0].mxu0
        %3548 = vmatprep.mubr.f32.mxu0 %v3377
        %3549 = vmatmul.mubr.f32.gmra.mrb[0].mxu0 %v3376
        %v3550 = vpop.f32.mrb[0].mxu0
        %v3551 = vadd.f32 0.0, %v3550
        %v3552 = vpop.f32.mrb[0].mxu0
        %3553 = vmatprep.mubr.f32.mxu0 %v3380
        %3554 = vmatmul.mubr.f32.gmra.mrb[0].mxu0 %v3379
        %v3555 = vpop.f32.mrb[0].mxu0
        %v3556 = vadd.f32 0.0, %v3555
        %v3557 = vpop.f32.mrb[0].mxu0
        %3558 = vmatprep.mubr.f32.mxu0 %v3383
        %3559 = vmatmul.mubr.f32.gmra.mrb[0].mxu0 %v3382
        %v3560 = vpop.f32.mrb[0].mxu0
        %v3561 = vadd.f32 0.0, %v3560
        %v3562 = vpop.f32.mrb[0].mxu0
        %3563 = vmatprep.mubr.f32.mxu0 %v3386
        %3564 = vmatmul.mubr.f32.gmra.mrb[0].mxu0 %v3385
        %v3565 = vpop.f32.mrb[0].mxu0
        %v3566 = vadd.f32 0.0, %v3565
        %v3567 = vpop.f32.mrb[0].mxu0
        %3568 = vmatprep.mubr.f32.mxu0 %v3389
        %3569 = vmatmul.mubr.f32.gmra.mrb[0].mxu0 %v3388
        %v3570 = vpop.f32.mrb[0].mxu0
        %v3571 = vadd.f32 0.0, %v3570
        %v3572 = vpop.f32.mrb[0].mxu0
        %3573 = vmatprep.mubr.f32.mxu0 %v3392
        %3574 = vmatmul.mubr.f32.gmra.mrb[0].mxu0 %v3391
        %v3575 = vpop.f32.mrb[0].mxu0
        %v3576 = vadd.f32 0.0, %v3575
        %v3577 = vpop.f32.mrb[0].mxu0
        %3578 = vmatprep.mubr.f32.mxu0 %v3395
        %3579 = vmatmul.mubr.f32.gmra.mrb[0].mxu0 %v3394
        %v3580 = vpop.f32.mrb[0].mxu0
        %v3581 = vadd.f32 0.0, %v3580
        %v3582 = vpop.f32.mrb[0].mxu0
        %3583 = vmatprep.mubr.f32.mxu0 %v3398
        %3584 = vmatmul.mubr.f32.gmra.mrb[0].mxu0 %v3397
        %v3585 = vpop.f32.mrb[0].mxu0
        %v3586 = vadd.f32 0.0, %v3585
        %v3587 = vpop.f32.mrb[0].mxu0
        %3588 = vmatprep.mubr.f32.mxu0 %v3401
        %3589 = vmatmul.mubr.f32.gmra.mrb[0].mxu0 %v3400
        %v3590 = vpop.f32.mrb[0].mxu0
        %v3591 = vadd.f32 0.0, %v3590
        %v3592 = vpop.f32.mrb[0].mxu0
        %3593 = vmatprep.mubr.f32.mxu0 %v3404
        %3594 = vmatmul.mubr.f32.gmra.mrb[0].mxu0 %v3403
        %v3595 = vpop.f32.mrb[0].mxu0
        %v3596 = vadd.f32 0.0, %v3595
        %v3597 = vpop.f32.mrb[0].mxu0
        %3598 = vmatprep.mubr.f32.mxu0 %v3407
        %3599 = vmatmul.mubr.f32.gmra.mrb[0].mxu0 %v3406
        %v3600 = vpop.f32.mrb[0].mxu0
        %v3601 = vadd.f32 0.0, %v3600
        %v3602 = vpop.f32.mrb[0].mxu0
        %3603 = vmatprep.mubr.f32.mxu0 %v3410
        %3604 = vmatmul.mubr.f32.gmra.mrb[0].mxu0 %v3409
        %v3605 = vpop.f32.mrb[0].mxu0
        %v3606 = vadd.f32 0.0, %v3605
        %v3607 = vpop.f32.mrb[0].mxu0
        %3608 = vmatprep.mubr.f32.mxu0 %v3413
        %3609 = vmatmul.mubr.f32.gmra.mrb[0].mxu0 %v3412
        %v3610 = vpop.f32.mrb[0].mxu0
        %v3611 = vadd.f32 0.0, %v3610
        %v3612 = vpop.f32.mrb[0].mxu0
        %3613 = vmatprep.mubr.f32.mxu0 %v3416
        %3614 = vmatmul.mubr.f32.gmra.mrb[0].mxu0 %v3415
        %v3615 = vpop.f32.mrb[0].mxu0
        %v3616 = vadd.f32 0.0, %v3615
        %v3617 = vpop.f32.mrb[0].mxu0
        %3618 = vmatprep.mubr.f32.mxu0 %v3419
        %3619 = vmatmul.mubr.f32.gmra.mrb[0].mxu0 %v3418
        %v3620 = vpop.f32.mrb[0].mxu0
        %v3621 = vadd.f32 0.0, %v3620
        %v3622 = vpop.f32.mrb[0].mxu0
        %3623 = vmatprep.mubr.f32.mxu0 %v3422
        %3624 = vmatmul.mubr.f32.gmra.mrb[0].mxu0 %v3421
        %v3625 = vpop.f32.mrb[0].mxu0
        %v3626 = vadd.f32 0.0, %v3625
        %v3627 = vpop.f32.mrb[0].mxu0
        %3628 = vmatprep.mubr.f32.mxu0 %v3425
        %3629 = vmatmul.mubr.f32.gmra.mrb[0].mxu0 %v3424
        %v3630 = vpop.f32.mrb[0].mxu0
        %v3631 = vadd.f32 0.0, %v3630
        %v3632 = vpop.f32.mrb[0].mxu0
        %3633 = vmatprep.mubr.f32.mxu0 %v3428
        %3634 = vmatmul.mubr.f32.gmra.mrb[0].mxu0 %v3427
        %v3635 = vpop.f32.mrb[0].mxu0
        %v3636 = vadd.f32 0.0, %v3635
        %v3637 = vpop.f32.mrb[0].mxu0
        %3638 = vmatprep.mubr.f32.mxu0 %v3431
        %3639 = vmatmul.mubr.f32.gmra.mrb[0].mxu0 %v3430
        %v3640 = vpop.f32.mrb[0].mxu0
        %v3641 = vadd.f32 0.0, %v3640
        %v3642 = vpop.f32.mrb[0].mxu0
        %3643 = vmatprep.mubr.f32.mxu0 %v3434
        %3644 = vmatmul.mubr.f32.gmra.mrb[0].mxu0 %v3433
        %v3645 = vpop.f32.mrb[0].mxu0
        %v3646 = vadd.f32 0.0, %v3645
        %v3647 = vpop.f32.mrb[0].mxu0
        %3648 = vmatprep.mubr.f32.mxu0 %v3437
        %3649 = vmatmul.mubr.f32.gmra.mrb[0].mxu0 %v3436
        %v3650 = vpop.f32.mrb[0].mxu0
        %v3651 = vadd.f32 0.0, %v3650
        %v3652 = vpop.f32.mrb[0].mxu0
        %3653 = vmatprep.mubr.f32.mxu0 %v3440
        %3654 = vmatmul.mubr.f32.gmra.mrb[0].mxu0 %v3439
        %v3655 = vpop.f32.mrb[0].mxu0
        %v3656 = vadd.f32 0.0, %v3655
        %v3657 = vpop.f32.mrb[0].mxu0
        %3658 = vmatprep.mubr.f32.mxu0 %v3443
        %3659 = vmatmul.mubr.f32.gmra.mrb[0].mxu0 %v3442
        %v3660 = vpop.f32.mrb[0].mxu0
        %v3661 = vadd.f32 0.0, %v3660
        %v3662 = vpop.f32.mrb[0].mxu0
        %3663 = vmatprep.mubr.f32.mxu0 %v3446
        %3664 = vmatmul.mubr.f32.gmra.mrb[0].mxu0 %v3445
        %v3665 = vpop.f32.mrb[0].mxu0
        %v3666 = vadd.f32 0.0, %v3665
        %v3667 = vpop.f32.mrb[0].mxu0
        %3668 = vmatprep.mubr.f32.mxu0 %v3449
        %3669 = vmatmul.mubr.f32.gmra.mrb[0].mxu0 %v3448
        %v3670 = vpop.f32.mrb[0].mxu0
        %v3671 = vadd.f32 0.0, %v3670
        %v3672 = vpop.f32.mrb[0].mxu0
        %3673 = vmatprep.mubr.f32.mxu0 %v3452
        %3674 = vmatmul.mubr.f32.gmra.mrb[0].mxu0 %v3451
        %v3675 = vpop.f32.mrb[0].mxu0
        %v3676 = vadd.f32 0.0, %v3675
        %v3677 = vpop.f32.mrb[0].mxu0
        %3678 = vdwg.mxu0
        %3679 = vmatprep.subr.mxu0 0.0
        %3680 = vmatpush1.msra.mxu0 %v420
        %3681 = vmatprep.subr.mxu0 0.0
        %3682 = vmatpush1.msra.mxu0 %v421
        %3683 = vmatprep.subr.mxu0 0.0
        %3684 = vmatpush1.msra.mxu0 %v422
        %3685 = vmatprep.subr.mxu0 0.0
        %3686 = vmatpush1.msra.mxu0 %v423
        %3687 = vmatprep.subr.mxu0 0.0
        %3688 = vmatpush1.msra.mxu0 %v424
        %3689 = vmatprep.subr.mxu0 0.0
        %3690 = vmatpush1.msra.mxu0 %v425
        %3691 = vmatprep.subr.mxu0 0.0
        %3692 = vmatpush1.msra.mxu0 %v426
        %3693 = vmatprep.subr.mxu0 0.0
        %3694 = vmatpush1.msra.mxu0 %v427
        %3695 = vmatprep.subr.mxu0 0.0
        %3696 = vmatpush1.msra.mxu0 %v428
        %3697 = vmatprep.subr.mxu0 0.0
        %3698 = vmatpush1.msra.mxu0 %v429
        %3699 = vmatprep.subr.mxu0 0.0
        %3700 = vmatpush1.msra.mxu0 %v430
        %3701 = vmatprep.subr.mxu0 0.0
        %3702 = vmatpush1.msra.mxu0 %v431
        %3703 = vmatprep.subr.mxu0 0.0
        %3704 = vmatpush1.msra.mxu0 %v432
        %3705 = vmatprep.subr.mxu0 0.0
        %3706 = vmatpush1.msra.mxu0 %v433
        %3707 = vmatprep.subr.mxu0 0.0
        %3708 = vmatpush1.msra.mxu0 %v434
        %3709 = vmatprep.subr.mxu0 0.0
        %3710 = vmatpush1.msra.mxu0 %v435
        %3711 = vmatprep.subr.mxu0 0.0
        %3712 = vmatpush1.msra.mxu0 0.0
        %3713 = vmatprep.subr.mxu0 0.0
        %3714 = vmatpush1.msra.mxu0 0.0
        %3715 = vmatprep.subr.mxu0 0.0
        %3716 = vmatpush1.msra.mxu0 0.0
        %3717 = vmatprep.subr.mxu0 0.0
        %3718 = vmatpush1.msra.mxu0 0.0
        %3719 = vmatprep.subr.mxu0 0.0
        %3720 = vmatpush1.msra.mxu0 0.0
        %3721 = vmatprep.subr.mxu0 0.0
        %3722 = vmatpush1.msra.mxu0 0.0
        %3723 = vmatprep.subr.mxu0 0.0
        %3724 = vmatpush1.msra.mxu0 0.0
        %3725 = vmatprep.subr.mxu0 0.0
        %3726 = vmatpush1.msra.mxu0 0.0
        %3727 = vmatprep.subr.mxu0 0.0
        %3728 = vmatpush1.msra.mxu0 0.0
        %3729 = vmatprep.subr.mxu0 0.0
        %3730 = vmatpush1.msra.mxu0 0.0
        %3731 = vmatprep.subr.mxu0 0.0
        %3732 = vmatpush1.msra.mxu0 0.0
        %3733 = vmatprep.subr.mxu0 0.0
        %3734 = vmatpush1.msra.mxu0 0.0
        %3735 = vmatprep.subr.mxu0 0.0
        %3736 = vmatpush1.msra.mxu0 0.0
        %3737 = vmatprep.subr.mxu0 0.0
        %3738 = vmatpush1.msra.mxu0 0.0
        %3739 = vmatprep.subr.mxu0 0.0
        %3740 = vmatpush1.msra.mxu0 0.0
        %3741 = vmatprep.subr.mxu0 0.0
        %3742 = vmatpush1.msra.mxu0 0.0
        %3743 = vmatprep.mubr.f32.mxu0 0.0
        %3744 = vmatmul.mubr.f32.gmra.mrb[0].mxu0 %v3360
        %v3745 = vpop.f32.mrb[0].mxu0
        %v3746 = vadd.f32 %v3521, %v3745
        %v3747 = vpop.f32.mrb[0].mxu0
        %3748 = vmatprep.mubr.f32.mxu0 0.0
        %3749 = vmatmul.mubr.f32.gmra.mrb[0].mxu0 %v3363
        %v3750 = vpop.f32.mrb[0].mxu0
        %v3751 = vadd.f32 %v3526, %v3750
        %v3752 = vpop.f32.mrb[0].mxu0
        %3753 = vmatprep.mubr.f32.mxu0 0.0
        %3754 = vmatmul.mubr.f32.gmra.mrb[0].mxu0 %v3366
        %v3755 = vpop.f32.mrb[0].mxu0
        %v3756 = vadd.f32 %v3531, %v3755
        %v3757 = vpop.f32.mrb[0].mxu0
        %3758 = vmatprep.mubr.f32.mxu0 0.0
        %3759 = vmatmul.mubr.f32.gmra.mrb[0].mxu0 %v3369
        %v3760 = vpop.f32.mrb[0].mxu0
        %v3761 = vadd.f32 %v3536, %v3760
        %v3762 = vpop.f32.mrb[0].mxu0
        %3763 = vmatprep.mubr.f32.mxu0 0.0
        %3764 = vmatmul.mubr.f32.gmra.mrb[0].mxu0 %v3372
        %v3765 = vpop.f32.mrb[0].mxu0
        %v3766 = vadd.f32 %v3541, %v3765
        %v3767 = vpop.f32.mrb[0].mxu0
        %3768 = vmatprep.mubr.f32.mxu0 0.0
        %3769 = vmatmul.mubr.f32.gmra.mrb[0].mxu0 %v3375
        %v3770 = vpop.f32.mrb[0].mxu0
        %v3771 = vadd.f32 %v3546, %v3770
        %v3772 = vpop.f32.mrb[0].mxu0
        %3773 = vmatprep.mubr.f32.mxu0 0.0
        %3774 = vmatmul.mubr.f32.gmra.mrb[0].mxu0 %v3378
        %v3775 = vpop.f32.mrb[0].mxu0
        %v3776 = vadd.f32 %v3551, %v3775
        %v3777 = vpop.f32.mrb[0].mxu0
        %3778 = vmatprep.mubr.f32.mxu0 0.0
        %3779 = vmatmul.mubr.f32.gmra.mrb[0].mxu0 %v3381
        %v3780 = vpop.f32.mrb[0].mxu0
        %v3781 = vadd.f32 %v3556, %v3780
        %v3782 = vpop.f32.mrb[0].mxu0
        %3783 = vmatprep.mubr.f32.mxu0 0.0
        %3784 = vmatmul.mubr.f32.gmra.mrb[0].mxu0 %v3384
        %v3785 = vpop.f32.mrb[0].mxu0
        %v3786 = vadd.f32 %v3561, %v3785
        %v3787 = vpop.f32.mrb[0].mxu0
        %3788 = vmatprep.mubr.f32.mxu0 0.0
        %3789 = vmatmul.mubr.f32.gmra.mrb[0].mxu0 %v3387
        %v3790 = vpop.f32.mrb[0].mxu0
        %v3791 = vadd.f32 %v3566, %v3790
        %v3792 = vpop.f32.mrb[0].mxu0
        %3793 = vmatprep.mubr.f32.mxu0 0.0
        %3794 = vmatmul.mubr.f32.gmra.mrb[0].mxu0 %v3390
        %v3795 = vpop.f32.mrb[0].mxu0
        %v3796 = vadd.f32 %v3571, %v3795
        %v3797 = vpop.f32.mrb[0].mxu0
        %3798 = vmatprep.mubr.f32.mxu0 0.0
        %3799 = vmatmul.mubr.f32.gmra.mrb[0].mxu0 %v3393
        %v3800 = vpop.f32.mrb[0].mxu0
        %v3801 = vadd.f32 %v3576, %v3800
        %v3802 = vpop.f32.mrb[0].mxu0
        %3803 = vmatprep.mubr.f32.mxu0 0.0
        %3804 = vmatmul.mubr.f32.gmra.mrb[0].mxu0 %v3396
        %v3805 = vpop.f32.mrb[0].mxu0
        %v3806 = vadd.f32 %v3581, %v3805
        %v3807 = vpop.f32.mrb[0].mxu0
        %3808 = vmatprep.mubr.f32.mxu0 0.0
        %3809 = vmatmul.mubr.f32.gmra.mrb[0].mxu0 %v3399
        %v3810 = vpop.f32.mrb[0].mxu0
        %v3811 = vadd.f32 %v3586, %v3810
        %v3812 = vpop.f32.mrb[0].mxu0
        %3813 = vmatprep.mubr.f32.mxu0 0.0
        %3814 = vmatmul.mubr.f32.gmra.mrb[0].mxu0 %v3402
        %v3815 = vpop.f32.mrb[0].mxu0
        %v3816 = vadd.f32 %v3591, %v3815
        %v3817 = vpop.f32.mrb[0].mxu0
        %3818 = vmatprep.mubr.f32.mxu0 0.0
        %3819 = vmatmul.mubr.f32.gmra.mrb[0].mxu0 %v3405
        %v3820 = vpop.f32.mrb[0].mxu0
        %v3821 = vadd.f32 %v3596, %v3820
        %v3822 = vpop.f32.mrb[0].mxu0
        %3823 = vmatprep.mubr.f32.mxu0 0.0
        %3824 = vmatmul.mubr.f32.gmra.mrb[0].mxu0 %v3408
        %v3825 = vpop.f32.mrb[0].mxu0
        %v3826 = vadd.f32 %v3601, %v3825
        %v3827 = vpop.f32.mrb[0].mxu0
        %3828 = vmatprep.mubr.f32.mxu0 0.0
        %3829 = vmatmul.mubr.f32.gmra.mrb[0].mxu0 %v3411
        %v3830 = vpop.f32.mrb[0].mxu0
        %v3831 = vadd.f32 %v3606, %v3830
        %v3832 = vpop.f32.mrb[0].mxu0
        %3833 = vmatprep.mubr.f32.mxu0 0.0
        %3834 = vmatmul.mubr.f32.gmra.mrb[0].mxu0 %v3414
        %v3835 = vpop.f32.mrb[0].mxu0
        %v3836 = vadd.f32 %v3611, %v3835
        %v3837 = vpop.f32.mrb[0].mxu0
        %3838 = vmatprep.mubr.f32.mxu0 0.0
        %3839 = vmatmul.mubr.f32.gmra.mrb[0].mxu0 %v3417
        %v3840 = vpop.f32.mrb[0].mxu0
        %v3841 = vadd.f32 %v3616, %v3840
        %v3842 = vpop.f32.mrb[0].mxu0
        %3843 = vmatprep.mubr.f32.mxu0 0.0
        %3844 = vmatmul.mubr.f32.gmra.mrb[0].mxu0 %v3420
        %v3845 = vpop.f32.mrb[0].mxu0
        %v3846 = vadd.f32 %v3621, %v3845
        %v3847 = vpop.f32.mrb[0].mxu0
        %3848 = vmatprep.mubr.f32.mxu0 0.0
        %3849 = vmatmul.mubr.f32.gmra.mrb[0].mxu0 %v3423
        %v3850 = vpop.f32.mrb[0].mxu0
        %v3851 = vadd.f32 %v3626, %v3850
        %v3852 = vpop.f32.mrb[0].mxu0
        %3853 = vmatprep.mubr.f32.mxu0 0.0
        %3854 = vmatmul.mubr.f32.gmra.mrb[0].mxu0 %v3426
        %v3855 = vpop.f32.mrb[0].mxu0
        %v3856 = vadd.f32 %v3631, %v3855
        %v3857 = vpop.f32.mrb[0].mxu0
        %3858 = vmatprep.mubr.f32.mxu0 0.0
        %3859 = vmatmul.mubr.f32.gmra.mrb[0].mxu0 %v3429
        %v3860 = vpop.f32.mrb[0].mxu0
        %v3861 = vadd.f32 %v3636, %v3860
        %v3862 = vpop.f32.mrb[0].mxu0
        %3863 = vmatprep.mubr.f32.mxu0 0.0
        %3864 = vmatmul.mubr.f32.gmra.mrb[0].mxu0 %v3432
        %v3865 = vpop.f32.mrb[0].mxu0
        %v3866 = vadd.f32 %v3641, %v3865
        %v3867 = vpop.f32.mrb[0].mxu0
        %3868 = vmatprep.mubr.f32.mxu0 0.0
        %3869 = vmatmul.mubr.f32.gmra.mrb[0].mxu0 %v3435
        %v3870 = vpop.f32.mrb[0].mxu0
        %v3871 = vadd.f32 %v3646, %v3870
        %v3872 = vpop.f32.mrb[0].mxu0
        %3873 = vmatprep.mubr.f32.mxu0 0.0
        %3874 = vmatmul.mubr.f32.gmra.mrb[0].mxu0 %v3438
        %v3875 = vpop.f32.mrb[0].mxu0
        %v3876 = vadd.f32 %v3651, %v3875
        %v3877 = vpop.f32.mrb[0].mxu0
        %3878 = vmatprep.mubr.f32.mxu0 0.0
        %3879 = vmatmul.mubr.f32.gmra.mrb[0].mxu0 %v3441
        %v3880 = vpop.f32.mrb[0].mxu0
        %v3881 = vadd.f32 %v3656, %v3880
        %v3882 = vpop.f32.mrb[0].mxu0
        %3883 = vmatprep.mubr.f32.mxu0 0.0
        %3884 = vmatmul.mubr.f32.gmra.mrb[0].mxu0 %v3444
        %v3885 = vpop.f32.mrb[0].mxu0
        %v3886 = vadd.f32 %v3661, %v3885
        %v3887 = vpop.f32.mrb[0].mxu0
        %3888 = vmatprep.mubr.f32.mxu0 0.0
        %3889 = vmatmul.mubr.f32.gmra.mrb[0].mxu0 %v3447
        %v3890 = vpop.f32.mrb[0].mxu0
        %v3891 = vadd.f32 %v3666, %v3890
        %v3892 = vpop.f32.mrb[0].mxu0
        %3893 = vmatprep.mubr.f32.mxu0 0.0
        %3894 = vmatmul.mubr.f32.gmra.mrb[0].mxu0 %v3450
        %v3895 = vpop.f32.mrb[0].mxu0
        %v3896 = vadd.f32 %v3671, %v3895
        %v3897 = vpop.f32.mrb[0].mxu0
        %3898 = vmatprep.mubr.f32.mxu0 0.0
        %3899 = vmatmul.mubr.f32.gmra.mrb[0].mxu0 %v3453
        %v3900 = vpop.f32.mrb[0].mxu0
        %v3901 = vadd.f32 %v3676, %v3900
        %v3902 = vpop.f32.mrb[0].mxu0
        %3903 = vdwg.mxu0
        %v3904 = vadd.f32 %v3200, %v3746
        %v3905 = vadd.f32 %v3205, %v3751
        %v3906 = vadd.f32 %v3210, %v3756
        %v3907 = vadd.f32 %v3215, %v3761
        %v3908 = vadd.f32 %v3220, %v3766
        %v3909 = vadd.f32 %v3225, %v3771
        %v3910 = vadd.f32 %v3230, %v3776
        %v3911 = vadd.f32 %v3235, %v3781
        %v3912 = vadd.f32 %v3240, %v3786
        %v3913 = vadd.f32 %v3245, %v3791
        %v3914 = vadd.f32 %v3250, %v3796
        %v3915 = vadd.f32 %v3255, %v3801
        %v3916 = vadd.f32 %v3260, %v3806
        %v3917 = vadd.f32 %v3265, %v3811
        %v3918 = vadd.f32 %v3270, %v3816
        %v3919 = vadd.f32 %v3275, %v3821
        %v3920 = vadd.f32 %v3280, %v3826
        %v3921 = vadd.f32 %v3285, %v3831
        %v3922 = vadd.f32 %v3290, %v3836
        %v3923 = vadd.f32 %v3295, %v3841
        %v3924 = vadd.f32 %v3300, %v3846
        %v3925 = vadd.f32 %v3305, %v3851
        %v3926 = vadd.f32 %v3310, %v3856
        %v3927 = vadd.f32 %v3315, %v3861
        %v3928 = vadd.f32 %v3320, %v3866
        %v3929 = vadd.f32 %v3325, %v3871
        %v3930 = vadd.f32 %v3330, %v3876
        %v3931 = vadd.f32 %v3335, %v3881
        %v3932 = vadd.f32 %v3340, %v3886
        %v3933 = vadd.f32 %v3345, %v3891
        %v3934 = vadd.f32 %v3350, %v3896
        %v3935 = vadd.f32 %v3355, %v3901
        %v3937 = vlaneseq
        %v3938 = vshrl.u32 %v3937, 7
        %v3939 = vsub.s32 0, %v3938
        %v3940 = vrot.slane %v289, %v3939
        %v3942 = vadd.f32 %v3904, %v3940
        %v3943 = vadd.f32 %v3905, %v3940
        %v3944 = vadd.f32 %v3906, %v3940
        %v3945 = vadd.f32 %v3907, %v3940
        %v3946 = vadd.f32 %v3908, %v3940
        %v3947 = vadd.f32 %v3909, %v3940
        %v3948 = vadd.f32 %v3910, %v3940
        %v3949 = vadd.f32 %v3911, %v3940
        %v3950 = vadd.f32 %v3912, %v3940
        %v3951 = vadd.f32 %v3913, %v3940
        %v3952 = vadd.f32 %v3914, %v3940
        %v3953 = vadd.f32 %v3915, %v3940
        %v3954 = vadd.f32 %v3916, %v3940
        %v3955 = vadd.f32 %v3917, %v3940
        %v3956 = vadd.f32 %v3918, %v3940
        %v3957 = vadd.f32 %v3919, %v3940
        %v3958 = vadd.f32 %v3920, %v3940
        %v3959 = vadd.f32 %v3921, %v3940
        %v3960 = vadd.f32 %v3922, %v3940
        %v3961 = vadd.f32 %v3923, %v3940
        %v3962 = vadd.f32 %v3924, %v3940
        %v3963 = vadd.f32 %v3925, %v3940
        %v3964 = vadd.f32 %v3926, %v3940
        %v3965 = vadd.f32 %v3927, %v3940
        %v3966 = vadd.f32 %v3928, %v3940
        %v3967 = vadd.f32 %v3929, %v3940
        %v3968 = vadd.f32 %v3930, %v3940
        %v3969 = vadd.f32 %v3931, %v3940
        %v3970 = vadd.f32 %v3932, %v3940
        %v3971 = vadd.f32 %v3933, %v3940
        %v3972 = vadd.f32 %v3934, %v3940
        %v3973 = vadd.f32 %v3935, %v3940
        %v3974 = vxor.u32 %v3942, 2147483648
        %v3975 = vxor.u32 %v3943, 2147483648
        %v3976 = vxor.u32 %v3944, 2147483648
        %v3977 = vxor.u32 %v3945, 2147483648
        %v3978 = vxor.u32 %v3946, 2147483648
        %v3979 = vxor.u32 %v3947, 2147483648
        %v3980 = vxor.u32 %v3948, 2147483648
        %v3981 = vxor.u32 %v3949, 2147483648
        %v3982 = vxor.u32 %v3950, 2147483648
        %v3983 = vxor.u32 %v3951, 2147483648
        %v3984 = vxor.u32 %v3952, 2147483648
        %v3985 = vxor.u32 %v3953, 2147483648
        %v3986 = vxor.u32 %v3954, 2147483648
        %v3987 = vxor.u32 %v3955, 2147483648
        %v3988 = vxor.u32 %v3956, 2147483648
        %v3989 = vxor.u32 %v3957, 2147483648
        %v3990 = vxor.u32 %v3958, 2147483648
        %v3991 = vxor.u32 %v3959, 2147483648
        %v3992 = vxor.u32 %v3960, 2147483648
        %v3993 = vxor.u32 %v3961, 2147483648
        %v3994 = vxor.u32 %v3962, 2147483648
        %v3995 = vxor.u32 %v3963, 2147483648
        %v3996 = vxor.u32 %v3964, 2147483648
        %v3997 = vxor.u32 %v3965, 2147483648
        %v3998 = vxor.u32 %v3966, 2147483648
        %v3999 = vxor.u32 %v3967, 2147483648
        %v4000 = vxor.u32 %v3968, 2147483648
        %v4001 = vxor.u32 %v3969, 2147483648
        %v4002 = vxor.u32 %v3970, 2147483648
        %v4003 = vxor.u32 %v3971, 2147483648
        %v4004 = vxor.u32 %v3972, 2147483648
        %v4005 = vxor.u32 %v3973, 2147483648
        %v4006 = vmul.f32 %v3974, 1.442695
        %v4007 = vpow.pop %v4006
        %v4008 = vmul.f32 %v3975, 1.442695
        %v4009 = vpow.pop %v4008
        %v4010 = vmul.f32 %v3976, 1.442695
        %v4011 = vpow.pop %v4010
        %v4012 = vmul.f32 %v3977, 1.442695
        %v4013 = vpow.pop %v4012
        %v4014 = vmul.f32 %v3978, 1.442695
        %v4015 = vpow.pop %v4014
        %v4016 = vmul.f32 %v3979, 1.442695
        %v4017 = vpow.pop %v4016
        %v4018 = vmul.f32 %v3980, 1.442695
        %v4019 = vpow.pop %v4018
        %v4020 = vmul.f32 %v3981, 1.442695
        %v4021 = vpow.pop %v4020
        %v4022 = vmul.f32 %v3982, 1.442695
        %v4023 = vpow.pop %v4022
        %v4024 = vmul.f32 %v3983, 1.442695
        %v4025 = vpow.pop %v4024
        %v4026 = vmul.f32 %v3984, 1.442695
        %v4027 = vpow.pop %v4026
        %v4028 = vmul.f32 %v3985, 1.442695
        %v4029 = vpow.pop %v4028
        %v4030 = vmul.f32 %v3986, 1.442695
        %v4031 = vpow.pop %v4030
        %v4032 = vmul.f32 %v3987, 1.442695
        %v4033 = vpow.pop %v4032
        %v4034 = vmul.f32 %v3988, 1.442695
        %v4035 = vpow.pop %v4034
        %v4036 = vmul.f32 %v3989, 1.442695
        %v4037 = vpow.pop %v4036
        %v4038 = vmul.f32 %v3990, 1.442695
        %v4039 = vpow.pop %v4038
        %v4040 = vmul.f32 %v3991, 1.442695
        %v4041 = vpow.pop %v4040
        %v4042 = vmul.f32 %v3992, 1.442695
        %v4043 = vpow.pop %v4042
        %v4044 = vmul.f32 %v3993, 1.442695
        %v4045 = vpow.pop %v4044
        %v4046 = vmul.f32 %v3994, 1.442695
        %v4047 = vpow.pop %v4046
        %v4048 = vmul.f32 %v3995, 1.442695
        %v4049 = vpow.pop %v4048
        %v4050 = vmul.f32 %v3996, 1.442695
        %v4051 = vpow.pop %v4050
        %v4052 = vmul.f32 %v3997, 1.442695
        %v4053 = vpow.pop %v4052
        %v4054 = vmul.f32 %v3998, 1.442695
        %v4055 = vpow.pop %v4054
        %v4056 = vmul.f32 %v3999, 1.442695
        %v4057 = vpow.pop %v4056
        %v4058 = vmul.f32 %v4000, 1.442695
        %v4059 = vpow.pop %v4058
        %v4060 = vmul.f32 %v4001, 1.442695
        %v4061 = vpow.pop %v4060
        %v4062 = vmul.f32 %v4002, 1.442695
        %v4063 = vpow.pop %v4062
        %v4064 = vmul.f32 %v4003, 1.442695
        %v4065 = vpow.pop %v4064
        %v4066 = vmul.f32 %v4004, 1.442695
        %v4067 = vpow.pop %v4066
        %v4068 = vmul.f32 %v4005, 1.442695
        %v4069 = vpow.pop %v4068
        %v4070 = vadd.f32 %v4007, 1.0
        %v4071 = vadd.f32 %v4009, 1.0
        %v4072 = vadd.f32 %v4011, 1.0
        %v4073 = vadd.f32 %v4013, 1.0
        %v4074 = vadd.f32 %v4015, 1.0
        %v4075 = vadd.f32 %v4017, 1.0
        %v4076 = vadd.f32 %v4019, 1.0
        %v4077 = vadd.f32 %v4021, 1.0
        %v4078 = vadd.f32 %v4023, 1.0
        %v4079 = vadd.f32 %v4025, 1.0
        %v4080 = vadd.f32 %v4027, 1.0
        %v4081 = vadd.f32 %v4029, 1.0
        %v4082 = vadd.f32 %v4031, 1.0
        %v4083 = vadd.f32 %v4033, 1.0
        %v4084 = vadd.f32 %v4035, 1.0
        %v4085 = vadd.f32 %v4037, 1.0
        %v4086 = vadd.f32 %v4039, 1.0
        %v4087 = vadd.f32 %v4041, 1.0
        %v4088 = vadd.f32 %v4043, 1.0
        %v4089 = vadd.f32 %v4045, 1.0
        %v4090 = vadd.f32 %v4047, 1.0
        %v4091 = vadd.f32 %v4049, 1.0
        %v4092 = vadd.f32 %v4051, 1.0
        %v4093 = vadd.f32 %v4053, 1.0
        %v4094 = vadd.f32 %v4055, 1.0
        %v4095 = vadd.f32 %v4057, 1.0
        %v4096 = vadd.f32 %v4059, 1.0
        %v4097 = vadd.f32 %v4061, 1.0
        %v4098 = vadd.f32 %v4063, 1.0
        %v4099 = vadd.f32 %v4065, 1.0
        %v4100 = vadd.f32 %v4067, 1.0
        %v4101 = vadd.f32 %v4069, 1.0
        %v4102 = vrcp.pop %v4070
        %v4103 = vmul.f32 1.0, %v4102
        %v4104 = vrcp.pop %v4071
        %v4105 = vmul.f32 1.0, %v4104
        %v4106 = vrcp.pop %v4072
        %v4107 = vmul.f32 1.0, %v4106
        %v4108 = vrcp.pop %v4073
        %v4109 = vmul.f32 1.0, %v4108
        %v4110 = vrcp.pop %v4074
        %v4111 = vmul.f32 1.0, %v4110
        %v4112 = vrcp.pop %v4075
        %v4113 = vmul.f32 1.0, %v4112
        %v4114 = vrcp.pop %v4076
        %v4115 = vmul.f32 1.0, %v4114
        %v4116 = vrcp.pop %v4077
        %v4117 = vmul.f32 1.0, %v4116
        %v4118 = vrcp.pop %v4078
        %v4119 = vmul.f32 1.0, %v4118
        %v4120 = vrcp.pop %v4079
        %v4121 = vmul.f32 1.0, %v4120
        %v4122 = vrcp.pop %v4080
        %v4123 = vmul.f32 1.0, %v4122
        %v4124 = vrcp.pop %v4081
        %v4125 = vmul.f32 1.0, %v4124
        %v4126 = vrcp.pop %v4082
        %v4127 = vmul.f32 1.0, %v4126
        %v4128 = vrcp.pop %v4083
        %v4129 = vmul.f32 1.0, %v4128
        %v4130 = vrcp.pop %v4084
        %v4131 = vmul.f32 1.0, %v4130
        %v4132 = vrcp.pop %v4085
        %v4133 = vmul.f32 1.0, %v4132
        %v4134 = vrcp.pop %v4086
        %v4135 = vmul.f32 1.0, %v4134
        %v4136 = vrcp.pop %v4087
        %v4137 = vmul.f32 1.0, %v4136
        %v4138 = vrcp.pop %v4088
        %v4139 = vmul.f32 1.0, %v4138
        %v4140 = vrcp.pop %v4089
        %v4141 = vmul.f32 1.0, %v4140
        %v4142 = vrcp.pop %v4090
        %v4143 = vmul.f32 1.0, %v4142
        %v4144 = vrcp.pop %v4091
        %v4145 = vmul.f32 1.0, %v4144
        %v4146 = vrcp.pop %v4092
        %v4147 = vmul.f32 1.0, %v4146
        %v4148 = vrcp.pop %v4093
        %v4149 = vmul.f32 1.0, %v4148
        %v4150 = vrcp.pop %v4094
        %v4151 = vmul.f32 1.0, %v4150
        %v4152 = vrcp.pop %v4095
        %v4153 = vmul.f32 1.0, %v4152
        %v4154 = vrcp.pop %v4096
        %v4155 = vmul.f32 1.0, %v4154
        %v4156 = vrcp.pop %v4097
        %v4157 = vmul.f32 1.0, %v4156
        %v4158 = vrcp.pop %v4098
        %v4159 = vmul.f32 1.0, %v4158
        %v4160 = vrcp.pop %v4099
        %v4161 = vmul.f32 1.0, %v4160
        %v4162 = vrcp.pop %v4100
        %v4163 = vmul.f32 1.0, %v4162
        %v4164 = vrcp.pop %v4101
        %v4165 = vmul.f32 1.0, %v4164
        %v4166 = vmul.f32 %v3942, %v4103
        %v4167 = vmul.f32 %v3943, %v4105
        %v4168 = vmul.f32 %v3944, %v4107
        %v4169 = vmul.f32 %v3945, %v4109
        %v4170 = vmul.f32 %v3946, %v4111
        %v4171 = vmul.f32 %v3947, %v4113
        %v4172 = vmul.f32 %v3948, %v4115
        %v4173 = vmul.f32 %v3949, %v4117
        %v4174 = vmul.f32 %v3950, %v4119
        %v4175 = vmul.f32 %v3951, %v4121
        %v4176 = vmul.f32 %v3952, %v4123
        %v4177 = vmul.f32 %v3953, %v4125
        %v4178 = vmul.f32 %v3954, %v4127
        %v4179 = vmul.f32 %v3955, %v4129
        %v4180 = vmul.f32 %v3956, %v4131
        %v4181 = vmul.f32 %v3957, %v4133
        %v4182 = vmul.f32 %v3958, %v4135
        %v4183 = vmul.f32 %v3959, %v4137
        %v4184 = vmul.f32 %v3960, %v4139
        %v4185 = vmul.f32 %v3961, %v4141
        %v4186 = vmul.f32 %v3962, %v4143
        %v4187 = vmul.f32 %v3963, %v4145
        %v4188 = vmul.f32 %v3964, %v4147
        %v4189 = vmul.f32 %v3965, %v4149
        %v4190 = vmul.f32 %v3966, %v4151
        %v4191 = vmul.f32 %v3967, %v4153
        %v4192 = vmul.f32 %v3968, %v4155
        %v4193 = vmul.f32 %v3969, %v4157
        %v4194 = vmul.f32 %v3970, %v4159
        %v4195 = vmul.f32 %v3971, %v4161
        %v4196 = vmul.f32 %v3972, %v4163
        %v4197 = vmul.f32 %v3973, %v4165
        %4198 = vmatprep.subr.mxu0 0.0
        %4199 = vmatpush1.msra.mxu0 %v272
        %4200 = vmatprep.subr.mxu0 0.0
        %4201 = vmatpush1.msra.mxu0 %v273
        %4202 = vmatprep.subr.mxu0 0.0
        %4203 = vmatpush1.msra.mxu0 %v274
        %4204 = vmatprep.subr.mxu0 0.0
        %4205 = vmatpush1.msra.mxu0 %v275
        %4206 = vmatprep.subr.mxu0 0.0
        %4207 = vmatpush1.msra.mxu0 %v276
        %4208 = vmatprep.subr.mxu0 0.0
        %4209 = vmatpush1.msra.mxu0 %v277
        %4210 = vmatprep.subr.mxu0 0.0
        %4211 = vmatpush1.msra.mxu0 %v278
        %4212 = vmatprep.subr.mxu0 0.0
        %4213 = vmatpush1.msra.mxu0 %v279
        %4214 = vmatprep.subr.mxu0 0.0
        %4215 = vmatpush1.msra.mxu0 %v280
        %4216 = vmatprep.subr.mxu0 0.0
        %4217 = vmatpush1.msra.mxu0 %v281
        %4218 = vmatprep.subr.mxu0 0.0
        %4219 = vmatpush1.msra.mxu0 %v282
        %4220 = vmatprep.subr.mxu0 0.0
        %4221 = vmatpush1.msra.mxu0 %v283
        %4222 = vmatprep.subr.mxu0 0.0
        %4223 = vmatpush1.msra.mxu0 %v284
        %4224 = vmatprep.subr.mxu0 0.0
        %4225 = vmatpush1.msra.mxu0 %v285
        %4226 = vmatprep.subr.mxu0 0.0
        %4227 = vmatpush1.msra.mxu0 %v286
        %4228 = vmatprep.subr.mxu0 0.0
        %4229 = vmatpush1.msra.mxu0 %v287
        %4230 = vmatprep.subr.mxu0 0.0
        %4231 = vmatpush1.msra.mxu0 0.0
        %4232 = vmatprep.subr.mxu0 0.0
        %4233 = vmatpush1.msra.mxu0 0.0
        %4234 = vmatprep.subr.mxu0 0.0
        %4235 = vmatpush1.msra.mxu0 0.0
        %4236 = vmatprep.subr.mxu0 0.0
        %4237 = vmatpush1.msra.mxu0 0.0
        %4238 = vmatprep.subr.mxu0 0.0
        %4239 = vmatpush1.msra.mxu0 0.0
        %4240 = vmatprep.subr.mxu0 0.0
        %4241 = vmatpush1.msra.mxu0 0.0
        %4242 = vmatprep.subr.mxu0 0.0
        %4243 = vmatpush1.msra.mxu0 0.0
        %4244 = vmatprep.subr.mxu0 0.0
        %4245 = vmatpush1.msra.mxu0 0.0
        %4246 = vmatprep.subr.mxu0 0.0
        %4247 = vmatpush1.msra.mxu0 0.0
        %4248 = vmatprep.subr.mxu0 0.0
        %4249 = vmatpush1.msra.mxu0 0.0
        %4250 = vmatprep.subr.mxu0 0.0
        %4251 = vmatpush1.msra.mxu0 0.0
        %4252 = vmatprep.subr.mxu0 0.0
        %4253 = vmatpush1.msra.mxu0 0.0
        %4254 = vmatprep.subr.mxu0 0.0
        %4255 = vmatpush1.msra.mxu0 0.0
        %4256 = vmatprep.subr.mxu0 0.0
        %4257 = vmatpush1.msra.mxu0 0.0
        %4258 = vmatprep.subr.mxu0 0.0
        %4259 = vmatpush1.msra.mxu0 0.0
        %4260 = vmatprep.subr.mxu0 0.0
        %4261 = vmatpush1.msra.mxu0 0.0
        %4262 = vmatprep.mubr.f32.mxu0 0.0
        %4263 = vmatmul.mubr.f32.gmra.mrb[0].mxu0 %v4166
        %v4264 = vpop.f32.mrb[0].mxu0
        %v4265 = vadd.f32 %v1189, %v4264
        %v4266 = vpop.f32.mrb[0].mxu0
        %4267 = vmatprep.mubr.f32.mxu0 0.0
        %4268 = vmatmul.mubr.f32.gmra.mrb[0].mxu0 %v4167
        %v4269 = vpop.f32.mrb[0].mxu0
        %v4270 = vadd.f32 %v1189, %v4269
        %v4271 = vpop.f32.mrb[0].mxu0
        %4272 = vmatprep.mubr.f32.mxu0 0.0
        %4273 = vmatmul.mubr.f32.gmra.mrb[0].mxu0 %v4168
        %v4274 = vpop.f32.mrb[0].mxu0
        %v4275 = vadd.f32 %v1189, %v4274
        %v4276 = vpop.f32.mrb[0].mxu0
        %4277 = vmatprep.mubr.f32.mxu0 0.0
        %4278 = vmatmul.mubr.f32.gmra.mrb[0].mxu0 %v4169
        %v4279 = vpop.f32.mrb[0].mxu0
        %v4280 = vadd.f32 %v1189, %v4279
        %v4281 = vpop.f32.mrb[0].mxu0
        %4282 = vmatprep.mubr.f32.mxu0 0.0
        %4283 = vmatmul.mubr.f32.gmra.mrb[0].mxu0 %v4170
        %v4284 = vpop.f32.mrb[0].mxu0
        %v4285 = vadd.f32 %v1189, %v4284
        %v4286 = vpop.f32.mrb[0].mxu0
        %4287 = vmatprep.mubr.f32.mxu0 0.0
        %4288 = vmatmul.mubr.f32.gmra.mrb[0].mxu0 %v4171
        %v4289 = vpop.f32.mrb[0].mxu0
        %v4290 = vadd.f32 %v1189, %v4289
        %v4291 = vpop.f32.mrb[0].mxu0
        %4292 = vmatprep.mubr.f32.mxu0 0.0
        %4293 = vmatmul.mubr.f32.gmra.mrb[0].mxu0 %v4172
        %v4294 = vpop.f32.mrb[0].mxu0
        %v4295 = vadd.f32 %v1189, %v4294
        %v4296 = vpop.f32.mrb[0].mxu0
        %4297 = vmatprep.mubr.f32.mxu0 0.0
        %4298 = vmatmul.mubr.f32.gmra.mrb[0].mxu0 %v4173
        %v4299 = vpop.f32.mrb[0].mxu0
        %v4300 = vadd.f32 %v1189, %v4299
        %v4301 = vpop.f32.mrb[0].mxu0
        %4302 = vmatprep.mubr.f32.mxu0 0.0
        %4303 = vmatmul.mubr.f32.gmra.mrb[0].mxu0 %v4174
        %v4304 = vpop.f32.mrb[0].mxu0
        %v4305 = vadd.f32 %v1189, %v4304
        %v4306 = vpop.f32.mrb[0].mxu0
        %4307 = vmatprep.mubr.f32.mxu0 0.0
        %4308 = vmatmul.mubr.f32.gmra.mrb[0].mxu0 %v4175
        %v4309 = vpop.f32.mrb[0].mxu0
        %v4310 = vadd.f32 %v1189, %v4309
        %v4311 = vpop.f32.mrb[0].mxu0
        %4312 = vmatprep.mubr.f32.mxu0 0.0
        %4313 = vmatmul.mubr.f32.gmra.mrb[0].mxu0 %v4176
        %v4314 = vpop.f32.mrb[0].mxu0
        %v4315 = vadd.f32 %v1189, %v4314
        %v4316 = vpop.f32.mrb[0].mxu0
        %4317 = vmatprep.mubr.f32.mxu0 0.0
        %4318 = vmatmul.mubr.f32.gmra.mrb[0].mxu0 %v4177
        %v4319 = vpop.f32.mrb[0].mxu0
        %v4320 = vadd.f32 %v1189, %v4319
        %v4321 = vpop.f32.mrb[0].mxu0
        %4322 = vmatprep.mubr.f32.mxu0 0.0
        %4323 = vmatmul.mubr.f32.gmra.mrb[0].mxu0 %v4178
        %v4324 = vpop.f32.mrb[0].mxu0
        %v4325 = vadd.f32 %v1189, %v4324
        %v4326 = vpop.f32.mrb[0].mxu0
        %4327 = vmatprep.mubr.f32.mxu0 0.0
        %4328 = vmatmul.mubr.f32.gmra.mrb[0].mxu0 %v4179
        %v4329 = vpop.f32.mrb[0].mxu0
        %v4330 = vadd.f32 %v1189, %v4329
        %v4331 = vpop.f32.mrb[0].mxu0
        %4332 = vmatprep.mubr.f32.mxu0 0.0
        %4333 = vmatmul.mubr.f32.gmra.mrb[0].mxu0 %v4180
        %v4334 = vpop.f32.mrb[0].mxu0
        %v4335 = vadd.f32 %v1189, %v4334
        %v4336 = vpop.f32.mrb[0].mxu0
        %4337 = vmatprep.mubr.f32.mxu0 0.0
        %4338 = vmatmul.mubr.f32.gmra.mrb[0].mxu0 %v4181
        %v4339 = vpop.f32.mrb[0].mxu0
        %v4340 = vadd.f32 %v1189, %v4339
        %v4341 = vpop.f32.mrb[0].mxu0
        %4342 = vmatprep.mubr.f32.mxu0 0.0
        %4343 = vmatmul.mubr.f32.gmra.mrb[0].mxu0 %v4182
        %v4344 = vpop.f32.mrb[0].mxu0
        %v4345 = vadd.f32 %v1189, %v4344
        %v4346 = vpop.f32.mrb[0].mxu0
        %4347 = vmatprep.mubr.f32.mxu0 0.0
        %4348 = vmatmul.mubr.f32.gmra.mrb[0].mxu0 %v4183
        %v4349 = vpop.f32.mrb[0].mxu0
        %v4350 = vadd.f32 %v1189, %v4349
        %v4351 = vpop.f32.mrb[0].mxu0
        %4352 = vmatprep.mubr.f32.mxu0 0.0
        %4353 = vmatmul.mubr.f32.gmra.mrb[0].mxu0 %v4184
        %v4354 = vpop.f32.mrb[0].mxu0
        %v4355 = vadd.f32 %v1189, %v4354
        %v4356 = vpop.f32.mrb[0].mxu0
        %4357 = vmatprep.mubr.f32.mxu0 0.0
        %4358 = vmatmul.mubr.f32.gmra.mrb[0].mxu0 %v4185
        %v4359 = vpop.f32.mrb[0].mxu0
        %v4360 = vadd.f32 %v1189, %v4359
        %v4361 = vpop.f32.mrb[0].mxu0
        %4362 = vmatprep.mubr.f32.mxu0 0.0
        %4363 = vmatmul.mubr.f32.gmra.mrb[0].mxu0 %v4186
        %v4364 = vpop.f32.mrb[0].mxu0
        %v4365 = vadd.f32 %v1189, %v4364
        %v4366 = vpop.f32.mrb[0].mxu0
        %4367 = vmatprep.mubr.f32.mxu0 0.0
        %4368 = vmatmul.mubr.f32.gmra.mrb[0].mxu0 %v4187
        %v4369 = vpop.f32.mrb[0].mxu0
        %v4370 = vadd.f32 %v1189, %v4369
        %v4371 = vpop.f32.mrb[0].mxu0
        %4372 = vmatprep.mubr.f32.mxu0 0.0
        %4373 = vmatmul.mubr.f32.gmra.mrb[0].mxu0 %v4188
        %v4374 = vpop.f32.mrb[0].mxu0
        %v4375 = vadd.f32 %v1189, %v4374
        %v4376 = vpop.f32.mrb[0].mxu0
        %4377 = vmatprep.mubr.f32.mxu0 0.0
        %4378 = vmatmul.mubr.f32.gmra.mrb[0].mxu0 %v4189
        %v4379 = vpop.f32.mrb[0].mxu0
        %v4380 = vadd.f32 %v1189, %v4379
        %v4381 = vpop.f32.mrb[0].mxu0
        %4382 = vmatprep.mubr.f32.mxu0 0.0
        %4383 = vmatmul.mubr.f32.gmra.mrb[0].mxu0 %v4190
        %v4384 = vpop.f32.mrb[0].mxu0
        %v4385 = vadd.f32 %v1189, %v4384
        %v4386 = vpop.f32.mrb[0].mxu0
        %4387 = vmatprep.mubr.f32.mxu0 0.0
        %4388 = vmatmul.mubr.f32.gmra.mrb[0].mxu0 %v4191
        %v4389 = vpop.f32.mrb[0].mxu0
        %v4390 = vadd.f32 %v1189, %v4389
        %v4391 = vpop.f32.mrb[0].mxu0
        %4392 = vmatprep.mubr.f32.mxu0 0.0
        %4393 = vmatmul.mubr.f32.gmra.mrb[0].mxu0 %v4192
        %v4394 = vpop.f32.mrb[0].mxu0
        %v4395 = vadd.f32 %v1189, %v4394
        %v4396 = vpop.f32.mrb[0].mxu0
        %4397 = vmatprep.mubr.f32.mxu0 0.0
        %4398 = vmatmul.mubr.f32.gmra.mrb[0].mxu0 %v4193
        %v4399 = vpop.f32.mrb[0].mxu0
        %v4400 = vadd.f32 %v1189, %v4399
        %v4401 = vpop.f32.mrb[0].mxu0
        %4402 = vmatprep.mubr.f32.mxu0 0.0
        %4403 = vmatmul.mubr.f32.gmra.mrb[0].mxu0 %v4194
        %v4404 = vpop.f32.mrb[0].mxu0
        %v4405 = vadd.f32 %v1189, %v4404
        %v4406 = vpop.f32.mrb[0].mxu0
        %4407 = vmatprep.mubr.f32.mxu0 0.0
        %4408 = vmatmul.mubr.f32.gmra.mrb[0].mxu0 %v4195
        %v4409 = vpop.f32.mrb[0].mxu0
        %v4410 = vadd.f32 %v1189, %v4409
        %v4411 = vpop.f32.mrb[0].mxu0
        %4412 = vmatprep.mubr.f32.mxu0 0.0
        %4413 = vmatmul.mubr.f32.gmra.mrb[0].mxu0 %v4196
        %v4414 = vpop.f32.mrb[0].mxu0
        %v4415 = vadd.f32 %v1189, %v4414
        %v4416 = vpop.f32.mrb[0].mxu0
        %4417 = vmatprep.mubr.f32.mxu0 0.0
        %4418 = vmatmul.mubr.f32.gmra.mrb[0].mxu0 %v4197
        %v4419 = vpop.f32.mrb[0].mxu0
        %v4420 = vadd.f32 %v1189, %v4419
        %v4421 = vpop.f32.mrb[0].mxu0
        %4422 = vdwg.mxu0
        %v4423 = vxor.u32 %v4265, 2147483648
        %v4424 = vxor.u32 %v4270, 2147483648
        %v4425 = vxor.u32 %v4275, 2147483648
        %v4426 = vxor.u32 %v4280, 2147483648
        %v4427 = vxor.u32 %v4285, 2147483648
        %v4428 = vxor.u32 %v4290, 2147483648
        %v4429 = vxor.u32 %v4295, 2147483648
        %v4430 = vxor.u32 %v4300, 2147483648
        %v4431 = vxor.u32 %v4305, 2147483648
        %v4432 = vxor.u32 %v4310, 2147483648
        %v4433 = vxor.u32 %v4315, 2147483648
        %v4434 = vxor.u32 %v4320, 2147483648
        %v4435 = vxor.u32 %v4325, 2147483648
        %v4436 = vxor.u32 %v4330, 2147483648
        %v4437 = vxor.u32 %v4335, 2147483648
        %v4438 = vxor.u32 %v4340, 2147483648
        %v4439 = vxor.u32 %v4345, 2147483648
        %v4440 = vxor.u32 %v4350, 2147483648
        %v4441 = vxor.u32 %v4355, 2147483648
        %v4442 = vxor.u32 %v4360, 2147483648
        %v4443 = vxor.u32 %v4365, 2147483648
        %v4444 = vxor.u32 %v4370, 2147483648
        %v4445 = vxor.u32 %v4375, 2147483648
        %v4446 = vxor.u32 %v4380, 2147483648
        %v4447 = vxor.u32 %v4385, 2147483648
        %v4448 = vxor.u32 %v4390, 2147483648
        %v4449 = vxor.u32 %v4395, 2147483648
        %v4450 = vxor.u32 %v4400, 2147483648
        %v4451 = vxor.u32 %v4405, 2147483648
        %v4452 = vxor.u32 %v4410, 2147483648
        %v4453 = vxor.u32 %v4415, 2147483648
        %v4454 = vxor.u32 %v4420, 2147483648
        %v4455 = vmul.f32 %v4423, 1.442695
        %v4456 = vpow.pop %v4455
        %v4457 = vmul.f32 %v4424, 1.442695
        %v4458 = vpow.pop %v4457
        %v4459 = vmul.f32 %v4425, 1.442695
        %v4460 = vpow.pop %v4459
        %v4461 = vmul.f32 %v4426, 1.442695
        %v4462 = vpow.pop %v4461
        %v4463 = vmul.f32 %v4427, 1.442695
        %v4464 = vpow.pop %v4463
        %v4465 = vmul.f32 %v4428, 1.442695
        %v4466 = vpow.pop %v4465
        %v4467 = vmul.f32 %v4429, 1.442695
        %v4468 = vpow.pop %v4467
        %v4469 = vmul.f32 %v4430, 1.442695
        %v4470 = vpow.pop %v4469
        %v4471 = vmul.f32 %v4431, 1.442695
        %v4472 = vpow.pop %v4471
        %v4473 = vmul.f32 %v4432, 1.442695
        %v4474 = vpow.pop %v4473
        %v4475 = vmul.f32 %v4433, 1.442695
        %v4476 = vpow.pop %v4475
        %v4477 = vmul.f32 %v4434, 1.442695
        %v4478 = vpow.pop %v4477
        %v4479 = vmul.f32 %v4435, 1.442695
        %v4480 = vpow.pop %v4479
        %v4481 = vmul.f32 %v4436, 1.442695
        %v4482 = vpow.pop %v4481
        %v4483 = vmul.f32 %v4437, 1.442695
        %v4484 = vpow.pop %v4483
        %v4485 = vmul.f32 %v4438, 1.442695
        %v4486 = vpow.pop %v4485
        %v4487 = vmul.f32 %v4439, 1.442695
        %v4488 = vpow.pop %v4487
        %v4489 = vmul.f32 %v4440, 1.442695
        %v4490 = vpow.pop %v4489
        %v4491 = vmul.f32 %v4441, 1.442695
        %v4492 = vpow.pop %v4491
        %v4493 = vmul.f32 %v4442, 1.442695
        %v4494 = vpow.pop %v4493
        %v4495 = vmul.f32 %v4443, 1.442695
        %v4496 = vpow.pop %v4495
        %v4497 = vmul.f32 %v4444, 1.442695
        %v4498 = vpow.pop %v4497
        %v4499 = vmul.f32 %v4445, 1.442695
        %v4500 = vpow.pop %v4499
        %v4501 = vmul.f32 %v4446, 1.442695
        %v4502 = vpow.pop %v4501
        %v4503 = vmul.f32 %v4447, 1.442695
        %v4504 = vpow.pop %v4503
        %v4505 = vmul.f32 %v4448, 1.442695
        %v4506 = vpow.pop %v4505
        %v4507 = vmul.f32 %v4449, 1.442695
        %v4508 = vpow.pop %v4507
        %v4509 = vmul.f32 %v4450, 1.442695
        %v4510 = vpow.pop %v4509
        %v4511 = vmul.f32 %v4451, 1.442695
        %v4512 = vpow.pop %v4511
        %v4513 = vmul.f32 %v4452, 1.442695
        %v4514 = vpow.pop %v4513
        %v4515 = vmul.f32 %v4453, 1.442695
        %v4516 = vpow.pop %v4515
        %v4517 = vmul.f32 %v4454, 1.442695
        %v4518 = vpow.pop %v4517
        %v4519 = vadd.f32 %v4456, 1.0
        %v4520 = vadd.f32 %v4458, 1.0
        %v4521 = vadd.f32 %v4460, 1.0
        %v4522 = vadd.f32 %v4462, 1.0
        %v4523 = vadd.f32 %v4464, 1.0
        %v4524 = vadd.f32 %v4466, 1.0
        %v4525 = vadd.f32 %v4468, 1.0
        %v4526 = vadd.f32 %v4470, 1.0
        %v4527 = vadd.f32 %v4472, 1.0
        %v4528 = vadd.f32 %v4474, 1.0
        %v4529 = vadd.f32 %v4476, 1.0
        %v4530 = vadd.f32 %v4478, 1.0
        %v4531 = vadd.f32 %v4480, 1.0
        %v4532 = vadd.f32 %v4482, 1.0
        %v4533 = vadd.f32 %v4484, 1.0
        %v4534 = vadd.f32 %v4486, 1.0
        %v4535 = vadd.f32 %v4488, 1.0
        %v4536 = vadd.f32 %v4490, 1.0
        %v4537 = vadd.f32 %v4492, 1.0
        %v4538 = vadd.f32 %v4494, 1.0
        %v4539 = vadd.f32 %v4496, 1.0
        %v4540 = vadd.f32 %v4498, 1.0
        %v4541 = vadd.f32 %v4500, 1.0
        %v4542 = vadd.f32 %v4502, 1.0
        %v4543 = vadd.f32 %v4504, 1.0
        %v4544 = vadd.f32 %v4506, 1.0
        %v4545 = vadd.f32 %v4508, 1.0
        %v4546 = vadd.f32 %v4510, 1.0
        %v4547 = vadd.f32 %v4512, 1.0
        %v4548 = vadd.f32 %v4514, 1.0
        %v4549 = vadd.f32 %v4516, 1.0
        %v4550 = vadd.f32 %v4518, 1.0
        %v4551 = vrcp.pop %v4519
        %v4552 = vmul.f32 1.0, %v4551
        %v4553 = vrcp.pop %v4520
        %v4554 = vmul.f32 1.0, %v4553
        %v4555 = vrcp.pop %v4521
        %v4556 = vmul.f32 1.0, %v4555
        %v4557 = vrcp.pop %v4522
        %v4558 = vmul.f32 1.0, %v4557
        %v4559 = vrcp.pop %v4523
        %v4560 = vmul.f32 1.0, %v4559
        %v4561 = vrcp.pop %v4524
        %v4562 = vmul.f32 1.0, %v4561
        %v4563 = vrcp.pop %v4525
        %v4564 = vmul.f32 1.0, %v4563
        %v4565 = vrcp.pop %v4526
        %v4566 = vmul.f32 1.0, %v4565
        %v4567 = vrcp.pop %v4527
        %v4568 = vmul.f32 1.0, %v4567
        %v4569 = vrcp.pop %v4528
        %v4570 = vmul.f32 1.0, %v4569
        %v4571 = vrcp.pop %v4529
        %v4572 = vmul.f32 1.0, %v4571
        %v4573 = vrcp.pop %v4530
        %v4574 = vmul.f32 1.0, %v4573
        %v4575 = vrcp.pop %v4531
        %v4576 = vmul.f32 1.0, %v4575
        %v4577 = vrcp.pop %v4532
        %v4578 = vmul.f32 1.0, %v4577
        %v4579 = vrcp.pop %v4533
        %v4580 = vmul.f32 1.0, %v4579
        %v4581 = vrcp.pop %v4534
        %v4582 = vmul.f32 1.0, %v4581
        %v4583 = vrcp.pop %v4535
        %v4584 = vmul.f32 1.0, %v4583
        %v4585 = vrcp.pop %v4536
        %v4586 = vmul.f32 1.0, %v4585
        %v4587 = vrcp.pop %v4537
        %v4588 = vmul.f32 1.0, %v4587
        %v4589 = vrcp.pop %v4538
        %v4590 = vmul.f32 1.0, %v4589
        %v4591 = vrcp.pop %v4539
        %v4592 = vmul.f32 1.0, %v4591
        %v4593 = vrcp.pop %v4540
        %v4594 = vmul.f32 1.0, %v4593
        %v4595 = vrcp.pop %v4541
        %v4596 = vmul.f32 1.0, %v4595
        %v4597 = vrcp.pop %v4542
        %v4598 = vmul.f32 1.0, %v4597
        %v4599 = vrcp.pop %v4543
        %v4600 = vmul.f32 1.0, %v4599
        %v4601 = vrcp.pop %v4544
        %v4602 = vmul.f32 1.0, %v4601
        %v4603 = vrcp.pop %v4545
        %v4604 = vmul.f32 1.0, %v4603
        %v4605 = vrcp.pop %v4546
        %v4606 = vmul.f32 1.0, %v4605
        %v4607 = vrcp.pop %v4547
        %v4608 = vmul.f32 1.0, %v4607
        %v4609 = vrcp.pop %v4548
        %v4610 = vmul.f32 1.0, %v4609
        %v4611 = vrcp.pop %v4549
        %v4612 = vmul.f32 1.0, %v4611
        %v4613 = vrcp.pop %v4550
        %v4614 = vmul.f32 1.0, %v4613
        %v4615 = vmul.f32 %v4265, %v4552
        %v4616 = vmul.f32 %v4270, %v4554
        %v4617 = vmul.f32 %v4275, %v4556
        %v4618 = vmul.f32 %v4280, %v4558
        %v4619 = vmul.f32 %v4285, %v4560
        %v4620 = vmul.f32 %v4290, %v4562
        %v4621 = vmul.f32 %v4295, %v4564
        %v4622 = vmul.f32 %v4300, %v4566
        %v4623 = vmul.f32 %v4305, %v4568
        %v4624 = vmul.f32 %v4310, %v4570
        %v4625 = vmul.f32 %v4315, %v4572
        %v4626 = vmul.f32 %v4320, %v4574
        %v4627 = vmul.f32 %v4325, %v4576
        %v4628 = vmul.f32 %v4330, %v4578
        %v4629 = vmul.f32 %v4335, %v4580
        %v4630 = vmul.f32 %v4340, %v4582
        %v4631 = vmul.f32 %v4345, %v4584
        %v4632 = vmul.f32 %v4350, %v4586
        %v4633 = vmul.f32 %v4355, %v4588
        %v4634 = vmul.f32 %v4360, %v4590
        %v4635 = vmul.f32 %v4365, %v4592
        %v4636 = vmul.f32 %v4370, %v4594
        %v4637 = vmul.f32 %v4375, %v4596
        %v4638 = vmul.f32 %v4380, %v4598
        %v4639 = vmul.f32 %v4385, %v4600
        %v4640 = vmul.f32 %v4390, %v4602
        %v4641 = vmul.f32 %v4395, %v4604
        %v4642 = vmul.f32 %v4400, %v4606
        %v4643 = vmul.f32 %v4405, %v4608
        %v4644 = vmul.f32 %v4410, %v4610
        %v4645 = vmul.f32 %v4415, %v4612
        %v4646 = vmul.f32 %v4420, %v4614
        %4647 = vst [vmem:[#allocation2 + $0x38] sm:$0xff] %v4615
        %4648 = vst [vmem:[#allocation2 + $0x50] sm:$0xff] %v4616
        %4649 = vst [vmem:[#allocation2 + $0x68] sm:$0xff] %v4617
        %4650 = vst [vmem:[#allocation2 + $0x80] sm:$0xff] %v4618
        %4651 = vst [vmem:[#allocation2 + $0x98] sm:$0xff] %v4619
        %4652 = vst [vmem:[#allocation2 + $0xb0] sm:$0xff] %v4620
        %4653 = vst [vmem:[#allocation2 + $0xc8] sm:$0xff] %v4621
        %4654 = vst [vmem:[#allocation2 + $0xe0] sm:$0xff] %v4622
        %4655 = vst [vmem:[#allocation2 + $0xf8] sm:$0xff] %v4623
        %4656 = vst [vmem:[#allocation2 + $0x110] sm:$0xff] %v4624
        %4657 = vst [vmem:[#allocation2 + $0x128] sm:$0xff] %v4625
        %4658 = vst [vmem:[#allocation2 + $0x140] sm:$0xff] %v4626
        %4659 = vst [vmem:[#allocation2 + $0x158] sm:$0xff] %v4627
        %4660 = vst [vmem:[#allocation2 + $0x170] sm:$0xff] %v4628
        %4661 = vst [vmem:[#allocation2 + $0x188] sm:$0xff] %v4629
        %4662 = vst [vmem:[#allocation2 + $0x1a0] sm:$0xff] %v4630
        %4663 = vst [vmem:[#allocation2 + $0x1b8] sm:$0xff] %v4631
        %4664 = vst [vmem:[#allocation2 + $0x1d0] sm:$0xff] %v4632
        %4665 = vst [vmem:[#allocation2 + $0x1e8] sm:$0xff] %v4633
        %4666 = vst [vmem:[#allocation2 + $0x200] sm:$0xff] %v4634
        %4667 = vst [vmem:[#allocation2 + $0x218] sm:$0xff] %v4635
        %4668 = vst [vmem:[#allocation2 + $0x230] sm:$0xff] %v4636
        %4669 = vst [vmem:[#allocation2 + $0x248] sm:$0xff] %v4637
        %4670 = vst [vmem:[#allocation2 + $0x260] sm:$0xff] %v4638
        %4671 = vst [vmem:[#allocation2 + $0x278] sm:$0xff] %v4639
        %4672 = vst [vmem:[#allocation2 + $0x290] sm:$0xff] %v4640
        %4673 = vst [vmem:[#allocation2 + $0x2a8] sm:$0xff] %v4641
        %4674 = vst [vmem:[#allocation2 + $0x2c0] sm:$0xff] %v4642
        %4675 = vst [vmem:[#allocation2 + $0x2d8] sm:$0xff] %v4643
        %4676 = vst [vmem:[#allocation2 + $0x2f0] sm:$0xff] %v4644
        %4677 = vst [vmem:[#allocation2 + $0x308] sm:$0xff] %v4645
        %4678 = vst [vmem:[#allocation2 + $0x320] sm:$0xff] %v4646
        %v4679 = vld [vmem:[#allocation2 + $0x20] sm:$0x80]
        %v4680 = vld [vmem:[#allocation2 + $0x38] sm:$0xff]
        %v4681 = vld [vmem:[#allocation2 + $0x50] sm:$0xff]
        %v4682 = vld [vmem:[#allocation2 + $0x68] sm:$0xff]
        %v4683 = vld [vmem:[#allocation2 + $0x80] sm:$0xff]
        %v4684 = vld [vmem:[#allocation2 + $0x98] sm:$0xff]
        %v4685 = vld [vmem:[#allocation2 + $0xb0] sm:$0xff]
        %v4686 = vld [vmem:[#allocation2 + $0xc8] sm:$0xff]
        %v4687 = vld [vmem:[#allocation2 + $0xe0] sm:$0xff]
        %v4688 = vld [vmem:[#allocation2 + $0xf8] sm:$0xff]
        %v4689 = vld [vmem:[#allocation2 + $0x110] sm:$0xff]
        %v4690 = vld [vmem:[#allocation2 + $0x128] sm:$0xff]
        %v4691 = vld [vmem:[#allocation2 + $0x140] sm:$0xff]
        %v4692 = vld [vmem:[#allocation2 + $0x158] sm:$0xff]
        %v4693 = vld [vmem:[#allocation2 + $0x170] sm:$0xff]
        %v4694 = vld [vmem:[#allocation2 + $0x188] sm:$0xff]
        %v4695 = vld [vmem:[#allocation2 + $0x1a0] sm:$0xff]
        %v4696 = vld [vmem:[#allocation2 + $0x1b8] sm:$0xff]
        %v4697 = vld [vmem:[#allocation2 + $0x1d0] sm:$0xff]
        %v4698 = vld [vmem:[#allocation2 + $0x1e8] sm:$0xff]
        %v4699 = vld [vmem:[#allocation2 + $0x200] sm:$0xff]
        %v4700 = vld [vmem:[#allocation2 + $0x218] sm:$0xff]
        %v4701 = vld [vmem:[#allocation2 + $0x230] sm:$0xff]
        %v4702 = vld [vmem:[#allocation2 + $0x248] sm:$0xff]
        %v4703 = vld [vmem:[#allocation2 + $0x260] sm:$0xff]
        %v4704 = vld [vmem:[#allocation2 + $0x278] sm:$0xff]
        %v4705 = vld [vmem:[#allocation2 + $0x290] sm:$0xff]
        %v4706 = vld [vmem:[#allocation2 + $0x2a8] sm:$0xff]
        %v4707 = vld [vmem:[#allocation2 + $0x2c0] sm:$0xff]
        %v4708 = vld [vmem:[#allocation2 + $0x2d8] sm:$0xff]
        %v4709 = vld [vmem:[#allocation2 + $0x2f0] sm:$0xff]
        %v4710 = vld [vmem:[#allocation2 + $0x308] sm:$0xff]
        %v4711 = vld [vmem:[#allocation2 + $0x320] sm:$0x7f]
        %v4712 = vmul.f32 %v4679, %v1738
        %v4713 = vmul.f32 %v4680, %v1740
        %v4714 = vmul.f32 %v4681, %v1742
        %v4715 = vmul.f32 %v4682, %v1744
        %v4716 = vmul.f32 %v4683, %v1746
        %v4717 = vmul.f32 %v4684, %v1748
        %v4718 = vmul.f32 %v4685, %v1750
        %v4719 = vmul.f32 %v4686, %v1752
        %v4720 = vmul.f32 %v4687, %v1754
        %v4721 = vmul.f32 %v4688, %v1756
        %v4722 = vmul.f32 %v4689, %v1758
        %v4723 = vmul.f32 %v4690, %v1760
        %v4724 = vmul.f32 %v4691, %v1762
        %v4725 = vmul.f32 %v4692, %v1764
        %v4726 = vmul.f32 %v4693, %v1766
        %v4727 = vmul.f32 %v4694, %v1768
        %v4728 = vmul.f32 %v4695, %v1770
        %v4729 = vmul.f32 %v4696, %v1772
        %v4730 = vmul.f32 %v4697, %v1774
        %v4731 = vmul.f32 %v4698, %v1776
        %v4732 = vmul.f32 %v4699, %v1778
        %v4733 = vmul.f32 %v4700, %v1780
        %v4734 = vmul.f32 %v4701, %v1782
        %v4735 = vmul.f32 %v4702, %v1784
        %v4736 = vmul.f32 %v4703, %v1786
        %v4737 = vmul.f32 %v4704, %v1788
        %v4738 = vmul.f32 %v4705, %v1790
        %v4739 = vmul.f32 %v4706, %v1792
        %v4740 = vmul.f32 %v4707, %v1794
        %v4741 = vmul.f32 %v4708, %v1796
        %v4742 = vmul.f32 %v4709, %v1798
        %v4743 = vmul.f32 %v4710, %v1800
        %v4744 = vmul.f32 %v4711, %v1799
        %v4745 = vld [vmem:[#allocation2 + $0x38] sm:$0xfe]
        %v4746 = vld [vmem:[#allocation2 + $0x320] sm:$0xff]
        %v4747 = vld [vmem:[#allocation2 + $0x338] sm:$0x1]
        %v4748 = vmul.f32 %v4745, %v1903
        %v4749 = vmul.f32 %v4681, %v1905
        %v4750 = vmul.f32 %v4682, %v1907
        %v4751 = vmul.f32 %v4683, %v1909
        %v4752 = vmul.f32 %v4684, %v1911
        %v4753 = vmul.f32 %v4685, %v1913
        %v4754 = vmul.f32 %v4686, %v1915
        %v4755 = vmul.f32 %v4687, %v1917
        %v4756 = vmul.f32 %v4688, %v1919
        %v4757 = vmul.f32 %v4689, %v1921
        %v4758 = vmul.f32 %v4690, %v1923
        %v4759 = vmul.f32 %v4691, %v1925
        %v4760 = vmul.f32 %v4692, %v1927
        %v4761 = vmul.f32 %v4693, %v1929
        %v4762 = vmul.f32 %v4694, %v1931
        %v4763 = vmul.f32 %v4695, %v1933
        %v4764 = vmul.f32 %v4696, %v1935
        %v4765 = vmul.f32 %v4697, %v1937
        %v4766 = vmul.f32 %v4698, %v1939
        %v4767 = vmul.f32 %v4699, %v1941
        %v4768 = vmul.f32 %v4700, %v1943
        %v4769 = vmul.f32 %v4701, %v1945
        %v4770 = vmul.f32 %v4702, %v1947
        %v4771 = vmul.f32 %v4703, %v1949
        %v4772 = vmul.f32 %v4704, %v1951
        %v4773 = vmul.f32 %v4705, %v1953
        %v4774 = vmul.f32 %v4706, %v1955
        %v4775 = vmul.f32 %v4707, %v1957
        %v4776 = vmul.f32 %v4708, %v1959
        %v4777 = vmul.f32 %v4709, %v1961
        %v4778 = vmul.f32 %v4710, %v1963
        %v4779 = vmul.f32 %v4746, %v1965
        %v4780 = vmul.f32 %v4747, %v1964
        %v4814 = vrot.slane %v4712, 7
        %v4815 = vrot.slane %v4713, 7
        %v4816 = vsel %vm1902, %v4814, %v4815
        %v4817 = vrot.slane %v4714, 7
        %v4818 = vsel %vm1902, %v4815, %v4817
        %v4819 = vrot.slane %v4715, 7
        %v4820 = vsel %vm1902, %v4817, %v4819
        %v4821 = vrot.slane %v4716, 7
        %v4822 = vsel %vm1902, %v4819, %v4821
        %v4823 = vrot.slane %v4717, 7
        %v4824 = vsel %vm1902, %v4821, %v4823
        %v4825 = vrot.slane %v4718, 7
        %v4826 = vsel %vm1902, %v4823, %v4825
        %v4827 = vrot.slane %v4719, 7
        %v4828 = vsel %vm1902, %v4825, %v4827
        %v4829 = vrot.slane %v4720, 7
        %v4830 = vsel %vm1902, %v4827, %v4829
        %v4831 = vrot.slane %v4721, 7
        %v4832 = vsel %vm1902, %v4829, %v4831
        %v4833 = vrot.slane %v4722, 7
        %v4834 = vsel %vm1902, %v4831, %v4833
        %v4835 = vrot.slane %v4723, 7
        %v4836 = vsel %vm1902, %v4833, %v4835
        %v4837 = vrot.slane %v4724, 7
        %v4838 = vsel %vm1902, %v4835, %v4837
        %v4839 = vrot.slane %v4725, 7
        %v4840 = vsel %vm1902, %v4837, %v4839
        %v4841 = vrot.slane %v4726, 7
        %v4842 = vsel %vm1902, %v4839, %v4841
        %v4843 = vrot.slane %v4727, 7
        %v4844 = vsel %vm1902, %v4841, %v4843
        %v4845 = vrot.slane %v4728, 7
        %v4846 = vsel %vm1902, %v4843, %v4845
        %v4847 = vrot.slane %v4729, 7
        %v4848 = vsel %vm1902, %v4845, %v4847
        %v4849 = vrot.slane %v4730, 7
        %v4850 = vsel %vm1902, %v4847, %v4849
        %v4851 = vrot.slane %v4731, 7
        %v4852 = vsel %vm1902, %v4849, %v4851
        %v4853 = vrot.slane %v4732, 7
        %v4854 = vsel %vm1902, %v4851, %v4853
        %v4855 = vrot.slane %v4733, 7
        %v4856 = vsel %vm1902, %v4853, %v4855
        %v4857 = vrot.slane %v4734, 7
        %v4858 = vsel %vm1902, %v4855, %v4857
        %v4859 = vrot.slane %v4735, 7
        %v4860 = vsel %vm1902, %v4857, %v4859
        %v4861 = vrot.slane %v4736, 7
        %v4862 = vsel %vm1902, %v4859, %v4861
        %v4863 = vrot.slane %v4737, 7
        %v4864 = vsel %vm1902, %v4861, %v4863
        %v4865 = vrot.slane %v4738, 7
        %v4866 = vsel %vm1902, %v4863, %v4865
        %v4867 = vrot.slane %v4739, 7
        %v4868 = vsel %vm1902, %v4865, %v4867
        %v4869 = vrot.slane %v4740, 7
        %v4870 = vsel %vm1902, %v4867, %v4869
        %v4871 = vrot.slane %v4741, 7
        %v4872 = vsel %vm1902, %v4869, %v4871
        %v4873 = vrot.slane %v4742, 7
        %v4874 = vsel %vm1902, %v4871, %v4873
        %v4875 = vrot.slane %v4743, 7
        %v4876 = vsel %vm1902, %v4873, %v4875
        %v4877 = vrot.slane %v4744, 7
        %v4878 = vsel %vm1902, %v4875, %v4877
        %4911 = vst [vmem:[#allocation2 + $0x30] sm:$0xff] %v4816
        %4912 = vst [vmem:[#allocation2 + $0x48] sm:$0xff] %v4818
        %4913 = vst [vmem:[#allocation2 + $0x60] sm:$0xff] %v4820
        %4914 = vst [vmem:[#allocation2 + $0x78] sm:$0xff] %v4822
        %4915 = vst [vmem:[#allocation2 + $0x90] sm:$0xff] %v4824
        %4916 = vst [vmem:[#allocation2 + $0xa8] sm:$0xff] %v4826
        %4917 = vst [vmem:[#allocation2 + $0xc0] sm:$0xff] %v4828
        %4918 = vst [vmem:[#allocation2 + $0xd8] sm:$0xff] %v4830
        %4919 = vst [vmem:[#allocation2 + $0xf0] sm:$0xff] %v4832
        %4920 = vst [vmem:[#allocation2 + $0x108] sm:$0xff] %v4834
        %4921 = vst [vmem:[#allocation2 + $0x120] sm:$0xff] %v4836
        %4922 = vst [vmem:[#allocation2 + $0x138] sm:$0xff] %v4838
        %4923 = vst [vmem:[#allocation2 + $0x150] sm:$0xff] %v4840
        %4924 = vst [vmem:[#allocation2 + $0x168] sm:$0xff] %v4842
        %4925 = vst [vmem:[#allocation2 + $0x180] sm:$0xff] %v4844
        %4926 = vst [vmem:[#allocation2 + $0x198] sm:$0xff] %v4846
        %4927 = vst [vmem:[#allocation2 + $0x1b0] sm:$0xff] %v4848
        %4928 = vst [vmem:[#allocation2 + $0x1c8] sm:$0xff] %v4850
        %4929 = vst [vmem:[#allocation2 + $0x1e0] sm:$0xff] %v4852
        %4930 = vst [vmem:[#allocation2 + $0x1f8] sm:$0xff] %v4854
        %4931 = vst [vmem:[#allocation2 + $0x210] sm:$0xff] %v4856
        %4932 = vst [vmem:[#allocation2 + $0x228] sm:$0xff] %v4858
        %4933 = vst [vmem:[#allocation2 + $0x240] sm:$0xff] %v4860
        %4934 = vst [vmem:[#allocation2 + $0x258] sm:$0xff] %v4862
        %4935 = vst [vmem:[#allocation2 + $0x270] sm:$0xff] %v4864
        %4936 = vst [vmem:[#allocation2 + $0x288] sm:$0xff] %v4866
        %4937 = vst [vmem:[#allocation2 + $0x2a0] sm:$0xff] %v4868
        %4938 = vst [vmem:[#allocation2 + $0x2b8] sm:$0xff] %v4870
        %4939 = vst [vmem:[#allocation2 + $0x2d0] sm:$0xff] %v4872
        %4940 = vst [vmem:[#allocation2 + $0x2e8] sm:$0xff] %v4874
        %4941 = vst [vmem:[#allocation2 + $0x300] sm:$0xff] %v4876
        %4942 = vst [vmem:[#allocation2 + $0x318] sm:$0xff] %v4878
        %v4976 = vrot.slane %v4748, 1
        %v4977 = vrot.slane %v4749, 1
        %v4978 = vsel %vm1737, %v4976, %v4977
        %v4979 = vrot.slane %v4750, 1
        %v4980 = vsel %vm1737, %v4977, %v4979
        %v4981 = vrot.slane %v4751, 1
        %v4982 = vsel %vm1737, %v4979, %v4981
        %v4983 = vrot.slane %v4752, 1
        %v4984 = vsel %vm1737, %v4981, %v4983
        %v4985 = vrot.slane %v4753, 1
        %v4986 = vsel %vm1737, %v4983, %v4985
        %v4987 = vrot.slane %v4754, 1
        %v4988 = vsel %vm1737, %v4985, %v4987
        %v4989 = vrot.slane %v4755, 1
        %v4990 = vsel %vm1737, %v4987, %v4989
        %v4991 = vrot.slane %v4756, 1
        %v4992 = vsel %vm1737, %v4989, %v4991
        %v4993 = vrot.slane %v4757, 1
        %v4994 = vsel %vm1737, %v4991, %v4993
        %v4995 = vrot.slane %v4758, 1
        %v4996 = vsel %vm1737, %v4993, %v4995
        %v4997 = vrot.slane %v4759, 1
        %v4998 = vsel %vm1737, %v4995, %v4997
        %v4999 = vrot.slane %v4760, 1
        %v5000 = vsel %vm1737, %v4997, %v4999
        %v5001 = vrot.slane %v4761, 1
        %v5002 = vsel %vm1737, %v4999, %v5001
        %v5003 = vrot.slane %v4762, 1
        %v5004 = vsel %vm1737, %v5001, %v5003
        %v5005 = vrot.slane %v4763, 1
        %v5006 = vsel %vm1737, %v5003, %v5005
        %v5007 = vrot.slane %v4764, 1
        %v5008 = vsel %vm1737, %v5005, %v5007
        %v5009 = vrot.slane %v4765, 1
        %v5010 = vsel %vm1737, %v5007, %v5009
        %v5011 = vrot.slane %v4766, 1
        %v5012 = vsel %vm1737, %v5009, %v5011
        %v5013 = vrot.slane %v4767, 1
        %v5014 = vsel %vm1737, %v5011, %v5013
        %v5015 = vrot.slane %v4768, 1
        %v5016 = vsel %vm1737, %v5013, %v5015
        %v5017 = vrot.slane %v4769, 1
        %v5018 = vsel %vm1737, %v5015, %v5017
        %v5019 = vrot.slane %v4770, 1
        %v5020 = vsel %vm1737, %v5017, %v5019
        %v5021 = vrot.slane %v4771, 1
        %v5022 = vsel %vm1737, %v5019, %v5021
        %v5023 = vrot.slane %v4772, 1
        %v5024 = vsel %vm1737, %v5021, %v5023
        %v5025 = vrot.slane %v4773, 1
        %v5026 = vsel %vm1737, %v5023, %v5025
        %v5027 = vrot.slane %v4774, 1
        %v5028 = vsel %vm1737, %v5025, %v5027
        %v5029 = vrot.slane %v4775, 1
        %v5030 = vsel %vm1737, %v5027, %v5029
        %v5031 = vrot.slane %v4776, 1
        %v5032 = vsel %vm1737, %v5029, %v5031
        %v5033 = vrot.slane %v4777, 1
        %v5034 = vsel %vm1737, %v5031, %v5033
        %v5035 = vrot.slane %v4778, 1
        %v5036 = vsel %vm1737, %v5033, %v5035
        %v5037 = vrot.slane %v4779, 1
        %v5038 = vsel %vm1737, %v5035, %v5037
        %v5039 = vrot.slane %v4780, 1
        %v5040 = vsel %vm1737, %v5037, %v5039
        %5073 = vst [vmem:[#allocation2 + $0x40] sm:$0xff] %v4978
        %5074 = vst [vmem:[#allocation2 + $0x58] sm:$0xff] %v4980
        %5075 = vst [vmem:[#allocation2 + $0x70] sm:$0xff] %v4982
        %5076 = vst [vmem:[#allocation2 + $0x88] sm:$0xff] %v4984
        %5077 = vst [vmem:[#allocation2 + $0xa0] sm:$0xff] %v4986
        %5078 = vst [vmem:[#allocation2 + $0xb8] sm:$0xff] %v4988
        %5079 = vst [vmem:[#allocation2 + $0xd0] sm:$0xff] %v4990
        %5080 = vst [vmem:[#allocation2 + $0xe8] sm:$0xff] %v4992
        %5081 = vst [vmem:[#allocation2 + $0x100] sm:$0xff] %v4994
        %5082 = vst [vmem:[#allocation2 + $0x118] sm:$0xff] %v4996
        %5083 = vst [vmem:[#allocation2 + $0x130] sm:$0xff] %v4998
        %5084 = vst [vmem:[#allocation2 + $0x148] sm:$0xff] %v5000
        %5085 = vst [vmem:[#allocation2 + $0x160] sm:$0xff] %v5002
        %5086 = vst [vmem:[#allocation2 + $0x178] sm:$0xff] %v5004
        %5087 = vst [vmem:[#allocation2 + $0x190] sm:$0xff] %v5006
        %5088 = vst [vmem:[#allocation2 + $0x1a8] sm:$0xff] %v5008
        %5089 = vst [vmem:[#allocation2 + $0x1c0] sm:$0xff] %v5010
        %5090 = vst [vmem:[#allocation2 + $0x1d8] sm:$0xff] %v5012
        %5091 = vst [vmem:[#allocation2 + $0x1f0] sm:$0xff] %v5014
        %5092 = vst [vmem:[#allocation2 + $0x208] sm:$0xff] %v5016
        %5093 = vst [vmem:[#allocation2 + $0x220] sm:$0xff] %v5018
        %5094 = vst [vmem:[#allocation2 + $0x238] sm:$0xff] %v5020
        %5095 = vst [vmem:[#allocation2 + $0x250] sm:$0xff] %v5022
        %5096 = vst [vmem:[#allocation2 + $0x268] sm:$0xff] %v5024
        %5097 = vst [vmem:[#allocation2 + $0x280] sm:$0xff] %v5026
        %5098 = vst [vmem:[#allocation2 + $0x298] sm:$0xff] %v5028
        %5099 = vst [vmem:[#allocation2 + $0x2b0] sm:$0xff] %v5030
        %5100 = vst [vmem:[#allocation2 + $0x2c8] sm:$0xff] %v5032
        %5101 = vst [vmem:[#allocation2 + $0x2e0] sm:$0xff] %v5034
        %5102 = vst [vmem:[#allocation2 + $0x2f8] sm:$0xff] %v5036
        %5103 = vst [vmem:[#allocation2 + $0x310] sm:$0xff] %v5038
        %5104 = vst [vmem:[#allocation2 + $0x328] sm:$0xff] %v5040
        %v5105 = vld [vmem:[#allocation2] sm:$0xff]
        %v5106 = vld [vmem:[#allocation2 + $0x8] sm:$0xff]
        %v5107 = vld [vmem:[#allocation2 + $0x10] sm:$0xff]
        %v5108 = vld [vmem:[#allocation2 + $0x18] sm:$0xff]
        %v5109 = vld [vmem:[#allocation2 + $0x20] sm:$0xff]
        %v5110 = vld [vmem:[#allocation2 + $0x28] sm:$0xff]
        %v5111 = vld [vmem:[#allocation2 + $0x30] sm:$0xff]
        %v5112 = vld [vmem:[#allocation2 + $0x38] sm:$0xff]
        %v5113 = vld [vmem:[#allocation2 + $0x40] sm:$0xff]
        %v5114 = vld [vmem:[#allocation2 + $0x48] sm:$0xff]
        %v5115 = vld [vmem:[#allocation2 + $0x50] sm:$0xff]
        %v5116 = vld [vmem:[#allocation2 + $0x58] sm:$0xff]
        %v5117 = vld [vmem:[#allocation2 + $0x60] sm:$0xff]
        %v5118 = vld [vmem:[#allocation2 + $0x68] sm:$0xff]
        %v5119 = vld [vmem:[#allocation2 + $0x70] sm:$0xff]
        %v5120 = vld [vmem:[#allocation2 + $0x78] sm:$0xff]
        %v5121 = vld [vmem:[#allocation2 + $0x80] sm:$0xff]
        %v5122 = vld [vmem:[#allocation2 + $0x88] sm:$0xff]
        %v5123 = vld [vmem:[#allocation2 + $0x90] sm:$0xff]
        %v5124 = vld [vmem:[#allocation2 + $0x98] sm:$0xff]
        %v5125 = vld [vmem:[#allocation2 + $0xa0] sm:$0xff]
        %v5126 = vld [vmem:[#allocation2 + $0xa8] sm:$0xff]
        %v5127 = vld [vmem:[#allocation2 + $0xb0] sm:$0xff]
        %v5128 = vld [vmem:[#allocation2 + $0xb8] sm:$0xff]
        %v5129 = vld [vmem:[#allocation2 + $0xc0] sm:$0xff]
        %v5130 = vld [vmem:[#allocation2 + $0xc8] sm:$0xff]
        %v5131 = vld [vmem:[#allocation2 + $0xd0] sm:$0xff]
        %v5132 = vld [vmem:[#allocation2 + $0xd8] sm:$0xff]
        %v5133 = vld [vmem:[#allocation2 + $0xe0] sm:$0xff]
        %v5134 = vld [vmem:[#allocation2 + $0xe8] sm:$0xff]
        %v5135 = vld [vmem:[#allocation2 + $0xf0] sm:$0xff]
        %v5136 = vld [vmem:[#allocation2 + $0xf8] sm:$0xff]
        %v5137 = vld [vmem:[#allocation2 + $0x100] sm:$0xff]
        %v5138 = vld [vmem:[#allocation2 + $0x108] sm:$0xff]
        %v5139 = vld [vmem:[#allocation2 + $0x110] sm:$0xff]
        %v5140 = vld [vmem:[#allocation2 + $0x118] sm:$0xff]
        %v5141 = vld [vmem:[#allocation2 + $0x120] sm:$0xff]
        %v5142 = vld [vmem:[#allocation2 + $0x128] sm:$0xff]
        %v5143 = vld [vmem:[#allocation2 + $0x130] sm:$0xff]
        %v5144 = vld [vmem:[#allocation2 + $0x138] sm:$0xff]
        %v5145 = vld [vmem:[#allocation2 + $0x140] sm:$0xff]
        %v5146 = vld [vmem:[#allocation2 + $0x148] sm:$0xff]
        %v5147 = vld [vmem:[#allocation2 + $0x150] sm:$0xff]
        %v5148 = vld [vmem:[#allocation2 + $0x158] sm:$0xff]
        %v5149 = vld [vmem:[#allocation2 + $0x160] sm:$0xff]
        %v5150 = vld [vmem:[#allocation2 + $0x168] sm:$0xff]
        %v5151 = vld [vmem:[#allocation2 + $0x170] sm:$0xff]
        %v5152 = vld [vmem:[#allocation2 + $0x178] sm:$0xff]
        %v5153 = vld [vmem:[#allocation2 + $0x180] sm:$0xff]
        %v5154 = vld [vmem:[#allocation2 + $0x188] sm:$0xff]
        %v5155 = vld [vmem:[#allocation2 + $0x190] sm:$0xff]
        %v5156 = vld [vmem:[#allocation2 + $0x198] sm:$0xff]
        %v5157 = vld [vmem:[#allocation2 + $0x1a0] sm:$0xff]
        %v5158 = vld [vmem:[#allocation2 + $0x1a8] sm:$0xff]
        %v5159 = vld [vmem:[#allocation2 + $0x1b0] sm:$0xff]
        %v5160 = vld [vmem:[#allocation2 + $0x1b8] sm:$0xff]
        %v5161 = vld [vmem:[#allocation2 + $0x1c0] sm:$0xff]
        %v5162 = vld [vmem:[#allocation2 + $0x1c8] sm:$0xff]
        %v5163 = vld [vmem:[#allocation2 + $0x1d0] sm:$0xff]
        %v5164 = vld [vmem:[#allocation2 + $0x1d8] sm:$0xff]
        %v5165 = vld [vmem:[#allocation2 + $0x1e0] sm:$0xff]
        %v5166 = vld [vmem:[#allocation2 + $0x1e8] sm:$0xff]
        %v5167 = vld [vmem:[#allocation2 + $0x1f0] sm:$0xff]
        %v5168 = vld [vmem:[#allocation2 + $0x1f8] sm:$0xff]
        %v5169 = vld [vmem:[#allocation2 + $0x200] sm:$0xff]
        %v5170 = vld [vmem:[#allocation2 + $0x208] sm:$0xff]
        %v5171 = vld [vmem:[#allocation2 + $0x210] sm:$0xff]
        %v5172 = vld [vmem:[#allocation2 + $0x218] sm:$0xff]
        %v5173 = vld [vmem:[#allocation2 + $0x220] sm:$0xff]
        %v5174 = vld [vmem:[#allocation2 + $0x228] sm:$0xff]
        %v5175 = vld [vmem:[#allocation2 + $0x230] sm:$0xff]
        %v5176 = vld [vmem:[#allocation2 + $0x238] sm:$0xff]
        %v5177 = vld [vmem:[#allocation2 + $0x240] sm:$0xff]
        %v5178 = vld [vmem:[#allocation2 + $0x248] sm:$0xff]
        %v5179 = vld [vmem:[#allocation2 + $0x250] sm:$0xff]
        %v5180 = vld [vmem:[#allocation2 + $0x258] sm:$0xff]
        %v5181 = vld [vmem:[#allocation2 + $0x260] sm:$0xff]
        %v5182 = vld [vmem:[#allocation2 + $0x268] sm:$0xff]
        %v5183 = vld [vmem:[#allocation2 + $0x270] sm:$0xff]
        %v5184 = vld [vmem:[#allocation2 + $0x278] sm:$0xff]
        %v5185 = vld [vmem:[#allocation2 + $0x280] sm:$0xff]
        %v5186 = vld [vmem:[#allocation2 + $0x288] sm:$0xff]
        %v5187 = vld [vmem:[#allocation2 + $0x290] sm:$0xff]
        %v5188 = vld [vmem:[#allocation2 + $0x298] sm:$0xff]
        %v5189 = vld [vmem:[#allocation2 + $0x2a0] sm:$0xff]
        %v5190 = vld [vmem:[#allocation2 + $0x2a8] sm:$0xff]
        %v5191 = vld [vmem:[#allocation2 + $0x2b0] sm:$0xff]
        %v5192 = vld [vmem:[#allocation2 + $0x2b8] sm:$0xff]
        %v5193 = vld [vmem:[#allocation2 + $0x2c0] sm:$0xff]
        %v5194 = vld [vmem:[#allocation2 + $0x2c8] sm:$0xff]
        %v5195 = vld [vmem:[#allocation2 + $0x2d0] sm:$0xff]
        %v5196 = vld [vmem:[#allocation2 + $0x2d8] sm:$0xff]
        %v5197 = vld [vmem:[#allocation2 + $0x2e0] sm:$0xff]
        %v5198 = vld [vmem:[#allocation2 + $0x2e8] sm:$0xff]
        %v5199 = vld [vmem:[#allocation2 + $0x2f0] sm:$0xff]
        %v5200 = vld [vmem:[#allocation2 + $0x2f8] sm:$0xff]
        %v5201 = vld [vmem:[#allocation2 + $0x300] sm:$0xff]
        %v5202 = vld [vmem:[#allocation2 + $0x308] sm:$0xff]
        %v5203 = vld [vmem:[#allocation2 + $0x310] sm:$0xff]
        %v5204 = vld [vmem:[#allocation2 + $0x318] sm:$0xff]
        %v5205 = vld [vmem:[#allocation2 + $0x320] sm:$0xff]
        %v5206 = vld [vmem:[#allocation2 + $0x328] sm:$0xff]
        %5207 = vmatprep.subr.mxu0 0.0
        %5208 = vmatpush1.msra.mxu0 %v339
        %5209 = vmatprep.subr.mxu0 0.0
        %5210 = vmatpush1.msra.mxu0 %v340
        %5211 = vmatprep.subr.mxu0 0.0
        %5212 = vmatpush1.msra.mxu0 %v341
        %5213 = vmatprep.subr.mxu0 0.0
        %5214 = vmatpush1.msra.mxu0 %v342
        %5215 = vmatprep.subr.mxu0 0.0
        %5216 = vmatpush1.msra.mxu0 %v343
        %5217 = vmatprep.subr.mxu0 0.0
        %5218 = vmatpush1.msra.mxu0 %v344
        %5219 = vmatprep.subr.mxu0 0.0
        %5220 = vmatpush1.msra.mxu0 %v345
        %5221 = vmatprep.subr.mxu0 0.0
        %5222 = vmatpush1.msra.mxu0 %v346
        %5223 = vmatprep.subr.mxu0 0.0
        %5224 = vmatpush1.msra.mxu0 %v347
        %5225 = vmatprep.subr.mxu0 0.0
        %5226 = vmatpush1.msra.mxu0 %v348
        %5227 = vmatprep.subr.mxu0 0.0
        %5228 = vmatpush1.msra.mxu0 %v349
        %5229 = vmatprep.subr.mxu0 0.0
        %5230 = vmatpush1.msra.mxu0 %v350
        %5231 = vmatprep.subr.mxu0 0.0
        %5232 = vmatpush1.msra.mxu0 %v351
        %5233 = vmatprep.subr.mxu0 0.0
        %5234 = vmatpush1.msra.mxu0 %v352
        %5235 = vmatprep.subr.mxu0 0.0
        %5236 = vmatpush1.msra.mxu0 %v353
        %5237 = vmatprep.subr.mxu0 0.0
        %5238 = vmatpush1.msra.mxu0 %v354
        %5239 = vmatprep.subr.mxu0 0.0
        %5240 = vmatpush1.msra.mxu0 %v355
        %5241 = vmatprep.subr.mxu0 0.0
        %5242 = vmatpush1.msra.mxu0 %v356
        %5243 = vmatprep.subr.mxu0 0.0
        %5244 = vmatpush1.msra.mxu0 %v357
        %5245 = vmatprep.subr.mxu0 0.0
        %5246 = vmatpush1.msra.mxu0 %v358
        %5247 = vmatprep.subr.mxu0 0.0
        %5248 = vmatpush1.msra.mxu0 %v359
        %5249 = vmatprep.subr.mxu0 0.0
        %5250 = vmatpush1.msra.mxu0 %v360
        %5251 = vmatprep.subr.mxu0 0.0
        %5252 = vmatpush1.msra.mxu0 %v361
        %5253 = vmatprep.subr.mxu0 0.0
        %5254 = vmatpush1.msra.mxu0 %v362
        %5255 = vmatprep.subr.mxu0 0.0
        %5256 = vmatpush1.msra.mxu0 %v363
        %5257 = vmatprep.subr.mxu0 0.0
        %5258 = vmatpush1.msra.mxu0 %v364
        %5259 = vmatprep.subr.mxu0 0.0
        %5260 = vmatpush1.msra.mxu0 %v365
        %5261 = vmatprep.subr.mxu0 0.0
        %5262 = vmatpush1.msra.mxu0 %v366
        %5263 = vmatprep.subr.mxu0 0.0
        %5264 = vmatpush1.msra.mxu0 %v367
        %5265 = vmatprep.subr.mxu0 0.0
        %5266 = vmatpush1.msra.mxu0 %v368
        %5267 = vmatprep.subr.mxu0 0.0
        %5268 = vmatpush1.msra.mxu0 %v369
        %5269 = vmatprep.subr.mxu0 0.0
        %5270 = vmatpush1.msra.mxu0 %v370
        %5271 = vmatprep.mubr.f32.mxu0 %v5112
        %5272 = vmatmul.mubr.f32.gmra.mrb[0].mxu0 %v5111
        %v5273 = vpop.f32.mrb[0].mxu0
        %v5274 = vadd.f32 0.0, %v5273
        %v5275 = vpop.f32.mrb[0].mxu0
        %5276 = vmatprep.mubr.f32.mxu0 %v5115
        %5277 = vmatmul.mubr.f32.gmra.mrb[0].mxu0 %v5114
        %v5278 = vpop.f32.mrb[0].mxu0
        %v5279 = vadd.f32 0.0, %v5278
        %v5280 = vpop.f32.mrb[0].mxu0
        %5281 = vmatprep.mubr.f32.mxu0 %v5118
        %5282 = vmatmul.mubr.f32.gmra.mrb[0].mxu0 %v5117
        %v5283 = vpop.f32.mrb[0].mxu0
        %v5284 = vadd.f32 0.0, %v5283
        %v5285 = vpop.f32.mrb[0].mxu0
        %5286 = vmatprep.mubr.f32.mxu0 %v5121
        %5287 = vmatmul.mubr.f32.gmra.mrb[0].mxu0 %v5120
        %v5288 = vpop.f32.mrb[0].mxu0
        %v5289 = vadd.f32 0.0, %v5288
        %v5290 = vpop.f32.mrb[0].mxu0
        %5291 = vmatprep.mubr.f32.mxu0 %v5124
        %5292 = vmatmul.mubr.f32.gmra.mrb[0].mxu0 %v5123
        %v5293 = vpop.f32.mrb[0].mxu0
        %v5294 = vadd.f32 0.0, %v5293
        %v5295 = vpop.f32.mrb[0].mxu0
        %5296 = vmatprep.mubr.f32.mxu0 %v5127
        %5297 = vmatmul.mubr.f32.gmra.mrb[0].mxu0 %v5126
        %v5298 = vpop.f32.mrb[0].mxu0
        %v5299 = vadd.f32 0.0, %v5298
        %v5300 = vpop.f32.mrb[0].mxu0
        %5301 = vmatprep.mubr.f32.mxu0 %v5130
        %5302 = vmatmul.mubr.f32.gmra.mrb[0].mxu0 %v5129
        %v5303 = vpop.f32.mrb[0].mxu0
        %v5304 = vadd.f32 0.0, %v5303
        %v5305 = vpop.f32.mrb[0].mxu0
        %5306 = vmatprep.mubr.f32.mxu0 %v5133
        %5307 = vmatmul.mubr.f32.gmra.mrb[0].mxu0 %v5132
        %v5308 = vpop.f32.mrb[0].mxu0
        %v5309 = vadd.f32 0.0, %v5308
        %v5310 = vpop.f32.mrb[0].mxu0
        %5311 = vmatprep.mubr.f32.mxu0 %v5136
        %5312 = vmatmul.mubr.f32.gmra.mrb[0].mxu0 %v5135
        %v5313 = vpop.f32.mrb[0].mxu0
        %v5314 = vadd.f32 0.0, %v5313
        %v5315 = vpop.f32.mrb[0].mxu0
        %5316 = vmatprep.mubr.f32.mxu0 %v5139
        %5317 = vmatmul.mubr.f32.gmra.mrb[0].mxu0 %v5138
        %v5318 = vpop.f32.mrb[0].mxu0
        %v5319 = vadd.f32 0.0, %v5318
        %v5320 = vpop.f32.mrb[0].mxu0
        %5321 = vmatprep.mubr.f32.mxu0 %v5142
        %5322 = vmatmul.mubr.f32.gmra.mrb[0].mxu0 %v5141
        %v5323 = vpop.f32.mrb[0].mxu0
        %v5324 = vadd.f32 0.0, %v5323
        %v5325 = vpop.f32.mrb[0].mxu0
        %5326 = vmatprep.mubr.f32.mxu0 %v5145
        %5327 = vmatmul.mubr.f32.gmra.mrb[0].mxu0 %v5144
        %v5328 = vpop.f32.mrb[0].mxu0
        %v5329 = vadd.f32 0.0, %v5328
        %v5330 = vpop.f32.mrb[0].mxu0
        %5331 = vmatprep.mubr.f32.mxu0 %v5148
        %5332 = vmatmul.mubr.f32.gmra.mrb[0].mxu0 %v5147
        %v5333 = vpop.f32.mrb[0].mxu0
        %v5334 = vadd.f32 0.0, %v5333
        %v5335 = vpop.f32.mrb[0].mxu0
        %5336 = vmatprep.mubr.f32.mxu0 %v5151
        %5337 = vmatmul.mubr.f32.gmra.mrb[0].mxu0 %v5150
        %v5338 = vpop.f32.mrb[0].mxu0
        %v5339 = vadd.f32 0.0, %v5338
        %v5340 = vpop.f32.mrb[0].mxu0
        %5341 = vmatprep.mubr.f32.mxu0 %v5154
        %5342 = vmatmul.mubr.f32.gmra.mrb[0].mxu0 %v5153
        %v5343 = vpop.f32.mrb[0].mxu0
        %v5344 = vadd.f32 0.0, %v5343
        %v5345 = vpop.f32.mrb[0].mxu0
        %5346 = vmatprep.mubr.f32.mxu0 %v5157
        %5347 = vmatmul.mubr.f32.gmra.mrb[0].mxu0 %v5156
        %v5348 = vpop.f32.mrb[0].mxu0
        %v5349 = vadd.f32 0.0, %v5348
        %v5350 = vpop.f32.mrb[0].mxu0
        %5351 = vmatprep.mubr.f32.mxu0 %v5160
        %5352 = vmatmul.mubr.f32.gmra.mrb[0].mxu0 %v5159
        %v5353 = vpop.f32.mrb[0].mxu0
        %v5354 = vadd.f32 0.0, %v5353
        %v5355 = vpop.f32.mrb[0].mxu0
        %5356 = vmatprep.mubr.f32.mxu0 %v5163
        %5357 = vmatmul.mubr.f32.gmra.mrb[0].mxu0 %v5162
        %v5358 = vpop.f32.mrb[0].mxu0
        %v5359 = vadd.f32 0.0, %v5358
        %v5360 = vpop.f32.mrb[0].mxu0
        %5361 = vmatprep.mubr.f32.mxu0 %v5166
        %5362 = vmatmul.mubr.f32.gmra.mrb[0].mxu0 %v5165
        %v5363 = vpop.f32.mrb[0].mxu0
        %v5364 = vadd.f32 0.0, %v5363
        %v5365 = vpop.f32.mrb[0].mxu0
        %5366 = vmatprep.mubr.f32.mxu0 %v5169
        %5367 = vmatmul.mubr.f32.gmra.mrb[0].mxu0 %v5168
        %v5368 = vpop.f32.mrb[0].mxu0
        %v5369 = vadd.f32 0.0, %v5368
        %v5370 = vpop.f32.mrb[0].mxu0
        %5371 = vmatprep.mubr.f32.mxu0 %v5172
        %5372 = vmatmul.mubr.f32.gmra.mrb[0].mxu0 %v5171
        %v5373 = vpop.f32.mrb[0].mxu0
        %v5374 = vadd.f32 0.0, %v5373
        %v5375 = vpop.f32.mrb[0].mxu0
        %5376 = vmatprep.mubr.f32.mxu0 %v5175
        %5377 = vmatmul.mubr.f32.gmra.mrb[0].mxu0 %v5174
        %v5378 = vpop.f32.mrb[0].mxu0
        %v5379 = vadd.f32 0.0, %v5378
        %v5380 = vpop.f32.mrb[0].mxu0
        %5381 = vmatprep.mubr.f32.mxu0 %v5178
        %5382 = vmatmul.mubr.f32.gmra.mrb[0].mxu0 %v5177
        %v5383 = vpop.f32.mrb[0].mxu0
        %v5384 = vadd.f32 0.0, %v5383
        %v5385 = vpop.f32.mrb[0].mxu0
        %5386 = vmatprep.mubr.f32.mxu0 %v5181
        %5387 = vmatmul.mubr.f32.gmra.mrb[0].mxu0 %v5180
        %v5388 = vpop.f32.mrb[0].mxu0
        %v5389 = vadd.f32 0.0, %v5388
        %v5390 = vpop.f32.mrb[0].mxu0
        %5391 = vmatprep.mubr.f32.mxu0 %v5184
        %5392 = vmatmul.mubr.f32.gmra.mrb[0].mxu0 %v5183
        %v5393 = vpop.f32.mrb[0].mxu0
        %v5394 = vadd.f32 0.0, %v5393
        %v5395 = vpop.f32.mrb[0].mxu0
        %5396 = vmatprep.mubr.f32.mxu0 %v5187
        %5397 = vmatmul.mubr.f32.gmra.mrb[0].mxu0 %v5186
        %v5398 = vpop.f32.mrb[0].mxu0
        %v5399 = vadd.f32 0.0, %v5398
        %v5400 = vpop.f32.mrb[0].mxu0
        %5401 = vmatprep.mubr.f32.mxu0 %v5190
        %5402 = vmatmul.mubr.f32.gmra.mrb[0].mxu0 %v5189
        %v5403 = vpop.f32.mrb[0].mxu0
        %v5404 = vadd.f32 0.0, %v5403
        %v5405 = vpop.f32.mrb[0].mxu0
        %5406 = vmatprep.mubr.f32.mxu0 %v5193
        %5407 = vmatmul.mubr.f32.gmra.mrb[0].mxu0 %v5192
        %v5408 = vpop.f32.mrb[0].mxu0
        %v5409 = vadd.f32 0.0, %v5408
        %v5410 = vpop.f32.mrb[0].mxu0
        %5411 = vmatprep.mubr.f32.mxu0 %v5196
        %5412 = vmatmul.mubr.f32.gmra.mrb[0].mxu0 %v5195
        %v5413 = vpop.f32.mrb[0].mxu0
        %v5414 = vadd.f32 0.0, %v5413
        %v5415 = vpop.f32.mrb[0].mxu0
        %5416 = vmatprep.mubr.f32.mxu0 %v5199
        %5417 = vmatmul.mubr.f32.gmra.mrb[0].mxu0 %v5198
        %v5418 = vpop.f32.mrb[0].mxu0
        %v5419 = vadd.f32 0.0, %v5418
        %v5420 = vpop.f32.mrb[0].mxu0
        %5421 = vmatprep.mubr.f32.mxu0 %v5202
        %5422 = vmatmul.mubr.f32.gmra.mrb[0].mxu0 %v5201
        %v5423 = vpop.f32.mrb[0].mxu0
        %v5424 = vadd.f32 0.0, %v5423
        %v5425 = vpop.f32.mrb[0].mxu0
        %5426 = vmatprep.mubr.f32.mxu0 %v5205
        %5427 = vmatmul.mubr.f32.gmra.mrb[0].mxu0 %v5204
        %v5428 = vpop.f32.mrb[0].mxu0
        %v5429 = vadd.f32 0.0, %v5428
        %v5430 = vpop.f32.mrb[0].mxu0
        %5431 = vdwg.mxu0
        %5432 = vmatprep.subr.mxu0 0.0
        %5433 = vmatpush1.msra.mxu0 %v371
        %5434 = vmatprep.subr.mxu0 0.0
        %5435 = vmatpush1.msra.mxu0 %v372
        %5436 = vmatprep.subr.mxu0 0.0
        %5437 = vmatpush1.msra.mxu0 %v373
        %5438 = vmatprep.subr.mxu0 0.0
        %5439 = vmatpush1.msra.mxu0 %v374
        %5440 = vmatprep.subr.mxu0 0.0
        %5441 = vmatpush1.msra.mxu0 %v375
        %5442 = vmatprep.subr.mxu0 0.0
        %5443 = vmatpush1.msra.mxu0 %v376
        %5444 = vmatprep.subr.mxu0 0.0
        %5445 = vmatpush1.msra.mxu0 %v377
        %5446 = vmatprep.subr.mxu0 0.0
        %5447 = vmatpush1.msra.mxu0 %v378
        %5448 = vmatprep.subr.mxu0 0.0
        %5449 = vmatpush1.msra.mxu0 %v379
        %5450 = vmatprep.subr.mxu0 0.0
        %5451 = vmatpush1.msra.mxu0 %v380
        %5452 = vmatprep.subr.mxu0 0.0
        %5453 = vmatpush1.msra.mxu0 %v381
        %5454 = vmatprep.subr.mxu0 0.0
        %5455 = vmatpush1.msra.mxu0 %v382
        %5456 = vmatprep.subr.mxu0 0.0
        %5457 = vmatpush1.msra.mxu0 %v383
        %5458 = vmatprep.subr.mxu0 0.0
        %5459 = vmatpush1.msra.mxu0 %v384
        %5460 = vmatprep.subr.mxu0 0.0
        %5461 = vmatpush1.msra.mxu0 %v385
        %5462 = vmatprep.subr.mxu0 0.0
        %5463 = vmatpush1.msra.mxu0 %v386
        %5464 = vmatprep.subr.mxu0 0.0
        %5465 = vmatpush1.msra.mxu0 0.0
        %5466 = vmatprep.subr.mxu0 0.0
        %5467 = vmatpush1.msra.mxu0 0.0
        %5468 = vmatprep.subr.mxu0 0.0
        %5469 = vmatpush1.msra.mxu0 0.0
        %5470 = vmatprep.subr.mxu0 0.0
        %5471 = vmatpush1.msra.mxu0 0.0
        %5472 = vmatprep.subr.mxu0 0.0
        %5473 = vmatpush1.msra.mxu0 0.0
        %5474 = vmatprep.subr.mxu0 0.0
        %5475 = vmatpush1.msra.mxu0 0.0
        %5476 = vmatprep.subr.mxu0 0.0
        %5477 = vmatpush1.msra.mxu0 0.0
        %5478 = vmatprep.subr.mxu0 0.0
        %5479 = vmatpush1.msra.mxu0 0.0
        %5480 = vmatprep.subr.mxu0 0.0
        %5481 = vmatpush1.msra.mxu0 0.0
        %5482 = vmatprep.subr.mxu0 0.0
        %5483 = vmatpush1.msra.mxu0 0.0
        %5484 = vmatprep.subr.mxu0 0.0
        %5485 = vmatpush1.msra.mxu0 0.0
        %5486 = vmatprep.subr.mxu0 0.0
        %5487 = vmatpush1.msra.mxu0 0.0
        %5488 = vmatprep.subr.mxu0 0.0
        %5489 = vmatpush1.msra.mxu0 0.0
        %5490 = vmatprep.subr.mxu0 0.0
        %5491 = vmatpush1.msra.mxu0 0.0
        %5492 = vmatprep.subr.mxu0 0.0
        %5493 = vmatpush1.msra.mxu0 0.0
        %5494 = vmatprep.subr.mxu0 0.0
        %5495 = vmatpush1.msra.mxu0 0.0
        %5496 = vmatprep.mubr.f32.mxu0 0.0
        %5497 = vmatmul.mubr.f32.gmra.mrb[0].mxu0 %v5113
        %v5498 = vpop.f32.mrb[0].mxu0
        %v5499 = vadd.f32 %v5274, %v5498
        %v5500 = vpop.f32.mrb[0].mxu0
        %5501 = vmatprep.mubr.f32.mxu0 0.0
        %5502 = vmatmul.mubr.f32.gmra.mrb[0].mxu0 %v5116
        %v5503 = vpop.f32.mrb[0].mxu0
        %v5504 = vadd.f32 %v5279, %v5503
        %v5505 = vpop.f32.mrb[0].mxu0
        %5506 = vmatprep.mubr.f32.mxu0 0.0
        %5507 = vmatmul.mubr.f32.gmra.mrb[0].mxu0 %v5119
        %v5508 = vpop.f32.mrb[0].mxu0
        %v5509 = vadd.f32 %v5284, %v5508
        %v5510 = vpop.f32.mrb[0].mxu0
        %5511 = vmatprep.mubr.f32.mxu0 0.0
        %5512 = vmatmul.mubr.f32.gmra.mrb[0].mxu0 %v5122
        %v5513 = vpop.f32.mrb[0].mxu0
        %v5514 = vadd.f32 %v5289, %v5513
        %v5515 = vpop.f32.mrb[0].mxu0
        %5516 = vmatprep.mubr.f32.mxu0 0.0
        %5517 = vmatmul.mubr.f32.gmra.mrb[0].mxu0 %v5125
        %v5518 = vpop.f32.mrb[0].mxu0
        %v5519 = vadd.f32 %v5294, %v5518
        %v5520 = vpop.f32.mrb[0].mxu0
        %5521 = vmatprep.mubr.f32.mxu0 0.0
        %5522 = vmatmul.mubr.f32.gmra.mrb[0].mxu0 %v5128
        %v5523 = vpop.f32.mrb[0].mxu0
        %v5524 = vadd.f32 %v5299, %v5523
        %v5525 = vpop.f32.mrb[0].mxu0
        %5526 = vmatprep.mubr.f32.mxu0 0.0
        %5527 = vmatmul.mubr.f32.gmra.mrb[0].mxu0 %v5131
        %v5528 = vpop.f32.mrb[0].mxu0
        %v5529 = vadd.f32 %v5304, %v5528
        %v5530 = vpop.f32.mrb[0].mxu0
        %5531 = vmatprep.mubr.f32.mxu0 0.0
        %5532 = vmatmul.mubr.f32.gmra.mrb[0].mxu0 %v5134
        %v5533 = vpop.f32.mrb[0].mxu0
        %v5534 = vadd.f32 %v5309, %v5533
        %v5535 = vpop.f32.mrb[0].mxu0
        %5536 = vmatprep.mubr.f32.mxu0 0.0
        %5537 = vmatmul.mubr.f32.gmra.mrb[0].mxu0 %v5137
        %v5538 = vpop.f32.mrb[0].mxu0
        %v5539 = vadd.f32 %v5314, %v5538
        %v5540 = vpop.f32.mrb[0].mxu0
        %5541 = vmatprep.mubr.f32.mxu0 0.0
        %5542 = vmatmul.mubr.f32.gmra.mrb[0].mxu0 %v5140
        %v5543 = vpop.f32.mrb[0].mxu0
        %v5544 = vadd.f32 %v5319, %v5543
        %v5545 = vpop.f32.mrb[0].mxu0
        %5546 = vmatprep.mubr.f32.mxu0 0.0
        %5547 = vmatmul.mubr.f32.gmra.mrb[0].mxu0 %v5143
        %v5548 = vpop.f32.mrb[0].mxu0
        %v5549 = vadd.f32 %v5324, %v5548
        %v5550 = vpop.f32.mrb[0].mxu0
        %5551 = vmatprep.mubr.f32.mxu0 0.0
        %5552 = vmatmul.mubr.f32.gmra.mrb[0].mxu0 %v5146
        %v5553 = vpop.f32.mrb[0].mxu0
        %v5554 = vadd.f32 %v5329, %v5553
        %v5555 = vpop.f32.mrb[0].mxu0
        %5556 = vmatprep.mubr.f32.mxu0 0.0
        %5557 = vmatmul.mubr.f32.gmra.mrb[0].mxu0 %v5149
        %v5558 = vpop.f32.mrb[0].mxu0
        %v5559 = vadd.f32 %v5334, %v5558
        %v5560 = vpop.f32.mrb[0].mxu0
        %5561 = vmatprep.mubr.f32.mxu0 0.0
        %5562 = vmatmul.mubr.f32.gmra.mrb[0].mxu0 %v5152
        %v5563 = vpop.f32.mrb[0].mxu0
        %v5564 = vadd.f32 %v5339, %v5563
        %v5565 = vpop.f32.mrb[0].mxu0
        %5566 = vmatprep.mubr.f32.mxu0 0.0
        %5567 = vmatmul.mubr.f32.gmra.mrb[0].mxu0 %v5155
        %v5568 = vpop.f32.mrb[0].mxu0
        %v5569 = vadd.f32 %v5344, %v5568
        %v5570 = vpop.f32.mrb[0].mxu0
        %5571 = vmatprep.mubr.f32.mxu0 0.0
        %5572 = vmatmul.mubr.f32.gmra.mrb[0].mxu0 %v5158
        %v5573 = vpop.f32.mrb[0].mxu0
        %v5574 = vadd.f32 %v5349, %v5573
        %v5575 = vpop.f32.mrb[0].mxu0
        %5576 = vmatprep.mubr.f32.mxu0 0.0
        %5577 = vmatmul.mubr.f32.gmra.mrb[0].mxu0 %v5161
        %v5578 = vpop.f32.mrb[0].mxu0
        %v5579 = vadd.f32 %v5354, %v5578
        %v5580 = vpop.f32.mrb[0].mxu0
        %5581 = vmatprep.mubr.f32.mxu0 0.0
        %5582 = vmatmul.mubr.f32.gmra.mrb[0].mxu0 %v5164
        %v5583 = vpop.f32.mrb[0].mxu0
        %v5584 = vadd.f32 %v5359, %v5583
        %v5585 = vpop.f32.mrb[0].mxu0
        %5586 = vmatprep.mubr.f32.mxu0 0.0
        %5587 = vmatmul.mubr.f32.gmra.mrb[0].mxu0 %v5167
        %v5588 = vpop.f32.mrb[0].mxu0
        %v5589 = vadd.f32 %v5364, %v5588
        %v5590 = vpop.f32.mrb[0].mxu0
        %5591 = vmatprep.mubr.f32.mxu0 0.0
        %5592 = vmatmul.mubr.f32.gmra.mrb[0].mxu0 %v5170
        %v5593 = vpop.f32.mrb[0].mxu0
        %v5594 = vadd.f32 %v5369, %v5593
        %v5595 = vpop.f32.mrb[0].mxu0
        %5596 = vmatprep.mubr.f32.mxu0 0.0
        %5597 = vmatmul.mubr.f32.gmra.mrb[0].mxu0 %v5173
        %v5598 = vpop.f32.mrb[0].mxu0
        %v5599 = vadd.f32 %v5374, %v5598
        %v5600 = vpop.f32.mrb[0].mxu0
        %5601 = vmatprep.mubr.f32.mxu0 0.0
        %5602 = vmatmul.mubr.f32.gmra.mrb[0].mxu0 %v5176
        %v5603 = vpop.f32.mrb[0].mxu0
        %v5604 = vadd.f32 %v5379, %v5603
        %v5605 = vpop.f32.mrb[0].mxu0
        %5606 = vmatprep.mubr.f32.mxu0 0.0
        %5607 = vmatmul.mubr.f32.gmra.mrb[0].mxu0 %v5179
        %v5608 = vpop.f32.mrb[0].mxu0
        %v5609 = vadd.f32 %v5384, %v5608
        %v5610 = vpop.f32.mrb[0].mxu0
        %5611 = vmatprep.mubr.f32.mxu0 0.0
        %5612 = vmatmul.mubr.f32.gmra.mrb[0].mxu0 %v5182
        %v5613 = vpop.f32.mrb[0].mxu0
        %v5614 = vadd.f32 %v5389, %v5613
        %v5615 = vpop.f32.mrb[0].mxu0
        %5616 = vmatprep.mubr.f32.mxu0 0.0
        %5617 = vmatmul.mubr.f32.gmra.mrb[0].mxu0 %v5185
        %v5618 = vpop.f32.mrb[0].mxu0
        %v5619 = vadd.f32 %v5394, %v5618
        %v5620 = vpop.f32.mrb[0].mxu0
        %5621 = vmatprep.mubr.f32.mxu0 0.0
        %5622 = vmatmul.mubr.f32.gmra.mrb[0].mxu0 %v5188
        %v5623 = vpop.f32.mrb[0].mxu0
        %v5624 = vadd.f32 %v5399, %v5623
        %v5625 = vpop.f32.mrb[0].mxu0
        %5626 = vmatprep.mubr.f32.mxu0 0.0
        %5627 = vmatmul.mubr.f32.gmra.mrb[0].mxu0 %v5191
        %v5628 = vpop.f32.mrb[0].mxu0
        %v5629 = vadd.f32 %v5404, %v5628
        %v5630 = vpop.f32.mrb[0].mxu0
        %5631 = vmatprep.mubr.f32.mxu0 0.0
        %5632 = vmatmul.mubr.f32.gmra.mrb[0].mxu0 %v5194
        %v5633 = vpop.f32.mrb[0].mxu0
        %v5634 = vadd.f32 %v5409, %v5633
        %v5635 = vpop.f32.mrb[0].mxu0
        %5636 = vmatprep.mubr.f32.mxu0 0.0
        %5637 = vmatmul.mubr.f32.gmra.mrb[0].mxu0 %v5197
        %v5638 = vpop.f32.mrb[0].mxu0
        %v5639 = vadd.f32 %v5414, %v5638
        %v5640 = vpop.f32.mrb[0].mxu0
        %5641 = vmatprep.mubr.f32.mxu0 0.0
        %5642 = vmatmul.mubr.f32.gmra.mrb[0].mxu0 %v5200
        %v5643 = vpop.f32.mrb[0].mxu0
        %v5644 = vadd.f32 %v5419, %v5643
        %v5645 = vpop.f32.mrb[0].mxu0
        %5646 = vmatprep.mubr.f32.mxu0 0.0
        %5647 = vmatmul.mubr.f32.gmra.mrb[0].mxu0 %v5203
        %v5648 = vpop.f32.mrb[0].mxu0
        %v5649 = vadd.f32 %v5424, %v5648
        %v5650 = vpop.f32.mrb[0].mxu0
        %5651 = vmatprep.mubr.f32.mxu0 0.0
        %5652 = vmatmul.mubr.f32.gmra.mrb[0].mxu0 %v5206
        %v5653 = vpop.f32.mrb[0].mxu0
        %v5654 = vadd.f32 %v5429, %v5653
        %v5655 = vpop.f32.mrb[0].mxu0
        %5656 = vdwg.mxu0
        %5657 = vmatprep.subr.mxu0 0.0
        %5658 = vmatpush1.msra.mxu0 %v290
        %5659 = vmatprep.subr.mxu0 0.0
        %5660 = vmatpush1.msra.mxu0 %v291
        %5661 = vmatprep.subr.mxu0 0.0
        %5662 = vmatpush1.msra.mxu0 %v292
        %5663 = vmatprep.subr.mxu0 0.0
        %5664 = vmatpush1.msra.mxu0 %v293
        %5665 = vmatprep.subr.mxu0 0.0
        %5666 = vmatpush1.msra.mxu0 %v294
        %5667 = vmatprep.subr.mxu0 0.0
        %5668 = vmatpush1.msra.mxu0 %v295
        %5669 = vmatprep.subr.mxu0 0.0
        %5670 = vmatpush1.msra.mxu0 %v296
        %5671 = vmatprep.subr.mxu0 0.0
        %5672 = vmatpush1.msra.mxu0 %v297
        %5673 = vmatprep.subr.mxu0 0.0
        %5674 = vmatpush1.msra.mxu0 %v298
        %5675 = vmatprep.subr.mxu0 0.0
        %5676 = vmatpush1.msra.mxu0 %v299
        %5677 = vmatprep.subr.mxu0 0.0
        %5678 = vmatpush1.msra.mxu0 %v300
        %5679 = vmatprep.subr.mxu0 0.0
        %5680 = vmatpush1.msra.mxu0 %v301
        %5681 = vmatprep.subr.mxu0 0.0
        %5682 = vmatpush1.msra.mxu0 %v302
        %5683 = vmatprep.subr.mxu0 0.0
        %5684 = vmatpush1.msra.mxu0 %v303
        %5685 = vmatprep.subr.mxu0 0.0
        %5686 = vmatpush1.msra.mxu0 %v304
        %5687 = vmatprep.subr.mxu0 0.0
        %5688 = vmatpush1.msra.mxu0 %v305
        %5689 = vmatprep.subr.mxu0 0.0
        %5690 = vmatpush1.msra.mxu0 %v306
        %5691 = vmatprep.subr.mxu0 0.0
        %5692 = vmatpush1.msra.mxu0 %v307
        %5693 = vmatprep.subr.mxu0 0.0
        %5694 = vmatpush1.msra.mxu0 %v308
        %5695 = vmatprep.subr.mxu0 0.0
        %5696 = vmatpush1.msra.mxu0 %v309
        %5697 = vmatprep.subr.mxu0 0.0
        %5698 = vmatpush1.msra.mxu0 %v310
        %5699 = vmatprep.subr.mxu0 0.0
        %5700 = vmatpush1.msra.mxu0 %v311
        %5701 = vmatprep.subr.mxu0 0.0
        %5702 = vmatpush1.msra.mxu0 %v312
        %5703 = vmatprep.subr.mxu0 0.0
        %5704 = vmatpush1.msra.mxu0 %v313
        %5705 = vmatprep.subr.mxu0 0.0
        %5706 = vmatpush1.msra.mxu0 %v314
        %5707 = vmatprep.subr.mxu0 0.0
        %5708 = vmatpush1.msra.mxu0 %v315
        %5709 = vmatprep.subr.mxu0 0.0
        %5710 = vmatpush1.msra.mxu0 %v316
        %5711 = vmatprep.subr.mxu0 0.0
        %5712 = vmatpush1.msra.mxu0 %v317
        %5713 = vmatprep.subr.mxu0 0.0
        %5714 = vmatpush1.msra.mxu0 %v318
        %5715 = vmatprep.subr.mxu0 0.0
        %5716 = vmatpush1.msra.mxu0 %v319
        %5717 = vmatprep.subr.mxu0 0.0
        %5718 = vmatpush1.msra.mxu0 %v320
        %5719 = vmatprep.subr.mxu0 0.0
        %5720 = vmatpush1.msra.mxu0 %v321
        %5721 = vmatprep.mubr.f32.mxu0 %v5106
        %5722 = vmatmul.mubr.f32.gmra.mrb[0].mxu0 %v5105
        %v5723 = vpop.f32.mrb[0].mxu0
        %v5724 = vadd.f32 %v5499, %v5723
        %v5725 = vpop.f32.mrb[0].mxu0
        %5726 = vmatprep.mubr.f32.mxu0 %v5109
        %5727 = vmatmul.mubr.f32.gmra.mrb[0].mxu0 %v5108
        %v5728 = vpop.f32.mrb[0].mxu0
        %v5729 = vadd.f32 %v5504, %v5728
        %v5730 = vpop.f32.mrb[0].mxu0
        %5731 = vmatprep.mubr.f32.mxu0 %v5112
        %5732 = vmatmul.mubr.f32.gmra.mrb[0].mxu0 %v5111
        %v5733 = vpop.f32.mrb[0].mxu0
        %v5734 = vadd.f32 %v5509, %v5733
        %v5735 = vpop.f32.mrb[0].mxu0
        %5736 = vmatprep.mubr.f32.mxu0 %v5115
        %5737 = vmatmul.mubr.f32.gmra.mrb[0].mxu0 %v5114
        %v5738 = vpop.f32.mrb[0].mxu0
        %v5739 = vadd.f32 %v5514, %v5738
        %v5740 = vpop.f32.mrb[0].mxu0
        %5741 = vmatprep.mubr.f32.mxu0 %v5118
        %5742 = vmatmul.mubr.f32.gmra.mrb[0].mxu0 %v5117
        %v5743 = vpop.f32.mrb[0].mxu0
        %v5744 = vadd.f32 %v5519, %v5743
        %v5745 = vpop.f32.mrb[0].mxu0
        %5746 = vmatprep.mubr.f32.mxu0 %v5121
        %5747 = vmatmul.mubr.f32.gmra.mrb[0].mxu0 %v5120
        %v5748 = vpop.f32.mrb[0].mxu0
        %v5749 = vadd.f32 %v5524, %v5748
        %v5750 = vpop.f32.mrb[0].mxu0
        %5751 = vmatprep.mubr.f32.mxu0 %v5124
        %5752 = vmatmul.mubr.f32.gmra.mrb[0].mxu0 %v5123
        %v5753 = vpop.f32.mrb[0].mxu0
        %v5754 = vadd.f32 %v5529, %v5753
        %v5755 = vpop.f32.mrb[0].mxu0
        %5756 = vmatprep.mubr.f32.mxu0 %v5127
        %5757 = vmatmul.mubr.f32.gmra.mrb[0].mxu0 %v5126
        %v5758 = vpop.f32.mrb[0].mxu0
        %v5759 = vadd.f32 %v5534, %v5758
        %v5760 = vpop.f32.mrb[0].mxu0
        %5761 = vmatprep.mubr.f32.mxu0 %v5130
        %5762 = vmatmul.mubr.f32.gmra.mrb[0].mxu0 %v5129
        %v5763 = vpop.f32.mrb[0].mxu0
        %v5764 = vadd.f32 %v5539, %v5763
        %v5765 = vpop.f32.mrb[0].mxu0
        %5766 = vmatprep.mubr.f32.mxu0 %v5133
        %5767 = vmatmul.mubr.f32.gmra.mrb[0].mxu0 %v5132
        %v5768 = vpop.f32.mrb[0].mxu0
        %v5769 = vadd.f32 %v5544, %v5768
        %v5770 = vpop.f32.mrb[0].mxu0
        %5771 = vmatprep.mubr.f32.mxu0 %v5136
        %5772 = vmatmul.mubr.f32.gmra.mrb[0].mxu0 %v5135
        %v5773 = vpop.f32.mrb[0].mxu0
        %v5774 = vadd.f32 %v5549, %v5773
        %v5775 = vpop.f32.mrb[0].mxu0
        %5776 = vmatprep.mubr.f32.mxu0 %v5139
        %5777 = vmatmul.mubr.f32.gmra.mrb[0].mxu0 %v5138
        %v5778 = vpop.f32.mrb[0].mxu0
        %v5779 = vadd.f32 %v5554, %v5778
        %v5780 = vpop.f32.mrb[0].mxu0
        %5781 = vmatprep.mubr.f32.mxu0 %v5142
        %5782 = vmatmul.mubr.f32.gmra.mrb[0].mxu0 %v5141
        %v5783 = vpop.f32.mrb[0].mxu0
        %v5784 = vadd.f32 %v5559, %v5783
        %v5785 = vpop.f32.mrb[0].mxu0
        %5786 = vmatprep.mubr.f32.mxu0 %v5145
        %5787 = vmatmul.mubr.f32.gmra.mrb[0].mxu0 %v5144
        %v5788 = vpop.f32.mrb[0].mxu0
        %v5789 = vadd.f32 %v5564, %v5788
        %v5790 = vpop.f32.mrb[0].mxu0
        %5791 = vmatprep.mubr.f32.mxu0 %v5148
        %5792 = vmatmul.mubr.f32.gmra.mrb[0].mxu0 %v5147
        %v5793 = vpop.f32.mrb[0].mxu0
        %v5794 = vadd.f32 %v5569, %v5793
        %v5795 = vpop.f32.mrb[0].mxu0
        %5796 = vmatprep.mubr.f32.mxu0 %v5151
        %5797 = vmatmul.mubr.f32.gmra.mrb[0].mxu0 %v5150
        %v5798 = vpop.f32.mrb[0].mxu0
        %v5799 = vadd.f32 %v5574, %v5798
        %v5800 = vpop.f32.mrb[0].mxu0
        %5801 = vmatprep.mubr.f32.mxu0 %v5154
        %5802 = vmatmul.mubr.f32.gmra.mrb[0].mxu0 %v5153
        %v5803 = vpop.f32.mrb[0].mxu0
        %v5804 = vadd.f32 %v5579, %v5803
        %v5805 = vpop.f32.mrb[0].mxu0
        %5806 = vmatprep.mubr.f32.mxu0 %v5157
        %5807 = vmatmul.mubr.f32.gmra.mrb[0].mxu0 %v5156
        %v5808 = vpop.f32.mrb[0].mxu0
        %v5809 = vadd.f32 %v5584, %v5808
        %v5810 = vpop.f32.mrb[0].mxu0
        %5811 = vmatprep.mubr.f32.mxu0 %v5160
        %5812 = vmatmul.mubr.f32.gmra.mrb[0].mxu0 %v5159
        %v5813 = vpop.f32.mrb[0].mxu0
        %v5814 = vadd.f32 %v5589, %v5813
        %v5815 = vpop.f32.mrb[0].mxu0
        %5816 = vmatprep.mubr.f32.mxu0 %v5163
        %5817 = vmatmul.mubr.f32.gmra.mrb[0].mxu0 %v5162
        %v5818 = vpop.f32.mrb[0].mxu0
        %v5819 = vadd.f32 %v5594, %v5818
        %v5820 = vpop.f32.mrb[0].mxu0
        %5821 = vmatprep.mubr.f32.mxu0 %v5166
        %5822 = vmatmul.mubr.f32.gmra.mrb[0].mxu0 %v5165
        %v5823 = vpop.f32.mrb[0].mxu0
        %v5824 = vadd.f32 %v5599, %v5823
        %v5825 = vpop.f32.mrb[0].mxu0
        %5826 = vmatprep.mubr.f32.mxu0 %v5169
        %5827 = vmatmul.mubr.f32.gmra.mrb[0].mxu0 %v5168
        %v5828 = vpop.f32.mrb[0].mxu0
        %v5829 = vadd.f32 %v5604, %v5828
        %v5830 = vpop.f32.mrb[0].mxu0
        %5831 = vmatprep.mubr.f32.mxu0 %v5172
        %5832 = vmatmul.mubr.f32.gmra.mrb[0].mxu0 %v5171
        %v5833 = vpop.f32.mrb[0].mxu0
        %v5834 = vadd.f32 %v5609, %v5833
        %v5835 = vpop.f32.mrb[0].mxu0
        %5836 = vmatprep.mubr.f32.mxu0 %v5175
        %5837 = vmatmul.mubr.f32.gmra.mrb[0].mxu0 %v5174
        %v5838 = vpop.f32.mrb[0].mxu0
        %v5839 = vadd.f32 %v5614, %v5838
        %v5840 = vpop.f32.mrb[0].mxu0
        %5841 = vmatprep.mubr.f32.mxu0 %v5178
        %5842 = vmatmul.mubr.f32.gmra.mrb[0].mxu0 %v5177
        %v5843 = vpop.f32.mrb[0].mxu0
        %v5844 = vadd.f32 %v5619, %v5843
        %v5845 = vpop.f32.mrb[0].mxu0
        %5846 = vmatprep.mubr.f32.mxu0 %v5181
        %5847 = vmatmul.mubr.f32.gmra.mrb[0].mxu0 %v5180
        %v5848 = vpop.f32.mrb[0].mxu0
        %v5849 = vadd.f32 %v5624, %v5848
        %v5850 = vpop.f32.mrb[0].mxu0
        %5851 = vmatprep.mubr.f32.mxu0 %v5184
        %5852 = vmatmul.mubr.f32.gmra.mrb[0].mxu0 %v5183
        %v5853 = vpop.f32.mrb[0].mxu0
        %v5854 = vadd.f32 %v5629, %v5853
        %v5855 = vpop.f32.mrb[0].mxu0
        %5856 = vmatprep.mubr.f32.mxu0 %v5187
        %5857 = vmatmul.mubr.f32.gmra.mrb[0].mxu0 %v5186
        %v5858 = vpop.f32.mrb[0].mxu0
        %v5859 = vadd.f32 %v5634, %v5858
        %v5860 = vpop.f32.mrb[0].mxu0
        %5861 = vmatprep.mubr.f32.mxu0 %v5190
        %5862 = vmatmul.mubr.f32.gmra.mrb[0].mxu0 %v5189
        %v5863 = vpop.f32.mrb[0].mxu0
        %v5864 = vadd.f32 %v5639, %v5863
        %v5865 = vpop.f32.mrb[0].mxu0
        %5866 = vmatprep.mubr.f32.mxu0 %v5193
        %5867 = vmatmul.mubr.f32.gmra.mrb[0].mxu0 %v5192
        %v5868 = vpop.f32.mrb[0].mxu0
        %v5869 = vadd.f32 %v5644, %v5868
        %v5870 = vpop.f32.mrb[0].mxu0
        %5871 = vmatprep.mubr.f32.mxu0 %v5196
        %5872 = vmatmul.mubr.f32.gmra.mrb[0].mxu0 %v5195
        %v5873 = vpop.f32.mrb[0].mxu0
        %v5874 = vadd.f32 %v5649, %v5873
        %v5875 = vpop.f32.mrb[0].mxu0
        %5876 = vmatprep.mubr.f32.mxu0 %v5199
        %5877 = vmatmul.mubr.f32.gmra.mrb[0].mxu0 %v5198
        %v5878 = vpop.f32.mrb[0].mxu0
        %v5879 = vadd.f32 %v5654, %v5878
        %v5880 = vpop.f32.mrb[0].mxu0
        %5881 = vdwg.mxu0
        %5882 = vmatprep.subr.mxu0 0.0
        %5883 = vmatpush1.msra.mxu0 %v322
        %5884 = vmatprep.subr.mxu0 0.0
        %5885 = vmatpush1.msra.mxu0 %v323
        %5886 = vmatprep.subr.mxu0 0.0
        %5887 = vmatpush1.msra.mxu0 %v324
        %5888 = vmatprep.subr.mxu0 0.0
        %5889 = vmatpush1.msra.mxu0 %v325
        %5890 = vmatprep.subr.mxu0 0.0
        %5891 = vmatpush1.msra.mxu0 %v326
        %5892 = vmatprep.subr.mxu0 0.0
        %5893 = vmatpush1.msra.mxu0 %v327
        %5894 = vmatprep.subr.mxu0 0.0
        %5895 = vmatpush1.msra.mxu0 %v328
        %5896 = vmatprep.subr.mxu0 0.0
        %5897 = vmatpush1.msra.mxu0 %v329
        %5898 = vmatprep.subr.mxu0 0.0
        %5899 = vmatpush1.msra.mxu0 %v330
        %5900 = vmatprep.subr.mxu0 0.0
        %5901 = vmatpush1.msra.mxu0 %v331
        %5902 = vmatprep.subr.mxu0 0.0
        %5903 = vmatpush1.msra.mxu0 %v332
        %5904 = vmatprep.subr.mxu0 0.0
        %5905 = vmatpush1.msra.mxu0 %v333
        %5906 = vmatprep.subr.mxu0 0.0
        %5907 = vmatpush1.msra.mxu0 %v334
        %5908 = vmatprep.subr.mxu0 0.0
        %5909 = vmatpush1.msra.mxu0 %v335
        %5910 = vmatprep.subr.mxu0 0.0
        %5911 = vmatpush1.msra.mxu0 %v336
        %5912 = vmatprep.subr.mxu0 0.0
        %5913 = vmatpush1.msra.mxu0 %v337
        %5914 = vmatprep.subr.mxu0 0.0
        %5915 = vmatpush1.msra.mxu0 0.0
        %5916 = vmatprep.subr.mxu0 0.0
        %5917 = vmatpush1.msra.mxu0 0.0
        %5918 = vmatprep.subr.mxu0 0.0
        %5919 = vmatpush1.msra.mxu0 0.0
        %5920 = vmatprep.subr.mxu0 0.0
        %5921 = vmatpush1.msra.mxu0 0.0
        %5922 = vmatprep.subr.mxu0 0.0
        %5923 = vmatpush1.msra.mxu0 0.0
        %5924 = vmatprep.subr.mxu0 0.0
        %5925 = vmatpush1.msra.mxu0 0.0
        %5926 = vmatprep.subr.mxu0 0.0
        %5927 = vmatpush1.msra.mxu0 0.0
        %5928 = vmatprep.subr.mxu0 0.0
        %5929 = vmatpush1.msra.mxu0 0.0
        %5930 = vmatprep.subr.mxu0 0.0
        %5931 = vmatpush1.msra.mxu0 0.0
        %5932 = vmatprep.subr.mxu0 0.0
        %5933 = vmatpush1.msra.mxu0 0.0
        %5934 = vmatprep.subr.mxu0 0.0
        %5935 = vmatpush1.msra.mxu0 0.0
        %5936 = vmatprep.subr.mxu0 0.0
        %5937 = vmatpush1.msra.mxu0 0.0
        %5938 = vmatprep.subr.mxu0 0.0
        %5939 = vmatpush1.msra.mxu0 0.0
        %5940 = vmatprep.subr.mxu0 0.0
        %5941 = vmatpush1.msra.mxu0 0.0
        %5942 = vmatprep.subr.mxu0 0.0
        %5943 = vmatpush1.msra.mxu0 0.0
        %5944 = vmatprep.subr.mxu0 0.0
        %5945 = vmatpush1.msra.mxu0 0.0
        %5946 = vmatprep.mubr.f32.mxu0 0.0
        %5947 = vmatmul.mubr.f32.gmra.mrb[0].mxu0 %v5107
        %v5948 = vpop.f32.mrb[0].mxu0
        %v5949 = vadd.f32 %v5724, %v5948
        %v5950 = vpop.f32.mrb[0].mxu0
        %5951 = vmatprep.mubr.f32.mxu0 0.0
        %5952 = vmatmul.mubr.f32.gmra.mrb[0].mxu0 %v5110
        %v5953 = vpop.f32.mrb[0].mxu0
        %v5954 = vadd.f32 %v5729, %v5953
        %v5955 = vpop.f32.mrb[0].mxu0
        %5956 = vmatprep.mubr.f32.mxu0 0.0
        %5957 = vmatmul.mubr.f32.gmra.mrb[0].mxu0 %v5113
        %v5958 = vpop.f32.mrb[0].mxu0
        %v5959 = vadd.f32 %v5734, %v5958
        %v5960 = vpop.f32.mrb[0].mxu0
        %5961 = vmatprep.mubr.f32.mxu0 0.0
        %5962 = vmatmul.mubr.f32.gmra.mrb[0].mxu0 %v5116
        %v5963 = vpop.f32.mrb[0].mxu0
        %v5964 = vadd.f32 %v5739, %v5963
        %v5965 = vpop.f32.mrb[0].mxu0
        %5966 = vmatprep.mubr.f32.mxu0 0.0
        %5967 = vmatmul.mubr.f32.gmra.mrb[0].mxu0 %v5119
        %v5968 = vpop.f32.mrb[0].mxu0
        %v5969 = vadd.f32 %v5744, %v5968
        %v5970 = vpop.f32.mrb[0].mxu0
        %5971 = vmatprep.mubr.f32.mxu0 0.0
        %5972 = vmatmul.mubr.f32.gmra.mrb[0].mxu0 %v5122
        %v5973 = vpop.f32.mrb[0].mxu0
        %v5974 = vadd.f32 %v5749, %v5973
        %v5975 = vpop.f32.mrb[0].mxu0
        %5976 = vmatprep.mubr.f32.mxu0 0.0
        %5977 = vmatmul.mubr.f32.gmra.mrb[0].mxu0 %v5125
        %v5978 = vpop.f32.mrb[0].mxu0
        %v5979 = vadd.f32 %v5754, %v5978
        %v5980 = vpop.f32.mrb[0].mxu0
        %5981 = vmatprep.mubr.f32.mxu0 0.0
        %5982 = vmatmul.mubr.f32.gmra.mrb[0].mxu0 %v5128
        %v5983 = vpop.f32.mrb[0].mxu0
        %v5984 = vadd.f32 %v5759, %v5983
        %v5985 = vpop.f32.mrb[0].mxu0
        %5986 = vmatprep.mubr.f32.mxu0 0.0
        %5987 = vmatmul.mubr.f32.gmra.mrb[0].mxu0 %v5131
        %v5988 = vpop.f32.mrb[0].mxu0
        %v5989 = vadd.f32 %v5764, %v5988
        %v5990 = vpop.f32.mrb[0].mxu0
        %5991 = vmatprep.mubr.f32.mxu0 0.0
        %5992 = vmatmul.mubr.f32.gmra.mrb[0].mxu0 %v5134
        %v5993 = vpop.f32.mrb[0].mxu0
        %v5994 = vadd.f32 %v5769, %v5993
        %v5995 = vpop.f32.mrb[0].mxu0
        %5996 = vmatprep.mubr.f32.mxu0 0.0
        %5997 = vmatmul.mubr.f32.gmra.mrb[0].mxu0 %v5137
        %v5998 = vpop.f32.mrb[0].mxu0
        %v5999 = vadd.f32 %v5774, %v5998
        %v6000 = vpop.f32.mrb[0].mxu0
        %6001 = vmatprep.mubr.f32.mxu0 0.0
        %6002 = vmatmul.mubr.f32.gmra.mrb[0].mxu0 %v5140
        %v6003 = vpop.f32.mrb[0].mxu0
        %v6004 = vadd.f32 %v5779, %v6003
        %v6005 = vpop.f32.mrb[0].mxu0
        %6006 = vmatprep.mubr.f32.mxu0 0.0
        %6007 = vmatmul.mubr.f32.gmra.mrb[0].mxu0 %v5143
        %v6008 = vpop.f32.mrb[0].mxu0
        %v6009 = vadd.f32 %v5784, %v6008
        %v6010 = vpop.f32.mrb[0].mxu0
        %6011 = vmatprep.mubr.f32.mxu0 0.0
        %6012 = vmatmul.mubr.f32.gmra.mrb[0].mxu0 %v5146
        %v6013 = vpop.f32.mrb[0].mxu0
        %v6014 = vadd.f32 %v5789, %v6013
        %v6015 = vpop.f32.mrb[0].mxu0
        %6016 = vmatprep.mubr.f32.mxu0 0.0
        %6017 = vmatmul.mubr.f32.gmra.mrb[0].mxu0 %v5149
        %v6018 = vpop.f32.mrb[0].mxu0
        %v6019 = vadd.f32 %v5794, %v6018
        %v6020 = vpop.f32.mrb[0].mxu0
        %6021 = vmatprep.mubr.f32.mxu0 0.0
        %6022 = vmatmul.mubr.f32.gmra.mrb[0].mxu0 %v5152
        %v6023 = vpop.f32.mrb[0].mxu0
        %v6024 = vadd.f32 %v5799, %v6023
        %v6025 = vpop.f32.mrb[0].mxu0
        %6026 = vmatprep.mubr.f32.mxu0 0.0
        %6027 = vmatmul.mubr.f32.gmra.mrb[0].mxu0 %v5155
        %v6028 = vpop.f32.mrb[0].mxu0
        %v6029 = vadd.f32 %v5804, %v6028
        %v6030 = vpop.f32.mrb[0].mxu0
        %6031 = vmatprep.mubr.f32.mxu0 0.0
        %6032 = vmatmul.mubr.f32.gmra.mrb[0].mxu0 %v5158
        %v6033 = vpop.f32.mrb[0].mxu0
        %v6034 = vadd.f32 %v5809, %v6033
        %v6035 = vpop.f32.mrb[0].mxu0
        %6036 = vmatprep.mubr.f32.mxu0 0.0
        %6037 = vmatmul.mubr.f32.gmra.mrb[0].mxu0 %v5161
        %v6038 = vpop.f32.mrb[0].mxu0
        %v6039 = vadd.f32 %v5814, %v6038
        %v6040 = vpop.f32.mrb[0].mxu0
        %6041 = vmatprep.mubr.f32.mxu0 0.0
        %6042 = vmatmul.mubr.f32.gmra.mrb[0].mxu0 %v5164
        %v6043 = vpop.f32.mrb[0].mxu0
        %v6044 = vadd.f32 %v5819, %v6043
        %v6045 = vpop.f32.mrb[0].mxu0
        %6046 = vmatprep.mubr.f32.mxu0 0.0
        %6047 = vmatmul.mubr.f32.gmra.mrb[0].mxu0 %v5167
        %v6048 = vpop.f32.mrb[0].mxu0
        %v6049 = vadd.f32 %v5824, %v6048
        %v6050 = vpop.f32.mrb[0].mxu0
        %6051 = vmatprep.mubr.f32.mxu0 0.0
        %6052 = vmatmul.mubr.f32.gmra.mrb[0].mxu0 %v5170
        %v6053 = vpop.f32.mrb[0].mxu0
        %v6054 = vadd.f32 %v5829, %v6053
        %v6055 = vpop.f32.mrb[0].mxu0
        %6056 = vmatprep.mubr.f32.mxu0 0.0
        %6057 = vmatmul.mubr.f32.gmra.mrb[0].mxu0 %v5173
        %v6058 = vpop.f32.mrb[0].mxu0
        %v6059 = vadd.f32 %v5834, %v6058
        %v6060 = vpop.f32.mrb[0].mxu0
        %6061 = vmatprep.mubr.f32.mxu0 0.0
        %6062 = vmatmul.mubr.f32.gmra.mrb[0].mxu0 %v5176
        %v6063 = vpop.f32.mrb[0].mxu0
        %v6064 = vadd.f32 %v5839, %v6063
        %v6065 = vpop.f32.mrb[0].mxu0
        %6066 = vmatprep.mubr.f32.mxu0 0.0
        %6067 = vmatmul.mubr.f32.gmra.mrb[0].mxu0 %v5179
        %v6068 = vpop.f32.mrb[0].mxu0
        %v6069 = vadd.f32 %v5844, %v6068
        %v6070 = vpop.f32.mrb[0].mxu0
        %6071 = vmatprep.mubr.f32.mxu0 0.0
        %6072 = vmatmul.mubr.f32.gmra.mrb[0].mxu0 %v5182
        %v6073 = vpop.f32.mrb[0].mxu0
        %v6074 = vadd.f32 %v5849, %v6073
        %v6075 = vpop.f32.mrb[0].mxu0
        %6076 = vmatprep.mubr.f32.mxu0 0.0
        %6077 = vmatmul.mubr.f32.gmra.mrb[0].mxu0 %v5185
        %v6078 = vpop.f32.mrb[0].mxu0
        %v6079 = vadd.f32 %v5854, %v6078
        %v6080 = vpop.f32.mrb[0].mxu0
        %6081 = vmatprep.mubr.f32.mxu0 0.0
        %6082 = vmatmul.mubr.f32.gmra.mrb[0].mxu0 %v5188
        %v6083 = vpop.f32.mrb[0].mxu0
        %v6084 = vadd.f32 %v5859, %v6083
        %v6085 = vpop.f32.mrb[0].mxu0
        %6086 = vmatprep.mubr.f32.mxu0 0.0
        %6087 = vmatmul.mubr.f32.gmra.mrb[0].mxu0 %v5191
        %v6088 = vpop.f32.mrb[0].mxu0
        %v6089 = vadd.f32 %v5864, %v6088
        %v6090 = vpop.f32.mrb[0].mxu0
        %6091 = vmatprep.mubr.f32.mxu0 0.0
        %6092 = vmatmul.mubr.f32.gmra.mrb[0].mxu0 %v5194
        %v6093 = vpop.f32.mrb[0].mxu0
        %v6094 = vadd.f32 %v5869, %v6093
        %v6095 = vpop.f32.mrb[0].mxu0
        %6096 = vmatprep.mubr.f32.mxu0 0.0
        %6097 = vmatmul.mubr.f32.gmra.mrb[0].mxu0 %v5197
        %v6098 = vpop.f32.mrb[0].mxu0
        %v6099 = vadd.f32 %v5874, %v6098
        %v6100 = vpop.f32.mrb[0].mxu0
        %6101 = vmatprep.mubr.f32.mxu0 0.0
        %6102 = vmatmul.mubr.f32.gmra.mrb[0].mxu0 %v5200
        %v6103 = vpop.f32.mrb[0].mxu0
        %v6104 = vadd.f32 %v5879, %v6103
        %v6105 = vpop.f32.mrb[0].mxu0
        %6106 = vdwg.mxu0
        %v6107 = vld [vmem:[#allocation2 + $0x60] sm:$0xff]
        %v6108 = vld [vmem:[#allocation2 + $0x68] sm:$0xff]
        %v6109 = vld [vmem:[#allocation2 + $0x70] sm:$0xff]
        %v6110 = vld [vmem:[#allocation2 + $0x78] sm:$0xff]
        %v6111 = vld [vmem:[#allocation2 + $0x80] sm:$0xff]
        %v6112 = vld [vmem:[#allocation2 + $0x88] sm:$0xff]
        %v6113 = vld [vmem:[#allocation2 + $0x90] sm:$0xff]
        %v6114 = vld [vmem:[#allocation2 + $0x98] sm:$0xff]
        %v6115 = vld [vmem:[#allocation2 + $0xa0] sm:$0xff]
        %v6116 = vld [vmem:[#allocation2 + $0xa8] sm:$0xff]
        %v6117 = vld [vmem:[#allocation2 + $0xb0] sm:$0xff]
        %v6118 = vld [vmem:[#allocation2 + $0xb8] sm:$0xff]
        %v6119 = vld [vmem:[#allocation2 + $0xc0] sm:$0xff]
        %v6120 = vld [vmem:[#allocation2 + $0xc8] sm:$0xff]
        %v6121 = vld [vmem:[#allocation2 + $0xd0] sm:$0xff]
        %v6122 = vld [vmem:[#allocation2 + $0xd8] sm:$0xff]
        %v6123 = vld [vmem:[#allocation2 + $0xe0] sm:$0xff]
        %v6124 = vld [vmem:[#allocation2 + $0xe8] sm:$0xff]
        %v6125 = vld [vmem:[#allocation2 + $0xf0] sm:$0xff]
        %v6126 = vld [vmem:[#allocation2 + $0xf8] sm:$0xff]
        %v6127 = vld [vmem:[#allocation2 + $0x100] sm:$0xff]
        %v6128 = vld [vmem:[#allocation2 + $0x108] sm:$0xff]
        %v6129 = vld [vmem:[#allocation2 + $0x110] sm:$0xff]
        %v6130 = vld [vmem:[#allocation2 + $0x118] sm:$0xff]
        %v6131 = vld [vmem:[#allocation2 + $0x120] sm:$0xff]
        %v6132 = vld [vmem:[#allocation2 + $0x128] sm:$0xff]
        %v6133 = vld [vmem:[#allocation2 + $0x130] sm:$0xff]
        %v6134 = vld [vmem:[#allocation2 + $0x138] sm:$0xff]
        %v6135 = vld [vmem:[#allocation2 + $0x140] sm:$0xff]
        %v6136 = vld [vmem:[#allocation2 + $0x148] sm:$0xff]
        %v6137 = vld [vmem:[#allocation2 + $0x150] sm:$0xff]
        %v6138 = vld [vmem:[#allocation2 + $0x158] sm:$0xff]
        %v6139 = vld [vmem:[#allocation2 + $0x160] sm:$0xff]
        %v6140 = vld [vmem:[#allocation2 + $0x168] sm:$0xff]
        %v6141 = vld [vmem:[#allocation2 + $0x170] sm:$0xff]
        %v6142 = vld [vmem:[#allocation2 + $0x178] sm:$0xff]
        %v6143 = vld [vmem:[#allocation2 + $0x180] sm:$0xff]
        %v6144 = vld [vmem:[#allocation2 + $0x188] sm:$0xff]
        %v6145 = vld [vmem:[#allocation2 + $0x190] sm:$0xff]
        %v6146 = vld [vmem:[#allocation2 + $0x198] sm:$0xff]
        %v6147 = vld [vmem:[#allocation2 + $0x1a0] sm:$0xff]
        %v6148 = vld [vmem:[#allocation2 + $0x1a8] sm:$0xff]
        %v6149 = vld [vmem:[#allocation2 + $0x1b0] sm:$0xff]
        %v6150 = vld [vmem:[#allocation2 + $0x1b8] sm:$0xff]
        %v6151 = vld [vmem:[#allocation2 + $0x1c0] sm:$0xff]
        %v6152 = vld [vmem:[#allocation2 + $0x1c8] sm:$0xff]
        %v6153 = vld [vmem:[#allocation2 + $0x1d0] sm:$0xff]
        %v6154 = vld [vmem:[#allocation2 + $0x1d8] sm:$0xff]
        %v6155 = vld [vmem:[#allocation2 + $0x1e0] sm:$0xff]
        %v6156 = vld [vmem:[#allocation2 + $0x1e8] sm:$0xff]
        %v6157 = vld [vmem:[#allocation2 + $0x1f0] sm:$0xff]
        %v6158 = vld [vmem:[#allocation2 + $0x1f8] sm:$0xff]
        %v6159 = vld [vmem:[#allocation2 + $0x200] sm:$0xff]
        %v6160 = vld [vmem:[#allocation2 + $0x208] sm:$0xff]
        %v6161 = vld [vmem:[#allocation2 + $0x210] sm:$0xff]
        %v6162 = vld [vmem:[#allocation2 + $0x218] sm:$0xff]
        %v6163 = vld [vmem:[#allocation2 + $0x220] sm:$0xff]
        %v6164 = vld [vmem:[#allocation2 + $0x228] sm:$0xff]
        %v6165 = vld [vmem:[#allocation2 + $0x230] sm:$0xff]
        %v6166 = vld [vmem:[#allocation2 + $0x238] sm:$0xff]
        %v6167 = vld [vmem:[#allocation2 + $0x240] sm:$0xff]
        %v6168 = vld [vmem:[#allocation2 + $0x248] sm:$0xff]
        %v6169 = vld [vmem:[#allocation2 + $0x250] sm:$0xff]
        %v6170 = vld [vmem:[#allocation2 + $0x258] sm:$0xff]
        %v6171 = vld [vmem:[#allocation2 + $0x260] sm:$0xff]
        %v6172 = vld [vmem:[#allocation2 + $0x268] sm:$0xff]
        %v6173 = vld [vmem:[#allocation2 + $0x270] sm:$0xff]
        %v6174 = vld [vmem:[#allocation2 + $0x278] sm:$0xff]
        %v6175 = vld [vmem:[#allocation2 + $0x280] sm:$0xff]
        %v6176 = vld [vmem:[#allocation2 + $0x288] sm:$0xff]
        %v6177 = vld [vmem:[#allocation2 + $0x290] sm:$0xff]
        %v6178 = vld [vmem:[#allocation2 + $0x298] sm:$0xff]
        %v6179 = vld [vmem:[#allocation2 + $0x2a0] sm:$0xff]
        %v6180 = vld [vmem:[#allocation2 + $0x2a8] sm:$0xff]
        %v6181 = vld [vmem:[#allocation2 + $0x2b0] sm:$0xff]
        %v6182 = vld [vmem:[#allocation2 + $0x2b8] sm:$0xff]
        %v6183 = vld [vmem:[#allocation2 + $0x2c0] sm:$0xff]
        %v6184 = vld [vmem:[#allocation2 + $0x2c8] sm:$0xff]
        %v6185 = vld [vmem:[#allocation2 + $0x2d0] sm:$0xff]
        %v6186 = vld [vmem:[#allocation2 + $0x2d8] sm:$0xff]
        %v6187 = vld [vmem:[#allocation2 + $0x2e0] sm:$0xff]
        %v6188 = vld [vmem:[#allocation2 + $0x2e8] sm:$0xff]
        %v6189 = vld [vmem:[#allocation2 + $0x2f0] sm:$0xff]
        %v6190 = vld [vmem:[#allocation2 + $0x2f8] sm:$0xff]
        %v6191 = vld [vmem:[#allocation2 + $0x300] sm:$0xff]
        %v6192 = vld [vmem:[#allocation2 + $0x308] sm:$0xff]
        %v6193 = vld [vmem:[#allocation2 + $0x310] sm:$0xff]
        %v6194 = vld [vmem:[#allocation2 + $0x318] sm:$0xff]
        %v6195 = vld [vmem:[#allocation2 + $0x320] sm:$0xff]
        %v6196 = vld [vmem:[#allocation2 + $0x328] sm:$0xff]
        %v6197 = vld [vmem:[#allocation2 + $0x330] sm:$0xff]
        %v6198 = vld [vmem:[#allocation2 + $0x338] sm:$0xff]
        %v6199 = vld [vmem:[#allocation2 + $0x340] sm:$0xff]
        %v6200 = vld [vmem:[#allocation2 + $0x348] sm:$0xff]
        %v6201 = vld [vmem:[#allocation2 + $0x350] sm:$0xff]
        %v6202 = vld [vmem:[#allocation2 + $0x358] sm:$0xff]
        %6203 = vmatprep.subr.mxu0 0.0
        %6204 = vmatpush1.msra.mxu0 %v388
        %6205 = vmatprep.subr.mxu0 0.0
        %6206 = vmatpush1.msra.mxu0 %v389
        %6207 = vmatprep.subr.mxu0 0.0
        %6208 = vmatpush1.msra.mxu0 %v390
        %6209 = vmatprep.subr.mxu0 0.0
        %6210 = vmatpush1.msra.mxu0 %v391
        %6211 = vmatprep.subr.mxu0 0.0
        %6212 = vmatpush1.msra.mxu0 %v392
        %6213 = vmatprep.subr.mxu0 0.0
        %6214 = vmatpush1.msra.mxu0 %v393
        %6215 = vmatprep.subr.mxu0 0.0
        %6216 = vmatpush1.msra.mxu0 %v394
        %6217 = vmatprep.subr.mxu0 0.0
        %6218 = vmatpush1.msra.mxu0 %v395
        %6219 = vmatprep.subr.mxu0 0.0
        %6220 = vmatpush1.msra.mxu0 %v396
        %6221 = vmatprep.subr.mxu0 0.0
        %6222 = vmatpush1.msra.mxu0 %v397
        %6223 = vmatprep.subr.mxu0 0.0
        %6224 = vmatpush1.msra.mxu0 %v398
        %6225 = vmatprep.subr.mxu0 0.0
        %6226 = vmatpush1.msra.mxu0 %v399
        %6227 = vmatprep.subr.mxu0 0.0
        %6228 = vmatpush1.msra.mxu0 %v400
        %6229 = vmatprep.subr.mxu0 0.0
        %6230 = vmatpush1.msra.mxu0 %v401
        %6231 = vmatprep.subr.mxu0 0.0
        %6232 = vmatpush1.msra.mxu0 %v402
        %6233 = vmatprep.subr.mxu0 0.0
        %6234 = vmatpush1.msra.mxu0 %v403
        %6235 = vmatprep.subr.mxu0 0.0
        %6236 = vmatpush1.msra.mxu0 %v404
        %6237 = vmatprep.subr.mxu0 0.0
        %6238 = vmatpush1.msra.mxu0 %v405
        %6239 = vmatprep.subr.mxu0 0.0
        %6240 = vmatpush1.msra.mxu0 %v406
        %6241 = vmatprep.subr.mxu0 0.0
        %6242 = vmatpush1.msra.mxu0 %v407
        %6243 = vmatprep.subr.mxu0 0.0
        %6244 = vmatpush1.msra.mxu0 %v408
        %6245 = vmatprep.subr.mxu0 0.0
        %6246 = vmatpush1.msra.mxu0 %v409
        %6247 = vmatprep.subr.mxu0 0.0
        %6248 = vmatpush1.msra.mxu0 %v410
        %6249 = vmatprep.subr.mxu0 0.0
        %6250 = vmatpush1.msra.mxu0 %v411
        %6251 = vmatprep.subr.mxu0 0.0
        %6252 = vmatpush1.msra.mxu0 %v412
        %6253 = vmatprep.subr.mxu0 0.0
        %6254 = vmatpush1.msra.mxu0 %v413
        %6255 = vmatprep.subr.mxu0 0.0
        %6256 = vmatpush1.msra.mxu0 %v414
        %6257 = vmatprep.subr.mxu0 0.0
        %6258 = vmatpush1.msra.mxu0 %v415
        %6259 = vmatprep.subr.mxu0 0.0
        %6260 = vmatpush1.msra.mxu0 %v416
        %6261 = vmatprep.subr.mxu0 0.0
        %6262 = vmatpush1.msra.mxu0 %v417
        %6263 = vmatprep.subr.mxu0 0.0
        %6264 = vmatpush1.msra.mxu0 %v418
        %6265 = vmatprep.subr.mxu0 0.0
        %6266 = vmatpush1.msra.mxu0 %v419
        %6267 = vmatprep.mubr.f32.mxu0 %v6108
        %6268 = vmatmul.mubr.f32.gmra.mrb[0].mxu0 %v6107
        %v6269 = vpop.f32.mrb[0].mxu0
        %v6270 = vadd.f32 0.0, %v6269
        %v6271 = vpop.f32.mrb[0].mxu0
        %6272 = vmatprep.mubr.f32.mxu0 %v6111
        %6273 = vmatmul.mubr.f32.gmra.mrb[0].mxu0 %v6110
        %v6274 = vpop.f32.mrb[0].mxu0
        %v6275 = vadd.f32 0.0, %v6274
        %v6276 = vpop.f32.mrb[0].mxu0
        %6277 = vmatprep.mubr.f32.mxu0 %v6114
        %6278 = vmatmul.mubr.f32.gmra.mrb[0].mxu0 %v6113
        %v6279 = vpop.f32.mrb[0].mxu0
        %v6280 = vadd.f32 0.0, %v6279
        %v6281 = vpop.f32.mrb[0].mxu0
        %6282 = vmatprep.mubr.f32.mxu0 %v6117
        %6283 = vmatmul.mubr.f32.gmra.mrb[0].mxu0 %v6116
        %v6284 = vpop.f32.mrb[0].mxu0
        %v6285 = vadd.f32 0.0, %v6284
        %v6286 = vpop.f32.mrb[0].mxu0
        %6287 = vmatprep.mubr.f32.mxu0 %v6120
        %6288 = vmatmul.mubr.f32.gmra.mrb[0].mxu0 %v6119
        %v6289 = vpop.f32.mrb[0].mxu0
        %v6290 = vadd.f32 0.0, %v6289
        %v6291 = vpop.f32.mrb[0].mxu0
        %6292 = vmatprep.mubr.f32.mxu0 %v6123
        %6293 = vmatmul.mubr.f32.gmra.mrb[0].mxu0 %v6122
        %v6294 = vpop.f32.mrb[0].mxu0
        %v6295 = vadd.f32 0.0, %v6294
        %v6296 = vpop.f32.mrb[0].mxu0
        %6297 = vmatprep.mubr.f32.mxu0 %v6126
        %6298 = vmatmul.mubr.f32.gmra.mrb[0].mxu0 %v6125
        %v6299 = vpop.f32.mrb[0].mxu0
        %v6300 = vadd.f32 0.0, %v6299
        %v6301 = vpop.f32.mrb[0].mxu0
        %6302 = vmatprep.mubr.f32.mxu0 %v6129
        %6303 = vmatmul.mubr.f32.gmra.mrb[0].mxu0 %v6128
        %v6304 = vpop.f32.mrb[0].mxu0
        %v6305 = vadd.f32 0.0, %v6304
        %v6306 = vpop.f32.mrb[0].mxu0
        %6307 = vmatprep.mubr.f32.mxu0 %v6132
        %6308 = vmatmul.mubr.f32.gmra.mrb[0].mxu0 %v6131
        %v6309 = vpop.f32.mrb[0].mxu0
        %v6310 = vadd.f32 0.0, %v6309
        %v6311 = vpop.f32.mrb[0].mxu0
        %6312 = vmatprep.mubr.f32.mxu0 %v6135
        %6313 = vmatmul.mubr.f32.gmra.mrb[0].mxu0 %v6134
        %v6314 = vpop.f32.mrb[0].mxu0
        %v6315 = vadd.f32 0.0, %v6314
        %v6316 = vpop.f32.mrb[0].mxu0
        %6317 = vmatprep.mubr.f32.mxu0 %v6138
        %6318 = vmatmul.mubr.f32.gmra.mrb[0].mxu0 %v6137
        %v6319 = vpop.f32.mrb[0].mxu0
        %v6320 = vadd.f32 0.0, %v6319
        %v6321 = vpop.f32.mrb[0].mxu0
        %6322 = vmatprep.mubr.f32.mxu0 %v6141
        %6323 = vmatmul.mubr.f32.gmra.mrb[0].mxu0 %v6140
        %v6324 = vpop.f32.mrb[0].mxu0
        %v6325 = vadd.f32 0.0, %v6324
        %v6326 = vpop.f32.mrb[0].mxu0
        %6327 = vmatprep.mubr.f32.mxu0 %v6144
        %6328 = vmatmul.mubr.f32.gmra.mrb[0].mxu0 %v6143
        %v6329 = vpop.f32.mrb[0].mxu0
        %v6330 = vadd.f32 0.0, %v6329
        %v6331 = vpop.f32.mrb[0].mxu0
        %6332 = vmatprep.mubr.f32.mxu0 %v6147
        %6333 = vmatmul.mubr.f32.gmra.mrb[0].mxu0 %v6146
        %v6334 = vpop.f32.mrb[0].mxu0
        %v6335 = vadd.f32 0.0, %v6334
        %v6336 = vpop.f32.mrb[0].mxu0
        %6337 = vmatprep.mubr.f32.mxu0 %v6150
        %6338 = vmatmul.mubr.f32.gmra.mrb[0].mxu0 %v6149
        %v6339 = vpop.f32.mrb[0].mxu0
        %v6340 = vadd.f32 0.0, %v6339
        %v6341 = vpop.f32.mrb[0].mxu0
        %6342 = vmatprep.mubr.f32.mxu0 %v6153
        %6343 = vmatmul.mubr.f32.gmra.mrb[0].mxu0 %v6152
        %v6344 = vpop.f32.mrb[0].mxu0
        %v6345 = vadd.f32 0.0, %v6344
        %v6346 = vpop.f32.mrb[0].mxu0
        %6347 = vmatprep.mubr.f32.mxu0 %v6156
        %6348 = vmatmul.mubr.f32.gmra.mrb[0].mxu0 %v6155
        %v6349 = vpop.f32.mrb[0].mxu0
        %v6350 = vadd.f32 0.0, %v6349
        %v6351 = vpop.f32.mrb[0].mxu0
        %6352 = vmatprep.mubr.f32.mxu0 %v6159
        %6353 = vmatmul.mubr.f32.gmra.mrb[0].mxu0 %v6158
        %v6354 = vpop.f32.mrb[0].mxu0
        %v6355 = vadd.f32 0.0, %v6354
        %v6356 = vpop.f32.mrb[0].mxu0
        %6357 = vmatprep.mubr.f32.mxu0 %v6162
        %6358 = vmatmul.mubr.f32.gmra.mrb[0].mxu0 %v6161
        %v6359 = vpop.f32.mrb[0].mxu0
        %v6360 = vadd.f32 0.0, %v6359
        %v6361 = vpop.f32.mrb[0].mxu0
        %6362 = vmatprep.mubr.f32.mxu0 %v6165
        %6363 = vmatmul.mubr.f32.gmra.mrb[0].mxu0 %v6164
        %v6364 = vpop.f32.mrb[0].mxu0
        %v6365 = vadd.f32 0.0, %v6364
        %v6366 = vpop.f32.mrb[0].mxu0
        %6367 = vmatprep.mubr.f32.mxu0 %v6168
        %6368 = vmatmul.mubr.f32.gmra.mrb[0].mxu0 %v6167
        %v6369 = vpop.f32.mrb[0].mxu0
        %v6370 = vadd.f32 0.0, %v6369
        %v6371 = vpop.f32.mrb[0].mxu0
        %6372 = vmatprep.mubr.f32.mxu0 %v6171
        %6373 = vmatmul.mubr.f32.gmra.mrb[0].mxu0 %v6170
        %v6374 = vpop.f32.mrb[0].mxu0
        %v6375 = vadd.f32 0.0, %v6374
        %v6376 = vpop.f32.mrb[0].mxu0
        %6377 = vmatprep.mubr.f32.mxu0 %v6174
        %6378 = vmatmul.mubr.f32.gmra.mrb[0].mxu0 %v6173
        %v6379 = vpop.f32.mrb[0].mxu0
        %v6380 = vadd.f32 0.0, %v6379
        %v6381 = vpop.f32.mrb[0].mxu0
        %6382 = vmatprep.mubr.f32.mxu0 %v6177
        %6383 = vmatmul.mubr.f32.gmra.mrb[0].mxu0 %v6176
        %v6384 = vpop.f32.mrb[0].mxu0
        %v6385 = vadd.f32 0.0, %v6384
        %v6386 = vpop.f32.mrb[0].mxu0
        %6387 = vmatprep.mubr.f32.mxu0 %v6180
        %6388 = vmatmul.mubr.f32.gmra.mrb[0].mxu0 %v6179
        %v6389 = vpop.f32.mrb[0].mxu0
        %v6390 = vadd.f32 0.0, %v6389
        %v6391 = vpop.f32.mrb[0].mxu0
        %6392 = vmatprep.mubr.f32.mxu0 %v6183
        %6393 = vmatmul.mubr.f32.gmra.mrb[0].mxu0 %v6182
        %v6394 = vpop.f32.mrb[0].mxu0
        %v6395 = vadd.f32 0.0, %v6394
        %v6396 = vpop.f32.mrb[0].mxu0
        %6397 = vmatprep.mubr.f32.mxu0 %v6186
        %6398 = vmatmul.mubr.f32.gmra.mrb[0].mxu0 %v6185
        %v6399 = vpop.f32.mrb[0].mxu0
        %v6400 = vadd.f32 0.0, %v6399
        %v6401 = vpop.f32.mrb[0].mxu0
        %6402 = vmatprep.mubr.f32.mxu0 %v6189
        %6403 = vmatmul.mubr.f32.gmra.mrb[0].mxu0 %v6188
        %v6404 = vpop.f32.mrb[0].mxu0
        %v6405 = vadd.f32 0.0, %v6404
        %v6406 = vpop.f32.mrb[0].mxu0
        %6407 = vmatprep.mubr.f32.mxu0 %v6192
        %6408 = vmatmul.mubr.f32.gmra.mrb[0].mxu0 %v6191
        %v6409 = vpop.f32.mrb[0].mxu0
        %v6410 = vadd.f32 0.0, %v6409
        %v6411 = vpop.f32.mrb[0].mxu0
        %6412 = vmatprep.mubr.f32.mxu0 %v6195
        %6413 = vmatmul.mubr.f32.gmra.mrb[0].mxu0 %v6194
        %v6414 = vpop.f32.mrb[0].mxu0
        %v6415 = vadd.f32 0.0, %v6414
        %v6416 = vpop.f32.mrb[0].mxu0
        %6417 = vmatprep.mubr.f32.mxu0 %v6198
        %6418 = vmatmul.mubr.f32.gmra.mrb[0].mxu0 %v6197
        %v6419 = vpop.f32.mrb[0].mxu0
        %v6420 = vadd.f32 0.0, %v6419
        %v6421 = vpop.f32.mrb[0].mxu0
        %6422 = vmatprep.mubr.f32.mxu0 %v6201
        %6423 = vmatmul.mubr.f32.gmra.mrb[0].mxu0 %v6200
        %v6424 = vpop.f32.mrb[0].mxu0
        %v6425 = vadd.f32 0.0, %v6424
        %v6426 = vpop.f32.mrb[0].mxu0
        %6427 = vdwg.mxu0
        %6428 = vmatprep.subr.mxu0 0.0
        %6429 = vmatpush1.msra.mxu0 %v420
        %6430 = vmatprep.subr.mxu0 0.0
        %6431 = vmatpush1.msra.mxu0 %v421
        %6432 = vmatprep.subr.mxu0 0.0
        %6433 = vmatpush1.msra.mxu0 %v422
        %6434 = vmatprep.subr.mxu0 0.0
        %6435 = vmatpush1.msra.mxu0 %v423
        %6436 = vmatprep.subr.mxu0 0.0
        %6437 = vmatpush1.msra.mxu0 %v424
        %6438 = vmatprep.subr.mxu0 0.0
        %6439 = vmatpush1.msra.mxu0 %v425
        %6440 = vmatprep.subr.mxu0 0.0
        %6441 = vmatpush1.msra.mxu0 %v426
        %6442 = vmatprep.subr.mxu0 0.0
        %6443 = vmatpush1.msra.mxu0 %v427
        %6444 = vmatprep.subr.mxu0 0.0
        %6445 = vmatpush1.msra.mxu0 %v428
        %6446 = vmatprep.subr.mxu0 0.0
        %6447 = vmatpush1.msra.mxu0 %v429
        %6448 = vmatprep.subr.mxu0 0.0
        %6449 = vmatpush1.msra.mxu0 %v430
        %6450 = vmatprep.subr.mxu0 0.0
        %6451 = vmatpush1.msra.mxu0 %v431
        %6452 = vmatprep.subr.mxu0 0.0
        %6453 = vmatpush1.msra.mxu0 %v432
        %6454 = vmatprep.subr.mxu0 0.0
        %6455 = vmatpush1.msra.mxu0 %v433
        %6456 = vmatprep.subr.mxu0 0.0
        %6457 = vmatpush1.msra.mxu0 %v434
        %6458 = vmatprep.subr.mxu0 0.0
        %6459 = vmatpush1.msra.mxu0 %v435
        %6460 = vmatprep.subr.mxu0 0.0
        %6461 = vmatpush1.msra.mxu0 0.0
        %6462 = vmatprep.subr.mxu0 0.0
        %6463 = vmatpush1.msra.mxu0 0.0
        %6464 = vmatprep.subr.mxu0 0.0
        %6465 = vmatpush1.msra.mxu0 0.0
        %6466 = vmatprep.subr.mxu0 0.0
        %6467 = vmatpush1.msra.mxu0 0.0
        %6468 = vmatprep.subr.mxu0 0.0
        %6469 = vmatpush1.msra.mxu0 0.0
        %6470 = vmatprep.subr.mxu0 0.0
        %6471 = vmatpush1.msra.mxu0 0.0
        %6472 = vmatprep.subr.mxu0 0.0
        %6473 = vmatpush1.msra.mxu0 0.0
        %6474 = vmatprep.subr.mxu0 0.0
        %6475 = vmatpush1.msra.mxu0 0.0
        %6476 = vmatprep.subr.mxu0 0.0
        %6477 = vmatpush1.msra.mxu0 0.0
        %6478 = vmatprep.subr.mxu0 0.0
        %6479 = vmatpush1.msra.mxu0 0.0
        %6480 = vmatprep.subr.mxu0 0.0
        %6481 = vmatpush1.msra.mxu0 0.0
        %6482 = vmatprep.subr.mxu0 0.0
        %6483 = vmatpush1.msra.mxu0 0.0
        %6484 = vmatprep.subr.mxu0 0.0
        %6485 = vmatpush1.msra.mxu0 0.0
        %6486 = vmatprep.subr.mxu0 0.0
        %6487 = vmatpush1.msra.mxu0 0.0
        %6488 = vmatprep.subr.mxu0 0.0
        %6489 = vmatpush1.msra.mxu0 0.0
        %6490 = vmatprep.subr.mxu0 0.0
        %6491 = vmatpush1.msra.mxu0 0.0
        %6492 = vmatprep.mubr.f32.mxu0 0.0
        %6493 = vmatmul.mubr.f32.gmra.mrb[0].mxu0 %v6109
        %v6494 = vpop.f32.mrb[0].mxu0
        %v6495 = vadd.f32 %v6270, %v6494
        %v6496 = vpop.f32.mrb[0].mxu0
        %6497 = vmatprep.mubr.f32.mxu0 0.0
        %6498 = vmatmul.mubr.f32.gmra.mrb[0].mxu0 %v6112
        %v6499 = vpop.f32.mrb[0].mxu0
        %v6500 = vadd.f32 %v6275, %v6499
        %v6501 = vpop.f32.mrb[0].mxu0
        %6502 = vmatprep.mubr.f32.mxu0 0.0
        %6503 = vmatmul.mubr.f32.gmra.mrb[0].mxu0 %v6115
        %v6504 = vpop.f32.mrb[0].mxu0
        %v6505 = vadd.f32 %v6280, %v6504
        %v6506 = vpop.f32.mrb[0].mxu0
        %6507 = vmatprep.mubr.f32.mxu0 0.0
        %6508 = vmatmul.mubr.f32.gmra.mrb[0].mxu0 %v6118
        %v6509 = vpop.f32.mrb[0].mxu0
        %v6510 = vadd.f32 %v6285, %v6509
        %v6511 = vpop.f32.mrb[0].mxu0
        %6512 = vmatprep.mubr.f32.mxu0 0.0
        %6513 = vmatmul.mubr.f32.gmra.mrb[0].mxu0 %v6121
        %v6514 = vpop.f32.mrb[0].mxu0
        %v6515 = vadd.f32 %v6290, %v6514
        %v6516 = vpop.f32.mrb[0].mxu0
        %6517 = vmatprep.mubr.f32.mxu0 0.0
        %6518 = vmatmul.mubr.f32.gmra.mrb[0].mxu0 %v6124
        %v6519 = vpop.f32.mrb[0].mxu0
        %v6520 = vadd.f32 %v6295, %v6519
        %v6521 = vpop.f32.mrb[0].mxu0
        %6522 = vmatprep.mubr.f32.mxu0 0.0
        %6523 = vmatmul.mubr.f32.gmra.mrb[0].mxu0 %v6127
        %v6524 = vpop.f32.mrb[0].mxu0
        %v6525 = vadd.f32 %v6300, %v6524
        %v6526 = vpop.f32.mrb[0].mxu0
        %6527 = vmatprep.mubr.f32.mxu0 0.0
        %6528 = vmatmul.mubr.f32.gmra.mrb[0].mxu0 %v6130
        %v6529 = vpop.f32.mrb[0].mxu0
        %v6530 = vadd.f32 %v6305, %v6529
        %v6531 = vpop.f32.mrb[0].mxu0
        %6532 = vmatprep.mubr.f32.mxu0 0.0
        %6533 = vmatmul.mubr.f32.gmra.mrb[0].mxu0 %v6133
        %v6534 = vpop.f32.mrb[0].mxu0
        %v6535 = vadd.f32 %v6310, %v6534
        %v6536 = vpop.f32.mrb[0].mxu0
        %6537 = vmatprep.mubr.f32.mxu0 0.0
        %6538 = vmatmul.mubr.f32.gmra.mrb[0].mxu0 %v6136
        %v6539 = vpop.f32.mrb[0].mxu0
        %v6540 = vadd.f32 %v6315, %v6539
        %v6541 = vpop.f32.mrb[0].mxu0
        %6542 = vmatprep.mubr.f32.mxu0 0.0
        %6543 = vmatmul.mubr.f32.gmra.mrb[0].mxu0 %v6139
        %v6544 = vpop.f32.mrb[0].mxu0
        %v6545 = vadd.f32 %v6320, %v6544
        %v6546 = vpop.f32.mrb[0].mxu0
        %6547 = vmatprep.mubr.f32.mxu0 0.0
        %6548 = vmatmul.mubr.f32.gmra.mrb[0].mxu0 %v6142
        %v6549 = vpop.f32.mrb[0].mxu0
        %v6550 = vadd.f32 %v6325, %v6549
        %v6551 = vpop.f32.mrb[0].mxu0
        %6552 = vmatprep.mubr.f32.mxu0 0.0
        %6553 = vmatmul.mubr.f32.gmra.mrb[0].mxu0 %v6145
        %v6554 = vpop.f32.mrb[0].mxu0
        %v6555 = vadd.f32 %v6330, %v6554
        %v6556 = vpop.f32.mrb[0].mxu0
        %6557 = vmatprep.mubr.f32.mxu0 0.0
        %6558 = vmatmul.mubr.f32.gmra.mrb[0].mxu0 %v6148
        %v6559 = vpop.f32.mrb[0].mxu0
        %v6560 = vadd.f32 %v6335, %v6559
        %v6561 = vpop.f32.mrb[0].mxu0
        %6562 = vmatprep.mubr.f32.mxu0 0.0
        %6563 = vmatmul.mubr.f32.gmra.mrb[0].mxu0 %v6151
        %v6564 = vpop.f32.mrb[0].mxu0
        %v6565 = vadd.f32 %v6340, %v6564
        %v6566 = vpop.f32.mrb[0].mxu0
        %6567 = vmatprep.mubr.f32.mxu0 0.0
        %6568 = vmatmul.mubr.f32.gmra.mrb[0].mxu0 %v6154
        %v6569 = vpop.f32.mrb[0].mxu0
        %v6570 = vadd.f32 %v6345, %v6569
        %v6571 = vpop.f32.mrb[0].mxu0
        %6572 = vmatprep.mubr.f32.mxu0 0.0
        %6573 = vmatmul.mubr.f32.gmra.mrb[0].mxu0 %v6157
        %v6574 = vpop.f32.mrb[0].mxu0
        %v6575 = vadd.f32 %v6350, %v6574
        %v6576 = vpop.f32.mrb[0].mxu0
        %6577 = vmatprep.mubr.f32.mxu0 0.0
        %6578 = vmatmul.mubr.f32.gmra.mrb[0].mxu0 %v6160
        %v6579 = vpop.f32.mrb[0].mxu0
        %v6580 = vadd.f32 %v6355, %v6579
        %v6581 = vpop.f32.mrb[0].mxu0
        %6582 = vmatprep.mubr.f32.mxu0 0.0
        %6583 = vmatmul.mubr.f32.gmra.mrb[0].mxu0 %v6163
        %v6584 = vpop.f32.mrb[0].mxu0
        %v6585 = vadd.f32 %v6360, %v6584
        %v6586 = vpop.f32.mrb[0].mxu0
        %6587 = vmatprep.mubr.f32.mxu0 0.0
        %6588 = vmatmul.mubr.f32.gmra.mrb[0].mxu0 %v6166
        %v6589 = vpop.f32.mrb[0].mxu0
        %v6590 = vadd.f32 %v6365, %v6589
        %v6591 = vpop.f32.mrb[0].mxu0
        %6592 = vmatprep.mubr.f32.mxu0 0.0
        %6593 = vmatmul.mubr.f32.gmra.mrb[0].mxu0 %v6169
        %v6594 = vpop.f32.mrb[0].mxu0
        %v6595 = vadd.f32 %v6370, %v6594
        %v6596 = vpop.f32.mrb[0].mxu0
        %6597 = vmatprep.mubr.f32.mxu0 0.0
        %6598 = vmatmul.mubr.f32.gmra.mrb[0].mxu0 %v6172
        %v6599 = vpop.f32.mrb[0].mxu0
        %v6600 = vadd.f32 %v6375, %v6599
        %v6601 = vpop.f32.mrb[0].mxu0
        %6602 = vmatprep.mubr.f32.mxu0 0.0
        %6603 = vmatmul.mubr.f32.gmra.mrb[0].mxu0 %v6175
        %v6604 = vpop.f32.mrb[0].mxu0
        %v6605 = vadd.f32 %v6380, %v6604
        %v6606 = vpop.f32.mrb[0].mxu0
        %6607 = vmatprep.mubr.f32.mxu0 0.0
        %6608 = vmatmul.mubr.f32.gmra.mrb[0].mxu0 %v6178
        %v6609 = vpop.f32.mrb[0].mxu0
        %v6610 = vadd.f32 %v6385, %v6609
        %v6611 = vpop.f32.mrb[0].mxu0
        %6612 = vmatprep.mubr.f32.mxu0 0.0
        %6613 = vmatmul.mubr.f32.gmra.mrb[0].mxu0 %v6181
        %v6614 = vpop.f32.mrb[0].mxu0
        %v6615 = vadd.f32 %v6390, %v6614
        %v6616 = vpop.f32.mrb[0].mxu0
        %6617 = vmatprep.mubr.f32.mxu0 0.0
        %6618 = vmatmul.mubr.f32.gmra.mrb[0].mxu0 %v6184
        %v6619 = vpop.f32.mrb[0].mxu0
        %v6620 = vadd.f32 %v6395, %v6619
        %v6621 = vpop.f32.mrb[0].mxu0
        %6622 = vmatprep.mubr.f32.mxu0 0.0
        %6623 = vmatmul.mubr.f32.gmra.mrb[0].mxu0 %v6187
        %v6624 = vpop.f32.mrb[0].mxu0
        %v6625 = vadd.f32 %v6400, %v6624
        %v6626 = vpop.f32.mrb[0].mxu0
        %6627 = vmatprep.mubr.f32.mxu0 0.0
        %6628 = vmatmul.mubr.f32.gmra.mrb[0].mxu0 %v6190
        %v6629 = vpop.f32.mrb[0].mxu0
        %v6630 = vadd.f32 %v6405, %v6629
        %v6631 = vpop.f32.mrb[0].mxu0
        %6632 = vmatprep.mubr.f32.mxu0 0.0
        %6633 = vmatmul.mubr.f32.gmra.mrb[0].mxu0 %v6193
        %v6634 = vpop.f32.mrb[0].mxu0
        %v6635 = vadd.f32 %v6410, %v6634
        %v6636 = vpop.f32.mrb[0].mxu0
        %6637 = vmatprep.mubr.f32.mxu0 0.0
        %6638 = vmatmul.mubr.f32.gmra.mrb[0].mxu0 %v6196
        %v6639 = vpop.f32.mrb[0].mxu0
        %v6640 = vadd.f32 %v6415, %v6639
        %v6641 = vpop.f32.mrb[0].mxu0
        %6642 = vmatprep.mubr.f32.mxu0 0.0
        %6643 = vmatmul.mubr.f32.gmra.mrb[0].mxu0 %v6199
        %v6644 = vpop.f32.mrb[0].mxu0
        %v6645 = vadd.f32 %v6420, %v6644
        %v6646 = vpop.f32.mrb[0].mxu0
        %6647 = vmatprep.mubr.f32.mxu0 0.0
        %6648 = vmatmul.mubr.f32.gmra.mrb[0].mxu0 %v6202
        %v6649 = vpop.f32.mrb[0].mxu0
        %v6650 = vadd.f32 %v6425, %v6649
        %v6651 = vpop.f32.mrb[0].mxu0
        %6652 = vdwg.mxu0
        %v6653 = vadd.f32 %v5949, %v6495
        %v6654 = vadd.f32 %v5954, %v6500
        %v6655 = vadd.f32 %v5959, %v6505
        %v6656 = vadd.f32 %v5964, %v6510
        %v6657 = vadd.f32 %v5969, %v6515
        %v6658 = vadd.f32 %v5974, %v6520
        %v6659 = vadd.f32 %v5979, %v6525
        %v6660 = vadd.f32 %v5984, %v6530
        %v6661 = vadd.f32 %v5989, %v6535
        %v6662 = vadd.f32 %v5994, %v6540
        %v6663 = vadd.f32 %v5999, %v6545
        %v6664 = vadd.f32 %v6004, %v6550
        %v6665 = vadd.f32 %v6009, %v6555
        %v6666 = vadd.f32 %v6014, %v6560
        %v6667 = vadd.f32 %v6019, %v6565
        %v6668 = vadd.f32 %v6024, %v6570
        %v6669 = vadd.f32 %v6029, %v6575
        %v6670 = vadd.f32 %v6034, %v6580
        %v6671 = vadd.f32 %v6039, %v6585
        %v6672 = vadd.f32 %v6044, %v6590
        %v6673 = vadd.f32 %v6049, %v6595
        %v6674 = vadd.f32 %v6054, %v6600
        %v6675 = vadd.f32 %v6059, %v6605
        %v6676 = vadd.f32 %v6064, %v6610
        %v6677 = vadd.f32 %v6069, %v6615
        %v6678 = vadd.f32 %v6074, %v6620
        %v6679 = vadd.f32 %v6079, %v6625
        %v6680 = vadd.f32 %v6084, %v6630
        %v6681 = vadd.f32 %v6089, %v6635
        %v6682 = vadd.f32 %v6094, %v6640
        %v6683 = vadd.f32 %v6099, %v6645
        %v6684 = vadd.f32 %v6104, %v6650
        %v6685 = vadd.f32 %v6653, %v3940
        %v6686 = vadd.f32 %v6654, %v3940
        %v6687 = vadd.f32 %v6655, %v3940
        %v6688 = vadd.f32 %v6656, %v3940
        %v6689 = vadd.f32 %v6657, %v3940
        %v6690 = vadd.f32 %v6658, %v3940
        %v6691 = vadd.f32 %v6659, %v3940
        %v6692 = vadd.f32 %v6660, %v3940
        %v6693 = vadd.f32 %v6661, %v3940
        %v6694 = vadd.f32 %v6662, %v3940
        %v6695 = vadd.f32 %v6663, %v3940
        %v6696 = vadd.f32 %v6664, %v3940
        %v6697 = vadd.f32 %v6665, %v3940
        %v6698 = vadd.f32 %v6666, %v3940
        %v6699 = vadd.f32 %v6667, %v3940
        %v6700 = vadd.f32 %v6668, %v3940
        %v6701 = vadd.f32 %v6669, %v3940
        %v6702 = vadd.f32 %v6670, %v3940
        %v6703 = vadd.f32 %v6671, %v3940
        %v6704 = vadd.f32 %v6672, %v3940
        %v6705 = vadd.f32 %v6673, %v3940
        %v6706 = vadd.f32 %v6674, %v3940
        %v6707 = vadd.f32 %v6675, %v3940
        %v6708 = vadd.f32 %v6676, %v3940
        %v6709 = vadd.f32 %v6677, %v3940
        %v6710 = vadd.f32 %v6678, %v3940
        %v6711 = vadd.f32 %v6679, %v3940
        %v6712 = vadd.f32 %v6680, %v3940
        %v6713 = vadd.f32 %v6681, %v3940
        %v6714 = vadd.f32 %v6682, %v3940
        %v6715 = vadd.f32 %v6683, %v3940
        %v6716 = vadd.f32 %v6684, %v3940
        %v6717 = vxor.u32 %v6685, 2147483648
        %v6718 = vxor.u32 %v6686, 2147483648
        %v6719 = vxor.u32 %v6687, 2147483648
        %v6720 = vxor.u32 %v6688, 2147483648
        %v6721 = vxor.u32 %v6689, 2147483648
        %v6722 = vxor.u32 %v6690, 2147483648
        %v6723 = vxor.u32 %v6691, 2147483648
        %v6724 = vxor.u32 %v6692, 2147483648
        %v6725 = vxor.u32 %v6693, 2147483648
        %v6726 = vxor.u32 %v6694, 2147483648
        %v6727 = vxor.u32 %v6695, 2147483648
        %v6728 = vxor.u32 %v6696, 2147483648
        %v6729 = vxor.u32 %v6697, 2147483648
        %v6730 = vxor.u32 %v6698, 2147483648
        %v6731 = vxor.u32 %v6699, 2147483648
        %v6732 = vxor.u32 %v6700, 2147483648
        %v6733 = vxor.u32 %v6701, 2147483648
        %v6734 = vxor.u32 %v6702, 2147483648
        %v6735 = vxor.u32 %v6703, 2147483648
        %v6736 = vxor.u32 %v6704, 2147483648
        %v6737 = vxor.u32 %v6705, 2147483648
        %v6738 = vxor.u32 %v6706, 2147483648
        %v6739 = vxor.u32 %v6707, 2147483648
        %v6740 = vxor.u32 %v6708, 2147483648
        %v6741 = vxor.u32 %v6709, 2147483648
        %v6742 = vxor.u32 %v6710, 2147483648
        %v6743 = vxor.u32 %v6711, 2147483648
        %v6744 = vxor.u32 %v6712, 2147483648
        %v6745 = vxor.u32 %v6713, 2147483648
        %v6746 = vxor.u32 %v6714, 2147483648
        %v6747 = vxor.u32 %v6715, 2147483648
        %v6748 = vxor.u32 %v6716, 2147483648
        %v6749 = vmul.f32 %v6717, 1.442695
        %v6750 = vpow.pop %v6749
        %v6751 = vmul.f32 %v6718, 1.442695
        %v6752 = vpow.pop %v6751
        %v6753 = vmul.f32 %v6719, 1.442695
        %v6754 = vpow.pop %v6753
        %v6755 = vmul.f32 %v6720, 1.442695
        %v6756 = vpow.pop %v6755
        %v6757 = vmul.f32 %v6721, 1.442695
        %v6758 = vpow.pop %v6757
        %v6759 = vmul.f32 %v6722, 1.442695
        %v6760 = vpow.pop %v6759
        %v6761 = vmul.f32 %v6723, 1.442695
        %v6762 = vpow.pop %v6761
        %v6763 = vmul.f32 %v6724, 1.442695
        %v6764 = vpow.pop %v6763
        %v6765 = vmul.f32 %v6725, 1.442695
        %v6766 = vpow.pop %v6765
        %v6767 = vmul.f32 %v6726, 1.442695
        %v6768 = vpow.pop %v6767
        %v6769 = vmul.f32 %v6727, 1.442695
        %v6770 = vpow.pop %v6769
        %v6771 = vmul.f32 %v6728, 1.442695
        %v6772 = vpow.pop %v6771
        %v6773 = vmul.f32 %v6729, 1.442695
        %v6774 = vpow.pop %v6773
        %v6775 = vmul.f32 %v6730, 1.442695
        %v6776 = vpow.pop %v6775
        %v6777 = vmul.f32 %v6731, 1.442695
        %v6778 = vpow.pop %v6777
        %v6779 = vmul.f32 %v6732, 1.442695
        %v6780 = vpow.pop %v6779
        %v6781 = vmul.f32 %v6733, 1.442695
        %v6782 = vpow.pop %v6781
        %v6783 = vmul.f32 %v6734, 1.442695
        %v6784 = vpow.pop %v6783
        %v6785 = vmul.f32 %v6735, 1.442695
        %v6786 = vpow.pop %v6785
        %v6787 = vmul.f32 %v6736, 1.442695
        %v6788 = vpow.pop %v6787
        %v6789 = vmul.f32 %v6737, 1.442695
        %v6790 = vpow.pop %v6789
        %v6791 = vmul.f32 %v6738, 1.442695
        %v6792 = vpow.pop %v6791
        %v6793 = vmul.f32 %v6739, 1.442695
        %v6794 = vpow.pop %v6793
        %v6795 = vmul.f32 %v6740, 1.442695
        %v6796 = vpow.pop %v6795
        %v6797 = vmul.f32 %v6741, 1.442695
        %v6798 = vpow.pop %v6797
        %v6799 = vmul.f32 %v6742, 1.442695
        %v6800 = vpow.pop %v6799
        %v6801 = vmul.f32 %v6743, 1.442695
        %v6802 = vpow.pop %v6801
        %v6803 = vmul.f32 %v6744, 1.442695
        %v6804 = vpow.pop %v6803
        %v6805 = vmul.f32 %v6745, 1.442695
        %v6806 = vpow.pop %v6805
        %v6807 = vmul.f32 %v6746, 1.442695
        %v6808 = vpow.pop %v6807
        %v6809 = vmul.f32 %v6747, 1.442695
        %v6810 = vpow.pop %v6809
        %v6811 = vmul.f32 %v6748, 1.442695
        %v6812 = vpow.pop %v6811
        %v6813 = vadd.f32 %v6750, 1.0
        %v6814 = vadd.f32 %v6752, 1.0
        %v6815 = vadd.f32 %v6754, 1.0
        %v6816 = vadd.f32 %v6756, 1.0
        %v6817 = vadd.f32 %v6758, 1.0
        %v6818 = vadd.f32 %v6760, 1.0
        %v6819 = vadd.f32 %v6762, 1.0
        %v6820 = vadd.f32 %v6764, 1.0
        %v6821 = vadd.f32 %v6766, 1.0
        %v6822 = vadd.f32 %v6768, 1.0
        %v6823 = vadd.f32 %v6770, 1.0
        %v6824 = vadd.f32 %v6772, 1.0
        %v6825 = vadd.f32 %v6774, 1.0
        %v6826 = vadd.f32 %v6776, 1.0
        %v6827 = vadd.f32 %v6778, 1.0
        %v6828 = vadd.f32 %v6780, 1.0
        %v6829 = vadd.f32 %v6782, 1.0
        %v6830 = vadd.f32 %v6784, 1.0
        %v6831 = vadd.f32 %v6786, 1.0
        %v6832 = vadd.f32 %v6788, 1.0
        %v6833 = vadd.f32 %v6790, 1.0
        %v6834 = vadd.f32 %v6792, 1.0
        %v6835 = vadd.f32 %v6794, 1.0
        %v6836 = vadd.f32 %v6796, 1.0
        %v6837 = vadd.f32 %v6798, 1.0
        %v6838 = vadd.f32 %v6800, 1.0
        %v6839 = vadd.f32 %v6802, 1.0
        %v6840 = vadd.f32 %v6804, 1.0
        %v6841 = vadd.f32 %v6806, 1.0
        %v6842 = vadd.f32 %v6808, 1.0
        %v6843 = vadd.f32 %v6810, 1.0
        %v6844 = vadd.f32 %v6812, 1.0
        %v6845 = vrcp.pop %v6813
        %v6846 = vmul.f32 1.0, %v6845
        %v6847 = vrcp.pop %v6814
        %v6848 = vmul.f32 1.0, %v6847
        %v6849 = vrcp.pop %v6815
        %v6850 = vmul.f32 1.0, %v6849
        %v6851 = vrcp.pop %v6816
        %v6852 = vmul.f32 1.0, %v6851
        %v6853 = vrcp.pop %v6817
        %v6854 = vmul.f32 1.0, %v6853
        %v6855 = vrcp.pop %v6818
        %v6856 = vmul.f32 1.0, %v6855
        %v6857 = vrcp.pop %v6819
        %v6858 = vmul.f32 1.0, %v6857
        %v6859 = vrcp.pop %v6820
        %v6860 = vmul.f32 1.0, %v6859
        %v6861 = vrcp.pop %v6821
        %v6862 = vmul.f32 1.0, %v6861
        %v6863 = vrcp.pop %v6822
        %v6864 = vmul.f32 1.0, %v6863
        %v6865 = vrcp.pop %v6823
        %v6866 = vmul.f32 1.0, %v6865
        %v6867 = vrcp.pop %v6824
        %v6868 = vmul.f32 1.0, %v6867
        %v6869 = vrcp.pop %v6825
        %v6870 = vmul.f32 1.0, %v6869
        %v6871 = vrcp.pop %v6826
        %v6872 = vmul.f32 1.0, %v6871
        %v6873 = vrcp.pop %v6827
        %v6874 = vmul.f32 1.0, %v6873
        %v6875 = vrcp.pop %v6828
        %v6876 = vmul.f32 1.0, %v6875
        %v6877 = vrcp.pop %v6829
        %v6878 = vmul.f32 1.0, %v6877
        %v6879 = vrcp.pop %v6830
        %v6880 = vmul.f32 1.0, %v6879
        %v6881 = vrcp.pop %v6831
        %v6882 = vmul.f32 1.0, %v6881
        %v6883 = vrcp.pop %v6832
        %v6884 = vmul.f32 1.0, %v6883
        %v6885 = vrcp.pop %v6833
        %v6886 = vmul.f32 1.0, %v6885
        %v6887 = vrcp.pop %v6834
        %v6888 = vmul.f32 1.0, %v6887
        %v6889 = vrcp.pop %v6835
        %v6890 = vmul.f32 1.0, %v6889
        %v6891 = vrcp.pop %v6836
        %v6892 = vmul.f32 1.0, %v6891
        %v6893 = vrcp.pop %v6837
        %v6894 = vmul.f32 1.0, %v6893
        %v6895 = vrcp.pop %v6838
        %v6896 = vmul.f32 1.0, %v6895
        %v6897 = vrcp.pop %v6839
        %v6898 = vmul.f32 1.0, %v6897
        %v6899 = vrcp.pop %v6840
        %v6900 = vmul.f32 1.0, %v6899
        %v6901 = vrcp.pop %v6841
        %v6902 = vmul.f32 1.0, %v6901
        %v6903 = vrcp.pop %v6842
        %v6904 = vmul.f32 1.0, %v6903
        %v6905 = vrcp.pop %v6843
        %v6906 = vmul.f32 1.0, %v6905
        %v6907 = vrcp.pop %v6844
        %v6908 = vmul.f32 1.0, %v6907
        %v6909 = vmul.f32 %v6685, %v6846
        %v6910 = vmul.f32 %v6686, %v6848
        %v6911 = vmul.f32 %v6687, %v6850
        %v6912 = vmul.f32 %v6688, %v6852
        %v6913 = vmul.f32 %v6689, %v6854
        %v6914 = vmul.f32 %v6690, %v6856
        %v6915 = vmul.f32 %v6691, %v6858
        %v6916 = vmul.f32 %v6692, %v6860
        %v6917 = vmul.f32 %v6693, %v6862
        %v6918 = vmul.f32 %v6694, %v6864
        %v6919 = vmul.f32 %v6695, %v6866
        %v6920 = vmul.f32 %v6696, %v6868
        %v6921 = vmul.f32 %v6697, %v6870
        %v6922 = vmul.f32 %v6698, %v6872
        %v6923 = vmul.f32 %v6699, %v6874
        %v6924 = vmul.f32 %v6700, %v6876
        %v6925 = vmul.f32 %v6701, %v6878
        %v6926 = vmul.f32 %v6702, %v6880
        %v6927 = vmul.f32 %v6703, %v6882
        %v6928 = vmul.f32 %v6704, %v6884
        %v6929 = vmul.f32 %v6705, %v6886
        %v6930 = vmul.f32 %v6706, %v6888
        %v6931 = vmul.f32 %v6707, %v6890
        %v6932 = vmul.f32 %v6708, %v6892
        %v6933 = vmul.f32 %v6709, %v6894
        %v6934 = vmul.f32 %v6710, %v6896
        %v6935 = vmul.f32 %v6711, %v6898
        %v6936 = vmul.f32 %v6712, %v6900
        %v6937 = vmul.f32 %v6713, %v6902
        %v6938 = vmul.f32 %v6714, %v6904
        %v6939 = vmul.f32 %v6715, %v6906
        %v6940 = vmul.f32 %v6716, %v6908
        %v6941 = vld [vmem:[%s237] sm:$0xff]
        %v6942 = vld [vmem:[%s237 + $0x8] sm:$0xff]
        %v6943 = vld [vmem:[%s237 + $0x10] sm:$0xff]
        %v6944 = vld [vmem:[%s237 + $0x18] sm:$0xff]
        %v6945 = vld [vmem:[%s237 + $0x20] sm:$0xff]
        %v6946 = vld [vmem:[%s237 + $0x28] sm:$0xff]
        %v6947 = vld [vmem:[%s237 + $0x30] sm:$0xff]
        %v6948 = vld [vmem:[%s237 + $0x38] sm:$0xff]
        %v6949 = vld [vmem:[%s237 + $0x40] sm:$0xff]
        %v6950 = vld [vmem:[%s237 + $0x48] sm:$0xff]
        %v6951 = vld [vmem:[%s237 + $0x50] sm:$0xff]
        %v6952 = vld [vmem:[%s237 + $0x58] sm:$0xff]
        %v6953 = vld [vmem:[%s237 + $0x60] sm:$0xff]
        %v6954 = vld [vmem:[%s237 + $0x68] sm:$0xff]
        %v6955 = vld [vmem:[%s237 + $0x70] sm:$0xff]
        %v6956 = vld [vmem:[%s237 + $0x78] sm:$0xff]
        %v6957 = vld [vmem:[%s237 + $0x80] sm:$0xff]
        %v6958 = vld [vmem:[%s237 + $0x88] sm:$0xff]
        %v6959 = vld [vmem:[%s237 + $0x90] sm:$0xff]
        %v6960 = vld [vmem:[%s237 + $0x98] sm:$0xff]
        %v6961 = vld [vmem:[%s237 + $0xa0] sm:$0xff]
        %v6962 = vld [vmem:[%s237 + $0xa8] sm:$0xff]
        %v6963 = vld [vmem:[%s237 + $0xb0] sm:$0xff]
        %v6964 = vld [vmem:[%s237 + $0xb8] sm:$0xff]
        %v6965 = vld [vmem:[%s237 + $0xc0] sm:$0xff]
        %v6966 = vld [vmem:[%s237 + $0xc8] sm:$0xff]
        %v6967 = vld [vmem:[%s237 + $0xd0] sm:$0xff]
        %v6968 = vld [vmem:[%s237 + $0xd8] sm:$0xff]
        %v6969 = vld [vmem:[%s237 + $0xe0] sm:$0xff]
        %v6970 = vld [vmem:[%s237 + $0xe8] sm:$0xff]
        %v6971 = vld [vmem:[%s237 + $0xf0] sm:$0xff]
        %v6972 = vld [vmem:[%s237 + $0xf8] sm:$0xff]
        %v6973 = vadd.f32 %v6909, %v6941
        %v6974 = vadd.f32 %v6910, %v6942
        %v6975 = vadd.f32 %v6911, %v6943
        %v6976 = vadd.f32 %v6912, %v6944
        %v6977 = vadd.f32 %v6913, %v6945
        %v6978 = vadd.f32 %v6914, %v6946
        %v6979 = vadd.f32 %v6915, %v6947
        %v6980 = vadd.f32 %v6916, %v6948
        %v6981 = vadd.f32 %v6917, %v6949
        %v6982 = vadd.f32 %v6918, %v6950
        %v6983 = vadd.f32 %v6919, %v6951
        %v6984 = vadd.f32 %v6920, %v6952
        %v6985 = vadd.f32 %v6921, %v6953
        %v6986 = vadd.f32 %v6922, %v6954
        %v6987 = vadd.f32 %v6923, %v6955
        %v6988 = vadd.f32 %v6924, %v6956
        %v6989 = vadd.f32 %v6925, %v6957
        %v6990 = vadd.f32 %v6926, %v6958
        %v6991 = vadd.f32 %v6927, %v6959
        %v6992 = vadd.f32 %v6928, %v6960
        %v6993 = vadd.f32 %v6929, %v6961
        %v6994 = vadd.f32 %v6930, %v6962
        %v6995 = vadd.f32 %v6931, %v6963
        %v6996 = vadd.f32 %v6932, %v6964
        %v6997 = vadd.f32 %v6933, %v6965
        %v6998 = vadd.f32 %v6934, %v6966
        %v6999 = vadd.f32 %v6935, %v6967
        %v7000 = vadd.f32 %v6936, %v6968
        %v7001 = vadd.f32 %v6937, %v6969
        %v7002 = vadd.f32 %v6938, %v6970
        %v7003 = vadd.f32 %v6939, %v6971
        %v7004 = vadd.f32 %v6940, %v6972
        %7005 = vst [vmem:[%s271] sm:$0xff] %v6973
        %7006 = vst [vmem:[%s271 + $0x8] sm:$0xff] %v6974
        %7007 = vst [vmem:[%s271 + $0x10] sm:$0xff] %v6975
        %7008 = vst [vmem:[%s271 + $0x18] sm:$0xff] %v6976
        %7009 = vst [vmem:[%s271 + $0x20] sm:$0xff] %v6977
        %7010 = vst [vmem:[%s271 + $0x28] sm:$0xff] %v6978
        %7011 = vst [vmem:[%s271 + $0x30] sm:$0xff] %v6979
        %7012 = vst [vmem:[%s271 + $0x38] sm:$0xff] %v6980
        %7013 = vst [vmem:[%s271 + $0x40] sm:$0xff] %v6981
        %7014 = vst [vmem:[%s271 + $0x48] sm:$0xff] %v6982
        %7015 = vst [vmem:[%s271 + $0x50] sm:$0xff] %v6983
        %7016 = vst [vmem:[%s271 + $0x58] sm:$0xff] %v6984
        %7017 = vst [vmem:[%s271 + $0x60] sm:$0xff] %v6985
        %7018 = vst [vmem:[%s271 + $0x68] sm:$0xff] %v6986
        %7019 = vst [vmem:[%s271 + $0x70] sm:$0xff] %v6987
        %7020 = vst [vmem:[%s271 + $0x78] sm:$0xff] %v6988
        %7021 = vst [vmem:[%s271 + $0x80] sm:$0xff] %v6989
        %7022 = vst [vmem:[%s271 + $0x88] sm:$0xff] %v6990
        %7023 = vst [vmem:[%s271 + $0x90] sm:$0xff] %v6991
        %7024 = vst [vmem:[%s271 + $0x98] sm:$0xff] %v6992
        %7025 = vst [vmem:[%s271 + $0xa0] sm:$0xff] %v6993
        %7026 = vst [vmem:[%s271 + $0xa8] sm:$0xff] %v6994
        %7027 = vst [vmem:[%s271 + $0xb0] sm:$0xff] %v6995
        %7028 = vst [vmem:[%s271 + $0xb8] sm:$0xff] %v6996
        %7029 = vst [vmem:[%s271 + $0xc0] sm:$0xff] %v6997
        %7030 = vst [vmem:[%s271 + $0xc8] sm:$0xff] %v6998
        %7031 = vst [vmem:[%s271 + $0xd0] sm:$0xff] %v6999
        %7032 = vst [vmem:[%s271 + $0xd8] sm:$0xff] %v7000
        %7033 = vst [vmem:[%s271 + $0xe0] sm:$0xff] %v7001
        %7034 = vst [vmem:[%s271 + $0xe8] sm:$0xff] %v7002
        %7035 = vst [vmem:[%s271 + $0xf0] sm:$0xff] %v7003
        %7036 = vst [vmem:[%s271 + $0xf8] sm:$0xff] %v7004
        %s7037 = sand.u32 %s141, 1
        %s7038 = scalar_lea.sflag [#allocation5], %s7037
        %s7039 = sand.u32 %s141, 1
        %s7040 = smul.addr %s7039, 256
        %s7041 = scalar_lea.vmem [#allocation9], %s7040
        // Predicated region
        $region53: #{tpu_custom_call.1} parent=39 // pred_check
          %p7042 = pneg %p151
        $region54: #{tpu_custom_call.1} parent=39 // pred_check_branch
          %7044 = sbr.rel (%p7042) target = $region56
        $region55: #{tpu_custom_call.1} parent=39 // pred_region
          %s7046 = ssub.s32 4096, 4096
          %7047 = vsyncadd %s7038, %s7046
          %s7048 = smul.addr %s23, 32
          %s7049 = smul.addr %s7048, 128
          %s7050 = scalar_lea.hbm %s5, %s7049
          %s7051 = sshll.u32 %s7041, 4
          %s7052 = int_to_ptr.vmem [resolvable:$true] %s7051
          %7057 = dma.vmem_to_hbm [thread:$0]  %s7052, 4096, %s7050, %s7038, 128, 128, 8
        $region56: #{tpu_custom_call.1} parent=39 // pred_fallthru
          _
      $region40: #{tpu_custom_call.1} parent=5 // pred_fallthru
        _
      %p7058 = scmp.le.s32.totalorder 2, %s18
      // Predicated region
      $region57: #{tpu_custom_call.1} parent=5 // pred_check
        %p7059 = pneg %p7058
      $region58: #{tpu_custom_call.1} parent=5 // pred_check_branch
        %7061 = sbr.rel (%p7059) target = $region60
      $region59: #{tpu_custom_call.1} parent=5 // pred_region
        %s7062 = ssub.s32 %s18, 2
        // Predicated region
        $region61: #{tpu_custom_call.1} parent=59 // pred_check
          %p7063 = pneg %p157
        $region62: #{tpu_custom_call.1} parent=59 // pred_check_branch
          %7065 = sbr.rel (%p7063) target = $region64
        $region63: #{tpu_custom_call.1} parent=59 // pred_region
          %s7066 = sand.u32 %s142, 1
          %s7067 = scalar_lea.sflag [#allocation5], %s7066
          %s7068 = sand.u32 %s142, 1
          %s7069 = smul.addr %s7068, 256
          %s7070 = scalar_lea.vmem [#allocation9], %s7069
          %7071 = dma.done %s7067, 4096
        $region64: #{tpu_custom_call.1} parent=59 // pred_fallthru
          _
      $region60: #{tpu_custom_call.1} parent=5 // pred_fallthru
        _
    $region6: #{tpu_custom_call.1} parent=1 // loop_footer
      %s22 = sadd.s32 1, %s18
    $region7: #{tpu_custom_call.1} parent=1 // loop_footer_branch
      %17 = sbr.rel target = $region3
    $region8: #{tpu_custom_call.1} parent=1 // loop_exit
      _
    %7072 = vsyncpa [#allocation4], 1
    %s7073 = scalar_lea.sflag [#allocation4], 1
    %7074 = vsyncpa %s7073, 1
    %7075 = vsyncpa [#allocation7], 1
    %7076 = vsyncpa [#allocation5], 1
    %s7077 = scalar_lea.sflag [#allocation5], 1
    %7078 = vsyncpa %s7077, 1

</llo_original>
